<compile_context>
chip_gen: v7x
topology: tpu7x:2x2x1
jax: 0.10.0
libtpu: 0.0.40
codegen_flags: <defaults>
</compile_context>

<pallas_src>
import functools

import jax
import jax.numpy as jnp
from jax import lax
from jax.experimental import pallas as pl
from jax.experimental.pallas import tpu as pltpu

_LAYER_WIDTHS = (4, 8, 16, 32)  # input spatial size (H == W) of each transposed-conv layer


# -----------------------------------------------------------------------------
# Fused decoder kernel: all four transposed-conv blocks for NIMG images per step.
# -----------------------------------------------------------------------------
def _decoder_kernel(*refs, layer_meta):
    x_ref = refs[0]
    out_ref = refs[-1]
    wrefs = refs[1:-1]

    # Activation layout: rows = (image, image-row) major, lanes = (col, channel).
    X = x_ref[...]

    for li, (h_in, relu, lane_concat) in enumerate(layer_meta):
        a_eo = wrefs[4 * li + 0][...]    # (W*Cin, 2*(2W*Cout))  [A_even | A_odd_tap0]
        a_o1 = wrefs[4 * li + 1][...]    # odd rows, tap from input row t+1 (kh=0)
        scale = wrefs[4 * li + 2][...]   # (1, lanes) fused BN scale          (f32)
        shift = wrefs[4 * li + 3][...]   # (1, lanes) fused conv-bias + BN shift (f32)

        rows, k = X.shape

        # Rows shifted up by one image row.  Every row that is the LAST row of its image
        # is zeroed so image i never reads image i+1 within the same grid step.
        x_shift = jnp.concatenate([X[1:, :], jnp.zeros((1, k), X.dtype)], axis=0)
        row_in_img = lax.broadcasted_iota(jnp.int32, (rows, k), 0) % h_in
        x_up = jnp.where(row_in_img == h_in - 1, jnp.zeros_like(x_shift), x_shift)
        # TODO(synk): pltpu.roll(X, rows-1, axis=0) + this mask would avoid the shifted
        #             copy, but sublane rolls of packed sub-32-bit rows may not lower.

        xc = X.astype(a_eo.dtype)
        xu = x_up.astype(a_eo.dtype)

        y = jnp.dot(xc, a_eo, preferred_element_type=jnp.float32)   # [even | odd_part0]
        z = jnp.dot(xu, a_o1, preferred_element_type=jnp.float32)

        if lane_concat:
            # Final layer, image_channels == 1: a_o1 was pre-padded so z already sits on
            # the odd lane half -> no slicing, no row interleave; the (rows, 128) result
            # is byte-identical to the NCHW 64x64 image and stores are lane-dense.
            X = (y + z) * scale + shift
            if relu:
                X = jnp.maximum(X, 0.0)
        else:
            n = a_o1.shape[1]                      # multiple of 128 for conv_channels % 8 == 0
            y_even = y[:, :n] * scale + shift
            y_odd = (y[:, n:] + z) * scale + shift
            if relu:
                y_even = jnp.maximum(y_even, 0.0)
                y_odd = jnp.maximum(y_odd, 0.0)
            # Interleave output rows: row 2t <- even, row 2t+1 <- odd (per image).
            X = jnp.concatenate([y_even[:, None, :], y_odd[:, None, :]],
                                axis=1).reshape(2 * rows, n)

    out_ref[...] = X.astype(out_ref.dtype)


# -----------------------------------------------------------------------------
# Banded column matrix for one row-tap (kh) of the stride-2 transposed conv.
# -----------------------------------------------------------------------------
def _band_matrix(w_kh, width):
    """w_kh: (Cin, Cout, 3) = W[:, :, kh, :] in PyTorch ConvTranspose2d layout.

    Returns (width*Cin, 2*width*Cout) so that an input row with lanes (u, ic)
    matmul'd by it yields the output row with lanes (j, oc), j in [0, 2*width).
    """
    cin, cout, _ = w_kh.shape
    m = jnp.zeros((width, cin, 2 * width, cout), w_kh.dtype)
    u = jnp.arange(width)
    m = m.at[u, :, 2 * u, :].set(w_kh[:, :, 1])              # out col 2u   <- in col u   (kw=1)
    m = m.at[u, :, 2 * u + 1, :].set(w_kh[:, :, 2])          # out col 2u+1 <- in col u   (kw=2)
    m = m.at[u[1:], :, 2 * u[1:] - 1, :].set(w_kh[:, :, 0])  # out col 2u+1 <- in col u+1 (kw=0)
    return m.reshape(width * cin, 2 * width * cout)


# -----------------------------------------------------------------------------
# Deterministic parameter construction (shapes follow the PyTorch __init__)
# -----------------------------------------------------------------------------
def init_params(key, conv_channels, image_channels):
    C = conv_channels
    specs = [
        (4 * C, 2 * C, True),             # block1: ConvT + BN + ReLU
        (2 * C, C, True),                 # block2
        (C, C // 2, True),                # block3
        (C // 2, image_channels, False),  # final_transconv
    ]
    raw = []
    for cin, cout, has_bn in specs:
        key, k1, k2, k3, k4, k5, k6 = jax.random.split(key, 7)
        # PyTorch ConvTranspose2d weight layout: (Cin, Cout, kH, kW)
        w = 0.05 * jax.random.normal(k1, (cin, cout, 3, 3), jnp.float32)
        b = 0.05 * jax.random.normal(k2, (cout,), jnp.float32)
        if has_bn:
            gamma = 1.0 + 0.1 * jax.random.normal(k3, (cout,), jnp.float32)
            beta = 0.1 * jax.random.normal(k4, (cout,), jnp.float32)
            rmean = 0.1 * jax.random.normal(k5, (cout,), jnp.float32)
            rvar = 1.0 + 0.1 * jax.random.uniform(k6, (cout,), jnp.float32)
            bn = (gamma, beta, rmean, rvar)
        else:
            bn = None
        raw.append((w, b, bn))
    return raw


def prepare_kernel_params(raw_params, image_channels, compute_dtype=jnp.bfloat16):
    """One-time prep: fold bias+BN, build fused banded matrices, tile per-channel affines."""
    eps = 1e-5
    flat, meta = [], []
    n_layers = len(raw_params)
    for li, (width, (w, b, bn)) in enumerate(zip(_LAYER_WIDTHS, raw_params)):
        cout = w.shape[1]
        if bn is not None:
            gamma, beta, rmean, rvar = bn
            s = gamma / jnp.sqrt(rvar + eps)
            sh = beta + s * (b - rmean)
            relu = True
        else:
            s = jnp.ones((cout,), jnp.float32)
            sh = b.astype(jnp.float32)
            relu = False

        a_e = _band_matrix(w[:, :, 1, :], width)    # even output rows        (kh=1)
        a_o0 = _band_matrix(w[:, :, 2, :], width)   # odd rows, input row t   (kh=2)
        a_o1 = _band_matrix(w[:, :, 0, :], width)   # odd rows, input row t+1 (kh=0)
        n = a_e.shape[1]                            # 2 * width * cout

        # One wide MXU op instead of two with the same LHS: Y = X @ [A_e | A_o0].
        a_eo = jnp.concatenate([a_e, a_o0], axis=1)

        lane_concat = (li == n_layers - 1) and (image_channels == 1)
        if lane_concat:
            # Pad the t+1-tap matrix so its product lands on the odd lane half of the
            # [even row | odd row] layout -> final layer needs no slicing/interleave.
            a_o1 = jnp.concatenate([jnp.zeros_like(a_o1), a_o1], axis=1)
            scale_vec = jnp.tile(s, 4 * width).reshape(1, 2 * n)
            shift_vec = jnp.tile(sh, 4 * width).reshape(1, 2 * n)
        else:
            scale_vec = jnp.tile(s, 2 * width).reshape(1, n)
            shift_vec = jnp.tile(sh, 2 * width).reshape(1, n)

        flat += [a_eo.astype(compute_dtype), a_o1.astype(compute_dtype),
                 scale_vec.astype(jnp.float32), shift_vec.astype(jnp.float32)]
        meta.append((width, relu, lane_concat))
    return flat, tuple(meta)


def _choose_images_per_step(batch, requested):
    nimg = max(1, min(requested, batch))
    if batch >= 4:
        nimg = min(nimg, batch // 2)   # keep >= 2 grid steps (v7x: feed both TensorCores)
    if nimg > 1 and nimg % 2:
        nimg -= 1                      # keep 4*nimg a multiple of 8 (sublane tiling)
    if nimg == 1 and batch > 1:
        nimg = 2
    return nimg


# -----------------------------------------------------------------------------
# Full ConvDecoder forward
# -----------------------------------------------------------------------------
def conv_decoder_forward(x_flat, kernel_params, layer_meta, conv_channels,
                         image_channels, images_per_step=8):
    C = conv_channels
    B = x_flat.shape[0]
    lane_concat_out = layer_meta[-1][2]
    out_lanes = 128 if lane_concat_out else 64 * image_channels
    out_rows_per_img = 32 if lane_concat_out else 64

    nimg = _choose_images_per_step(B, images_per_step)
    b_pad = ((B + nimg - 1) // nimg) * nimg
    steps = b_pad // nimg

    # x.view(-1, 4C, 4, 4) (NCHW) -> rows = image row, lanes = (col, channel).
    # TODO(synk): this tiny permute stays in the wrapper: the image-row axis of NCHW is not
    #             reachable by a pure reshape, so it cannot be folded into the layer-1 band
    #             matrices without a dense (full-image) layer-1 matrix.
    x = x_flat.reshape(B, 4 * C, 4, 4)
    x = jnp.transpose(x, (0, 2, 3, 1)).reshape(B * 4, 4 * 4 * C)
    if b_pad != B:
        x = jnp.concatenate(
            [x, jnp.zeros(((b_pad - B) * 4, 4 * 4 * C), x.dtype)], axis=0)

    kernel = functools.partial(_decoder_kernel, layer_meta=layer_meta)

    in_specs = [pl.BlockSpec((4 * nimg, 4 * 4 * C), lambda n: (n, 0))]
    for p in kernel_params:
        # Full-block, constant index map -> fetched once, VMEM-resident for the whole call.
        in_specs.append(pl.BlockSpec(p.shape, lambda n: (0, 0)))
    # TODO(synk): pipeline_mode=pl.Buffered(1) on the constant weight specs would halve
    #             their VMEM footprint on v7x once top-level pallas_call honors it.

    out_struct = jax.ShapeDtypeStruct((b_pad * out_rows_per_img, out_lanes), jnp.float32)
    out_spec = pl.BlockSpec((nimg * out_rows_per_img, out_lanes), lambda n: (n, 0))

    # Advisory cost estimate so XLA schedules/overlaps the custom call sensibly.
    flops = 0
    for li, (h_in, _, _) in enumerate(layer_meta):
        a_eo, a_o1 = kernel_params[4 * li], kernel_params[4 * li + 1]
        flops += 2 * (b_pad * h_in) * a_eo.shape[0] * (a_eo.shape[1] + a_o1.shape[1])
    weight_bytes = sum(int(p.size) * p.dtype.itemsize for p in kernel_params)
    bytes_accessed = (int(x.size) * x.dtype.itemsize
                      + b_pad * out_rows_per_img * out_lanes * 4
                      + weight_bytes)
    # Scoped-VMEM ask sized to actual use (weights double-buffered + headroom); well under
    # v7x's 64 MiB/TC and far below the previous flat 48 MiB request at small widths.
    vmem_limit = int(min(48 * 1024 * 1024, 2 * weight_bytes + 16 * 1024 * 1024))

    out = pl.pallas_call(
        kernel,
        out_shape=out_struct,
        grid=(steps,),
        in_specs=in_specs,
        out_specs=out_spec,
        compiler_params=pltpu.CompilerParams(
            dimension_semantics=("parallel",),
            vmem_limit_bytes=vmem_limit),
        cost_estimate=pl.CostEstimate(
            flops=int(flops), transcendentals=0, bytes_accessed=int(bytes_accessed)),
    )(x, *kernel_params)

    if lane_concat_out:
        out = out.reshape(b_pad, 32, 128)[:B]
        return out.reshape(B, 1, 64, 64)          # pure row-major reshape (free)
    out = out.reshape(b_pad, 64, 64, image_channels)[:B]
    # TODO(synk): for image_channels > 1 this small transpose stays in the wrapper.
    return jnp.transpose(out, (0, 3, 1, 2))


# -----------------------------------------------------------------------------
# Pure-JAX reference (same math as the PyTorch module in eval mode), for checking.
# -----------------------------------------------------------------------------
def _reference_forward(x_flat, raw_params, conv_channels):
    eps = 1e-5
    x = x_flat.reshape(-1, 4 * conv_channels, 4, 4)
    for (w, b, bn) in raw_params:
        wf = jnp.transpose(w, (1, 0, 2, 3))[:, :, ::-1, ::-1]  # OIHW, spatially flipped
        x = lax.conv_general_dilated(
            x, wf, window_strides=(1, 1), padding=((1, 2), (1, 2)),
            lhs_dilation=(2, 2), dimension_numbers=("NCHW", "OIHW", "NCHW"),
            precision=lax.Precision.HIGHEST)
        x = x + b[None, :, None, None]
        if bn is not None:
            gamma, beta, rmean, rvar = bn
            x = (x - rmean[None, :, None, None]) * (
                gamma[None, :, None, None]
                / jnp.sqrt(rvar[None, :, None, None] + eps)) + beta[None, :, None, None]
            x = jnp.maximum(x, 0.0)
    return x


if __name__ == "__main__":
    conv_channels = 8      # small version of the module's default conv_channels=32
    image_channels = 1
    batch = 16             # 8 images per grid step -> 2 parallel steps (both v7x TCs busy)

    key = jax.random.PRNGKey(0)
    kx, kp = jax.random.split(key)
    x = jax.random.normal(kx, (batch, 4 * conv_channels * 4 * 4), jnp.float32)

    raw_params = init_params(kp, conv_channels, image_channels)
    ref = _reference_forward(x, raw_params, conv_channels)

    # --- f32 MXU operands: exact-parity check against the reference --------------------
    p32, meta32 = prepare_kernel_params(raw_params, image_channels, compute_dtype=jnp.float32)
    fwd32 = jax.jit(functools.partial(
        conv_decoder_forward, layer_meta=meta32,
        conv_channels=conv_channels, image_channels=image_channels, images_per_step=8))
    out32 = jax.block_until_ready(fwd32(x, p32))
    assert out32.shape == (batch, image_channels, 64, 64), out32.shape
    assert bool(jnp.all(jnp.isfinite(out32)))
    err32 = float(jnp.max(jnp.abs(out32 - ref)))
    assert jnp.allclose(out32, ref, atol=2e-3, rtol=2e-3), err32

    # --- bf16 MXU operands (recommended on v6e/v7x): looser tolerance -------------------
    pbf, metabf = prepare_kernel_params(raw_params, image_channels, compute_dtype=jnp.bfloat16)
    fwdbf = jax.jit(functools.partial(
        conv_decoder_forward, layer_meta=metabf,
        conv_channels=conv_channels, image_channels=image_channels, images_per_step=8))
    outbf = jax.block_until_ready(fwdbf(x, pbf))
    assert outbf.shape == (batch, image_channels, 64, 64), outbf.shape
    errbf = float(jnp.max(jnp.abs(outbf - ref)))
    assert jnp.allclose(outbf, ref, atol=2e-2, rtol=2e-2), errbf

    print("KERNEL_OK")
</pallas_src>

<mosaic_0001>
module attributes {stable_mosaic.version = 11 : i64} {
  func.func @_decoder_kernel(%arg0: i32, %arg1: memref<32x128xf32, #tpu.memory_space<vmem>>, %arg2: memref<128x256xf32, #tpu.memory_space<vmem>>, %arg3: memref<128x128xf32, #tpu.memory_space<vmem>>, %arg4: memref<1x128xf32, #tpu.memory_space<vmem>>, %arg5: memref<1x128xf32, #tpu.memory_space<vmem>>, %arg6: memref<128x256xf32, #tpu.memory_space<vmem>>, %arg7: memref<128x128xf32, #tpu.memory_space<vmem>>, %arg8: memref<1x128xf32, #tpu.memory_space<vmem>>, %arg9: memref<1x128xf32, #tpu.memory_space<vmem>>, %arg10: memref<128x256xf32, #tpu.memory_space<vmem>>, %arg11: memref<128x128xf32, #tpu.memory_space<vmem>>, %arg12: memref<1x128xf32, #tpu.memory_space<vmem>>, %arg13: memref<1x128xf32, #tpu.memory_space<vmem>>, %arg14: memref<128x128xf32, #tpu.memory_space<vmem>>, %arg15: memref<128x128xf32, #tpu.memory_space<vmem>>, %arg16: memref<1x128xf32, #tpu.memory_space<vmem>>, %arg17: memref<1x128xf32, #tpu.memory_space<vmem>>, %arg18: memref<256x128xf32, #tpu.memory_space<vmem>>) attributes {dimension_semantics = [#tpu.dimension_semantics<parallel>], iteration_bounds = array<i64: 2>, scalar_prefetch = 0 : i64, scratch_operands = 0 : i64, tpu.core_type = #tpu.core_type<tc>, window_params = [{transform_indices = @transform_0, window_bounds = array<i64: 32, 128>}, {pipeline_mode = #tpu.pipeline_mode<synchronous>, transform_indices = @transform_1, window_bounds = array<i64: 128, 256>}, {pipeline_mode = #tpu.pipeline_mode<synchronous>, transform_indices = @transform_2, window_bounds = array<i64: 128, 128>}, {pipeline_mode = #tpu.pipeline_mode<synchronous>, transform_indices = @transform_3, window_bounds = array<i64: 1, 128>}, {pipeline_mode = #tpu.pipeline_mode<synchronous>, transform_indices = @transform_4, window_bounds = array<i64: 1, 128>}, {pipeline_mode = #tpu.pipeline_mode<synchronous>, transform_indices = @transform_5, window_bounds = array<i64: 128, 256>}, {pipeline_mode = #tpu.pipeline_mode<synchronous>, transform_indices = @transform_6, window_bounds = array<i64: 128, 128>}, {pipeline_mode = #tpu.pipeline_mode<synchronous>, transform_indices = @transform_7, window_bounds = array<i64: 1, 128>}, {pipeline_mode = #tpu.pipeline_mode<synchronous>, transform_indices = @transform_8, window_bounds = array<i64: 1, 128>}, {pipeline_mode = #tpu.pipeline_mode<synchronous>, transform_indices = @transform_9, window_bounds = array<i64: 128, 256>}, {pipeline_mode = #tpu.pipeline_mode<synchronous>, transform_indices = @transform_10, window_bounds = array<i64: 128, 128>}, {pipeline_mode = #tpu.pipeline_mode<synchronous>, transform_indices = @transform_11, window_bounds = array<i64: 1, 128>}, {pipeline_mode = #tpu.pipeline_mode<synchronous>, transform_indices = @transform_12, window_bounds = array<i64: 1, 128>}, {pipeline_mode = #tpu.pipeline_mode<synchronous>, transform_indices = @transform_13, window_bounds = array<i64: 128, 128>}, {pipeline_mode = #tpu.pipeline_mode<synchronous>, transform_indices = @transform_14, window_bounds = array<i64: 128, 128>}, {pipeline_mode = #tpu.pipeline_mode<synchronous>, transform_indices = @transform_15, window_bounds = array<i64: 1, 128>}, {pipeline_mode = #tpu.pipeline_mode<synchronous>, transform_indices = @transform_16, window_bounds = array<i64: 1, 128>}, {transform_indices = @transform_17, window_bounds = array<i64: 256, 128>}]} {
    %c0 = arith.constant 0 : index
    %c0_0 = arith.constant 0 : index
    %0 = vector.load %arg1[%c0, %c0_0] : memref<32x128xf32, #tpu.memory_space<vmem>>, vector<32x128xf32>
    %c0_1 = arith.constant 0 : index
    %c0_2 = arith.constant 0 : index
    %1 = vector.load %arg2[%c0_1, %c0_2] : memref<128x256xf32, #tpu.memory_space<vmem>>, vector<128x256xf32>
    %c0_3 = arith.constant 0 : index
    %c0_4 = arith.constant 0 : index
    %2 = vector.load %arg3[%c0_3, %c0_4] : memref<128x128xf32, #tpu.memory_space<vmem>>, vector<128x128xf32>
    %c0_5 = arith.constant 0 : index
    %c0_6 = arith.constant 0 : index
    %3 = vector.load %arg4[%c0_5, %c0_6] : memref<1x128xf32, #tpu.memory_space<vmem>>, vector<1x128xf32>
    %c0_7 = arith.constant 0 : index
    %c0_8 = arith.constant 0 : index
    %4 = vector.load %arg5[%c0_7, %c0_8] : memref<1x128xf32, #tpu.memory_space<vmem>>, vector<1x128xf32>
    %5 = vector.extract_strided_slice %0 {offsets = [1, 0], sizes = [31, 128], strides = [1, 1]} : vector<32x128xf32> to vector<31x128xf32>
    %cst = arith.constant 0.000000e+00 : f32
    %6 = vector.broadcast %cst : f32 to vector<1x128xf32>
    %7 = tpu.concatenate %5, %6 in 0 : vector<31x128xf32>, vector<1x128xf32> -> vector<32x128xf32>
    %8 = tpu.iota {dimensions = array<i32: 0>} : vector<32x128xi32>
    %c4_i32 = arith.constant 4 : i32
    %c0_i32 = arith.constant 0 : i32
    %9 = arith.cmpi eq, %c4_i32, %c0_i32 : i32
    %c1_i32 = arith.constant 1 : i32
    %10 = arith.select %9, %c1_i32, %c4_i32 : i32
    %11 = vector.broadcast %10 : i32 to vector<32x128xi32>
    %12 = arith.remsi %8, %11 : vector<32x128xi32>
    %c0_i32_9 = arith.constant 0 : i32
    %13 = vector.broadcast %c0_i32_9 : i32 to vector<32x128xi32>
    %14 = arith.cmpi ne, %12, %13 : vector<32x128xi32>
    %c0_i32_10 = arith.constant 0 : i32
    %15 = vector.broadcast %c0_i32_10 : i32 to vector<32x128xi32>
    %16 = arith.cmpi slt, %12, %15 : vector<32x128xi32>
    %c0_i32_11 = arith.constant 0 : i32
    %17 = arith.cmpi slt, %10, %c0_i32_11 : i32
    %18 = vector.broadcast %17 : i1 to vector<32x128xi1>
    %19 = vector.broadcast %18 : vector<32x128xi1> to vector<32x128xi1>
    %20 = arith.xori %16, %19 : vector<32x128xi1>
    %21 = arith.andi %20, %14 : vector<32x128xi1>
    %22 = vector.broadcast %10 : i32 to vector<32x128xi32>
    %23 = arith.addi %12, %22 : vector<32x128xi32>
    %24 = arith.select %21, %23, %12 : vector<32x128xi1>, vector<32x128xi32>
    %c3_i32 = arith.constant 3 : i32
    %25 = vector.broadcast %c3_i32 : i32 to vector<32x128xi32>
    %26 = arith.cmpi eq, %24, %25 : vector<32x128xi32>
    %cst_12 = arith.constant 0.000000e+00 : f32
    %27 = vector.broadcast %cst_12 : f32 to vector<32x128xf32>
    %28 = arith.select %26, %27, %7 : vector<32x128xi1>, vector<32x128xf32>
    %cst_13 = arith.constant dense<0.000000e+00> : vector<32x256xf32>
    %29 = tpu.matmul %0, %1, %cst_13 {dimension_numbers = #tpu.dot_dimension_numbers<[1], [0], [0], [1], [0, 0, 1, 1], [], []>} : vector<32x128xf32>, vector<128x256xf32>, vector<32x256xf32> -> vector<32x256xf32>
    %cst_14 = arith.constant dense<0.000000e+00> : vector<32x128xf32>
    %30 = tpu.matmul %28, %2, %cst_14 {dimension_numbers = #tpu.dot_dimension_numbers<[1], [0], [0], [1], [0, 0, 1, 1], [], []>} : vector<32x128xf32>, vector<128x128xf32>, vector<32x128xf32> -> vector<32x128xf32>
    %31 = vector.extract_strided_slice %29 {offsets = [0, 0], sizes = [32, 128], strides = [1, 1]} : vector<32x256xf32> to vector<32x128xf32>
    %32 = vector.broadcast %3 : vector<1x128xf32> to vector<32x128xf32>
    %33 = arith.mulf %31, %32 : vector<32x128xf32>
    %34 = vector.broadcast %4 : vector<1x128xf32> to vector<32x128xf32>
    %35 = arith.addf %33, %34 : vector<32x128xf32>
    %36 = vector.extract_strided_slice %29 {offsets = [0, 128], sizes = [32, 128], strides = [1, 1]} : vector<32x256xf32> to vector<32x128xf32>
    %37 = arith.addf %36, %30 : vector<32x128xf32>
    %38 = vector.broadcast %3 : vector<1x128xf32> to vector<32x128xf32>
    %39 = arith.mulf %37, %38 : vector<32x128xf32>
    %40 = vector.broadcast %4 : vector<1x128xf32> to vector<32x128xf32>
    %41 = arith.addf %39, %40 : vector<32x128xf32>
    %cst_15 = arith.constant 0.000000e+00 : f32
    %42 = vector.broadcast %cst_15 : f32 to vector<32x128xf32>
    %43 = arith.maximumf %35, %42 : vector<32x128xf32>
    %cst_16 = arith.constant 0.000000e+00 : f32
    %44 = vector.broadcast %cst_16 : f32 to vector<32x128xf32>
    %45 = arith.maximumf %41, %44 : vector<32x128xf32>
    %46 = vector.shape_cast %43 : vector<32x128xf32> to vector<32x1x128xf32>
    %47 = vector.shape_cast %45 : vector<32x128xf32> to vector<32x1x128xf32>
    %48 = tpu.concatenate %46, %47 in 1 : vector<32x1x128xf32>, vector<32x1x128xf32> -> vector<32x2x128xf32>
    %49 = vector.shape_cast %48 : vector<32x2x128xf32> to vector<64x128xf32>
    %c0_17 = arith.constant 0 : index
    %c0_18 = arith.constant 0 : index
    %50 = vector.load %arg6[%c0_17, %c0_18] : memref<128x256xf32, #tpu.memory_space<vmem>>, vector<128x256xf32>
    %c0_19 = arith.constant 0 : index
    %c0_20 = arith.constant 0 : index
    %51 = vector.load %arg7[%c0_19, %c0_20] : memref<128x128xf32, #tpu.memory_space<vmem>>, vector<128x128xf32>
    %c0_21 = arith.constant 0 : index
    %c0_22 = arith.constant 0 : index
    %52 = vector.load %arg8[%c0_21, %c0_22] : memref<1x128xf32, #tpu.memory_space<vmem>>, vector<1x128xf32>
    %c0_23 = arith.constant 0 : index
    %c0_24 = arith.constant 0 : index
    %53 = vector.load %arg9[%c0_23, %c0_24] : memref<1x128xf32, #tpu.memory_space<vmem>>, vector<1x128xf32>
    %54 = vector.extract_strided_slice %49 {offsets = [1, 0], sizes = [63, 128], strides = [1, 1]} : vector<64x128xf32> to vector<63x128xf32>
    %cst_25 = arith.constant 0.000000e+00 : f32
    %55 = vector.broadcast %cst_25 : f32 to vector<1x128xf32>
    %56 = tpu.concatenate %54, %55 in 0 : vector<63x128xf32>, vector<1x128xf32> -> vector<64x128xf32>
    %57 = tpu.iota {dimensions = array<i32: 0>} : vector<64x128xi32>
    %c8_i32 = arith.constant 8 : i32
    %c0_i32_26 = arith.constant 0 : i32
    %58 = arith.cmpi eq, %c8_i32, %c0_i32_26 : i32
    %c1_i32_27 = arith.constant 1 : i32
    %59 = arith.select %58, %c1_i32_27, %c8_i32 : i32
    %60 = vector.broadcast %59 : i32 to vector<64x128xi32>
    %61 = arith.remsi %57, %60 : vector<64x128xi32>
    %c0_i32_28 = arith.constant 0 : i32
    %62 = vector.broadcast %c0_i32_28 : i32 to vector<64x128xi32>
    %63 = arith.cmpi ne, %61, %62 : vector<64x128xi32>
    %c0_i32_29 = arith.constant 0 : i32
    %64 = vector.broadcast %c0_i32_29 : i32 to vector<64x128xi32>
    %65 = arith.cmpi slt, %61, %64 : vector<64x128xi32>
    %c0_i32_30 = arith.constant 0 : i32
    %66 = arith.cmpi slt, %59, %c0_i32_30 : i32
    %67 = vector.broadcast %66 : i1 to vector<64x128xi1>
    %68 = vector.broadcast %67 : vector<64x128xi1> to vector<64x128xi1>
    %69 = arith.xori %65, %68 : vector<64x128xi1>
    %70 = arith.andi %69, %63 : vector<64x128xi1>
    %71 = vector.broadcast %59 : i32 to vector<64x128xi32>
    %72 = arith.addi %61, %71 : vector<64x128xi32>
    %73 = arith.select %70, %72, %61 : vector<64x128xi1>, vector<64x128xi32>
    %c7_i32 = arith.constant 7 : i32
    %74 = vector.broadcast %c7_i32 : i32 to vector<64x128xi32>
    %75 = arith.cmpi eq, %73, %74 : vector<64x128xi32>
    %cst_31 = arith.constant 0.000000e+00 : f32
    %76 = vector.broadcast %cst_31 : f32 to vector<64x128xf32>
    %77 = arith.select %75, %76, %56 : vector<64x128xi1>, vector<64x128xf32>
    %cst_32 = arith.constant dense<0.000000e+00> : vector<64x256xf32>
    %78 = tpu.matmul %49, %50, %cst_32 {dimension_numbers = #tpu.dot_dimension_numbers<[1], [0], [0], [1], [0, 0, 1, 1], [], []>} : vector<64x128xf32>, vector<128x256xf32>, vector<64x256xf32> -> vector<64x256xf32>
    %cst_33 = arith.constant dense<0.000000e+00> : vector<64x128xf32>
    %79 = tpu.matmul %77, %51, %cst_33 {dimension_numbers = #tpu.dot_dimension_numbers<[1], [0], [0], [1], [0, 0, 1, 1], [], []>} : vector<64x128xf32>, vector<128x128xf32>, vector<64x128xf32> -> vector<64x128xf32>
    %80 = vector.extract_strided_slice %78 {offsets = [0, 0], sizes = [64, 128], strides = [1, 1]} : vector<64x256xf32> to vector<64x128xf32>
    %81 = vector.broadcast %52 : vector<1x128xf32> to vector<64x128xf32>
    %82 = arith.mulf %80, %81 : vector<64x128xf32>
    %83 = vector.broadcast %53 : vector<1x128xf32> to vector<64x128xf32>
    %84 = arith.addf %82, %83 : vector<64x128xf32>
    %85 = vector.extract_strided_slice %78 {offsets = [0, 128], sizes = [64, 128], strides = [1, 1]} : vector<64x256xf32> to vector<64x128xf32>
    %86 = arith.addf %85, %79 : vector<64x128xf32>
    %87 = vector.broadcast %52 : vector<1x128xf32> to vector<64x128xf32>
    %88 = arith.mulf %86, %87 : vector<64x128xf32>
    %89 = vector.broadcast %53 : vector<1x128xf32> to vector<64x128xf32>
    %90 = arith.addf %88, %89 : vector<64x128xf32>
    %cst_34 = arith.constant 0.000000e+00 : f32
    %91 = vector.broadcast %cst_34 : f32 to vector<64x128xf32>
    %92 = arith.maximumf %84, %91 : vector<64x128xf32>
    %cst_35 = arith.constant 0.000000e+00 : f32
    %93 = vector.broadcast %cst_35 : f32 to vector<64x128xf32>
    %94 = arith.maximumf %90, %93 : vector<64x128xf32>
    %95 = vector.shape_cast %92 : vector<64x128xf32> to vector<64x1x128xf32>
    %96 = vector.shape_cast %94 : vector<64x128xf32> to vector<64x1x128xf32>
    %97 = tpu.concatenate %95, %96 in 1 : vector<64x1x128xf32>, vector<64x1x128xf32> -> vector<64x2x128xf32>
    %98 = vector.shape_cast %97 : vector<64x2x128xf32> to vector<128x128xf32>
    %c0_36 = arith.constant 0 : index
    %c0_37 = arith.constant 0 : index
    %99 = vector.load %arg10[%c0_36, %c0_37] : memref<128x256xf32, #tpu.memory_space<vmem>>, vector<128x256xf32>
    %c0_38 = arith.constant 0 : index
    %c0_39 = arith.constant 0 : index
    %100 = vector.load %arg11[%c0_38, %c0_39] : memref<128x128xf32, #tpu.memory_space<vmem>>, vector<128x128xf32>
    %c0_40 = arith.constant 0 : index
    %c0_41 = arith.constant 0 : index
    %101 = vector.load %arg12[%c0_40, %c0_41] : memref<1x128xf32, #tpu.memory_space<vmem>>, vector<1x128xf32>
    %c0_42 = arith.constant 0 : index
    %c0_43 = arith.constant 0 : index
    %102 = vector.load %arg13[%c0_42, %c0_43] : memref<1x128xf32, #tpu.memory_space<vmem>>, vector<1x128xf32>
    %103 = vector.extract_strided_slice %98 {offsets = [1, 0], sizes = [127, 128], strides = [1, 1]} : vector<128x128xf32> to vector<127x128xf32>
    %cst_44 = arith.constant 0.000000e+00 : f32
    %104 = vector.broadcast %cst_44 : f32 to vector<1x128xf32>
    %105 = tpu.concatenate %103, %104 in 0 : vector<127x128xf32>, vector<1x128xf32> -> vector<128x128xf32>
    %106 = tpu.iota {dimensions = array<i32: 0>} : vector<128x128xi32>
    %c16_i32 = arith.constant 16 : i32
    %c0_i32_45 = arith.constant 0 : i32
    %107 = arith.cmpi eq, %c16_i32, %c0_i32_45 : i32
    %c1_i32_46 = arith.constant 1 : i32
    %108 = arith.select %107, %c1_i32_46, %c16_i32 : i32
    %109 = vector.broadcast %108 : i32 to vector<128x128xi32>
    %110 = arith.remsi %106, %109 : vector<128x128xi32>
    %c0_i32_47 = arith.constant 0 : i32
    %111 = vector.broadcast %c0_i32_47 : i32 to vector<128x128xi32>
    %112 = arith.cmpi ne, %110, %111 : vector<128x128xi32>
    %c0_i32_48 = arith.constant 0 : i32
    %113 = vector.broadcast %c0_i32_48 : i32 to vector<128x128xi32>
    %114 = arith.cmpi slt, %110, %113 : vector<128x128xi32>
    %c0_i32_49 = arith.constant 0 : i32
    %115 = arith.cmpi slt, %108, %c0_i32_49 : i32
    %116 = vector.broadcast %115 : i1 to vector<128x128xi1>
    %117 = vector.broadcast %116 : vector<128x128xi1> to vector<128x128xi1>
    %118 = arith.xori %114, %117 : vector<128x128xi1>
    %119 = arith.andi %118, %112 : vector<128x128xi1>
    %120 = vector.broadcast %108 : i32 to vector<128x128xi32>
    %121 = arith.addi %110, %120 : vector<128x128xi32>
    %122 = arith.select %119, %121, %110 : vector<128x128xi1>, vector<128x128xi32>
    %c15_i32 = arith.constant 15 : i32
    %123 = vector.broadcast %c15_i32 : i32 to vector<128x128xi32>
    %124 = arith.cmpi eq, %122, %123 : vector<128x128xi32>
    %cst_50 = arith.constant 0.000000e+00 : f32
    %125 = vector.broadcast %cst_50 : f32 to vector<128x128xf32>
    %126 = arith.select %124, %125, %105 : vector<128x128xi1>, vector<128x128xf32>
    %cst_51 = arith.constant dense<0.000000e+00> : vector<128x256xf32>
    %127 = tpu.matmul %98, %99, %cst_51 {dimension_numbers = #tpu.dot_dimension_numbers<[1], [0], [0], [1], [0, 0, 1, 1], [], []>} : vector<128x128xf32>, vector<128x256xf32>, vector<128x256xf32> -> vector<128x256xf32>
    %cst_52 = arith.constant dense<0.000000e+00> : vector<128x128xf32>
    %128 = tpu.matmul %126, %100, %cst_52 {dimension_numbers = #tpu.dot_dimension_numbers<[1], [0], [0], [1], [0, 0, 1, 1], [], []>} : vector<128x128xf32>, vector<128x128xf32>, vector<128x128xf32> -> vector<128x128xf32>
    %129 = vector.extract_strided_slice %127 {offsets = [0, 0], sizes = [128, 128], strides = [1, 1]} : vector<128x256xf32> to vector<128x128xf32>
    %130 = vector.broadcast %101 : vector<1x128xf32> to vector<128x128xf32>
    %131 = arith.mulf %129, %130 : vector<128x128xf32>
    %132 = vector.broadcast %102 : vector<1x128xf32> to vector<128x128xf32>
    %133 = arith.addf %131, %132 : vector<128x128xf32>
    %134 = vector.extract_strided_slice %127 {offsets = [0, 128], sizes = [128, 128], strides = [1, 1]} : vector<128x256xf32> to vector<128x128xf32>
    %135 = arith.addf %134, %128 : vector<128x128xf32>
    %136 = vector.broadcast %101 : vector<1x128xf32> to vector<128x128xf32>
    %137 = arith.mulf %135, %136 : vector<128x128xf32>
    %138 = vector.broadcast %102 : vector<1x128xf32> to vector<128x128xf32>
    %139 = arith.addf %137, %138 : vector<128x128xf32>
    %cst_53 = arith.constant 0.000000e+00 : f32
    %140 = vector.broadcast %cst_53 : f32 to vector<128x128xf32>
    %141 = arith.maximumf %133, %140 : vector<128x128xf32>
    %cst_54 = arith.constant 0.000000e+00 : f32
    %142 = vector.broadcast %cst_54 : f32 to vector<128x128xf32>
    %143 = arith.maximumf %139, %142 : vector<128x128xf32>
    %144 = vector.shape_cast %141 : vector<128x128xf32> to vector<128x1x128xf32>
    %145 = vector.shape_cast %143 : vector<128x128xf32> to vector<128x1x128xf32>
    %146 = tpu.concatenate %144, %145 in 1 : vector<128x1x128xf32>, vector<128x1x128xf32> -> vector<128x2x128xf32>
    %147 = vector.shape_cast %146 : vector<128x2x128xf32> to vector<256x128xf32>
    %c0_55 = arith.constant 0 : index
    %c0_56 = arith.constant 0 : index
    %148 = vector.load %arg14[%c0_55, %c0_56] : memref<128x128xf32, #tpu.memory_space<vmem>>, vector<128x128xf32>
    %c0_57 = arith.constant 0 : index
    %c0_58 = arith.constant 0 : index
    %149 = vector.load %arg15[%c0_57, %c0_58] : memref<128x128xf32, #tpu.memory_space<vmem>>, vector<128x128xf32>
    %c0_59 = arith.constant 0 : index
    %c0_60 = arith.constant 0 : index
    %150 = vector.load %arg16[%c0_59, %c0_60] : memref<1x128xf32, #tpu.memory_space<vmem>>, vector<1x128xf32>
    %c0_61 = arith.constant 0 : index
    %c0_62 = arith.constant 0 : index
    %151 = vector.load %arg17[%c0_61, %c0_62] : memref<1x128xf32, #tpu.memory_space<vmem>>, vector<1x128xf32>
    %152 = vector.extract_strided_slice %147 {offsets = [1, 0], sizes = [255, 128], strides = [1, 1]} : vector<256x128xf32> to vector<255x128xf32>
    %cst_63 = arith.constant 0.000000e+00 : f32
    %153 = vector.broadcast %cst_63 : f32 to vector<1x128xf32>
    %154 = tpu.concatenate %152, %153 in 0 : vector<255x128xf32>, vector<1x128xf32> -> vector<256x128xf32>
    %155 = tpu.iota {dimensions = array<i32: 0>} : vector<256x128xi32>
    %c32_i32 = arith.constant 32 : i32
    %c0_i32_64 = arith.constant 0 : i32
    %156 = arith.cmpi eq, %c32_i32, %c0_i32_64 : i32
    %c1_i32_65 = arith.constant 1 : i32
    %157 = arith.select %156, %c1_i32_65, %c32_i32 : i32
    %158 = vector.broadcast %157 : i32 to vector<256x128xi32>
    %159 = arith.remsi %155, %158 : vector<256x128xi32>
    %c0_i32_66 = arith.constant 0 : i32
    %160 = vector.broadcast %c0_i32_66 : i32 to vector<256x128xi32>
    %161 = arith.cmpi ne, %159, %160 : vector<256x128xi32>
    %c0_i32_67 = arith.constant 0 : i32
    %162 = vector.broadcast %c0_i32_67 : i32 to vector<256x128xi32>
    %163 = arith.cmpi slt, %159, %162 : vector<256x128xi32>
    %c0_i32_68 = arith.constant 0 : i32
    %164 = arith.cmpi slt, %157, %c0_i32_68 : i32
    %165 = vector.broadcast %164 : i1 to vector<256x128xi1>
    %166 = vector.broadcast %165 : vector<256x128xi1> to vector<256x128xi1>
    %167 = arith.xori %163, %166 : vector<256x128xi1>
    %168 = arith.andi %167, %161 : vector<256x128xi1>
    %169 = vector.broadcast %157 : i32 to vector<256x128xi32>
    %170 = arith.addi %159, %169 : vector<256x128xi32>
    %171 = arith.select %168, %170, %159 : vector<256x128xi1>, vector<256x128xi32>
    %c31_i32 = arith.constant 31 : i32
    %172 = vector.broadcast %c31_i32 : i32 to vector<256x128xi32>
    %173 = arith.cmpi eq, %171, %172 : vector<256x128xi32>
    %cst_69 = arith.constant 0.000000e+00 : f32
    %174 = vector.broadcast %cst_69 : f32 to vector<256x128xf32>
    %175 = arith.select %173, %174, %154 : vector<256x128xi1>, vector<256x128xf32>
    %cst_70 = arith.constant dense<0.000000e+00> : vector<256x128xf32>
    %176 = tpu.matmul %147, %148, %cst_70 {dimension_numbers = #tpu.dot_dimension_numbers<[1], [0], [0], [1], [0, 0, 1, 1], [], []>} : vector<256x128xf32>, vector<128x128xf32>, vector<256x128xf32> -> vector<256x128xf32>
    %cst_71 = arith.constant dense<0.000000e+00> : vector<256x128xf32>
    %177 = tpu.matmul %175, %149, %cst_71 {dimension_numbers = #tpu.dot_dimension_numbers<[1], [0], [0], [1], [0, 0, 1, 1], [], []>} : vector<256x128xf32>, vector<128x128xf32>, vector<256x128xf32> -> vector<256x128xf32>
    %178 = arith.addf %176, %177 : vector<256x128xf32>
    %179 = vector.broadcast %150 : vector<1x128xf32> to vector<256x128xf32>
    %180 = arith.mulf %178, %179 : vector<256x128xf32>
    %181 = vector.broadcast %151 : vector<1x128xf32> to vector<256x128xf32>
    %182 = arith.addf %180, %181 : vector<256x128xf32>
    %c0_72 = arith.constant 0 : index
    %c0_73 = arith.constant 0 : index
    %183 = vector.load %arg18[%c0_72, %c0_73] : memref<256x128xf32, #tpu.memory_space<vmem>>, vector<256x128xf32>
    tpu.vector_store %arg18[%c0_72, %c0_73], %182 {strides = array<i32>} : memref<256x128xf32, #tpu.memory_space<vmem>>, vector<256x128xf32>,
    return
  }
  func.func @transform_0(%arg0: i32) -> (i32, i32) {
    %c0_i32 = arith.constant 0 : i32
    %c0_i32_0 = arith.constant 0 : i32
    return %arg0, %c0_i32 : i32, i32
  }
  func.func @transform_1(%arg0: i32) -> (i32, i32) {
    %c0_i32 = arith.constant 0 : i32
    %c0_i32_0 = arith.constant 0 : i32
    %c0_i32_1 = arith.constant 0 : i32
    return %c0_i32, %c0_i32_0 : i32, i32
  }
  func.func @transform_2(%arg0: i32) -> (i32, i32) {
    %c0_i32 = arith.constant 0 : i32
    %c0_i32_0 = arith.constant 0 : i32
    %c0_i32_1 = arith.constant 0 : i32
    return %c0_i32, %c0_i32_0 : i32, i32
  }
  func.func @transform_3(%arg0: i32) -> (i32, i32) {
    %c0_i32 = arith.constant 0 : i32
    %c0_i32_0 = arith.constant 0 : i32
    %c0_i32_1 = arith.constant 0 : i32
    return %c0_i32, %c0_i32_0 : i32, i32
  }
  func.func @transform_4(%arg0: i32) -> (i32, i32) {
    %c0_i32 = arith.constant 0 : i32
    %c0_i32_0 = arith.constant 0 : i32
    %c0_i32_1 = arith.constant 0 : i32
    return %c0_i32, %c0_i32_0 : i32, i32
  }
  func.func @transform_5(%arg0: i32) -> (i32, i32) {
    %c0_i32 = arith.constant 0 : i32
    %c0_i32_0 = arith.constant 0 : i32
    %c0_i32_1 = arith.constant 0 : i32
    return %c0_i32, %c0_i32_0 : i32, i32
  }
  func.func @transform_6(%arg0: i32) -> (i32, i32) {
    %c0_i32 = arith.constant 0 : i32
    %c0_i32_0 = arith.constant 0 : i32
    %c0_i32_1 = arith.constant 0 : i32
    return %c0_i32, %c0_i32_0 : i32, i32
  }
  func.func @transform_7(%arg0: i32) -> (i32, i32) {
    %c0_i32 = arith.constant 0 : i32
    %c0_i32_0 = arith.constant 0 : i32
    %c0_i32_1 = arith.constant 0 : i32
    return %c0_i32, %c0_i32_0 : i32, i32
  }
  func.func @transform_8(%arg0: i32) -> (i32, i32) {
    %c0_i32 = arith.constant 0 : i32
    %c0_i32_0 = arith.constant 0 : i32
    %c0_i32_1 = arith.constant 0 : i32
    return %c0_i32, %c0_i32_0 : i32, i32
  }
  func.func @transform_9(%arg0: i32) -> (i32, i32) {
    %c0_i32 = arith.constant 0 : i32
    %c0_i32_0 = arith.constant 0 : i32
    %c0_i32_1 = arith.constant 0 : i32
    return %c0_i32, %c0_i32_0 : i32, i32
  }
  func.func @transform_10(%arg0: i32) -> (i32, i32) {
    %c0_i32 = arith.constant 0 : i32
    %c0_i32_0 = arith.constant 0 : i32
    %c0_i32_1 = arith.constant 0 : i32
    return %c0_i32, %c0_i32_0 : i32, i32
  }
  func.func @transform_11(%arg0: i32) -> (i32, i32) {
    %c0_i32 = arith.constant 0 : i32
    %c0_i32_0 = arith.constant 0 : i32
    %c0_i32_1 = arith.constant 0 : i32
    return %c0_i32, %c0_i32_0 : i32, i32
  }
  func.func @transform_12(%arg0: i32) -> (i32, i32) {
    %c0_i32 = arith.constant 0 : i32
    %c0_i32_0 = arith.constant 0 : i32
    %c0_i32_1 = arith.constant 0 : i32
    return %c0_i32, %c0_i32_0 : i32, i32
  }
  func.func @transform_13(%arg0: i32) -> (i32, i32) {
    %c0_i32 = arith.constant 0 : i32
    %c0_i32_0 = arith.constant 0 : i32
    %c0_i32_1 = arith.constant 0 : i32
    return %c0_i32, %c0_i32_0 : i32, i32
  }
  func.func @transform_14(%arg0: i32) -> (i32, i32) {
    %c0_i32 = arith.constant 0 : i32
    %c0_i32_0 = arith.constant 0 : i32
    %c0_i32_1 = arith.constant 0 : i32
    return %c0_i32, %c0_i32_0 : i32, i32
  }
  func.func @transform_15(%arg0: i32) -> (i32, i32) {
    %c0_i32 = arith.constant 0 : i32
    %c0_i32_0 = arith.constant 0 : i32
    %c0_i32_1 = arith.constant 0 : i32
    return %c0_i32, %c0_i32_0 : i32, i32
  }
  func.func @transform_16(%arg0: i32) -> (i32, i32) {
    %c0_i32 = arith.constant 0 : i32
    %c0_i32_0 = arith.constant 0 : i32
    %c0_i32_1 = arith.constant 0 : i32
    return %c0_i32, %c0_i32_0 : i32, i32
  }
  func.func @transform_17(%arg0: i32) -> (i32, i32) {
    %c0_i32 = arith.constant 0 : i32
    %c0_i32_0 = arith.constant 0 : i32
    return %arg0, %c0_i32 : i32, i32
  }
}

</mosaic_0001>

<llo_original>
// kernel: conv_decoder_forward.1
$region0: #{conv_decoder_forward.1}
  #allocation0 [shape = 'u32[]', space=smem, size = 0x4, offset = 0x4, fixed_abs, tag = 'smem constant byte address 0x4 - core index']
  #allocation1 [shape = 'u32[144,128]{1,0:T(1,128)}', space=vmem, size = 0x12000, scoped, tag = 'internal scratch']
  %s0 = inlined_call_operand.vmem [shape: f32[64,128], index: 0, kind: input, shape index: {}]
  %s1 = inlined_call_operand.vmem [shape: f32[128,256], index: 1, kind: input, shape index: {}]
  %s2 = inlined_call_operand.vmem [shape: f32[128,128], index: 2, kind: input, shape index: {}]
  %s3 = inlined_call_operand.vmem [shape: f32[1,128], index: 3, kind: input, shape index: {}]
  %s4 = inlined_call_operand.vmem [shape: f32[1,128], index: 4, kind: input, shape index: {}]
  %s5 = inlined_call_operand.vmem [shape: f32[128,256], index: 5, kind: input, shape index: {}]
  %s6 = inlined_call_operand.vmem [shape: f32[128,128], index: 6, kind: input, shape index: {}]
  %s7 = inlined_call_operand.vmem [shape: f32[1,128], index: 7, kind: input, shape index: {}]
  %s8 = inlined_call_operand.vmem [shape: f32[1,128], index: 8, kind: input, shape index: {}]
  %s9 = inlined_call_operand.vmem [shape: f32[128,256], index: 9, kind: input, shape index: {}]
  %s10 = inlined_call_operand.vmem [shape: f32[128,128], index: 10, kind: input, shape index: {}]
  %s11 = inlined_call_operand.vmem [shape: f32[1,128], index: 11, kind: input, shape index: {}]
  %s12 = inlined_call_operand.vmem [shape: f32[1,128], index: 12, kind: input, shape index: {}]
  %s13 = inlined_call_operand.vmem [shape: f32[128,128], index: 13, kind: input, shape index: {}]
  %s14 = inlined_call_operand.vmem [shape: f32[128,128], index: 14, kind: input, shape index: {}]
  %s15 = inlined_call_operand.vmem [shape: f32[1,128], index: 15, kind: input, shape index: {}]
  %s16 = inlined_call_operand.vmem [shape: f32[1,128], index: 16, kind: input, shape index: {}]
  %s17 = inlined_call_operand.vmem [shape: f32[512,128], index: 17, kind: output, shape index: {}]
  %s18 = sld [smem:[#allocation0]]
  $region101: #{conv_decoder_forward.1} parent=0
    _
  %s20 = ssub.s32 1, %s18
  %s21 = scalar_select 0, %s20, %s18
  loop: start=0, step=1, limit=4
  $region2: #{conv_decoder_forward.1} parent=0 // loop_pre_header
    _
  $region3: #{conv_decoder_forward.1} parent=0 // loop_header
    %s23 = sphi 0, %s27
    %p24 = scmp.ge.s32.totalorder %s23, 4
    %s33 = sphi 0, %s35
    %s36 = sphi 0, %s33
    %s37 = sphi 0, %s36
    %s53 = sphi 0, %s37
    %s57 = sphi 0, %s57
    %s59 = sphi 0, %s57
    %s60 = sphi 0, %s59
    %s74 = sphi 0, %s60
    %s78 = sphi 0, %s78
    %s80 = sphi 0, %s78
    %s81 = sphi 0, %s80
    %s95 = sphi 0, %s81
    %s99 = sphi 0, %s99
    %s101 = sphi 0, %s99
    %s102 = sphi 0, %s101
    %s116 = sphi 0, %s102
    %s120 = sphi 0, %s120
    %s122 = sphi 0, %s120
    %s123 = sphi 0, %s122
    %s137 = sphi 0, %s123
    %s141 = sphi 0, %s141
    %s143 = sphi 0, %s141
    %s144 = sphi 0, %s143
    %s158 = sphi 0, %s144
    %s162 = sphi 0, %s162
    %s164 = sphi 0, %s162
    %s165 = sphi 0, %s164
    %s179 = sphi 0, %s165
    %s183 = sphi 0, %s183
    %s185 = sphi 0, %s183
    %s186 = sphi 0, %s185
    %s200 = sphi 0, %s186
    %s204 = sphi 0, %s204
    %s206 = sphi 0, %s204
    %s207 = sphi 0, %s206
    %s221 = sphi 0, %s207
    %s225 = sphi 0, %s225
    %s227 = sphi 0, %s225
    %s228 = sphi 0, %s227
    %s242 = sphi 0, %s228
    %s246 = sphi 0, %s246
    %s248 = sphi 0, %s246
    %s249 = sphi 0, %s248
    %s263 = sphi 0, %s249
    %s267 = sphi 0, %s267
    %s269 = sphi 0, %s267
    %s270 = sphi 0, %s269
    %s284 = sphi 0, %s270
    %s288 = sphi 0, %s288
    %s290 = sphi 0, %s288
    %s291 = sphi 0, %s290
    %s305 = sphi 0, %s291
    %s309 = sphi 0, %s309
    %s311 = sphi 0, %s309
    %s312 = sphi 0, %s311
    %s326 = sphi 0, %s312
    %s330 = sphi 0, %s330
    %s332 = sphi 0, %s330
    %s333 = sphi 0, %s332
    %s347 = sphi 0, %s333
    %s351 = sphi 0, %s351
    %s353 = sphi 0, %s351
    %s354 = sphi 0, %s353
    %s368 = sphi 0, %s354
    %s372 = sphi 0, %s372
    %s374 = sphi 0, %s372
    %s375 = sphi 0, %s374
    %s389 = sphi 0, %s375
    %s395 = sphi 0, %s397
    %s398 = sphi 0, %s395
    %s399 = sphi 0, %s398
    %s415 = sphi 0, %s399
  $region4: #{conv_decoder_forward.1} parent=0 // loop_header_branch
    %26 = sbr.rel (%p24) target = $region8
  $region5: #{conv_decoder_forward.1} parent=0 // loop_body
    %s28 = ssub.s32 %s23, 1
    %s29 = ssub.s32 %s23, 2
    %s30 = sadd.s32 %s23, 1
    %s31 = ssub.s32 %s23, %s30
    %p32 = scmp.eq.s32.totalorder %s31, 0
    %s34 = sadd.s32 %s33, 1
    %s35 = scalar_select %p32, %s33, %s34
    %p38 = pneg %p32
    %p39 = scmp.eq.s32.totalorder %s23, 1
    %p40 = por %p38, %p39
    %p41 = scmp.ne.s32.totalorder %s33, %s36
    %p42 = scmp.eq.s32.totalorder %s23, 0
    %p43 = por %p41, %p42
    %p44 = scmp.ne.s32.totalorder %s33, %s36
    %p45 = scmp.eq.s32.totalorder %s28, 1
    %p46 = por %p44, %p45
    %p47 = scmp.ne.s32.totalorder %s36, %s37
    %p48 = scmp.eq.s32.totalorder %s28, 0
    %p49 = por %p47, %p48
    %p50 = scmp.ne.s32.totalorder %s36, %s37
    %p51 = scmp.eq.s32.totalorder %s29, 1
    %p52 = por %p50, %p51
    %p54 = scmp.ne.s32.totalorder %s37, %s53
    %p55 = scmp.eq.s32.totalorder %s29, 0
    %p56 = por %p54, %p55
    %s58 = sadd.s32 %s57, 1
    %p61 = scmp.eq.s32.totalorder %s23, 1
    %p62 = scmp.ne.s32.totalorder %s57, %s59
    %p63 = scmp.eq.s32.totalorder %s23, 0
    %p64 = por %p62, %p63
    %p65 = scmp.ne.s32.totalorder %s57, %s59
    %p66 = scmp.eq.s32.totalorder %s28, 1
    %p67 = por %p65, %p66
    %p68 = scmp.ne.s32.totalorder %s59, %s60
    %p69 = scmp.eq.s32.totalorder %s28, 0
    %p70 = por %p68, %p69
    %p71 = scmp.ne.s32.totalorder %s59, %s60
    %p72 = scmp.eq.s32.totalorder %s29, 1
    %p73 = por %p71, %p72
    %p75 = scmp.ne.s32.totalorder %s60, %s74
    %p76 = scmp.eq.s32.totalorder %s29, 0
    %p77 = por %p75, %p76
    %s79 = sadd.s32 %s78, 1
    %p82 = scmp.eq.s32.totalorder %s23, 1
    %p83 = scmp.ne.s32.totalorder %s78, %s80
    %p84 = scmp.eq.s32.totalorder %s23, 0
    %p85 = por %p83, %p84
    %p86 = scmp.ne.s32.totalorder %s78, %s80
    %p87 = scmp.eq.s32.totalorder %s28, 1
    %p88 = por %p86, %p87
    %p89 = scmp.ne.s32.totalorder %s80, %s81
    %p90 = scmp.eq.s32.totalorder %s28, 0
    %p91 = por %p89, %p90
    %p92 = scmp.ne.s32.totalorder %s80, %s81
    %p93 = scmp.eq.s32.totalorder %s29, 1
    %p94 = por %p92, %p93
    %p96 = scmp.ne.s32.totalorder %s81, %s95
    %p97 = scmp.eq.s32.totalorder %s29, 0
    %p98 = por %p96, %p97
    %s100 = sadd.s32 %s99, 1
    %p103 = scmp.eq.s32.totalorder %s23, 1
    %p104 = scmp.ne.s32.totalorder %s99, %s101
    %p105 = scmp.eq.s32.totalorder %s23, 0
    %p106 = por %p104, %p105
    %p107 = scmp.ne.s32.totalorder %s99, %s101
    %p108 = scmp.eq.s32.totalorder %s28, 1
    %p109 = por %p107, %p108
    %p110 = scmp.ne.s32.totalorder %s101, %s102
    %p111 = scmp.eq.s32.totalorder %s28, 0
    %p112 = por %p110, %p111
    %p113 = scmp.ne.s32.totalorder %s101, %s102
    %p114 = scmp.eq.s32.totalorder %s29, 1
    %p115 = por %p113, %p114
    %p117 = scmp.ne.s32.totalorder %s102, %s116
    %p118 = scmp.eq.s32.totalorder %s29, 0
    %p119 = por %p117, %p118
    %s121 = sadd.s32 %s120, 1
    %p124 = scmp.eq.s32.totalorder %s23, 1
    %p125 = scmp.ne.s32.totalorder %s120, %s122
    %p126 = scmp.eq.s32.totalorder %s23, 0
    %p127 = por %p125, %p126
    %p128 = scmp.ne.s32.totalorder %s120, %s122
    %p129 = scmp.eq.s32.totalorder %s28, 1
    %p130 = por %p128, %p129
    %p131 = scmp.ne.s32.totalorder %s122, %s123
    %p132 = scmp.eq.s32.totalorder %s28, 0
    %p133 = por %p131, %p132
    %p134 = scmp.ne.s32.totalorder %s122, %s123
    %p135 = scmp.eq.s32.totalorder %s29, 1
    %p136 = por %p134, %p135
    %p138 = scmp.ne.s32.totalorder %s123, %s137
    %p139 = scmp.eq.s32.totalorder %s29, 0
    %p140 = por %p138, %p139
    %s142 = sadd.s32 %s141, 1
    %p145 = scmp.eq.s32.totalorder %s23, 1
    %p146 = scmp.ne.s32.totalorder %s141, %s143
    %p147 = scmp.eq.s32.totalorder %s23, 0
    %p148 = por %p146, %p147
    %p149 = scmp.ne.s32.totalorder %s141, %s143
    %p150 = scmp.eq.s32.totalorder %s28, 1
    %p151 = por %p149, %p150
    %p152 = scmp.ne.s32.totalorder %s143, %s144
    %p153 = scmp.eq.s32.totalorder %s28, 0
    %p154 = por %p152, %p153
    %p155 = scmp.ne.s32.totalorder %s143, %s144
    %p156 = scmp.eq.s32.totalorder %s29, 1
    %p157 = por %p155, %p156
    %p159 = scmp.ne.s32.totalorder %s144, %s158
    %p160 = scmp.eq.s32.totalorder %s29, 0
    %p161 = por %p159, %p160
    %s163 = sadd.s32 %s162, 1
    %p166 = scmp.eq.s32.totalorder %s23, 1
    %p167 = scmp.ne.s32.totalorder %s162, %s164
    %p168 = scmp.eq.s32.totalorder %s23, 0
    %p169 = por %p167, %p168
    %p170 = scmp.ne.s32.totalorder %s162, %s164
    %p171 = scmp.eq.s32.totalorder %s28, 1
    %p172 = por %p170, %p171
    %p173 = scmp.ne.s32.totalorder %s164, %s165
    %p174 = scmp.eq.s32.totalorder %s28, 0
    %p175 = por %p173, %p174
    %p176 = scmp.ne.s32.totalorder %s164, %s165
    %p177 = scmp.eq.s32.totalorder %s29, 1
    %p178 = por %p176, %p177
    %p180 = scmp.ne.s32.totalorder %s165, %s179
    %p181 = scmp.eq.s32.totalorder %s29, 0
    %p182 = por %p180, %p181
    %s184 = sadd.s32 %s183, 1
    %p187 = scmp.eq.s32.totalorder %s23, 1
    %p188 = scmp.ne.s32.totalorder %s183, %s185
    %p189 = scmp.eq.s32.totalorder %s23, 0
    %p190 = por %p188, %p189
    %p191 = scmp.ne.s32.totalorder %s183, %s185
    %p192 = scmp.eq.s32.totalorder %s28, 1
    %p193 = por %p191, %p192
    %p194 = scmp.ne.s32.totalorder %s185, %s186
    %p195 = scmp.eq.s32.totalorder %s28, 0
    %p196 = por %p194, %p195
    %p197 = scmp.ne.s32.totalorder %s185, %s186
    %p198 = scmp.eq.s32.totalorder %s29, 1
    %p199 = por %p197, %p198
    %p201 = scmp.ne.s32.totalorder %s186, %s200
    %p202 = scmp.eq.s32.totalorder %s29, 0
    %p203 = por %p201, %p202
    %s205 = sadd.s32 %s204, 1
    %p208 = scmp.eq.s32.totalorder %s23, 1
    %p209 = scmp.ne.s32.totalorder %s204, %s206
    %p210 = scmp.eq.s32.totalorder %s23, 0
    %p211 = por %p209, %p210
    %p212 = scmp.ne.s32.totalorder %s204, %s206
    %p213 = scmp.eq.s32.totalorder %s28, 1
    %p214 = por %p212, %p213
    %p215 = scmp.ne.s32.totalorder %s206, %s207
    %p216 = scmp.eq.s32.totalorder %s28, 0
    %p217 = por %p215, %p216
    %p218 = scmp.ne.s32.totalorder %s206, %s207
    %p219 = scmp.eq.s32.totalorder %s29, 1
    %p220 = por %p218, %p219
    %p222 = scmp.ne.s32.totalorder %s207, %s221
    %p223 = scmp.eq.s32.totalorder %s29, 0
    %p224 = por %p222, %p223
    %s226 = sadd.s32 %s225, 1
    %p229 = scmp.eq.s32.totalorder %s23, 1
    %p230 = scmp.ne.s32.totalorder %s225, %s227
    %p231 = scmp.eq.s32.totalorder %s23, 0
    %p232 = por %p230, %p231
    %p233 = scmp.ne.s32.totalorder %s225, %s227
    %p234 = scmp.eq.s32.totalorder %s28, 1
    %p235 = por %p233, %p234
    %p236 = scmp.ne.s32.totalorder %s227, %s228
    %p237 = scmp.eq.s32.totalorder %s28, 0
    %p238 = por %p236, %p237
    %p239 = scmp.ne.s32.totalorder %s227, %s228
    %p240 = scmp.eq.s32.totalorder %s29, 1
    %p241 = por %p239, %p240
    %p243 = scmp.ne.s32.totalorder %s228, %s242
    %p244 = scmp.eq.s32.totalorder %s29, 0
    %p245 = por %p243, %p244
    %s247 = sadd.s32 %s246, 1
    %p250 = scmp.eq.s32.totalorder %s23, 1
    %p251 = scmp.ne.s32.totalorder %s246, %s248
    %p252 = scmp.eq.s32.totalorder %s23, 0
    %p253 = por %p251, %p252
    %p254 = scmp.ne.s32.totalorder %s246, %s248
    %p255 = scmp.eq.s32.totalorder %s28, 1
    %p256 = por %p254, %p255
    %p257 = scmp.ne.s32.totalorder %s248, %s249
    %p258 = scmp.eq.s32.totalorder %s28, 0
    %p259 = por %p257, %p258
    %p260 = scmp.ne.s32.totalorder %s248, %s249
    %p261 = scmp.eq.s32.totalorder %s29, 1
    %p262 = por %p260, %p261
    %p264 = scmp.ne.s32.totalorder %s249, %s263
    %p265 = scmp.eq.s32.totalorder %s29, 0
    %p266 = por %p264, %p265
    %s268 = sadd.s32 %s267, 1
    %p271 = scmp.eq.s32.totalorder %s23, 1
    %p272 = scmp.ne.s32.totalorder %s267, %s269
    %p273 = scmp.eq.s32.totalorder %s23, 0
    %p274 = por %p272, %p273
    %p275 = scmp.ne.s32.totalorder %s267, %s269
    %p276 = scmp.eq.s32.totalorder %s28, 1
    %p277 = por %p275, %p276
    %p278 = scmp.ne.s32.totalorder %s269, %s270
    %p279 = scmp.eq.s32.totalorder %s28, 0
    %p280 = por %p278, %p279
    %p281 = scmp.ne.s32.totalorder %s269, %s270
    %p282 = scmp.eq.s32.totalorder %s29, 1
    %p283 = por %p281, %p282
    %p285 = scmp.ne.s32.totalorder %s270, %s284
    %p286 = scmp.eq.s32.totalorder %s29, 0
    %p287 = por %p285, %p286
    %s289 = sadd.s32 %s288, 1
    %p292 = scmp.eq.s32.totalorder %s23, 1
    %p293 = scmp.ne.s32.totalorder %s288, %s290
    %p294 = scmp.eq.s32.totalorder %s23, 0
    %p295 = por %p293, %p294
    %p296 = scmp.ne.s32.totalorder %s288, %s290
    %p297 = scmp.eq.s32.totalorder %s28, 1
    %p298 = por %p296, %p297
    %p299 = scmp.ne.s32.totalorder %s290, %s291
    %p300 = scmp.eq.s32.totalorder %s28, 0
    %p301 = por %p299, %p300
    %p302 = scmp.ne.s32.totalorder %s290, %s291
    %p303 = scmp.eq.s32.totalorder %s29, 1
    %p304 = por %p302, %p303
    %p306 = scmp.ne.s32.totalorder %s291, %s305
    %p307 = scmp.eq.s32.totalorder %s29, 0
    %p308 = por %p306, %p307
    %s310 = sadd.s32 %s309, 1
    %p313 = scmp.eq.s32.totalorder %s23, 1
    %p314 = scmp.ne.s32.totalorder %s309, %s311
    %p315 = scmp.eq.s32.totalorder %s23, 0
    %p316 = por %p314, %p315
    %p317 = scmp.ne.s32.totalorder %s309, %s311
    %p318 = scmp.eq.s32.totalorder %s28, 1
    %p319 = por %p317, %p318
    %p320 = scmp.ne.s32.totalorder %s311, %s312
    %p321 = scmp.eq.s32.totalorder %s28, 0
    %p322 = por %p320, %p321
    %p323 = scmp.ne.s32.totalorder %s311, %s312
    %p324 = scmp.eq.s32.totalorder %s29, 1
    %p325 = por %p323, %p324
    %p327 = scmp.ne.s32.totalorder %s312, %s326
    %p328 = scmp.eq.s32.totalorder %s29, 0
    %p329 = por %p327, %p328
    %s331 = sadd.s32 %s330, 1
    %p334 = scmp.eq.s32.totalorder %s23, 1
    %p335 = scmp.ne.s32.totalorder %s330, %s332
    %p336 = scmp.eq.s32.totalorder %s23, 0
    %p337 = por %p335, %p336
    %p338 = scmp.ne.s32.totalorder %s330, %s332
    %p339 = scmp.eq.s32.totalorder %s28, 1
    %p340 = por %p338, %p339
    %p341 = scmp.ne.s32.totalorder %s332, %s333
    %p342 = scmp.eq.s32.totalorder %s28, 0
    %p343 = por %p341, %p342
    %p344 = scmp.ne.s32.totalorder %s332, %s333
    %p345 = scmp.eq.s32.totalorder %s29, 1
    %p346 = por %p344, %p345
    %p348 = scmp.ne.s32.totalorder %s333, %s347
    %p349 = scmp.eq.s32.totalorder %s29, 0
    %p350 = por %p348, %p349
    %s352 = sadd.s32 %s351, 1
    %p355 = scmp.eq.s32.totalorder %s23, 1
    %p356 = scmp.ne.s32.totalorder %s351, %s353
    %p357 = scmp.eq.s32.totalorder %s23, 0
    %p358 = por %p356, %p357
    %p359 = scmp.ne.s32.totalorder %s351, %s353
    %p360 = scmp.eq.s32.totalorder %s28, 1
    %p361 = por %p359, %p360
    %p362 = scmp.ne.s32.totalorder %s353, %s354
    %p363 = scmp.eq.s32.totalorder %s28, 0
    %p364 = por %p362, %p363
    %p365 = scmp.ne.s32.totalorder %s353, %s354
    %p366 = scmp.eq.s32.totalorder %s29, 1
    %p367 = por %p365, %p366
    %p369 = scmp.ne.s32.totalorder %s354, %s368
    %p370 = scmp.eq.s32.totalorder %s29, 0
    %p371 = por %p369, %p370
    %s373 = sadd.s32 %s372, 1
    %p376 = scmp.eq.s32.totalorder %s23, 1
    %p377 = scmp.ne.s32.totalorder %s372, %s374
    %p378 = scmp.eq.s32.totalorder %s23, 0
    %p379 = por %p377, %p378
    %p380 = scmp.ne.s32.totalorder %s372, %s374
    %p381 = scmp.eq.s32.totalorder %s28, 1
    %p382 = por %p380, %p381
    %p383 = scmp.ne.s32.totalorder %s374, %s375
    %p384 = scmp.eq.s32.totalorder %s28, 0
    %p385 = por %p383, %p384
    %p386 = scmp.ne.s32.totalorder %s374, %s375
    %p387 = scmp.eq.s32.totalorder %s29, 1
    %p388 = por %p386, %p387
    %p390 = scmp.ne.s32.totalorder %s375, %s389
    %p391 = scmp.eq.s32.totalorder %s29, 0
    %p392 = por %p390, %p391
    %s393 = ssub.s32 %s23, %s30
    %p394 = scmp.eq.s32.totalorder %s393, 0
    %s396 = sadd.s32 %s395, 1
    %s397 = scalar_select %p394, %s395, %s396
    %p400 = pneg %p394
    %p401 = scmp.eq.s32.totalorder %s23, 1
    %p402 = por %p400, %p401
    %p403 = scmp.ne.s32.totalorder %s395, %s398
    %p404 = scmp.eq.s32.totalorder %s23, 0
    %p405 = por %p403, %p404
    %p406 = scmp.ne.s32.totalorder %s395, %s398
    %p407 = scmp.eq.s32.totalorder %s28, 1
    %p408 = por %p406, %p407
    %p409 = scmp.ne.s32.totalorder %s398, %s399
    %p410 = scmp.eq.s32.totalorder %s28, 0
    %p411 = por %p409, %p410
    %p412 = scmp.ne.s32.totalorder %s398, %s399
    %p413 = scmp.eq.s32.totalorder %s29, 1
    %p414 = por %p412, %p413
    %p416 = scmp.ne.s32.totalorder %s399, %s415
    %p417 = scmp.eq.s32.totalorder %s29, 0
    %p418 = por %p416, %p417
    %p419 = scmp.le.s32.totalorder 1, %s23
    %p420 = scmp.lt.s32.totalorder %s23, 3
    %p421 = pnand %p419, %p420
    %p422 = pneg %p421
    // Predicated region
    $region9: #{conv_decoder_forward.1} parent=5 // pred_check
      _
    $region10: #{conv_decoder_forward.1} parent=5 // pred_check_branch
      %424 = sbr.rel (%p421) target = $region12
    $region11: #{conv_decoder_forward.1} parent=5 // pred_region
      %s425 = ssub.s32 %s23, 1
      // Predicated region
      $region13: #{conv_decoder_forward.1} parent=11 // pred_check
        %p426 = pneg %p70
      $region14: #{conv_decoder_forward.1} parent=11 // pred_check_branch
        %428 = sbr.rel (%p426) target = $region16
      $region15: #{conv_decoder_forward.1} parent=11 // pred_region
        _
      $region16: #{conv_decoder_forward.1} parent=11 // pred_fallthru
        _
      // Predicated region
      $region17: #{conv_decoder_forward.1} parent=11 // pred_check
        %p429 = pneg %p91
      $region18: #{conv_decoder_forward.1} parent=11 // pred_check_branch
        %431 = sbr.rel (%p429) target = $region20
      $region19: #{conv_decoder_forward.1} parent=11 // pred_region
        _
      $region20: #{conv_decoder_forward.1} parent=11 // pred_fallthru
        _
      // Predicated region
      $region21: #{conv_decoder_forward.1} parent=11 // pred_check
        %p432 = pneg %p112
      $region22: #{conv_decoder_forward.1} parent=11 // pred_check_branch
        %434 = sbr.rel (%p432) target = $region24
      $region23: #{conv_decoder_forward.1} parent=11 // pred_region
        _
      $region24: #{conv_decoder_forward.1} parent=11 // pred_fallthru
        _
      // Predicated region
      $region25: #{conv_decoder_forward.1} parent=11 // pred_check
        %p435 = pneg %p133
      $region26: #{conv_decoder_forward.1} parent=11 // pred_check_branch
        %437 = sbr.rel (%p435) target = $region28
      $region27: #{conv_decoder_forward.1} parent=11 // pred_region
        _
      $region28: #{conv_decoder_forward.1} parent=11 // pred_fallthru
        _
      // Predicated region
      $region29: #{conv_decoder_forward.1} parent=11 // pred_check
        %p438 = pneg %p154
      $region30: #{conv_decoder_forward.1} parent=11 // pred_check_branch
        %440 = sbr.rel (%p438) target = $region32
      $region31: #{conv_decoder_forward.1} parent=11 // pred_region
        _
      $region32: #{conv_decoder_forward.1} parent=11 // pred_fallthru
        _
      // Predicated region
      $region33: #{conv_decoder_forward.1} parent=11 // pred_check
        %p441 = pneg %p175
      $region34: #{conv_decoder_forward.1} parent=11 // pred_check_branch
        %443 = sbr.rel (%p441) target = $region36
      $region35: #{conv_decoder_forward.1} parent=11 // pred_region
        _
      $region36: #{conv_decoder_forward.1} parent=11 // pred_fallthru
        _
      // Predicated region
      $region37: #{conv_decoder_forward.1} parent=11 // pred_check
        %p444 = pneg %p196
      $region38: #{conv_decoder_forward.1} parent=11 // pred_check_branch
        %446 = sbr.rel (%p444) target = $region40
      $region39: #{conv_decoder_forward.1} parent=11 // pred_region
        _
      $region40: #{conv_decoder_forward.1} parent=11 // pred_fallthru
        _
      // Predicated region
      $region41: #{conv_decoder_forward.1} parent=11 // pred_check
        %p447 = pneg %p217
      $region42: #{conv_decoder_forward.1} parent=11 // pred_check_branch
        %449 = sbr.rel (%p447) target = $region44
      $region43: #{conv_decoder_forward.1} parent=11 // pred_region
        _
      $region44: #{conv_decoder_forward.1} parent=11 // pred_fallthru
        _
      // Predicated region
      $region45: #{conv_decoder_forward.1} parent=11 // pred_check
        %p450 = pneg %p238
      $region46: #{conv_decoder_forward.1} parent=11 // pred_check_branch
        %452 = sbr.rel (%p450) target = $region48
      $region47: #{conv_decoder_forward.1} parent=11 // pred_region
        _
      $region48: #{conv_decoder_forward.1} parent=11 // pred_fallthru
        _
      // Predicated region
      $region49: #{conv_decoder_forward.1} parent=11 // pred_check
        %p453 = pneg %p259
      $region50: #{conv_decoder_forward.1} parent=11 // pred_check_branch
        %455 = sbr.rel (%p453) target = $region52
      $region51: #{conv_decoder_forward.1} parent=11 // pred_region
        _
      $region52: #{conv_decoder_forward.1} parent=11 // pred_fallthru
        _
      // Predicated region
      $region53: #{conv_decoder_forward.1} parent=11 // pred_check
        %p456 = pneg %p280
      $region54: #{conv_decoder_forward.1} parent=11 // pred_check_branch
        %458 = sbr.rel (%p456) target = $region56
      $region55: #{conv_decoder_forward.1} parent=11 // pred_region
        _
      $region56: #{conv_decoder_forward.1} parent=11 // pred_fallthru
        _
      // Predicated region
      $region57: #{conv_decoder_forward.1} parent=11 // pred_check
        %p459 = pneg %p301
      $region58: #{conv_decoder_forward.1} parent=11 // pred_check_branch
        %461 = sbr.rel (%p459) target = $region60
      $region59: #{conv_decoder_forward.1} parent=11 // pred_region
        _
      $region60: #{conv_decoder_forward.1} parent=11 // pred_fallthru
        _
      // Predicated region
      $region61: #{conv_decoder_forward.1} parent=11 // pred_check
        %p462 = pneg %p322
      $region62: #{conv_decoder_forward.1} parent=11 // pred_check_branch
        %464 = sbr.rel (%p462) target = $region64
      $region63: #{conv_decoder_forward.1} parent=11 // pred_region
        _
      $region64: #{conv_decoder_forward.1} parent=11 // pred_fallthru
        _
      // Predicated region
      $region65: #{conv_decoder_forward.1} parent=11 // pred_check
        %p465 = pneg %p343
      $region66: #{conv_decoder_forward.1} parent=11 // pred_check_branch
        %467 = sbr.rel (%p465) target = $region68
      $region67: #{conv_decoder_forward.1} parent=11 // pred_region
        _
      $region68: #{conv_decoder_forward.1} parent=11 // pred_fallthru
        _
      // Predicated region
      $region69: #{conv_decoder_forward.1} parent=11 // pred_check
        %p468 = pneg %p364
      $region70: #{conv_decoder_forward.1} parent=11 // pred_check_branch
        %470 = sbr.rel (%p468) target = $region72
      $region71: #{conv_decoder_forward.1} parent=11 // pred_region
        _
      $region72: #{conv_decoder_forward.1} parent=11 // pred_fallthru
        _
      // Predicated region
      $region73: #{conv_decoder_forward.1} parent=11 // pred_check
        %p471 = pneg %p385
      $region74: #{conv_decoder_forward.1} parent=11 // pred_check_branch
        %473 = sbr.rel (%p471) target = $region76
      $region75: #{conv_decoder_forward.1} parent=11 // pred_region
        _
      $region76: #{conv_decoder_forward.1} parent=11 // pred_fallthru
        _
    $region12: #{conv_decoder_forward.1} parent=5 // pred_fallthru
      _
    %p474 = scmp.lt.s32.totalorder %s23, 2
    // Predicated region
    $region77: #{conv_decoder_forward.1} parent=5 // pred_check
      %p475 = pneg %p474
    $region78: #{conv_decoder_forward.1} parent=5 // pred_check_branch
      %477 = sbr.rel (%p475) target = $region80
    $region79: #{conv_decoder_forward.1} parent=5 // pred_region
      // Predicated region
      $region81: #{conv_decoder_forward.1} parent=79 // pred_check
        %p478 = pneg %p43
      $region82: #{conv_decoder_forward.1} parent=79 // pred_check_branch
        %480 = sbr.rel (%p478) target = $region84
      $region83: #{conv_decoder_forward.1} parent=79 // pred_region
        %s481 = smul.u32 4, %s23
        %p482 = scmp.lt.s32.totalorder %s481, 7
        %s483 = scalar_select %p482, %s481, 7
        %s484 = smul.addr %s483, 8
        %s485 = scalar_lea.vmem %s0, %s484
        %s486 = smul.u32 4, %s23
      $region84: #{conv_decoder_forward.1} parent=79 // pred_fallthru
        _
    $region80: #{conv_decoder_forward.1} parent=5 // pred_fallthru
      _
    %p487 = scmp.le.s32.totalorder 1, %s23
    %p488 = scmp.lt.s32.totalorder %s23, 3
    %p489 = pnand %p487, %p488
    %p490 = pneg %p489
    // Predicated region
    $region85: #{conv_decoder_forward.1} parent=5 // pred_check
      _
    $region86: #{conv_decoder_forward.1} parent=5 // pred_check_branch
      %492 = sbr.rel (%p489) target = $region88
    $region87: #{conv_decoder_forward.1} parent=5 // pred_region
      %s493 = ssub.s32 %s23, 1
      %s494 = smul.u32 4, %s28
      %p495 = scmp.lt.s32.totalorder %s494, 7
      %s496 = scalar_select %p495, %s494, 7
      %s497 = smul.addr %s496, 8
      %s498 = scalar_lea.vmem %s0, %s497
      %p499 = pneg %p49
      %p500 = pneg %p46
      %p501 = pneg %p70
      %p502 = pneg %p67
      %p503 = pneg %p91
      %p504 = pneg %p88
      %p505 = pneg %p112
      %p506 = pneg %p109
      %p507 = pneg %p133
      %p508 = pneg %p130
      %p509 = pneg %p154
      %p510 = pneg %p151
      %p511 = pneg %p175
      %p512 = pneg %p172
      %p513 = pneg %p196
      %p514 = pneg %p193
      %p515 = pneg %p217
      %p516 = pneg %p214
      %p517 = pneg %p238
      %p518 = pneg %p235
      %p519 = pneg %p259
      %p520 = pneg %p256
      %p521 = pneg %p280
      %p522 = pneg %p277
      %p523 = pneg %p301
      %p524 = pneg %p298
      %p525 = pneg %p322
      %p526 = pneg %p319
      %p527 = pneg %p343
      %p528 = pneg %p340
      %p529 = pneg %p364
      %p530 = pneg %p361
      %p531 = pneg %p385
      %p532 = pneg %p382
      %p533 = pneg %p411
      %p534 = pneg %p408
      %s535 = smul.u32 32, %s28
      %p536 = scmp.lt.s32.totalorder %s535, 63
      %s537 = scalar_select %p536, %s535, 63
      %s538 = smul.addr %s537, 8
      %s539 = scalar_lea.vmem %s17, %s538
      %s540 = smul.u32 4, %s28
      %p541 = scmp.lt.s32.totalorder %s540, 7
      %s542 = scalar_select %p541, %s540, 7
      %s543 = smul.addr %s542, 8
      %s544 = scalar_lea.vmem %s0, %s543
      %s545 = smul.u32 4, %s28
      %s546 = smul.u32 32, %s28
      %p547 = scmp.lt.s32.totalorder %s546, 63
      %s548 = scalar_select %p547, %s546, 63
      %s549 = smul.addr %s548, 8
      %s550 = scalar_lea.vmem %s17, %s549
      %s551 = smul.u32 32, %s28
      %v552 = vld [vmem:[%s544] sm:$0xff]
      %v553 = vld [vmem:[%s544 + $0x8] sm:$0xff]
      %v554 = vld [vmem:[%s544 + $0x10] sm:$0xff]
      %v555 = vld [vmem:[%s544 + $0x18] sm:$0xff]
      %v556 = vld [vmem:[%s1] sm:$0xff]
      %v557 = vld [vmem:[%s1 + $0x8] sm:$0xff]
      %v558 = vld [vmem:[%s1 + $0x10] sm:$0xff]
      %v559 = vld [vmem:[%s1 + $0x18] sm:$0xff]
      %v560 = vld [vmem:[%s1 + $0x20] sm:$0xff]
      %v561 = vld [vmem:[%s1 + $0x28] sm:$0xff]
      %v562 = vld [vmem:[%s1 + $0x30] sm:$0xff]
      %v563 = vld [vmem:[%s1 + $0x38] sm:$0xff]
      %v564 = vld [vmem:[%s1 + $0x40] sm:$0xff]
      %v565 = vld [vmem:[%s1 + $0x48] sm:$0xff]
      %v566 = vld [vmem:[%s1 + $0x50] sm:$0xff]
      %v567 = vld [vmem:[%s1 + $0x58] sm:$0xff]
      %v568 = vld [vmem:[%s1 + $0x60] sm:$0xff]
      %v569 = vld [vmem:[%s1 + $0x68] sm:$0xff]
      %v570 = vld [vmem:[%s1 + $0x70] sm:$0xff]
      %v571 = vld [vmem:[%s1 + $0x78] sm:$0xff]
      %v572 = vld [vmem:[%s1 + $0x80] sm:$0xff]
      %v573 = vld [vmem:[%s1 + $0x88] sm:$0xff]
      %v574 = vld [vmem:[%s1 + $0x90] sm:$0xff]
      %v575 = vld [vmem:[%s1 + $0x98] sm:$0xff]
      %v576 = vld [vmem:[%s1 + $0xa0] sm:$0xff]
      %v577 = vld [vmem:[%s1 + $0xa8] sm:$0xff]
      %v578 = vld [vmem:[%s1 + $0xb0] sm:$0xff]
      %v579 = vld [vmem:[%s1 + $0xb8] sm:$0xff]
      %v580 = vld [vmem:[%s1 + $0xc0] sm:$0xff]
      %v581 = vld [vmem:[%s1 + $0xc8] sm:$0xff]
      %v582 = vld [vmem:[%s1 + $0xd0] sm:$0xff]
      %v583 = vld [vmem:[%s1 + $0xd8] sm:$0xff]
      %v584 = vld [vmem:[%s1 + $0xe0] sm:$0xff]
      %v585 = vld [vmem:[%s1 + $0xe8] sm:$0xff]
      %v586 = vld [vmem:[%s1 + $0xf0] sm:$0xff]
      %v587 = vld [vmem:[%s1 + $0xf8] sm:$0xff]
      %v588 = vld [vmem:[%s2] sm:$0xff]
      %v589 = vld [vmem:[%s2 + $0x8] sm:$0xff]
      %v590 = vld [vmem:[%s2 + $0x10] sm:$0xff]
      %v591 = vld [vmem:[%s2 + $0x18] sm:$0xff]
      %v592 = vld [vmem:[%s2 + $0x20] sm:$0xff]
      %v593 = vld [vmem:[%s2 + $0x28] sm:$0xff]
      %v594 = vld [vmem:[%s2 + $0x30] sm:$0xff]
      %v595 = vld [vmem:[%s2 + $0x38] sm:$0xff]
      %v596 = vld [vmem:[%s2 + $0x40] sm:$0xff]
      %v597 = vld [vmem:[%s2 + $0x48] sm:$0xff]
      %v598 = vld [vmem:[%s2 + $0x50] sm:$0xff]
      %v599 = vld [vmem:[%s2 + $0x58] sm:$0xff]
      %v600 = vld [vmem:[%s2 + $0x60] sm:$0xff]
      %v601 = vld [vmem:[%s2 + $0x68] sm:$0xff]
      %v602 = vld [vmem:[%s2 + $0x70] sm:$0xff]
      %v603 = vld [vmem:[%s2 + $0x78] sm:$0xff]
      %v604 = vld [vmem:[%s3] sm:$0x1]
      %v605 = vld [vmem:[%s4] sm:$0x1]
      %vm610 = vcmask 1046528
      %v611 = vrot.slane %v552, 1
      %v612 = vrot.slane %v553, 1
      %v613 = vsel %vm610, %v611, %v612
      %v614 = vrot.slane %v554, 1
      %v615 = vsel %vm610, %v612, %v614
      %v616 = vrot.slane %v555, 1
      %v617 = vsel %vm610, %v614, %v616
      %v622 = vsel %vm610, %v616, 0.0
      %v623 = vlaneseq
      %v624 = vshrl.u32 %v623, 7
      %v625 = vadd.s32 %v624, 8
      %v626 = vadd.s32 %v624, 16
      %v627 = vadd.s32 %v624, 24
      %vm628 = vcmp.lt.s32.totalorder %v624, 0
      %v629 = vsub.s32 0, %v624
      %v630 = vsel %vm628, %v629, %v624
      %v631 = vshrl.u32 %v630, 2
      %v632 = vand.u32 %v630, 3
      %v633 = vsub.s32 0, %v632
      %v634 = vsel %vm628, %v633, %v632
      %vm635 = vcmp.lt.s32.totalorder %v625, 0
      %v636 = vsub.s32 0, %v625
      %v637 = vsel %vm635, %v636, %v625
      %v638 = vshrl.u32 %v637, 2
      %v639 = vand.u32 %v637, 3
      %v640 = vsub.s32 0, %v639
      %v641 = vsel %vm635, %v640, %v639
      %vm642 = vcmp.lt.s32.totalorder %v626, 0
      %v643 = vsub.s32 0, %v626
      %v644 = vsel %vm642, %v643, %v626
      %v645 = vshrl.u32 %v644, 2
      %v646 = vand.u32 %v644, 3
      %v647 = vsub.s32 0, %v646
      %v648 = vsel %vm642, %v647, %v646
      %vm649 = vcmp.lt.s32.totalorder %v627, 0
      %v650 = vsub.s32 0, %v627
      %v651 = vsel %vm649, %v650, %v627
      %v652 = vshrl.u32 %v651, 2
      %v653 = vand.u32 %v651, 3
      %v654 = vsub.s32 0, %v653
      %v655 = vsel %vm649, %v654, %v653
      %vm656 = vcmp.ne.s32.totalorder %v634, 0
      %vm657 = vcmp.ne.s32.totalorder %v641, 0
      %vm658 = vcmp.ne.s32.totalorder %v648, 0
      %vm659 = vcmp.ne.s32.totalorder %v655, 0
      %vm660 = vcmp.lt.s32.totalorder %v634, 0
      %vm661 = vcmp.lt.s32.totalorder %v641, 0
      %vm662 = vcmp.lt.s32.totalorder %v648, 0
      %vm663 = vcmp.lt.s32.totalorder %v655, 0
      %vm664 = vmand %vm660, %vm656
      %vm665 = vmand %vm661, %vm657
      %vm666 = vmand %vm662, %vm658
      %vm667 = vmand %vm663, %vm659
      %v668 = vadd.s32 %v634, 4
      %v669 = vadd.s32 %v641, 4
      %v670 = vadd.s32 %v648, 4
      %v671 = vadd.s32 %v655, 4
      %v672 = vsel %vm664, %v668, %v634
      %v673 = vsel %vm665, %v669, %v641
      %v674 = vsel %vm666, %v670, %v648
      %v675 = vsel %vm667, %v671, %v655
      %vm676 = vcmp.eq.s32.totalorder %v672, 3
      %vm677 = vcmp.eq.s32.totalorder %v673, 3
      %vm678 = vcmp.eq.s32.totalorder %v674, 3
      %vm679 = vcmp.eq.s32.totalorder %v675, 3
      %v680 = vsel %vm676, 0.0, %v613
      %v681 = vsel %vm677, 0.0, %v615
      %v682 = vsel %vm678, 0.0, %v617
      %v683 = vsel %vm679, 0.0, %v622
      %684 = vmatprep.subr.mxu0 %v557
      %685 = vmatpush1.msra.mxu0 %v556
      %686 = vmatprep.subr.mxu0 %v559
      %687 = vmatpush1.msra.mxu0 %v558
      %688 = vmatprep.subr.mxu0 %v561
      %689 = vmatpush1.msra.mxu0 %v560
      %690 = vmatprep.subr.mxu0 %v563
      %691 = vmatpush1.msra.mxu0 %v562
      %692 = vmatprep.subr.mxu0 %v565
      %693 = vmatpush1.msra.mxu0 %v564
      %694 = vmatprep.subr.mxu0 %v567
      %695 = vmatpush1.msra.mxu0 %v566
      %696 = vmatprep.subr.mxu0 %v569
      %697 = vmatpush1.msra.mxu0 %v568
      %698 = vmatprep.subr.mxu0 %v571
      %699 = vmatpush1.msra.mxu0 %v570
      %700 = vmatprep.subr.mxu0 %v573
      %701 = vmatpush1.msra.mxu0 %v572
      %702 = vmatprep.subr.mxu0 %v575
      %703 = vmatpush1.msra.mxu0 %v574
      %704 = vmatprep.subr.mxu0 %v577
      %705 = vmatpush1.msra.mxu0 %v576
      %706 = vmatprep.subr.mxu0 %v579
      %707 = vmatpush1.msra.mxu0 %v578
      %708 = vmatprep.subr.mxu0 %v581
      %709 = vmatpush1.msra.mxu0 %v580
      %710 = vmatprep.subr.mxu0 %v583
      %711 = vmatpush1.msra.mxu0 %v582
      %712 = vmatprep.subr.mxu0 %v585
      %713 = vmatpush1.msra.mxu0 %v584
      %714 = vmatprep.subr.mxu0 %v587
      %715 = vmatpush1.msra.mxu0 %v586
      %716 = vmatprep.subr.mxu0 0.0
      %717 = vmatpush1.msra.mxu0 0.0
      %718 = vmatprep.subr.mxu0 0.0
      %719 = vmatpush1.msra.mxu0 0.0
      %720 = vmatprep.subr.mxu0 0.0
      %721 = vmatpush1.msra.mxu0 0.0
      %722 = vmatprep.subr.mxu0 0.0
      %723 = vmatpush1.msra.mxu0 0.0
      %724 = vmatprep.subr.mxu0 0.0
      %725 = vmatpush1.msra.mxu0 0.0
      %726 = vmatprep.subr.mxu0 0.0
      %727 = vmatpush1.msra.mxu0 0.0
      %728 = vmatprep.subr.mxu0 0.0
      %729 = vmatpush1.msra.mxu0 0.0
      %730 = vmatprep.subr.mxu0 0.0
      %731 = vmatpush1.msra.mxu0 0.0
      %732 = vmatprep.subr.mxu0 0.0
      %733 = vmatpush1.msra.mxu0 0.0
      %734 = vmatprep.subr.mxu0 0.0
      %735 = vmatpush1.msra.mxu0 0.0
      %736 = vmatprep.subr.mxu0 0.0
      %737 = vmatpush1.msra.mxu0 0.0
      %738 = vmatprep.subr.mxu0 0.0
      %739 = vmatpush1.msra.mxu0 0.0
      %740 = vmatprep.subr.mxu0 0.0
      %741 = vmatpush1.msra.mxu0 0.0
      %742 = vmatprep.subr.mxu0 0.0
      %743 = vmatpush1.msra.mxu0 0.0
      %744 = vmatprep.subr.mxu0 0.0
      %745 = vmatpush1.msra.mxu0 0.0
      %746 = vmatprep.subr.mxu0 0.0
      %747 = vmatpush1.msra.mxu0 0.0
      %748 = vmatprep.mubr.f32.mxu0 0.0
      %749 = vmatmul.mubr.f32.gmra.mrb[0].mxu0 %v552
      %v750 = vpop.f32.mrb[0].mxu0
      %v751 = vadd.f32 0.0, %v750
      %v752 = vpop.f32.mrb[0].mxu0
      %v753 = vadd.f32 0.0, %v752
      %754 = vmatprep.mubr.f32.mxu0 0.0
      %755 = vmatmul.mubr.f32.gmra.mrb[0].mxu0 %v553
      %v756 = vpop.f32.mrb[0].mxu0
      %v757 = vadd.f32 0.0, %v756
      %v758 = vpop.f32.mrb[0].mxu0
      %v759 = vadd.f32 0.0, %v758
      %760 = vmatprep.mubr.f32.mxu0 0.0
      %761 = vmatmul.mubr.f32.gmra.mrb[0].mxu0 %v554
      %v762 = vpop.f32.mrb[0].mxu0
      %v763 = vadd.f32 0.0, %v762
      %v764 = vpop.f32.mrb[0].mxu0
      %v765 = vadd.f32 0.0, %v764
      %766 = vmatprep.mubr.f32.mxu0 0.0
      %767 = vmatmul.mubr.f32.gmra.mrb[0].mxu0 %v555
      %v768 = vpop.f32.mrb[0].mxu0
      %v769 = vadd.f32 0.0, %v768
      %v770 = vpop.f32.mrb[0].mxu0
      %v771 = vadd.f32 0.0, %v770
      %772 = vdwg.mxu0
      %773 = vmatprep.subr.mxu0 0.0
      %774 = vmatpush1.msra.mxu0 %v588
      %775 = vmatprep.subr.mxu0 0.0
      %776 = vmatpush1.msra.mxu0 %v589
      %777 = vmatprep.subr.mxu0 0.0
      %778 = vmatpush1.msra.mxu0 %v590
      %779 = vmatprep.subr.mxu0 0.0
      %780 = vmatpush1.msra.mxu0 %v591
      %781 = vmatprep.subr.mxu0 0.0
      %782 = vmatpush1.msra.mxu0 %v592
      %783 = vmatprep.subr.mxu0 0.0
      %784 = vmatpush1.msra.mxu0 %v593
      %785 = vmatprep.subr.mxu0 0.0
      %786 = vmatpush1.msra.mxu0 %v594
      %787 = vmatprep.subr.mxu0 0.0
      %788 = vmatpush1.msra.mxu0 %v595
      %789 = vmatprep.subr.mxu0 0.0
      %790 = vmatpush1.msra.mxu0 %v596
      %791 = vmatprep.subr.mxu0 0.0
      %792 = vmatpush1.msra.mxu0 %v597
      %793 = vmatprep.subr.mxu0 0.0
      %794 = vmatpush1.msra.mxu0 %v598
      %795 = vmatprep.subr.mxu0 0.0
      %796 = vmatpush1.msra.mxu0 %v599
      %797 = vmatprep.subr.mxu0 0.0
      %798 = vmatpush1.msra.mxu0 %v600
      %799 = vmatprep.subr.mxu0 0.0
      %800 = vmatpush1.msra.mxu0 %v601
      %801 = vmatprep.subr.mxu0 0.0
      %802 = vmatpush1.msra.mxu0 %v602
      %803 = vmatprep.subr.mxu0 0.0
      %804 = vmatpush1.msra.mxu0 %v603
      %805 = vmatprep.subr.mxu0 0.0
      %806 = vmatpush1.msra.mxu0 0.0
      %807 = vmatprep.subr.mxu0 0.0
      %808 = vmatpush1.msra.mxu0 0.0
      %809 = vmatprep.subr.mxu0 0.0
      %810 = vmatpush1.msra.mxu0 0.0
      %811 = vmatprep.subr.mxu0 0.0
      %812 = vmatpush1.msra.mxu0 0.0
      %813 = vmatprep.subr.mxu0 0.0
      %814 = vmatpush1.msra.mxu0 0.0
      %815 = vmatprep.subr.mxu0 0.0
      %816 = vmatpush1.msra.mxu0 0.0
      %817 = vmatprep.subr.mxu0 0.0
      %818 = vmatpush1.msra.mxu0 0.0
      %819 = vmatprep.subr.mxu0 0.0
      %820 = vmatpush1.msra.mxu0 0.0
      %821 = vmatprep.subr.mxu0 0.0
      %822 = vmatpush1.msra.mxu0 0.0
      %823 = vmatprep.subr.mxu0 0.0
      %824 = vmatpush1.msra.mxu0 0.0
      %825 = vmatprep.subr.mxu0 0.0
      %826 = vmatpush1.msra.mxu0 0.0
      %827 = vmatprep.subr.mxu0 0.0
      %828 = vmatpush1.msra.mxu0 0.0
      %829 = vmatprep.subr.mxu0 0.0
      %830 = vmatpush1.msra.mxu0 0.0
      %831 = vmatprep.subr.mxu0 0.0
      %832 = vmatpush1.msra.mxu0 0.0
      %833 = vmatprep.subr.mxu0 0.0
      %834 = vmatpush1.msra.mxu0 0.0
      %835 = vmatprep.subr.mxu0 0.0
      %836 = vmatpush1.msra.mxu0 0.0
      %837 = vmatprep.mubr.f32.mxu0 0.0
      %838 = vmatmul.mubr.f32.gmra.mrb[0].mxu0 %v680
      %v839 = vpop.f32.mrb[0].mxu0
      %v840 = vadd.f32 0.0, %v839
      %v841 = vpop.f32.mrb[0].mxu0
      %842 = vmatprep.mubr.f32.mxu0 0.0
      %843 = vmatmul.mubr.f32.gmra.mrb[0].mxu0 %v681
      %v844 = vpop.f32.mrb[0].mxu0
      %v845 = vadd.f32 0.0, %v844
      %v846 = vpop.f32.mrb[0].mxu0
      %847 = vmatprep.mubr.f32.mxu0 0.0
      %848 = vmatmul.mubr.f32.gmra.mrb[0].mxu0 %v682
      %v849 = vpop.f32.mrb[0].mxu0
      %v850 = vadd.f32 0.0, %v849
      %v851 = vpop.f32.mrb[0].mxu0
      %852 = vmatprep.mubr.f32.mxu0 0.0
      %853 = vmatmul.mubr.f32.gmra.mrb[0].mxu0 %v683
      %v854 = vpop.f32.mrb[0].mxu0
      %v855 = vadd.f32 0.0, %v854
      %v856 = vpop.f32.mrb[0].mxu0
      %857 = vdwg.mxu0
      %v859 = vlaneseq
      %v860 = vshrl.u32 %v859, 7
      %v861 = vsub.s32 0, %v860
      %v862 = vrot.slane %v604, %v861
      %v864 = vmul.f32 %v751, %v862
      %v865 = vmul.f32 %v757, %v862
      %v866 = vmul.f32 %v763, %v862
      %v867 = vmul.f32 %v769, %v862
      %v869 = vlaneseq
      %v870 = vshrl.u32 %v869, 7
      %v871 = vsub.s32 0, %v870
      %v872 = vrot.slane %v605, %v871
      %v874 = vadd.f32 %v864, %v872
      %v875 = vadd.f32 %v865, %v872
      %v876 = vadd.f32 %v866, %v872
      %v877 = vadd.f32 %v867, %v872
      %v878 = vadd.f32 %v753, %v840
      %v879 = vadd.f32 %v759, %v845
      %v880 = vadd.f32 %v765, %v850
      %v881 = vadd.f32 %v771, %v855
      %v882 = vmul.f32 %v878, %v862
      %v883 = vmul.f32 %v879, %v862
      %v884 = vmul.f32 %v880, %v862
      %v885 = vmul.f32 %v881, %v862
      %v886 = vadd.f32 %v882, %v872
      %v887 = vadd.f32 %v883, %v872
      %v888 = vadd.f32 %v884, %v872
      %v889 = vadd.f32 %v885, %v872
      %v890 = vmax.f32 %v874, 0.0
      %v891 = vmax.f32 %v875, 0.0
      %v892 = vmax.f32 %v876, 0.0
      %v893 = vmax.f32 %v877, 0.0
      %v894 = vmax.f32 %v886, 0.0
      %v895 = vmax.f32 %v887, 0.0
      %v896 = vmax.f32 %v888, 0.0
      %v897 = vmax.f32 %v889, 0.0
      %v902 = vcombine.high %v890, %v890
      %v904 = vunpack.c.l.s4 1966171168
      %v905 = vunpack.c.0.s8 %v904
      %v906 = vlaneseq
      %v907 = vshrl.u32 %v906, 7
      %v908 = vsub.s32 %v905, %v907
      %v909 = vrot.slane %v890, %v908
      %v911 = vunpack.c.l.s4 1966171168
      %v912 = vunpack.c.0.s8 %v911
      %v913 = vlaneseq
      %v914 = vshrl.u32 %v913, 7
      %v915 = vsub.s32 %v912, %v914
      %v916 = vrot.slane %v902, %v915
      %v917 = vcombine.high %v909, %v909
      %v918 = vcombine.high %v916, %v916
      %v920 = vunpack.c.l.s4 1966171168
      %v921 = vunpack.c.0.s8 %v920
      %v922 = vlaneseq
      %v923 = vshrl.u32 %v922, 7
      %v924 = vsub.s32 %v921, %v923
      %v925 = vrot.slane %v909, %v924
      %v927 = vunpack.c.l.s4 1966171168
      %v928 = vunpack.c.0.s8 %v927
      %v929 = vlaneseq
      %v930 = vshrl.u32 %v929, 7
      %v931 = vsub.s32 %v928, %v930
      %v932 = vrot.slane %v916, %v931
      %v934 = vunpack.c.l.s4 1966171168
      %v935 = vunpack.c.0.s8 %v934
      %v936 = vlaneseq
      %v937 = vshrl.u32 %v936, 7
      %v938 = vsub.s32 %v935, %v937
      %v939 = vrot.slane %v917, %v938
      %v941 = vunpack.c.l.s4 1966171168
      %v942 = vunpack.c.0.s8 %v941
      %v943 = vlaneseq
      %v944 = vshrl.u32 %v943, 7
      %v945 = vsub.s32 %v942, %v944
      %v946 = vrot.slane %v918, %v945
      %v947 = vcombine.high %v925, %v925
      %v948 = vcombine.high %v932, %v932
      %v949 = vcombine.high %v939, %v939
      %v950 = vcombine.high %v946, %v946
      %v951 = vcombine.high %v891, %v891
      %v953 = vunpack.c.l.s4 1966171168
      %v954 = vunpack.c.0.s8 %v953
      %v955 = vlaneseq
      %v956 = vshrl.u32 %v955, 7
      %v957 = vsub.s32 %v954, %v956
      %v958 = vrot.slane %v891, %v957
      %v960 = vunpack.c.l.s4 1966171168
      %v961 = vunpack.c.0.s8 %v960
      %v962 = vlaneseq
      %v963 = vshrl.u32 %v962, 7
      %v964 = vsub.s32 %v961, %v963
      %v965 = vrot.slane %v951, %v964
      %v966 = vcombine.high %v958, %v958
      %v967 = vcombine.high %v965, %v965
      %v969 = vunpack.c.l.s4 1966171168
      %v970 = vunpack.c.0.s8 %v969
      %v971 = vlaneseq
      %v972 = vshrl.u32 %v971, 7
      %v973 = vsub.s32 %v970, %v972
      %v974 = vrot.slane %v958, %v973
      %v976 = vunpack.c.l.s4 1966171168
      %v977 = vunpack.c.0.s8 %v976
      %v978 = vlaneseq
      %v979 = vshrl.u32 %v978, 7
      %v980 = vsub.s32 %v977, %v979
      %v981 = vrot.slane %v965, %v980
      %v983 = vunpack.c.l.s4 1966171168
      %v984 = vunpack.c.0.s8 %v983
      %v985 = vlaneseq
      %v986 = vshrl.u32 %v985, 7
      %v987 = vsub.s32 %v984, %v986
      %v988 = vrot.slane %v966, %v987
      %v990 = vunpack.c.l.s4 1966171168
      %v991 = vunpack.c.0.s8 %v990
      %v992 = vlaneseq
      %v993 = vshrl.u32 %v992, 7
      %v994 = vsub.s32 %v991, %v993
      %v995 = vrot.slane %v967, %v994
      %v996 = vcombine.high %v974, %v974
      %v997 = vcombine.high %v981, %v981
      %v998 = vcombine.high %v988, %v988
      %v999 = vcombine.high %v995, %v995
      %v1000 = vcombine.high %v892, %v892
      %v1002 = vunpack.c.l.s4 1966171168
      %v1003 = vunpack.c.0.s8 %v1002
      %v1004 = vlaneseq
      %v1005 = vshrl.u32 %v1004, 7
      %v1006 = vsub.s32 %v1003, %v1005
      %v1007 = vrot.slane %v892, %v1006
      %v1009 = vunpack.c.l.s4 1966171168
      %v1010 = vunpack.c.0.s8 %v1009
      %v1011 = vlaneseq
      %v1012 = vshrl.u32 %v1011, 7
      %v1013 = vsub.s32 %v1010, %v1012
      %v1014 = vrot.slane %v1000, %v1013
      %v1015 = vcombine.high %v1007, %v1007
      %v1016 = vcombine.high %v1014, %v1014
      %v1018 = vunpack.c.l.s4 1966171168
      %v1019 = vunpack.c.0.s8 %v1018
      %v1020 = vlaneseq
      %v1021 = vshrl.u32 %v1020, 7
      %v1022 = vsub.s32 %v1019, %v1021
      %v1023 = vrot.slane %v1007, %v1022
      %v1025 = vunpack.c.l.s4 1966171168
      %v1026 = vunpack.c.0.s8 %v1025
      %v1027 = vlaneseq
      %v1028 = vshrl.u32 %v1027, 7
      %v1029 = vsub.s32 %v1026, %v1028
      %v1030 = vrot.slane %v1014, %v1029
      %v1032 = vunpack.c.l.s4 1966171168
      %v1033 = vunpack.c.0.s8 %v1032
      %v1034 = vlaneseq
      %v1035 = vshrl.u32 %v1034, 7
      %v1036 = vsub.s32 %v1033, %v1035
      %v1037 = vrot.slane %v1015, %v1036
      %v1039 = vunpack.c.l.s4 1966171168
      %v1040 = vunpack.c.0.s8 %v1039
      %v1041 = vlaneseq
      %v1042 = vshrl.u32 %v1041, 7
      %v1043 = vsub.s32 %v1040, %v1042
      %v1044 = vrot.slane %v1016, %v1043
      %v1045 = vcombine.high %v1023, %v1023
      %v1046 = vcombine.high %v1030, %v1030
      %v1047 = vcombine.high %v1037, %v1037
      %v1048 = vcombine.high %v1044, %v1044
      %v1049 = vcombine.high %v893, %v893
      %v1051 = vunpack.c.l.s4 1966171168
      %v1052 = vunpack.c.0.s8 %v1051
      %v1053 = vlaneseq
      %v1054 = vshrl.u32 %v1053, 7
      %v1055 = vsub.s32 %v1052, %v1054
      %v1056 = vrot.slane %v893, %v1055
      %v1058 = vunpack.c.l.s4 1966171168
      %v1059 = vunpack.c.0.s8 %v1058
      %v1060 = vlaneseq
      %v1061 = vshrl.u32 %v1060, 7
      %v1062 = vsub.s32 %v1059, %v1061
      %v1063 = vrot.slane %v1049, %v1062
      %v1064 = vcombine.high %v1056, %v1056
      %v1065 = vcombine.high %v1063, %v1063
      %v1067 = vunpack.c.l.s4 1966171168
      %v1068 = vunpack.c.0.s8 %v1067
      %v1069 = vlaneseq
      %v1070 = vshrl.u32 %v1069, 7
      %v1071 = vsub.s32 %v1068, %v1070
      %v1072 = vrot.slane %v1056, %v1071
      %v1074 = vunpack.c.l.s4 1966171168
      %v1075 = vunpack.c.0.s8 %v1074
      %v1076 = vlaneseq
      %v1077 = vshrl.u32 %v1076, 7
      %v1078 = vsub.s32 %v1075, %v1077
      %v1079 = vrot.slane %v1063, %v1078
      %v1081 = vunpack.c.l.s4 1966171168
      %v1082 = vunpack.c.0.s8 %v1081
      %v1083 = vlaneseq
      %v1084 = vshrl.u32 %v1083, 7
      %v1085 = vsub.s32 %v1082, %v1084
      %v1086 = vrot.slane %v1064, %v1085
      %v1088 = vunpack.c.l.s4 1966171168
      %v1089 = vunpack.c.0.s8 %v1088
      %v1090 = vlaneseq
      %v1091 = vshrl.u32 %v1090, 7
      %v1092 = vsub.s32 %v1089, %v1091
      %v1093 = vrot.slane %v1065, %v1092
      %v1094 = vcombine.high %v1072, %v1072
      %v1095 = vcombine.high %v1079, %v1079
      %v1096 = vcombine.high %v1086, %v1086
      %v1097 = vcombine.high %v1093, %v1093
      %v1134 = vcombine.high %v894, %v894
      %v1136 = vunpack.c.l.s4 1966171168
      %v1137 = vunpack.c.0.s8 %v1136
      %v1138 = vlaneseq
      %v1139 = vshrl.u32 %v1138, 7
      %v1140 = vsub.s32 %v1137, %v1139
      %v1141 = vrot.slane %v894, %v1140
      %v1143 = vunpack.c.l.s4 1966171168
      %v1144 = vunpack.c.0.s8 %v1143
      %v1145 = vlaneseq
      %v1146 = vshrl.u32 %v1145, 7
      %v1147 = vsub.s32 %v1144, %v1146
      %v1148 = vrot.slane %v1134, %v1147
      %v1149 = vcombine.high %v1141, %v1141
      %v1150 = vcombine.high %v1148, %v1148
      %v1152 = vunpack.c.l.s4 1966171168
      %v1153 = vunpack.c.0.s8 %v1152
      %v1154 = vlaneseq
      %v1155 = vshrl.u32 %v1154, 7
      %v1156 = vsub.s32 %v1153, %v1155
      %v1157 = vrot.slane %v1141, %v1156
      %v1159 = vunpack.c.l.s4 1966171168
      %v1160 = vunpack.c.0.s8 %v1159
      %v1161 = vlaneseq
      %v1162 = vshrl.u32 %v1161, 7
      %v1163 = vsub.s32 %v1160, %v1162
      %v1164 = vrot.slane %v1148, %v1163
      %v1166 = vunpack.c.l.s4 1966171168
      %v1167 = vunpack.c.0.s8 %v1166
      %v1168 = vlaneseq
      %v1169 = vshrl.u32 %v1168, 7
      %v1170 = vsub.s32 %v1167, %v1169
      %v1171 = vrot.slane %v1149, %v1170
      %v1173 = vunpack.c.l.s4 1966171168
      %v1174 = vunpack.c.0.s8 %v1173
      %v1175 = vlaneseq
      %v1176 = vshrl.u32 %v1175, 7
      %v1177 = vsub.s32 %v1174, %v1176
      %v1178 = vrot.slane %v1150, %v1177
      %v1179 = vcombine.high %v1157, %v1157
      %v1180 = vcombine.high %v1164, %v1164
      %v1181 = vcombine.high %v1171, %v1171
      %v1182 = vcombine.high %v1178, %v1178
      %v1183 = vcombine.high %v895, %v895
      %v1185 = vunpack.c.l.s4 1966171168
      %v1186 = vunpack.c.0.s8 %v1185
      %v1187 = vlaneseq
      %v1188 = vshrl.u32 %v1187, 7
      %v1189 = vsub.s32 %v1186, %v1188
      %v1190 = vrot.slane %v895, %v1189
      %v1192 = vunpack.c.l.s4 1966171168
      %v1193 = vunpack.c.0.s8 %v1192
      %v1194 = vlaneseq
      %v1195 = vshrl.u32 %v1194, 7
      %v1196 = vsub.s32 %v1193, %v1195
      %v1197 = vrot.slane %v1183, %v1196
      %v1198 = vcombine.high %v1190, %v1190
      %v1199 = vcombine.high %v1197, %v1197
      %v1201 = vunpack.c.l.s4 1966171168
      %v1202 = vunpack.c.0.s8 %v1201
      %v1203 = vlaneseq
      %v1204 = vshrl.u32 %v1203, 7
      %v1205 = vsub.s32 %v1202, %v1204
      %v1206 = vrot.slane %v1190, %v1205
      %v1208 = vunpack.c.l.s4 1966171168
      %v1209 = vunpack.c.0.s8 %v1208
      %v1210 = vlaneseq
      %v1211 = vshrl.u32 %v1210, 7
      %v1212 = vsub.s32 %v1209, %v1211
      %v1213 = vrot.slane %v1197, %v1212
      %v1215 = vunpack.c.l.s4 1966171168
      %v1216 = vunpack.c.0.s8 %v1215
      %v1217 = vlaneseq
      %v1218 = vshrl.u32 %v1217, 7
      %v1219 = vsub.s32 %v1216, %v1218
      %v1220 = vrot.slane %v1198, %v1219
      %v1222 = vunpack.c.l.s4 1966171168
      %v1223 = vunpack.c.0.s8 %v1222
      %v1224 = vlaneseq
      %v1225 = vshrl.u32 %v1224, 7
      %v1226 = vsub.s32 %v1223, %v1225
      %v1227 = vrot.slane %v1199, %v1226
      %v1228 = vcombine.high %v1206, %v1206
      %v1229 = vcombine.high %v1213, %v1213
      %v1230 = vcombine.high %v1220, %v1220
      %v1231 = vcombine.high %v1227, %v1227
      %v1232 = vcombine.high %v896, %v896
      %v1234 = vunpack.c.l.s4 1966171168
      %v1235 = vunpack.c.0.s8 %v1234
      %v1236 = vlaneseq
      %v1237 = vshrl.u32 %v1236, 7
      %v1238 = vsub.s32 %v1235, %v1237
      %v1239 = vrot.slane %v896, %v1238
      %v1241 = vunpack.c.l.s4 1966171168
      %v1242 = vunpack.c.0.s8 %v1241
      %v1243 = vlaneseq
      %v1244 = vshrl.u32 %v1243, 7
      %v1245 = vsub.s32 %v1242, %v1244
      %v1246 = vrot.slane %v1232, %v1245
      %v1247 = vcombine.high %v1239, %v1239
      %v1248 = vcombine.high %v1246, %v1246
      %v1250 = vunpack.c.l.s4 1966171168
      %v1251 = vunpack.c.0.s8 %v1250
      %v1252 = vlaneseq
      %v1253 = vshrl.u32 %v1252, 7
      %v1254 = vsub.s32 %v1251, %v1253
      %v1255 = vrot.slane %v1239, %v1254
      %v1257 = vunpack.c.l.s4 1966171168
      %v1258 = vunpack.c.0.s8 %v1257
      %v1259 = vlaneseq
      %v1260 = vshrl.u32 %v1259, 7
      %v1261 = vsub.s32 %v1258, %v1260
      %v1262 = vrot.slane %v1246, %v1261
      %v1264 = vunpack.c.l.s4 1966171168
      %v1265 = vunpack.c.0.s8 %v1264
      %v1266 = vlaneseq
      %v1267 = vshrl.u32 %v1266, 7
      %v1268 = vsub.s32 %v1265, %v1267
      %v1269 = vrot.slane %v1247, %v1268
      %v1271 = vunpack.c.l.s4 1966171168
      %v1272 = vunpack.c.0.s8 %v1271
      %v1273 = vlaneseq
      %v1274 = vshrl.u32 %v1273, 7
      %v1275 = vsub.s32 %v1272, %v1274
      %v1276 = vrot.slane %v1248, %v1275
      %v1277 = vcombine.high %v1255, %v1255
      %v1278 = vcombine.high %v1262, %v1262
      %v1279 = vcombine.high %v1269, %v1269
      %v1280 = vcombine.high %v1276, %v1276
      %v1281 = vcombine.high %v897, %v897
      %v1283 = vunpack.c.l.s4 1966171168
      %v1284 = vunpack.c.0.s8 %v1283
      %v1285 = vlaneseq
      %v1286 = vshrl.u32 %v1285, 7
      %v1287 = vsub.s32 %v1284, %v1286
      %v1288 = vrot.slane %v897, %v1287
      %v1290 = vunpack.c.l.s4 1966171168
      %v1291 = vunpack.c.0.s8 %v1290
      %v1292 = vlaneseq
      %v1293 = vshrl.u32 %v1292, 7
      %v1294 = vsub.s32 %v1291, %v1293
      %v1295 = vrot.slane %v1281, %v1294
      %v1296 = vcombine.high %v1288, %v1288
      %v1297 = vcombine.high %v1295, %v1295
      %v1299 = vunpack.c.l.s4 1966171168
      %v1300 = vunpack.c.0.s8 %v1299
      %v1301 = vlaneseq
      %v1302 = vshrl.u32 %v1301, 7
      %v1303 = vsub.s32 %v1300, %v1302
      %v1304 = vrot.slane %v1288, %v1303
      %v1306 = vunpack.c.l.s4 1966171168
      %v1307 = vunpack.c.0.s8 %v1306
      %v1308 = vlaneseq
      %v1309 = vshrl.u32 %v1308, 7
      %v1310 = vsub.s32 %v1307, %v1309
      %v1311 = vrot.slane %v1295, %v1310
      %v1313 = vunpack.c.l.s4 1966171168
      %v1314 = vunpack.c.0.s8 %v1313
      %v1315 = vlaneseq
      %v1316 = vshrl.u32 %v1315, 7
      %v1317 = vsub.s32 %v1314, %v1316
      %v1318 = vrot.slane %v1296, %v1317
      %v1320 = vunpack.c.l.s4 1966171168
      %v1321 = vunpack.c.0.s8 %v1320
      %v1322 = vlaneseq
      %v1323 = vshrl.u32 %v1322, 7
      %v1324 = vsub.s32 %v1321, %v1323
      %v1325 = vrot.slane %v1297, %v1324
      %v1326 = vcombine.high %v1304, %v1304
      %v1327 = vcombine.high %v1311, %v1311
      %v1328 = vcombine.high %v1318, %v1318
      %v1329 = vcombine.high %v1325, %v1325
      %v1330 = vlaneseq
      %v1331 = vshrl.u32 %v1330, 7
      %v1332 = vsub.s32 0, %v1331
      %v1333 = vrot.slane %v1157, %v1332
      %v1334 = vlaneseq
      %v1335 = vshrl.u32 %v1334, 7
      %v1336 = vsub.s32 0, %v1335
      %v1337 = vrot.slane %v1171, %v1336
      %v1338 = vlaneseq
      %v1339 = vshrl.u32 %v1338, 7
      %v1340 = vsub.s32 0, %v1339
      %v1341 = vrot.slane %v1179, %v1340
      %v1342 = vlaneseq
      %v1343 = vshrl.u32 %v1342, 7
      %v1344 = vsub.s32 0, %v1343
      %v1345 = vrot.slane %v1181, %v1344
      %v1346 = vlaneseq
      %v1347 = vshrl.u32 %v1346, 7
      %v1348 = vsub.s32 0, %v1347
      %v1349 = vrot.slane %v1164, %v1348
      %v1350 = vlaneseq
      %v1351 = vshrl.u32 %v1350, 7
      %v1352 = vsub.s32 0, %v1351
      %v1353 = vrot.slane %v1178, %v1352
      %v1354 = vlaneseq
      %v1355 = vshrl.u32 %v1354, 7
      %v1356 = vsub.s32 0, %v1355
      %v1357 = vrot.slane %v1180, %v1356
      %v1358 = vlaneseq
      %v1359 = vshrl.u32 %v1358, 7
      %v1360 = vsub.s32 0, %v1359
      %v1361 = vrot.slane %v1182, %v1360
      %v1362 = vlaneseq
      %v1363 = vshrl.u32 %v1362, 7
      %v1364 = vsub.s32 0, %v1363
      %v1365 = vrot.slane %v1206, %v1364
      %v1366 = vlaneseq
      %v1367 = vshrl.u32 %v1366, 7
      %v1368 = vsub.s32 0, %v1367
      %v1369 = vrot.slane %v1220, %v1368
      %v1370 = vlaneseq
      %v1371 = vshrl.u32 %v1370, 7
      %v1372 = vsub.s32 0, %v1371
      %v1373 = vrot.slane %v1228, %v1372
      %v1374 = vlaneseq
      %v1375 = vshrl.u32 %v1374, 7
      %v1376 = vsub.s32 0, %v1375
      %v1377 = vrot.slane %v1230, %v1376
      %v1378 = vlaneseq
      %v1379 = vshrl.u32 %v1378, 7
      %v1380 = vsub.s32 0, %v1379
      %v1381 = vrot.slane %v1213, %v1380
      %v1382 = vlaneseq
      %v1383 = vshrl.u32 %v1382, 7
      %v1384 = vsub.s32 0, %v1383
      %v1385 = vrot.slane %v1227, %v1384
      %v1386 = vlaneseq
      %v1387 = vshrl.u32 %v1386, 7
      %v1388 = vsub.s32 0, %v1387
      %v1389 = vrot.slane %v1229, %v1388
      %v1390 = vlaneseq
      %v1391 = vshrl.u32 %v1390, 7
      %v1392 = vsub.s32 0, %v1391
      %v1393 = vrot.slane %v1231, %v1392
      %v1394 = vlaneseq
      %v1395 = vshrl.u32 %v1394, 7
      %v1396 = vsub.s32 0, %v1395
      %v1397 = vrot.slane %v1255, %v1396
      %v1398 = vlaneseq
      %v1399 = vshrl.u32 %v1398, 7
      %v1400 = vsub.s32 0, %v1399
      %v1401 = vrot.slane %v1269, %v1400
      %v1402 = vlaneseq
      %v1403 = vshrl.u32 %v1402, 7
      %v1404 = vsub.s32 0, %v1403
      %v1405 = vrot.slane %v1277, %v1404
      %v1406 = vlaneseq
      %v1407 = vshrl.u32 %v1406, 7
      %v1408 = vsub.s32 0, %v1407
      %v1409 = vrot.slane %v1279, %v1408
      %v1410 = vlaneseq
      %v1411 = vshrl.u32 %v1410, 7
      %v1412 = vsub.s32 0, %v1411
      %v1413 = vrot.slane %v1262, %v1412
      %v1414 = vlaneseq
      %v1415 = vshrl.u32 %v1414, 7
      %v1416 = vsub.s32 0, %v1415
      %v1417 = vrot.slane %v1276, %v1416
      %v1418 = vlaneseq
      %v1419 = vshrl.u32 %v1418, 7
      %v1420 = vsub.s32 0, %v1419
      %v1421 = vrot.slane %v1278, %v1420
      %v1422 = vlaneseq
      %v1423 = vshrl.u32 %v1422, 7
      %v1424 = vsub.s32 0, %v1423
      %v1425 = vrot.slane %v1280, %v1424
      %v1426 = vlaneseq
      %v1427 = vshrl.u32 %v1426, 7
      %v1428 = vsub.s32 0, %v1427
      %v1429 = vrot.slane %v1304, %v1428
      %v1430 = vlaneseq
      %v1431 = vshrl.u32 %v1430, 7
      %v1432 = vsub.s32 0, %v1431
      %v1433 = vrot.slane %v1318, %v1432
      %v1434 = vlaneseq
      %v1435 = vshrl.u32 %v1434, 7
      %v1436 = vsub.s32 0, %v1435
      %v1437 = vrot.slane %v1326, %v1436
      %v1438 = vlaneseq
      %v1439 = vshrl.u32 %v1438, 7
      %v1440 = vsub.s32 0, %v1439
      %v1441 = vrot.slane %v1328, %v1440
      %v1442 = vlaneseq
      %v1443 = vshrl.u32 %v1442, 7
      %v1444 = vsub.s32 0, %v1443
      %v1445 = vrot.slane %v1311, %v1444
      %v1446 = vlaneseq
      %v1447 = vshrl.u32 %v1446, 7
      %v1448 = vsub.s32 0, %v1447
      %v1449 = vrot.slane %v1325, %v1448
      %v1450 = vlaneseq
      %v1451 = vshrl.u32 %v1450, 7
      %v1452 = vsub.s32 0, %v1451
      %v1453 = vrot.slane %v1327, %v1452
      %v1454 = vlaneseq
      %v1455 = vshrl.u32 %v1454, 7
      %v1456 = vsub.s32 0, %v1455
      %v1457 = vrot.slane %v1329, %v1456
      %vm1490 = vcmask 1040384
      %v1491 = vsel %vm1490, %v925, %v1333
      %v1492 = vsel %vm1490, %v939, %v1337
      %v1493 = vsel %vm1490, %v947, %v1341
      %v1494 = vsel %vm1490, %v949, %v1345
      %v1495 = vsel %vm1490, %v932, %v1349
      %v1496 = vsel %vm1490, %v946, %v1353
      %v1497 = vsel %vm1490, %v948, %v1357
      %v1498 = vsel %vm1490, %v950, %v1361
      %v1499 = vsel %vm1490, %v974, %v1365
      %v1500 = vsel %vm1490, %v988, %v1369
      %v1501 = vsel %vm1490, %v996, %v1373
      %v1502 = vsel %vm1490, %v998, %v1377
      %v1503 = vsel %vm1490, %v981, %v1381
      %v1504 = vsel %vm1490, %v995, %v1385
      %v1505 = vsel %vm1490, %v997, %v1389
      %v1506 = vsel %vm1490, %v999, %v1393
      %v1507 = vsel %vm1490, %v1023, %v1397
      %v1508 = vsel %vm1490, %v1037, %v1401
      %v1509 = vsel %vm1490, %v1045, %v1405
      %v1510 = vsel %vm1490, %v1047, %v1409
      %v1511 = vsel %vm1490, %v1030, %v1413
      %v1512 = vsel %vm1490, %v1044, %v1417
      %v1513 = vsel %vm1490, %v1046, %v1421
      %v1514 = vsel %vm1490, %v1048, %v1425
      %v1515 = vsel %vm1490, %v1072, %v1429
      %v1516 = vsel %vm1490, %v1086, %v1433
      %v1517 = vsel %vm1490, %v1094, %v1437
      %v1518 = vsel %vm1490, %v1096, %v1441
      %v1519 = vsel %vm1490, %v1079, %v1445
      %v1520 = vsel %vm1490, %v1093, %v1449
      %v1521 = vsel %vm1490, %v1095, %v1453
      %v1522 = vsel %vm1490, %v1097, %v1457
      %v1523 = vld [vmem:[%s5] sm:$0xff]
      %v1524 = vld [vmem:[%s5 + $0x8] sm:$0xff]
      %v1525 = vld [vmem:[%s5 + $0x10] sm:$0xff]
      %v1526 = vld [vmem:[%s5 + $0x18] sm:$0xff]
      %v1527 = vld [vmem:[%s5 + $0x20] sm:$0xff]
      %v1528 = vld [vmem:[%s5 + $0x28] sm:$0xff]
      %v1529 = vld [vmem:[%s5 + $0x30] sm:$0xff]
      %v1530 = vld [vmem:[%s5 + $0x38] sm:$0xff]
      %v1531 = vld [vmem:[%s5 + $0x40] sm:$0xff]
      %v1532 = vld [vmem:[%s5 + $0x48] sm:$0xff]
      %v1533 = vld [vmem:[%s5 + $0x50] sm:$0xff]
      %v1534 = vld [vmem:[%s5 + $0x58] sm:$0xff]
      %v1535 = vld [vmem:[%s5 + $0x60] sm:$0xff]
      %v1536 = vld [vmem:[%s5 + $0x68] sm:$0xff]
      %v1537 = vld [vmem:[%s5 + $0x70] sm:$0xff]
      %v1538 = vld [vmem:[%s5 + $0x78] sm:$0xff]
      %v1539 = vld [vmem:[%s5 + $0x80] sm:$0xff]
      %v1540 = vld [vmem:[%s5 + $0x88] sm:$0xff]
      %v1541 = vld [vmem:[%s5 + $0x90] sm:$0xff]
      %v1542 = vld [vmem:[%s5 + $0x98] sm:$0xff]
      %v1543 = vld [vmem:[%s5 + $0xa0] sm:$0xff]
      %v1544 = vld [vmem:[%s5 + $0xa8] sm:$0xff]
      %v1545 = vld [vmem:[%s5 + $0xb0] sm:$0xff]
      %v1546 = vld [vmem:[%s5 + $0xb8] sm:$0xff]
      %v1547 = vld [vmem:[%s5 + $0xc0] sm:$0xff]
      %v1548 = vld [vmem:[%s5 + $0xc8] sm:$0xff]
      %v1549 = vld [vmem:[%s5 + $0xd0] sm:$0xff]
      %v1550 = vld [vmem:[%s5 + $0xd8] sm:$0xff]
      %v1551 = vld [vmem:[%s5 + $0xe0] sm:$0xff]
      %v1552 = vld [vmem:[%s5 + $0xe8] sm:$0xff]
      %v1553 = vld [vmem:[%s5 + $0xf0] sm:$0xff]
      %v1554 = vld [vmem:[%s5 + $0xf8] sm:$0xff]
      %v1555 = vld [vmem:[%s6] sm:$0xff]
      %v1556 = vld [vmem:[%s6 + $0x8] sm:$0xff]
      %v1557 = vld [vmem:[%s6 + $0x10] sm:$0xff]
      %v1558 = vld [vmem:[%s6 + $0x18] sm:$0xff]
      %v1559 = vld [vmem:[%s6 + $0x20] sm:$0xff]
      %v1560 = vld [vmem:[%s6 + $0x28] sm:$0xff]
      %v1561 = vld [vmem:[%s6 + $0x30] sm:$0xff]
      %v1562 = vld [vmem:[%s6 + $0x38] sm:$0xff]
      %v1563 = vld [vmem:[%s6 + $0x40] sm:$0xff]
      %v1564 = vld [vmem:[%s6 + $0x48] sm:$0xff]
      %v1565 = vld [vmem:[%s6 + $0x50] sm:$0xff]
      %v1566 = vld [vmem:[%s6 + $0x58] sm:$0xff]
      %v1567 = vld [vmem:[%s6 + $0x60] sm:$0xff]
      %v1568 = vld [vmem:[%s6 + $0x68] sm:$0xff]
      %v1569 = vld [vmem:[%s6 + $0x70] sm:$0xff]
      %v1570 = vld [vmem:[%s6 + $0x78] sm:$0xff]
      %v1571 = vld [vmem:[%s7] sm:$0x1]
      %v1572 = vld [vmem:[%s8] sm:$0x1]
      %v1605 = vcombine.low %v1491, %v1492
      %v1606 = vcombine.low %v1493, %v1494
      %v1608 = vunpack.c.l.s4 1983009808
      %v1609 = vunpack.c.0.s8 %v1608
      %v1610 = vlaneseq
      %v1611 = vshrl.u32 %v1610, 7
      %v1612 = vsub.s32 %v1609, %v1611
      %v1613 = vrot.slane %v1605, %v1612
      %v1615 = vunpack.c.l.s4 1983009808
      %v1616 = vunpack.c.0.s8 %v1615
      %v1617 = vlaneseq
      %v1618 = vshrl.u32 %v1617, 7
      %v1619 = vsub.s32 %v1616, %v1618
      %v1620 = vrot.slane %v1606, %v1619
      %v1621 = vcombine.low %v1613, %v1620
      %v1622 = vcombine.low %v1495, %v1496
      %v1623 = vcombine.low %v1497, %v1498
      %v1625 = vunpack.c.l.s4 1983009808
      %v1626 = vunpack.c.0.s8 %v1625
      %v1627 = vlaneseq
      %v1628 = vshrl.u32 %v1627, 7
      %v1629 = vsub.s32 %v1626, %v1628
      %v1630 = vrot.slane %v1622, %v1629
      %v1632 = vunpack.c.l.s4 1983009808
      %v1633 = vunpack.c.0.s8 %v1632
      %v1634 = vlaneseq
      %v1635 = vshrl.u32 %v1634, 7
      %v1636 = vsub.s32 %v1633, %v1635
      %v1637 = vrot.slane %v1623, %v1636
      %v1638 = vcombine.low %v1630, %v1637
      %v1639 = vcombine.low %v1499, %v1500
      %v1640 = vcombine.low %v1501, %v1502
      %v1642 = vunpack.c.l.s4 1983009808
      %v1643 = vunpack.c.0.s8 %v1642
      %v1644 = vlaneseq
      %v1645 = vshrl.u32 %v1644, 7
      %v1646 = vsub.s32 %v1643, %v1645
      %v1647 = vrot.slane %v1639, %v1646
      %v1649 = vunpack.c.l.s4 1983009808
      %v1650 = vunpack.c.0.s8 %v1649
      %v1651 = vlaneseq
      %v1652 = vshrl.u32 %v1651, 7
      %v1653 = vsub.s32 %v1650, %v1652
      %v1654 = vrot.slane %v1640, %v1653
      %v1655 = vcombine.low %v1647, %v1654
      %v1656 = vcombine.low %v1503, %v1504
      %v1657 = vcombine.low %v1505, %v1506
      %v1659 = vunpack.c.l.s4 1983009808
      %v1660 = vunpack.c.0.s8 %v1659
      %v1661 = vlaneseq
      %v1662 = vshrl.u32 %v1661, 7
      %v1663 = vsub.s32 %v1660, %v1662
      %v1664 = vrot.slane %v1656, %v1663
      %v1666 = vunpack.c.l.s4 1983009808
      %v1667 = vunpack.c.0.s8 %v1666
      %v1668 = vlaneseq
      %v1669 = vshrl.u32 %v1668, 7
      %v1670 = vsub.s32 %v1667, %v1669
      %v1671 = vrot.slane %v1657, %v1670
      %v1672 = vcombine.low %v1664, %v1671
      %v1673 = vcombine.low %v1507, %v1508
      %v1674 = vcombine.low %v1509, %v1510
      %v1676 = vunpack.c.l.s4 1983009808
      %v1677 = vunpack.c.0.s8 %v1676
      %v1678 = vlaneseq
      %v1679 = vshrl.u32 %v1678, 7
      %v1680 = vsub.s32 %v1677, %v1679
      %v1681 = vrot.slane %v1673, %v1680
      %v1683 = vunpack.c.l.s4 1983009808
      %v1684 = vunpack.c.0.s8 %v1683
      %v1685 = vlaneseq
      %v1686 = vshrl.u32 %v1685, 7
      %v1687 = vsub.s32 %v1684, %v1686
      %v1688 = vrot.slane %v1674, %v1687
      %v1689 = vcombine.low %v1681, %v1688
      %v1690 = vcombine.low %v1511, %v1512
      %v1691 = vcombine.low %v1513, %v1514
      %v1693 = vunpack.c.l.s4 1983009808
      %v1694 = vunpack.c.0.s8 %v1693
      %v1695 = vlaneseq
      %v1696 = vshrl.u32 %v1695, 7
      %v1697 = vsub.s32 %v1694, %v1696
      %v1698 = vrot.slane %v1690, %v1697
      %v1700 = vunpack.c.l.s4 1983009808
      %v1701 = vunpack.c.0.s8 %v1700
      %v1702 = vlaneseq
      %v1703 = vshrl.u32 %v1702, 7
      %v1704 = vsub.s32 %v1701, %v1703
      %v1705 = vrot.slane %v1691, %v1704
      %v1706 = vcombine.low %v1698, %v1705
      %v1707 = vcombine.low %v1515, %v1516
      %v1708 = vcombine.low %v1517, %v1518
      %v1710 = vunpack.c.l.s4 1983009808
      %v1711 = vunpack.c.0.s8 %v1710
      %v1712 = vlaneseq
      %v1713 = vshrl.u32 %v1712, 7
      %v1714 = vsub.s32 %v1711, %v1713
      %v1715 = vrot.slane %v1707, %v1714
      %v1717 = vunpack.c.l.s4 1983009808
      %v1718 = vunpack.c.0.s8 %v1717
      %v1719 = vlaneseq
      %v1720 = vshrl.u32 %v1719, 7
      %v1721 = vsub.s32 %v1718, %v1720
      %v1722 = vrot.slane %v1708, %v1721
      %v1723 = vcombine.low %v1715, %v1722
      %v1724 = vcombine.low %v1519, %v1520
      %v1725 = vcombine.low %v1521, %v1522
      %v1727 = vunpack.c.l.s4 1983009808
      %v1728 = vunpack.c.0.s8 %v1727
      %v1729 = vlaneseq
      %v1730 = vshrl.u32 %v1729, 7
      %v1731 = vsub.s32 %v1728, %v1730
      %v1732 = vrot.slane %v1724, %v1731
      %v1734 = vunpack.c.l.s4 1983009808
      %v1735 = vunpack.c.0.s8 %v1734
      %v1736 = vlaneseq
      %v1737 = vshrl.u32 %v1736, 7
      %v1738 = vsub.s32 %v1735, %v1737
      %v1739 = vrot.slane %v1725, %v1738
      %v1740 = vcombine.low %v1732, %v1739
      %v1741 = vrot.slane %v1621, 1
      %v1742 = vrot.slane %v1638, 1
      %v1743 = vsel %vm610, %v1741, %v1742
      %v1744 = vrot.slane %v1655, 1
      %v1745 = vsel %vm610, %v1742, %v1744
      %v1746 = vrot.slane %v1672, 1
      %v1747 = vsel %vm610, %v1744, %v1746
      %v1748 = vrot.slane %v1689, 1
      %v1749 = vsel %vm610, %v1746, %v1748
      %v1750 = vrot.slane %v1706, 1
      %v1751 = vsel %vm610, %v1748, %v1750
      %v1752 = vrot.slane %v1723, 1
      %v1753 = vsel %vm610, %v1750, %v1752
      %v1754 = vrot.slane %v1740, 1
      %v1755 = vsel %vm610, %v1752, %v1754
      %v1764 = vsel %vm610, %v1754, 0.0
      %v1765 = vadd.s32 %v624, 32
      %v1766 = vadd.s32 %v624, 40
      %v1767 = vadd.s32 %v624, 48
      %v1768 = vadd.s32 %v624, 56
      %vm1769 = vcmp.lt.s32.totalorder %v624, 0
      %v1770 = vsub.s32 0, %v624
      %v1771 = vsel %vm1769, %v1770, %v624
      %v1772 = vshrl.u32 %v1771, 3
      %v1773 = vand.u32 %v1771, 7
      %v1774 = vsub.s32 0, %v1773
      %v1775 = vsel %vm1769, %v1774, %v1773
      %vm1776 = vcmp.lt.s32.totalorder %v625, 0
      %v1777 = vsub.s32 0, %v625
      %v1778 = vsel %vm1776, %v1777, %v625
      %v1779 = vshrl.u32 %v1778, 3
      %v1780 = vand.u32 %v1778, 7
      %v1781 = vsub.s32 0, %v1780
      %v1782 = vsel %vm1776, %v1781, %v1780
      %vm1783 = vcmp.lt.s32.totalorder %v626, 0
      %v1784 = vsub.s32 0, %v626
      %v1785 = vsel %vm1783, %v1784, %v626
      %v1786 = vshrl.u32 %v1785, 3
      %v1787 = vand.u32 %v1785, 7
      %v1788 = vsub.s32 0, %v1787
      %v1789 = vsel %vm1783, %v1788, %v1787
      %vm1790 = vcmp.lt.s32.totalorder %v627, 0
      %v1791 = vsub.s32 0, %v627
      %v1792 = vsel %vm1790, %v1791, %v627
      %v1793 = vshrl.u32 %v1792, 3
      %v1794 = vand.u32 %v1792, 7
      %v1795 = vsub.s32 0, %v1794
      %v1796 = vsel %vm1790, %v1795, %v1794
      %vm1797 = vcmp.lt.s32.totalorder %v1765, 0
      %v1798 = vsub.s32 0, %v1765
      %v1799 = vsel %vm1797, %v1798, %v1765
      %v1800 = vshrl.u32 %v1799, 3
      %v1801 = vand.u32 %v1799, 7
      %v1802 = vsub.s32 0, %v1801
      %v1803 = vsel %vm1797, %v1802, %v1801
      %vm1804 = vcmp.lt.s32.totalorder %v1766, 0
      %v1805 = vsub.s32 0, %v1766
      %v1806 = vsel %vm1804, %v1805, %v1766
      %v1807 = vshrl.u32 %v1806, 3
      %v1808 = vand.u32 %v1806, 7
      %v1809 = vsub.s32 0, %v1808
      %v1810 = vsel %vm1804, %v1809, %v1808
      %vm1811 = vcmp.lt.s32.totalorder %v1767, 0
      %v1812 = vsub.s32 0, %v1767
      %v1813 = vsel %vm1811, %v1812, %v1767
      %v1814 = vshrl.u32 %v1813, 3
      %v1815 = vand.u32 %v1813, 7
      %v1816 = vsub.s32 0, %v1815
      %v1817 = vsel %vm1811, %v1816, %v1815
      %vm1818 = vcmp.lt.s32.totalorder %v1768, 0
      %v1819 = vsub.s32 0, %v1768
      %v1820 = vsel %vm1818, %v1819, %v1768
      %v1821 = vshrl.u32 %v1820, 3
      %v1822 = vand.u32 %v1820, 7
      %v1823 = vsub.s32 0, %v1822
      %v1824 = vsel %vm1818, %v1823, %v1822
      %vm1825 = vcmp.ne.s32.totalorder %v1775, 0
      %vm1826 = vcmp.ne.s32.totalorder %v1782, 0
      %vm1827 = vcmp.ne.s32.totalorder %v1789, 0
      %vm1828 = vcmp.ne.s32.totalorder %v1796, 0
      %vm1829 = vcmp.ne.s32.totalorder %v1803, 0
      %vm1830 = vcmp.ne.s32.totalorder %v1810, 0
      %vm1831 = vcmp.ne.s32.totalorder %v1817, 0
      %vm1832 = vcmp.ne.s32.totalorder %v1824, 0
      %vm1833 = vcmp.lt.s32.totalorder %v1775, 0
      %vm1834 = vcmp.lt.s32.totalorder %v1782, 0
      %vm1835 = vcmp.lt.s32.totalorder %v1789, 0
      %vm1836 = vcmp.lt.s32.totalorder %v1796, 0
      %vm1837 = vcmp.lt.s32.totalorder %v1803, 0
      %vm1838 = vcmp.lt.s32.totalorder %v1810, 0
      %vm1839 = vcmp.lt.s32.totalorder %v1817, 0
      %vm1840 = vcmp.lt.s32.totalorder %v1824, 0
      %vm1841 = vmand %vm1833, %vm1825
      %vm1842 = vmand %vm1834, %vm1826
      %vm1843 = vmand %vm1835, %vm1827
      %vm1844 = vmand %vm1836, %vm1828
      %vm1845 = vmand %vm1837, %vm1829
      %vm1846 = vmand %vm1838, %vm1830
      %vm1847 = vmand %vm1839, %vm1831
      %vm1848 = vmand %vm1840, %vm1832
      %v1849 = vadd.s32 %v1775, 8
      %v1850 = vadd.s32 %v1782, 8
      %v1851 = vadd.s32 %v1789, 8
      %v1852 = vadd.s32 %v1796, 8
      %v1853 = vadd.s32 %v1803, 8
      %v1854 = vadd.s32 %v1810, 8
      %v1855 = vadd.s32 %v1817, 8
      %v1856 = vadd.s32 %v1824, 8
      %v1857 = vsel %vm1841, %v1849, %v1775
      %v1858 = vsel %vm1842, %v1850, %v1782
      %v1859 = vsel %vm1843, %v1851, %v1789
      %v1860 = vsel %vm1844, %v1852, %v1796
      %v1861 = vsel %vm1845, %v1853, %v1803
      %v1862 = vsel %vm1846, %v1854, %v1810
      %v1863 = vsel %vm1847, %v1855, %v1817
      %v1864 = vsel %vm1848, %v1856, %v1824
      %vm1865 = vcmp.eq.s32.totalorder %v1857, 7
      %vm1866 = vcmp.eq.s32.totalorder %v1858, 7
      %vm1867 = vcmp.eq.s32.totalorder %v1859, 7
      %vm1868 = vcmp.eq.s32.totalorder %v1860, 7
      %vm1869 = vcmp.eq.s32.totalorder %v1861, 7
      %vm1870 = vcmp.eq.s32.totalorder %v1862, 7
      %vm1871 = vcmp.eq.s32.totalorder %v1863, 7
      %vm1872 = vcmp.eq.s32.totalorder %v1864, 7
      %v1873 = vsel %vm1865, 0.0, %v1743
      %v1874 = vsel %vm1866, 0.0, %v1745
      %v1875 = vsel %vm1867, 0.0, %v1747
      %v1876 = vsel %vm1868, 0.0, %v1749
      %v1877 = vsel %vm1869, 0.0, %v1751
      %v1878 = vsel %vm1870, 0.0, %v1753
      %v1879 = vsel %vm1871, 0.0, %v1755
      %v1880 = vsel %vm1872, 0.0, %v1764
      %1889 = vmatprep.subr.mxu0 %v1524
      %1890 = vmatpush1.msra.mxu0 %v1523
      %1891 = vmatprep.subr.mxu0 %v1526
      %1892 = vmatpush1.msra.mxu0 %v1525
      %1893 = vmatprep.subr.mxu0 %v1528
      %1894 = vmatpush1.msra.mxu0 %v1527
      %1895 = vmatprep.subr.mxu0 %v1530
      %1896 = vmatpush1.msra.mxu0 %v1529
      %1897 = vmatprep.subr.mxu0 %v1532
      %1898 = vmatpush1.msra.mxu0 %v1531
      %1899 = vmatprep.subr.mxu0 %v1534
      %1900 = vmatpush1.msra.mxu0 %v1533
      %1901 = vmatprep.subr.mxu0 %v1536
      %1902 = vmatpush1.msra.mxu0 %v1535
      %1903 = vmatprep.subr.mxu0 %v1538
      %1904 = vmatpush1.msra.mxu0 %v1537
      %1905 = vmatprep.subr.mxu0 %v1540
      %1906 = vmatpush1.msra.mxu0 %v1539
      %1907 = vmatprep.subr.mxu0 %v1542
      %1908 = vmatpush1.msra.mxu0 %v1541
      %1909 = vmatprep.subr.mxu0 %v1544
      %1910 = vmatpush1.msra.mxu0 %v1543
      %1911 = vmatprep.subr.mxu0 %v1546
      %1912 = vmatpush1.msra.mxu0 %v1545
      %1913 = vmatprep.subr.mxu0 %v1548
      %1914 = vmatpush1.msra.mxu0 %v1547
      %1915 = vmatprep.subr.mxu0 %v1550
      %1916 = vmatpush1.msra.mxu0 %v1549
      %1917 = vmatprep.subr.mxu0 %v1552
      %1918 = vmatpush1.msra.mxu0 %v1551
      %1919 = vmatprep.subr.mxu0 %v1554
      %1920 = vmatpush1.msra.mxu0 %v1553
      %1921 = vmatprep.subr.mxu0 0.0
      %1922 = vmatpush1.msra.mxu0 0.0
      %1923 = vmatprep.subr.mxu0 0.0
      %1924 = vmatpush1.msra.mxu0 0.0
      %1925 = vmatprep.subr.mxu0 0.0
      %1926 = vmatpush1.msra.mxu0 0.0
      %1927 = vmatprep.subr.mxu0 0.0
      %1928 = vmatpush1.msra.mxu0 0.0
      %1929 = vmatprep.subr.mxu0 0.0
      %1930 = vmatpush1.msra.mxu0 0.0
      %1931 = vmatprep.subr.mxu0 0.0
      %1932 = vmatpush1.msra.mxu0 0.0
      %1933 = vmatprep.subr.mxu0 0.0
      %1934 = vmatpush1.msra.mxu0 0.0
      %1935 = vmatprep.subr.mxu0 0.0
      %1936 = vmatpush1.msra.mxu0 0.0
      %1937 = vmatprep.subr.mxu0 0.0
      %1938 = vmatpush1.msra.mxu0 0.0
      %1939 = vmatprep.subr.mxu0 0.0
      %1940 = vmatpush1.msra.mxu0 0.0
      %1941 = vmatprep.subr.mxu0 0.0
      %1942 = vmatpush1.msra.mxu0 0.0
      %1943 = vmatprep.subr.mxu0 0.0
      %1944 = vmatpush1.msra.mxu0 0.0
      %1945 = vmatprep.subr.mxu0 0.0
      %1946 = vmatpush1.msra.mxu0 0.0
      %1947 = vmatprep.subr.mxu0 0.0
      %1948 = vmatpush1.msra.mxu0 0.0
      %1949 = vmatprep.subr.mxu0 0.0
      %1950 = vmatpush1.msra.mxu0 0.0
      %1951 = vmatprep.subr.mxu0 0.0
      %1952 = vmatpush1.msra.mxu0 0.0
      %1953 = vmatprep.mubr.f32.mxu0 0.0
      %1954 = vmatmul.mubr.f32.gmra.mrb[0].mxu0 %v1621
      %v1955 = vpop.f32.mrb[0].mxu0
      %v1956 = vadd.f32 0.0, %v1955
      %v1957 = vpop.f32.mrb[0].mxu0
      %v1958 = vadd.f32 0.0, %v1957
      %1959 = vmatprep.mubr.f32.mxu0 0.0
      %1960 = vmatmul.mubr.f32.gmra.mrb[0].mxu0 %v1638
      %v1961 = vpop.f32.mrb[0].mxu0
      %v1962 = vadd.f32 0.0, %v1961
      %v1963 = vpop.f32.mrb[0].mxu0
      %v1964 = vadd.f32 0.0, %v1963
      %1965 = vmatprep.mubr.f32.mxu0 0.0
      %1966 = vmatmul.mubr.f32.gmra.mrb[0].mxu0 %v1655
      %v1967 = vpop.f32.mrb[0].mxu0
      %v1968 = vadd.f32 0.0, %v1967
      %v1969 = vpop.f32.mrb[0].mxu0
      %v1970 = vadd.f32 0.0, %v1969
      %1971 = vmatprep.mubr.f32.mxu0 0.0
      %1972 = vmatmul.mubr.f32.gmra.mrb[0].mxu0 %v1672
      %v1973 = vpop.f32.mrb[0].mxu0
      %v1974 = vadd.f32 0.0, %v1973
      %v1975 = vpop.f32.mrb[0].mxu0
      %v1976 = vadd.f32 0.0, %v1975
      %1977 = vmatprep.mubr.f32.mxu0 0.0
      %1978 = vmatmul.mubr.f32.gmra.mrb[0].mxu0 %v1689
      %v1979 = vpop.f32.mrb[0].mxu0
      %v1980 = vadd.f32 0.0, %v1979
      %v1981 = vpop.f32.mrb[0].mxu0
      %v1982 = vadd.f32 0.0, %v1981
      %1983 = vmatprep.mubr.f32.mxu0 0.0
      %1984 = vmatmul.mubr.f32.gmra.mrb[0].mxu0 %v1706
      %v1985 = vpop.f32.mrb[0].mxu0
      %v1986 = vadd.f32 0.0, %v1985
      %v1987 = vpop.f32.mrb[0].mxu0
      %v1988 = vadd.f32 0.0, %v1987
      %1989 = vmatprep.mubr.f32.mxu0 0.0
      %1990 = vmatmul.mubr.f32.gmra.mrb[0].mxu0 %v1723
      %v1991 = vpop.f32.mrb[0].mxu0
      %v1992 = vadd.f32 0.0, %v1991
      %v1993 = vpop.f32.mrb[0].mxu0
      %v1994 = vadd.f32 0.0, %v1993
      %1995 = vmatprep.mubr.f32.mxu0 0.0
      %1996 = vmatmul.mubr.f32.gmra.mrb[0].mxu0 %v1740
      %v1997 = vpop.f32.mrb[0].mxu0
      %v1998 = vadd.f32 0.0, %v1997
      %v1999 = vpop.f32.mrb[0].mxu0
      %v2000 = vadd.f32 0.0, %v1999
      %2001 = vdwg.mxu0
      %2002 = vmatprep.subr.mxu0 0.0
      %2003 = vmatpush1.msra.mxu0 %v1555
      %2004 = vmatprep.subr.mxu0 0.0
      %2005 = vmatpush1.msra.mxu0 %v1556
      %2006 = vmatprep.subr.mxu0 0.0
      %2007 = vmatpush1.msra.mxu0 %v1557
      %2008 = vmatprep.subr.mxu0 0.0
      %2009 = vmatpush1.msra.mxu0 %v1558
      %2010 = vmatprep.subr.mxu0 0.0
      %2011 = vmatpush1.msra.mxu0 %v1559
      %2012 = vmatprep.subr.mxu0 0.0
      %2013 = vmatpush1.msra.mxu0 %v1560
      %2014 = vmatprep.subr.mxu0 0.0
      %2015 = vmatpush1.msra.mxu0 %v1561
      %2016 = vmatprep.subr.mxu0 0.0
      %2017 = vmatpush1.msra.mxu0 %v1562
      %2018 = vmatprep.subr.mxu0 0.0
      %2019 = vmatpush1.msra.mxu0 %v1563
      %2020 = vmatprep.subr.mxu0 0.0
      %2021 = vmatpush1.msra.mxu0 %v1564
      %2022 = vmatprep.subr.mxu0 0.0
      %2023 = vmatpush1.msra.mxu0 %v1565
      %2024 = vmatprep.subr.mxu0 0.0
      %2025 = vmatpush1.msra.mxu0 %v1566
      %2026 = vmatprep.subr.mxu0 0.0
      %2027 = vmatpush1.msra.mxu0 %v1567
      %2028 = vmatprep.subr.mxu0 0.0
      %2029 = vmatpush1.msra.mxu0 %v1568
      %2030 = vmatprep.subr.mxu0 0.0
      %2031 = vmatpush1.msra.mxu0 %v1569
      %2032 = vmatprep.subr.mxu0 0.0
      %2033 = vmatpush1.msra.mxu0 %v1570
      %2034 = vmatprep.subr.mxu0 0.0
      %2035 = vmatpush1.msra.mxu0 0.0
      %2036 = vmatprep.subr.mxu0 0.0
      %2037 = vmatpush1.msra.mxu0 0.0
      %2038 = vmatprep.subr.mxu0 0.0
      %2039 = vmatpush1.msra.mxu0 0.0
      %2040 = vmatprep.subr.mxu0 0.0
      %2041 = vmatpush1.msra.mxu0 0.0
      %2042 = vmatprep.subr.mxu0 0.0
      %2043 = vmatpush1.msra.mxu0 0.0
      %2044 = vmatprep.subr.mxu0 0.0
      %2045 = vmatpush1.msra.mxu0 0.0
      %2046 = vmatprep.subr.mxu0 0.0
      %2047 = vmatpush1.msra.mxu0 0.0
      %2048 = vmatprep.subr.mxu0 0.0
      %2049 = vmatpush1.msra.mxu0 0.0
      %2050 = vmatprep.subr.mxu0 0.0
      %2051 = vmatpush1.msra.mxu0 0.0
      %2052 = vmatprep.subr.mxu0 0.0
      %2053 = vmatpush1.msra.mxu0 0.0
      %2054 = vmatprep.subr.mxu0 0.0
      %2055 = vmatpush1.msra.mxu0 0.0
      %2056 = vmatprep.subr.mxu0 0.0
      %2057 = vmatpush1.msra.mxu0 0.0
      %2058 = vmatprep.subr.mxu0 0.0
      %2059 = vmatpush1.msra.mxu0 0.0
      %2060 = vmatprep.subr.mxu0 0.0
      %2061 = vmatpush1.msra.mxu0 0.0
      %2062 = vmatprep.subr.mxu0 0.0
      %2063 = vmatpush1.msra.mxu0 0.0
      %2064 = vmatprep.subr.mxu0 0.0
      %2065 = vmatpush1.msra.mxu0 0.0
      %2066 = vmatprep.mubr.f32.mxu0 0.0
      %2067 = vmatmul.mubr.f32.gmra.mrb[0].mxu0 %v1873
      %v2068 = vpop.f32.mrb[0].mxu0
      %v2069 = vadd.f32 0.0, %v2068
      %v2070 = vpop.f32.mrb[0].mxu0
      %2071 = vmatprep.mubr.f32.mxu0 0.0
      %2072 = vmatmul.mubr.f32.gmra.mrb[0].mxu0 %v1874
      %v2073 = vpop.f32.mrb[0].mxu0
      %v2074 = vadd.f32 0.0, %v2073
      %v2075 = vpop.f32.mrb[0].mxu0
      %2076 = vmatprep.mubr.f32.mxu0 0.0
      %2077 = vmatmul.mubr.f32.gmra.mrb[0].mxu0 %v1875
      %v2078 = vpop.f32.mrb[0].mxu0
      %v2079 = vadd.f32 0.0, %v2078
      %v2080 = vpop.f32.mrb[0].mxu0
      %2081 = vmatprep.mubr.f32.mxu0 0.0
      %2082 = vmatmul.mubr.f32.gmra.mrb[0].mxu0 %v1876
      %v2083 = vpop.f32.mrb[0].mxu0
      %v2084 = vadd.f32 0.0, %v2083
      %v2085 = vpop.f32.mrb[0].mxu0
      %2086 = vmatprep.mubr.f32.mxu0 0.0
      %2087 = vmatmul.mubr.f32.gmra.mrb[0].mxu0 %v1877
      %v2088 = vpop.f32.mrb[0].mxu0
      %v2089 = vadd.f32 0.0, %v2088
      %v2090 = vpop.f32.mrb[0].mxu0
      %2091 = vmatprep.mubr.f32.mxu0 0.0
      %2092 = vmatmul.mubr.f32.gmra.mrb[0].mxu0 %v1878
      %v2093 = vpop.f32.mrb[0].mxu0
      %v2094 = vadd.f32 0.0, %v2093
      %v2095 = vpop.f32.mrb[0].mxu0
      %2096 = vmatprep.mubr.f32.mxu0 0.0
      %2097 = vmatmul.mubr.f32.gmra.mrb[0].mxu0 %v1879
      %v2098 = vpop.f32.mrb[0].mxu0
      %v2099 = vadd.f32 0.0, %v2098
      %v2100 = vpop.f32.mrb[0].mxu0
      %2101 = vmatprep.mubr.f32.mxu0 0.0
      %2102 = vmatmul.mubr.f32.gmra.mrb[0].mxu0 %v1880
      %v2103 = vpop.f32.mrb[0].mxu0
      %v2104 = vadd.f32 0.0, %v2103
      %v2105 = vpop.f32.mrb[0].mxu0
      %2106 = vdwg.mxu0
      %v2108 = vlaneseq
      %v2109 = vshrl.u32 %v2108, 7
      %v2110 = vsub.s32 0, %v2109
      %v2111 = vrot.slane %v1571, %v2110
      %v2113 = vmul.f32 %v1956, %v2111
      %v2114 = vmul.f32 %v1962, %v2111
      %v2115 = vmul.f32 %v1968, %v2111
      %v2116 = vmul.f32 %v1974, %v2111
      %v2117 = vmul.f32 %v1980, %v2111
      %v2118 = vmul.f32 %v1986, %v2111
      %v2119 = vmul.f32 %v1992, %v2111
      %v2120 = vmul.f32 %v1998, %v2111
      %v2122 = vlaneseq
      %v2123 = vshrl.u32 %v2122, 7
      %v2124 = vsub.s32 0, %v2123
      %v2125 = vrot.slane %v1572, %v2124
      %v2127 = vadd.f32 %v2113, %v2125
      %v2128 = vadd.f32 %v2114, %v2125
      %v2129 = vadd.f32 %v2115, %v2125
      %v2130 = vadd.f32 %v2116, %v2125
      %v2131 = vadd.f32 %v2117, %v2125
      %v2132 = vadd.f32 %v2118, %v2125
      %v2133 = vadd.f32 %v2119, %v2125
      %v2134 = vadd.f32 %v2120, %v2125
      %v2135 = vadd.f32 %v1958, %v2069
      %v2136 = vadd.f32 %v1964, %v2074
      %v2137 = vadd.f32 %v1970, %v2079
      %v2138 = vadd.f32 %v1976, %v2084
      %v2139 = vadd.f32 %v1982, %v2089
      %v2140 = vadd.f32 %v1988, %v2094
      %v2141 = vadd.f32 %v1994, %v2099
      %v2142 = vadd.f32 %v2000, %v2104
      %v2143 = vmul.f32 %v2135, %v2111
      %v2144 = vmul.f32 %v2136, %v2111
      %v2145 = vmul.f32 %v2137, %v2111
      %v2146 = vmul.f32 %v2138, %v2111
      %v2147 = vmul.f32 %v2139, %v2111
      %v2148 = vmul.f32 %v2140, %v2111
      %v2149 = vmul.f32 %v2141, %v2111
      %v2150 = vmul.f32 %v2142, %v2111
      %v2151 = vadd.f32 %v2143, %v2125
      %v2152 = vadd.f32 %v2144, %v2125
      %v2153 = vadd.f32 %v2145, %v2125
      %v2154 = vadd.f32 %v2146, %v2125
      %v2155 = vadd.f32 %v2147, %v2125
      %v2156 = vadd.f32 %v2148, %v2125
      %v2157 = vadd.f32 %v2149, %v2125
      %v2158 = vadd.f32 %v2150, %v2125
      %v2159 = vmax.f32 %v2127, 0.0
      %v2160 = vmax.f32 %v2128, 0.0
      %v2161 = vmax.f32 %v2129, 0.0
      %v2162 = vmax.f32 %v2130, 0.0
      %v2163 = vmax.f32 %v2131, 0.0
      %v2164 = vmax.f32 %v2132, 0.0
      %v2165 = vmax.f32 %v2133, 0.0
      %v2166 = vmax.f32 %v2134, 0.0
      %v2167 = vmax.f32 %v2151, 0.0
      %v2168 = vmax.f32 %v2152, 0.0
      %v2169 = vmax.f32 %v2153, 0.0
      %v2170 = vmax.f32 %v2154, 0.0
      %v2171 = vmax.f32 %v2155, 0.0
      %v2172 = vmax.f32 %v2156, 0.0
      %v2173 = vmax.f32 %v2157, 0.0
      %v2174 = vmax.f32 %v2158, 0.0
      %v2183 = vcombine.high %v2159, %v2159
      %v2185 = vunpack.c.l.s4 1966171168
      %v2186 = vunpack.c.0.s8 %v2185
      %v2187 = vlaneseq
      %v2188 = vshrl.u32 %v2187, 7
      %v2189 = vsub.s32 %v2186, %v2188
      %v2190 = vrot.slane %v2159, %v2189
      %v2192 = vunpack.c.l.s4 1966171168
      %v2193 = vunpack.c.0.s8 %v2192
      %v2194 = vlaneseq
      %v2195 = vshrl.u32 %v2194, 7
      %v2196 = vsub.s32 %v2193, %v2195
      %v2197 = vrot.slane %v2183, %v2196
      %v2198 = vcombine.high %v2190, %v2190
      %v2199 = vcombine.high %v2197, %v2197
      %v2201 = vunpack.c.l.s4 1966171168
      %v2202 = vunpack.c.0.s8 %v2201
      %v2203 = vlaneseq
      %v2204 = vshrl.u32 %v2203, 7
      %v2205 = vsub.s32 %v2202, %v2204
      %v2206 = vrot.slane %v2190, %v2205
      %v2208 = vunpack.c.l.s4 1966171168
      %v2209 = vunpack.c.0.s8 %v2208
      %v2210 = vlaneseq
      %v2211 = vshrl.u32 %v2210, 7
      %v2212 = vsub.s32 %v2209, %v2211
      %v2213 = vrot.slane %v2197, %v2212
      %v2215 = vunpack.c.l.s4 1966171168
      %v2216 = vunpack.c.0.s8 %v2215
      %v2217 = vlaneseq
      %v2218 = vshrl.u32 %v2217, 7
      %v2219 = vsub.s32 %v2216, %v2218
      %v2220 = vrot.slane %v2198, %v2219
      %v2222 = vunpack.c.l.s4 1966171168
      %v2223 = vunpack.c.0.s8 %v2222
      %v2224 = vlaneseq
      %v2225 = vshrl.u32 %v2224, 7
      %v2226 = vsub.s32 %v2223, %v2225
      %v2227 = vrot.slane %v2199, %v2226
      %v2228 = vcombine.high %v2206, %v2206
      %v2229 = vcombine.high %v2213, %v2213
      %v2230 = vcombine.high %v2220, %v2220
      %v2231 = vcombine.high %v2227, %v2227
      %v2232 = vcombine.high %v2160, %v2160
      %v2234 = vunpack.c.l.s4 1966171168
      %v2235 = vunpack.c.0.s8 %v2234
      %v2236 = vlaneseq
      %v2237 = vshrl.u32 %v2236, 7
      %v2238 = vsub.s32 %v2235, %v2237
      %v2239 = vrot.slane %v2160, %v2238
      %v2241 = vunpack.c.l.s4 1966171168
      %v2242 = vunpack.c.0.s8 %v2241
      %v2243 = vlaneseq
      %v2244 = vshrl.u32 %v2243, 7
      %v2245 = vsub.s32 %v2242, %v2244
      %v2246 = vrot.slane %v2232, %v2245
      %v2247 = vcombine.high %v2239, %v2239
      %v2248 = vcombine.high %v2246, %v2246
      %v2250 = vunpack.c.l.s4 1966171168
      %v2251 = vunpack.c.0.s8 %v2250
      %v2252 = vlaneseq
      %v2253 = vshrl.u32 %v2252, 7
      %v2254 = vsub.s32 %v2251, %v2253
      %v2255 = vrot.slane %v2239, %v2254
      %v2257 = vunpack.c.l.s4 1966171168
      %v2258 = vunpack.c.0.s8 %v2257
      %v2259 = vlaneseq
      %v2260 = vshrl.u32 %v2259, 7
      %v2261 = vsub.s32 %v2258, %v2260
      %v2262 = vrot.slane %v2246, %v2261
      %v2264 = vunpack.c.l.s4 1966171168
      %v2265 = vunpack.c.0.s8 %v2264
      %v2266 = vlaneseq
      %v2267 = vshrl.u32 %v2266, 7
      %v2268 = vsub.s32 %v2265, %v2267
      %v2269 = vrot.slane %v2247, %v2268
      %v2271 = vunpack.c.l.s4 1966171168
      %v2272 = vunpack.c.0.s8 %v2271
      %v2273 = vlaneseq
      %v2274 = vshrl.u32 %v2273, 7
      %v2275 = vsub.s32 %v2272, %v2274
      %v2276 = vrot.slane %v2248, %v2275
      %v2277 = vcombine.high %v2255, %v2255
      %v2278 = vcombine.high %v2262, %v2262
      %v2279 = vcombine.high %v2269, %v2269
      %v2280 = vcombine.high %v2276, %v2276
      %v2281 = vcombine.high %v2161, %v2161
      %v2283 = vunpack.c.l.s4 1966171168
      %v2284 = vunpack.c.0.s8 %v2283
      %v2285 = vlaneseq
      %v2286 = vshrl.u32 %v2285, 7
      %v2287 = vsub.s32 %v2284, %v2286
      %v2288 = vrot.slane %v2161, %v2287
      %v2290 = vunpack.c.l.s4 1966171168
      %v2291 = vunpack.c.0.s8 %v2290
      %v2292 = vlaneseq
      %v2293 = vshrl.u32 %v2292, 7
      %v2294 = vsub.s32 %v2291, %v2293
      %v2295 = vrot.slane %v2281, %v2294
      %v2296 = vcombine.high %v2288, %v2288
      %v2297 = vcombine.high %v2295, %v2295
      %v2299 = vunpack.c.l.s4 1966171168
      %v2300 = vunpack.c.0.s8 %v2299
      %v2301 = vlaneseq
      %v2302 = vshrl.u32 %v2301, 7
      %v2303 = vsub.s32 %v2300, %v2302
      %v2304 = vrot.slane %v2288, %v2303
      %v2306 = vunpack.c.l.s4 1966171168
      %v2307 = vunpack.c.0.s8 %v2306
      %v2308 = vlaneseq
      %v2309 = vshrl.u32 %v2308, 7
      %v2310 = vsub.s32 %v2307, %v2309
      %v2311 = vrot.slane %v2295, %v2310
      %v2313 = vunpack.c.l.s4 1966171168
      %v2314 = vunpack.c.0.s8 %v2313
      %v2315 = vlaneseq
      %v2316 = vshrl.u32 %v2315, 7
      %v2317 = vsub.s32 %v2314, %v2316
      %v2318 = vrot.slane %v2296, %v2317
      %v2320 = vunpack.c.l.s4 1966171168
      %v2321 = vunpack.c.0.s8 %v2320
      %v2322 = vlaneseq
      %v2323 = vshrl.u32 %v2322, 7
      %v2324 = vsub.s32 %v2321, %v2323
      %v2325 = vrot.slane %v2297, %v2324
      %v2326 = vcombine.high %v2304, %v2304
      %v2327 = vcombine.high %v2311, %v2311
      %v2328 = vcombine.high %v2318, %v2318
      %v2329 = vcombine.high %v2325, %v2325
      %v2330 = vcombine.high %v2162, %v2162
      %v2332 = vunpack.c.l.s4 1966171168
      %v2333 = vunpack.c.0.s8 %v2332
      %v2334 = vlaneseq
      %v2335 = vshrl.u32 %v2334, 7
      %v2336 = vsub.s32 %v2333, %v2335
      %v2337 = vrot.slane %v2162, %v2336
      %v2339 = vunpack.c.l.s4 1966171168
      %v2340 = vunpack.c.0.s8 %v2339
      %v2341 = vlaneseq
      %v2342 = vshrl.u32 %v2341, 7
      %v2343 = vsub.s32 %v2340, %v2342
      %v2344 = vrot.slane %v2330, %v2343
      %v2345 = vcombine.high %v2337, %v2337
      %v2346 = vcombine.high %v2344, %v2344
      %v2348 = vunpack.c.l.s4 1966171168
      %v2349 = vunpack.c.0.s8 %v2348
      %v2350 = vlaneseq
      %v2351 = vshrl.u32 %v2350, 7
      %v2352 = vsub.s32 %v2349, %v2351
      %v2353 = vrot.slane %v2337, %v2352
      %v2355 = vunpack.c.l.s4 1966171168
      %v2356 = vunpack.c.0.s8 %v2355
      %v2357 = vlaneseq
      %v2358 = vshrl.u32 %v2357, 7
      %v2359 = vsub.s32 %v2356, %v2358
      %v2360 = vrot.slane %v2344, %v2359
      %v2362 = vunpack.c.l.s4 1966171168
      %v2363 = vunpack.c.0.s8 %v2362
      %v2364 = vlaneseq
      %v2365 = vshrl.u32 %v2364, 7
      %v2366 = vsub.s32 %v2363, %v2365
      %v2367 = vrot.slane %v2345, %v2366
      %v2369 = vunpack.c.l.s4 1966171168
      %v2370 = vunpack.c.0.s8 %v2369
      %v2371 = vlaneseq
      %v2372 = vshrl.u32 %v2371, 7
      %v2373 = vsub.s32 %v2370, %v2372
      %v2374 = vrot.slane %v2346, %v2373
      %v2375 = vcombine.high %v2353, %v2353
      %v2376 = vcombine.high %v2360, %v2360
      %v2377 = vcombine.high %v2367, %v2367
      %v2378 = vcombine.high %v2374, %v2374
      %v2379 = vcombine.high %v2163, %v2163
      %v2381 = vunpack.c.l.s4 1966171168
      %v2382 = vunpack.c.0.s8 %v2381
      %v2383 = vlaneseq
      %v2384 = vshrl.u32 %v2383, 7
      %v2385 = vsub.s32 %v2382, %v2384
      %v2386 = vrot.slane %v2163, %v2385
      %v2388 = vunpack.c.l.s4 1966171168
      %v2389 = vunpack.c.0.s8 %v2388
      %v2390 = vlaneseq
      %v2391 = vshrl.u32 %v2390, 7
      %v2392 = vsub.s32 %v2389, %v2391
      %v2393 = vrot.slane %v2379, %v2392
      %v2394 = vcombine.high %v2386, %v2386
      %v2395 = vcombine.high %v2393, %v2393
      %v2397 = vunpack.c.l.s4 1966171168
      %v2398 = vunpack.c.0.s8 %v2397
      %v2399 = vlaneseq
      %v2400 = vshrl.u32 %v2399, 7
      %v2401 = vsub.s32 %v2398, %v2400
      %v2402 = vrot.slane %v2386, %v2401
      %v2404 = vunpack.c.l.s4 1966171168
      %v2405 = vunpack.c.0.s8 %v2404
      %v2406 = vlaneseq
      %v2407 = vshrl.u32 %v2406, 7
      %v2408 = vsub.s32 %v2405, %v2407
      %v2409 = vrot.slane %v2393, %v2408
      %v2411 = vunpack.c.l.s4 1966171168
      %v2412 = vunpack.c.0.s8 %v2411
      %v2413 = vlaneseq
      %v2414 = vshrl.u32 %v2413, 7
      %v2415 = vsub.s32 %v2412, %v2414
      %v2416 = vrot.slane %v2394, %v2415
      %v2418 = vunpack.c.l.s4 1966171168
      %v2419 = vunpack.c.0.s8 %v2418
      %v2420 = vlaneseq
      %v2421 = vshrl.u32 %v2420, 7
      %v2422 = vsub.s32 %v2419, %v2421
      %v2423 = vrot.slane %v2395, %v2422
      %v2424 = vcombine.high %v2402, %v2402
      %v2425 = vcombine.high %v2409, %v2409
      %v2426 = vcombine.high %v2416, %v2416
      %v2427 = vcombine.high %v2423, %v2423
      %v2428 = vcombine.high %v2164, %v2164
      %v2430 = vunpack.c.l.s4 1966171168
      %v2431 = vunpack.c.0.s8 %v2430
      %v2432 = vlaneseq
      %v2433 = vshrl.u32 %v2432, 7
      %v2434 = vsub.s32 %v2431, %v2433
      %v2435 = vrot.slane %v2164, %v2434
      %v2437 = vunpack.c.l.s4 1966171168
      %v2438 = vunpack.c.0.s8 %v2437
      %v2439 = vlaneseq
      %v2440 = vshrl.u32 %v2439, 7
      %v2441 = vsub.s32 %v2438, %v2440
      %v2442 = vrot.slane %v2428, %v2441
      %v2443 = vcombine.high %v2435, %v2435
      %v2444 = vcombine.high %v2442, %v2442
      %v2446 = vunpack.c.l.s4 1966171168
      %v2447 = vunpack.c.0.s8 %v2446
      %v2448 = vlaneseq
      %v2449 = vshrl.u32 %v2448, 7
      %v2450 = vsub.s32 %v2447, %v2449
      %v2451 = vrot.slane %v2435, %v2450
      %v2453 = vunpack.c.l.s4 1966171168
      %v2454 = vunpack.c.0.s8 %v2453
      %v2455 = vlaneseq
      %v2456 = vshrl.u32 %v2455, 7
      %v2457 = vsub.s32 %v2454, %v2456
      %v2458 = vrot.slane %v2442, %v2457
      %v2460 = vunpack.c.l.s4 1966171168
      %v2461 = vunpack.c.0.s8 %v2460
      %v2462 = vlaneseq
      %v2463 = vshrl.u32 %v2462, 7
      %v2464 = vsub.s32 %v2461, %v2463
      %v2465 = vrot.slane %v2443, %v2464
      %v2467 = vunpack.c.l.s4 1966171168
      %v2468 = vunpack.c.0.s8 %v2467
      %v2469 = vlaneseq
      %v2470 = vshrl.u32 %v2469, 7
      %v2471 = vsub.s32 %v2468, %v2470
      %v2472 = vrot.slane %v2444, %v2471
      %v2473 = vcombine.high %v2451, %v2451
      %v2474 = vcombine.high %v2458, %v2458
      %v2475 = vcombine.high %v2465, %v2465
      %v2476 = vcombine.high %v2472, %v2472
      %v2477 = vcombine.high %v2165, %v2165
      %v2479 = vunpack.c.l.s4 1966171168
      %v2480 = vunpack.c.0.s8 %v2479
      %v2481 = vlaneseq
      %v2482 = vshrl.u32 %v2481, 7
      %v2483 = vsub.s32 %v2480, %v2482
      %v2484 = vrot.slane %v2165, %v2483
      %v2486 = vunpack.c.l.s4 1966171168
      %v2487 = vunpack.c.0.s8 %v2486
      %v2488 = vlaneseq
      %v2489 = vshrl.u32 %v2488, 7
      %v2490 = vsub.s32 %v2487, %v2489
      %v2491 = vrot.slane %v2477, %v2490
      %v2492 = vcombine.high %v2484, %v2484
      %v2493 = vcombine.high %v2491, %v2491
      %v2495 = vunpack.c.l.s4 1966171168
      %v2496 = vunpack.c.0.s8 %v2495
      %v2497 = vlaneseq
      %v2498 = vshrl.u32 %v2497, 7
      %v2499 = vsub.s32 %v2496, %v2498
      %v2500 = vrot.slane %v2484, %v2499
      %v2502 = vunpack.c.l.s4 1966171168
      %v2503 = vunpack.c.0.s8 %v2502
      %v2504 = vlaneseq
      %v2505 = vshrl.u32 %v2504, 7
      %v2506 = vsub.s32 %v2503, %v2505
      %v2507 = vrot.slane %v2491, %v2506
      %v2509 = vunpack.c.l.s4 1966171168
      %v2510 = vunpack.c.0.s8 %v2509
      %v2511 = vlaneseq
      %v2512 = vshrl.u32 %v2511, 7
      %v2513 = vsub.s32 %v2510, %v2512
      %v2514 = vrot.slane %v2492, %v2513
      %v2516 = vunpack.c.l.s4 1966171168
      %v2517 = vunpack.c.0.s8 %v2516
      %v2518 = vlaneseq
      %v2519 = vshrl.u32 %v2518, 7
      %v2520 = vsub.s32 %v2517, %v2519
      %v2521 = vrot.slane %v2493, %v2520
      %v2522 = vcombine.high %v2500, %v2500
      %v2523 = vcombine.high %v2507, %v2507
      %v2524 = vcombine.high %v2514, %v2514
      %v2525 = vcombine.high %v2521, %v2521
      %v2526 = vcombine.high %v2166, %v2166
      %v2528 = vunpack.c.l.s4 1966171168
      %v2529 = vunpack.c.0.s8 %v2528
      %v2530 = vlaneseq
      %v2531 = vshrl.u32 %v2530, 7
      %v2532 = vsub.s32 %v2529, %v2531
      %v2533 = vrot.slane %v2166, %v2532
      %v2535 = vunpack.c.l.s4 1966171168
      %v2536 = vunpack.c.0.s8 %v2535
      %v2537 = vlaneseq
      %v2538 = vshrl.u32 %v2537, 7
      %v2539 = vsub.s32 %v2536, %v2538
      %v2540 = vrot.slane %v2526, %v2539
      %v2541 = vcombine.high %v2533, %v2533
      %v2542 = vcombine.high %v2540, %v2540
      %v2544 = vunpack.c.l.s4 1966171168
      %v2545 = vunpack.c.0.s8 %v2544
      %v2546 = vlaneseq
      %v2547 = vshrl.u32 %v2546, 7
      %v2548 = vsub.s32 %v2545, %v2547
      %v2549 = vrot.slane %v2533, %v2548
      %v2551 = vunpack.c.l.s4 1966171168
      %v2552 = vunpack.c.0.s8 %v2551
      %v2553 = vlaneseq
      %v2554 = vshrl.u32 %v2553, 7
      %v2555 = vsub.s32 %v2552, %v2554
      %v2556 = vrot.slane %v2540, %v2555
      %v2558 = vunpack.c.l.s4 1966171168
      %v2559 = vunpack.c.0.s8 %v2558
      %v2560 = vlaneseq
      %v2561 = vshrl.u32 %v2560, 7
      %v2562 = vsub.s32 %v2559, %v2561
      %v2563 = vrot.slane %v2541, %v2562
      %v2565 = vunpack.c.l.s4 1966171168
      %v2566 = vunpack.c.0.s8 %v2565
      %v2567 = vlaneseq
      %v2568 = vshrl.u32 %v2567, 7
      %v2569 = vsub.s32 %v2566, %v2568
      %v2570 = vrot.slane %v2542, %v2569
      %v2571 = vcombine.high %v2549, %v2549
      %v2572 = vcombine.high %v2556, %v2556
      %v2573 = vcombine.high %v2563, %v2563
      %v2574 = vcombine.high %v2570, %v2570
      %v2647 = vcombine.high %v2167, %v2167
      %v2649 = vunpack.c.l.s4 1966171168
      %v2650 = vunpack.c.0.s8 %v2649
      %v2651 = vlaneseq
      %v2652 = vshrl.u32 %v2651, 7
      %v2653 = vsub.s32 %v2650, %v2652
      %v2654 = vrot.slane %v2167, %v2653
      %v2656 = vunpack.c.l.s4 1966171168
      %v2657 = vunpack.c.0.s8 %v2656
      %v2658 = vlaneseq
      %v2659 = vshrl.u32 %v2658, 7
      %v2660 = vsub.s32 %v2657, %v2659
      %v2661 = vrot.slane %v2647, %v2660
      %v2662 = vcombine.high %v2654, %v2654
      %v2663 = vcombine.high %v2661, %v2661
      %v2665 = vunpack.c.l.s4 1966171168
      %v2666 = vunpack.c.0.s8 %v2665
      %v2667 = vlaneseq
      %v2668 = vshrl.u32 %v2667, 7
      %v2669 = vsub.s32 %v2666, %v2668
      %v2670 = vrot.slane %v2654, %v2669
      %v2672 = vunpack.c.l.s4 1966171168
      %v2673 = vunpack.c.0.s8 %v2672
      %v2674 = vlaneseq
      %v2675 = vshrl.u32 %v2674, 7
      %v2676 = vsub.s32 %v2673, %v2675
      %v2677 = vrot.slane %v2661, %v2676
      %v2679 = vunpack.c.l.s4 1966171168
      %v2680 = vunpack.c.0.s8 %v2679
      %v2681 = vlaneseq
      %v2682 = vshrl.u32 %v2681, 7
      %v2683 = vsub.s32 %v2680, %v2682
      %v2684 = vrot.slane %v2662, %v2683
      %v2686 = vunpack.c.l.s4 1966171168
      %v2687 = vunpack.c.0.s8 %v2686
      %v2688 = vlaneseq
      %v2689 = vshrl.u32 %v2688, 7
      %v2690 = vsub.s32 %v2687, %v2689
      %v2691 = vrot.slane %v2663, %v2690
      %v2692 = vcombine.high %v2670, %v2670
      %v2693 = vcombine.high %v2677, %v2677
      %v2694 = vcombine.high %v2684, %v2684
      %v2695 = vcombine.high %v2691, %v2691
      %v2696 = vcombine.high %v2168, %v2168
      %v2698 = vunpack.c.l.s4 1966171168
      %v2699 = vunpack.c.0.s8 %v2698
      %v2700 = vlaneseq
      %v2701 = vshrl.u32 %v2700, 7
      %v2702 = vsub.s32 %v2699, %v2701
      %v2703 = vrot.slane %v2168, %v2702
      %v2705 = vunpack.c.l.s4 1966171168
      %v2706 = vunpack.c.0.s8 %v2705
      %v2707 = vlaneseq
      %v2708 = vshrl.u32 %v2707, 7
      %v2709 = vsub.s32 %v2706, %v2708
      %v2710 = vrot.slane %v2696, %v2709
      %v2711 = vcombine.high %v2703, %v2703
      %v2712 = vcombine.high %v2710, %v2710
      %v2714 = vunpack.c.l.s4 1966171168
      %v2715 = vunpack.c.0.s8 %v2714
      %v2716 = vlaneseq
      %v2717 = vshrl.u32 %v2716, 7
      %v2718 = vsub.s32 %v2715, %v2717
      %v2719 = vrot.slane %v2703, %v2718
      %v2721 = vunpack.c.l.s4 1966171168
      %v2722 = vunpack.c.0.s8 %v2721
      %v2723 = vlaneseq
      %v2724 = vshrl.u32 %v2723, 7
      %v2725 = vsub.s32 %v2722, %v2724
      %v2726 = vrot.slane %v2710, %v2725
      %v2728 = vunpack.c.l.s4 1966171168
      %v2729 = vunpack.c.0.s8 %v2728
      %v2730 = vlaneseq
      %v2731 = vshrl.u32 %v2730, 7
      %v2732 = vsub.s32 %v2729, %v2731
      %v2733 = vrot.slane %v2711, %v2732
      %v2735 = vunpack.c.l.s4 1966171168
      %v2736 = vunpack.c.0.s8 %v2735
      %v2737 = vlaneseq
      %v2738 = vshrl.u32 %v2737, 7
      %v2739 = vsub.s32 %v2736, %v2738
      %v2740 = vrot.slane %v2712, %v2739
      %v2741 = vcombine.high %v2719, %v2719
      %v2742 = vcombine.high %v2726, %v2726
      %v2743 = vcombine.high %v2733, %v2733
      %v2744 = vcombine.high %v2740, %v2740
      %v2745 = vcombine.high %v2169, %v2169
      %v2747 = vunpack.c.l.s4 1966171168
      %v2748 = vunpack.c.0.s8 %v2747
      %v2749 = vlaneseq
      %v2750 = vshrl.u32 %v2749, 7
      %v2751 = vsub.s32 %v2748, %v2750
      %v2752 = vrot.slane %v2169, %v2751
      %v2754 = vunpack.c.l.s4 1966171168
      %v2755 = vunpack.c.0.s8 %v2754
      %v2756 = vlaneseq
      %v2757 = vshrl.u32 %v2756, 7
      %v2758 = vsub.s32 %v2755, %v2757
      %v2759 = vrot.slane %v2745, %v2758
      %v2760 = vcombine.high %v2752, %v2752
      %v2761 = vcombine.high %v2759, %v2759
      %v2763 = vunpack.c.l.s4 1966171168
      %v2764 = vunpack.c.0.s8 %v2763
      %v2765 = vlaneseq
      %v2766 = vshrl.u32 %v2765, 7
      %v2767 = vsub.s32 %v2764, %v2766
      %v2768 = vrot.slane %v2752, %v2767
      %v2770 = vunpack.c.l.s4 1966171168
      %v2771 = vunpack.c.0.s8 %v2770
      %v2772 = vlaneseq
      %v2773 = vshrl.u32 %v2772, 7
      %v2774 = vsub.s32 %v2771, %v2773
      %v2775 = vrot.slane %v2759, %v2774
      %v2777 = vunpack.c.l.s4 1966171168
      %v2778 = vunpack.c.0.s8 %v2777
      %v2779 = vlaneseq
      %v2780 = vshrl.u32 %v2779, 7
      %v2781 = vsub.s32 %v2778, %v2780
      %v2782 = vrot.slane %v2760, %v2781
      %v2784 = vunpack.c.l.s4 1966171168
      %v2785 = vunpack.c.0.s8 %v2784
      %v2786 = vlaneseq
      %v2787 = vshrl.u32 %v2786, 7
      %v2788 = vsub.s32 %v2785, %v2787
      %v2789 = vrot.slane %v2761, %v2788
      %v2790 = vcombine.high %v2768, %v2768
      %v2791 = vcombine.high %v2775, %v2775
      %v2792 = vcombine.high %v2782, %v2782
      %v2793 = vcombine.high %v2789, %v2789
      %v2794 = vcombine.high %v2170, %v2170
      %v2796 = vunpack.c.l.s4 1966171168
      %v2797 = vunpack.c.0.s8 %v2796
      %v2798 = vlaneseq
      %v2799 = vshrl.u32 %v2798, 7
      %v2800 = vsub.s32 %v2797, %v2799
      %v2801 = vrot.slane %v2170, %v2800
      %v2803 = vunpack.c.l.s4 1966171168
      %v2804 = vunpack.c.0.s8 %v2803
      %v2805 = vlaneseq
      %v2806 = vshrl.u32 %v2805, 7
      %v2807 = vsub.s32 %v2804, %v2806
      %v2808 = vrot.slane %v2794, %v2807
      %v2809 = vcombine.high %v2801, %v2801
      %v2810 = vcombine.high %v2808, %v2808
      %v2812 = vunpack.c.l.s4 1966171168
      %v2813 = vunpack.c.0.s8 %v2812
      %v2814 = vlaneseq
      %v2815 = vshrl.u32 %v2814, 7
      %v2816 = vsub.s32 %v2813, %v2815
      %v2817 = vrot.slane %v2801, %v2816
      %v2819 = vunpack.c.l.s4 1966171168
      %v2820 = vunpack.c.0.s8 %v2819
      %v2821 = vlaneseq
      %v2822 = vshrl.u32 %v2821, 7
      %v2823 = vsub.s32 %v2820, %v2822
      %v2824 = vrot.slane %v2808, %v2823
      %v2826 = vunpack.c.l.s4 1966171168
      %v2827 = vunpack.c.0.s8 %v2826
      %v2828 = vlaneseq
      %v2829 = vshrl.u32 %v2828, 7
      %v2830 = vsub.s32 %v2827, %v2829
      %v2831 = vrot.slane %v2809, %v2830
      %v2833 = vunpack.c.l.s4 1966171168
      %v2834 = vunpack.c.0.s8 %v2833
      %v2835 = vlaneseq
      %v2836 = vshrl.u32 %v2835, 7
      %v2837 = vsub.s32 %v2834, %v2836
      %v2838 = vrot.slane %v2810, %v2837
      %v2839 = vcombine.high %v2817, %v2817
      %v2840 = vcombine.high %v2824, %v2824
      %v2841 = vcombine.high %v2831, %v2831
      %v2842 = vcombine.high %v2838, %v2838
      %v2843 = vcombine.high %v2171, %v2171
      %v2845 = vunpack.c.l.s4 1966171168
      %v2846 = vunpack.c.0.s8 %v2845
      %v2847 = vlaneseq
      %v2848 = vshrl.u32 %v2847, 7
      %v2849 = vsub.s32 %v2846, %v2848
      %v2850 = vrot.slane %v2171, %v2849
      %v2852 = vunpack.c.l.s4 1966171168
      %v2853 = vunpack.c.0.s8 %v2852
      %v2854 = vlaneseq
      %v2855 = vshrl.u32 %v2854, 7
      %v2856 = vsub.s32 %v2853, %v2855
      %v2857 = vrot.slane %v2843, %v2856
      %v2858 = vcombine.high %v2850, %v2850
      %v2859 = vcombine.high %v2857, %v2857
      %v2861 = vunpack.c.l.s4 1966171168
      %v2862 = vunpack.c.0.s8 %v2861
      %v2863 = vlaneseq
      %v2864 = vshrl.u32 %v2863, 7
      %v2865 = vsub.s32 %v2862, %v2864
      %v2866 = vrot.slane %v2850, %v2865
      %v2868 = vunpack.c.l.s4 1966171168
      %v2869 = vunpack.c.0.s8 %v2868
      %v2870 = vlaneseq
      %v2871 = vshrl.u32 %v2870, 7
      %v2872 = vsub.s32 %v2869, %v2871
      %v2873 = vrot.slane %v2857, %v2872
      %v2875 = vunpack.c.l.s4 1966171168
      %v2876 = vunpack.c.0.s8 %v2875
      %v2877 = vlaneseq
      %v2878 = vshrl.u32 %v2877, 7
      %v2879 = vsub.s32 %v2876, %v2878
      %v2880 = vrot.slane %v2858, %v2879
      %v2882 = vunpack.c.l.s4 1966171168
      %v2883 = vunpack.c.0.s8 %v2882
      %v2884 = vlaneseq
      %v2885 = vshrl.u32 %v2884, 7
      %v2886 = vsub.s32 %v2883, %v2885
      %v2887 = vrot.slane %v2859, %v2886
      %v2888 = vcombine.high %v2866, %v2866
      %v2889 = vcombine.high %v2873, %v2873
      %v2890 = vcombine.high %v2880, %v2880
      %v2891 = vcombine.high %v2887, %v2887
      %v2892 = vcombine.high %v2172, %v2172
      %v2894 = vunpack.c.l.s4 1966171168
      %v2895 = vunpack.c.0.s8 %v2894
      %v2896 = vlaneseq
      %v2897 = vshrl.u32 %v2896, 7
      %v2898 = vsub.s32 %v2895, %v2897
      %v2899 = vrot.slane %v2172, %v2898
      %v2901 = vunpack.c.l.s4 1966171168
      %v2902 = vunpack.c.0.s8 %v2901
      %v2903 = vlaneseq
      %v2904 = vshrl.u32 %v2903, 7
      %v2905 = vsub.s32 %v2902, %v2904
      %v2906 = vrot.slane %v2892, %v2905
      %v2907 = vcombine.high %v2899, %v2899
      %v2908 = vcombine.high %v2906, %v2906
      %v2910 = vunpack.c.l.s4 1966171168
      %v2911 = vunpack.c.0.s8 %v2910
      %v2912 = vlaneseq
      %v2913 = vshrl.u32 %v2912, 7
      %v2914 = vsub.s32 %v2911, %v2913
      %v2915 = vrot.slane %v2899, %v2914
      %v2917 = vunpack.c.l.s4 1966171168
      %v2918 = vunpack.c.0.s8 %v2917
      %v2919 = vlaneseq
      %v2920 = vshrl.u32 %v2919, 7
      %v2921 = vsub.s32 %v2918, %v2920
      %v2922 = vrot.slane %v2906, %v2921
      %v2924 = vunpack.c.l.s4 1966171168
      %v2925 = vunpack.c.0.s8 %v2924
      %v2926 = vlaneseq
      %v2927 = vshrl.u32 %v2926, 7
      %v2928 = vsub.s32 %v2925, %v2927
      %v2929 = vrot.slane %v2907, %v2928
      %v2931 = vunpack.c.l.s4 1966171168
      %v2932 = vunpack.c.0.s8 %v2931
      %v2933 = vlaneseq
      %v2934 = vshrl.u32 %v2933, 7
      %v2935 = vsub.s32 %v2932, %v2934
      %v2936 = vrot.slane %v2908, %v2935
      %v2937 = vcombine.high %v2915, %v2915
      %v2938 = vcombine.high %v2922, %v2922
      %v2939 = vcombine.high %v2929, %v2929
      %v2940 = vcombine.high %v2936, %v2936
      %v2941 = vcombine.high %v2173, %v2173
      %v2943 = vunpack.c.l.s4 1966171168
      %v2944 = vunpack.c.0.s8 %v2943
      %v2945 = vlaneseq
      %v2946 = vshrl.u32 %v2945, 7
      %v2947 = vsub.s32 %v2944, %v2946
      %v2948 = vrot.slane %v2173, %v2947
      %v2950 = vunpack.c.l.s4 1966171168
      %v2951 = vunpack.c.0.s8 %v2950
      %v2952 = vlaneseq
      %v2953 = vshrl.u32 %v2952, 7
      %v2954 = vsub.s32 %v2951, %v2953
      %v2955 = vrot.slane %v2941, %v2954
      %v2956 = vcombine.high %v2948, %v2948
      %v2957 = vcombine.high %v2955, %v2955
      %v2959 = vunpack.c.l.s4 1966171168
      %v2960 = vunpack.c.0.s8 %v2959
      %v2961 = vlaneseq
      %v2962 = vshrl.u32 %v2961, 7
      %v2963 = vsub.s32 %v2960, %v2962
      %v2964 = vrot.slane %v2948, %v2963
      %v2966 = vunpack.c.l.s4 1966171168
      %v2967 = vunpack.c.0.s8 %v2966
      %v2968 = vlaneseq
      %v2969 = vshrl.u32 %v2968, 7
      %v2970 = vsub.s32 %v2967, %v2969
      %v2971 = vrot.slane %v2955, %v2970
      %v2973 = vunpack.c.l.s4 1966171168
      %v2974 = vunpack.c.0.s8 %v2973
      %v2975 = vlaneseq
      %v2976 = vshrl.u32 %v2975, 7
      %v2977 = vsub.s32 %v2974, %v2976
      %v2978 = vrot.slane %v2956, %v2977
      %v2980 = vunpack.c.l.s4 1966171168
      %v2981 = vunpack.c.0.s8 %v2980
      %v2982 = vlaneseq
      %v2983 = vshrl.u32 %v2982, 7
      %v2984 = vsub.s32 %v2981, %v2983
      %v2985 = vrot.slane %v2957, %v2984
      %v2986 = vcombine.high %v2964, %v2964
      %v2987 = vcombine.high %v2971, %v2971
      %v2988 = vcombine.high %v2978, %v2978
      %v2989 = vcombine.high %v2985, %v2985
      %v2990 = vcombine.high %v2174, %v2174
      %v2992 = vunpack.c.l.s4 1966171168
      %v2993 = vunpack.c.0.s8 %v2992
      %v2994 = vlaneseq
      %v2995 = vshrl.u32 %v2994, 7
      %v2996 = vsub.s32 %v2993, %v2995
      %v2997 = vrot.slane %v2174, %v2996
      %v2999 = vunpack.c.l.s4 1966171168
      %v3000 = vunpack.c.0.s8 %v2999
      %v3001 = vlaneseq
      %v3002 = vshrl.u32 %v3001, 7
      %v3003 = vsub.s32 %v3000, %v3002
      %v3004 = vrot.slane %v2990, %v3003
      %v3005 = vcombine.high %v2997, %v2997
      %v3006 = vcombine.high %v3004, %v3004
      %v3008 = vunpack.c.l.s4 1966171168
      %v3009 = vunpack.c.0.s8 %v3008
      %v3010 = vlaneseq
      %v3011 = vshrl.u32 %v3010, 7
      %v3012 = vsub.s32 %v3009, %v3011
      %v3013 = vrot.slane %v2997, %v3012
      %v3015 = vunpack.c.l.s4 1966171168
      %v3016 = vunpack.c.0.s8 %v3015
      %v3017 = vlaneseq
      %v3018 = vshrl.u32 %v3017, 7
      %v3019 = vsub.s32 %v3016, %v3018
      %v3020 = vrot.slane %v3004, %v3019
      %v3022 = vunpack.c.l.s4 1966171168
      %v3023 = vunpack.c.0.s8 %v3022
      %v3024 = vlaneseq
      %v3025 = vshrl.u32 %v3024, 7
      %v3026 = vsub.s32 %v3023, %v3025
      %v3027 = vrot.slane %v3005, %v3026
      %v3029 = vunpack.c.l.s4 1966171168
      %v3030 = vunpack.c.0.s8 %v3029
      %v3031 = vlaneseq
      %v3032 = vshrl.u32 %v3031, 7
      %v3033 = vsub.s32 %v3030, %v3032
      %v3034 = vrot.slane %v3006, %v3033
      %v3035 = vcombine.high %v3013, %v3013
      %v3036 = vcombine.high %v3020, %v3020
      %v3037 = vcombine.high %v3027, %v3027
      %v3038 = vcombine.high %v3034, %v3034
      %v3039 = vlaneseq
      %v3040 = vshrl.u32 %v3039, 7
      %v3041 = vsub.s32 0, %v3040
      %v3042 = vrot.slane %v2670, %v3041
      %v3043 = vlaneseq
      %v3044 = vshrl.u32 %v3043, 7
      %v3045 = vsub.s32 0, %v3044
      %v3046 = vrot.slane %v2684, %v3045
      %v3047 = vlaneseq
      %v3048 = vshrl.u32 %v3047, 7
      %v3049 = vsub.s32 0, %v3048
      %v3050 = vrot.slane %v2692, %v3049
      %v3051 = vlaneseq
      %v3052 = vshrl.u32 %v3051, 7
      %v3053 = vsub.s32 0, %v3052
      %v3054 = vrot.slane %v2694, %v3053
      %v3055 = vlaneseq
      %v3056 = vshrl.u32 %v3055, 7
      %v3057 = vsub.s32 0, %v3056
      %v3058 = vrot.slane %v2677, %v3057
      %v3059 = vlaneseq
      %v3060 = vshrl.u32 %v3059, 7
      %v3061 = vsub.s32 0, %v3060
      %v3062 = vrot.slane %v2691, %v3061
      %v3063 = vlaneseq
      %v3064 = vshrl.u32 %v3063, 7
      %v3065 = vsub.s32 0, %v3064
      %v3066 = vrot.slane %v2693, %v3065
      %v3067 = vlaneseq
      %v3068 = vshrl.u32 %v3067, 7
      %v3069 = vsub.s32 0, %v3068
      %v3070 = vrot.slane %v2695, %v3069
      %v3071 = vlaneseq
      %v3072 = vshrl.u32 %v3071, 7
      %v3073 = vsub.s32 0, %v3072
      %v3074 = vrot.slane %v2719, %v3073
      %v3075 = vlaneseq
      %v3076 = vshrl.u32 %v3075, 7
      %v3077 = vsub.s32 0, %v3076
      %v3078 = vrot.slane %v2733, %v3077
      %v3079 = vlaneseq
      %v3080 = vshrl.u32 %v3079, 7
      %v3081 = vsub.s32 0, %v3080
      %v3082 = vrot.slane %v2741, %v3081
      %v3083 = vlaneseq
      %v3084 = vshrl.u32 %v3083, 7
      %v3085 = vsub.s32 0, %v3084
      %v3086 = vrot.slane %v2743, %v3085
      %v3087 = vlaneseq
      %v3088 = vshrl.u32 %v3087, 7
      %v3089 = vsub.s32 0, %v3088
      %v3090 = vrot.slane %v2726, %v3089
      %v3091 = vlaneseq
      %v3092 = vshrl.u32 %v3091, 7
      %v3093 = vsub.s32 0, %v3092
      %v3094 = vrot.slane %v2740, %v3093
      %v3095 = vlaneseq
      %v3096 = vshrl.u32 %v3095, 7
      %v3097 = vsub.s32 0, %v3096
      %v3098 = vrot.slane %v2742, %v3097
      %v3099 = vlaneseq
      %v3100 = vshrl.u32 %v3099, 7
      %v3101 = vsub.s32 0, %v3100
      %v3102 = vrot.slane %v2744, %v3101
      %v3103 = vlaneseq
      %v3104 = vshrl.u32 %v3103, 7
      %v3105 = vsub.s32 0, %v3104
      %v3106 = vrot.slane %v2768, %v3105
      %v3107 = vlaneseq
      %v3108 = vshrl.u32 %v3107, 7
      %v3109 = vsub.s32 0, %v3108
      %v3110 = vrot.slane %v2782, %v3109
      %v3111 = vlaneseq
      %v3112 = vshrl.u32 %v3111, 7
      %v3113 = vsub.s32 0, %v3112
      %v3114 = vrot.slane %v2790, %v3113
      %v3115 = vlaneseq
      %v3116 = vshrl.u32 %v3115, 7
      %v3117 = vsub.s32 0, %v3116
      %v3118 = vrot.slane %v2792, %v3117
      %v3119 = vlaneseq
      %v3120 = vshrl.u32 %v3119, 7
      %v3121 = vsub.s32 0, %v3120
      %v3122 = vrot.slane %v2775, %v3121
      %v3123 = vlaneseq
      %v3124 = vshrl.u32 %v3123, 7
      %v3125 = vsub.s32 0, %v3124
      %v3126 = vrot.slane %v2789, %v3125
      %v3127 = vlaneseq
      %v3128 = vshrl.u32 %v3127, 7
      %v3129 = vsub.s32 0, %v3128
      %v3130 = vrot.slane %v2791, %v3129
      %v3131 = vlaneseq
      %v3132 = vshrl.u32 %v3131, 7
      %v3133 = vsub.s32 0, %v3132
      %v3134 = vrot.slane %v2793, %v3133
      %v3135 = vlaneseq
      %v3136 = vshrl.u32 %v3135, 7
      %v3137 = vsub.s32 0, %v3136
      %v3138 = vrot.slane %v2817, %v3137
      %v3139 = vlaneseq
      %v3140 = vshrl.u32 %v3139, 7
      %v3141 = vsub.s32 0, %v3140
      %v3142 = vrot.slane %v2831, %v3141
      %v3143 = vlaneseq
      %v3144 = vshrl.u32 %v3143, 7
      %v3145 = vsub.s32 0, %v3144
      %v3146 = vrot.slane %v2839, %v3145
      %v3147 = vlaneseq
      %v3148 = vshrl.u32 %v3147, 7
      %v3149 = vsub.s32 0, %v3148
      %v3150 = vrot.slane %v2841, %v3149
      %v3151 = vlaneseq
      %v3152 = vshrl.u32 %v3151, 7
      %v3153 = vsub.s32 0, %v3152
      %v3154 = vrot.slane %v2824, %v3153
      %v3155 = vlaneseq
      %v3156 = vshrl.u32 %v3155, 7
      %v3157 = vsub.s32 0, %v3156
      %v3158 = vrot.slane %v2838, %v3157
      %v3159 = vlaneseq
      %v3160 = vshrl.u32 %v3159, 7
      %v3161 = vsub.s32 0, %v3160
      %v3162 = vrot.slane %v2840, %v3161
      %v3163 = vlaneseq
      %v3164 = vshrl.u32 %v3163, 7
      %v3165 = vsub.s32 0, %v3164
      %v3166 = vrot.slane %v2842, %v3165
      %v3167 = vlaneseq
      %v3168 = vshrl.u32 %v3167, 7
      %v3169 = vsub.s32 0, %v3168
      %v3170 = vrot.slane %v2866, %v3169
      %v3171 = vlaneseq
      %v3172 = vshrl.u32 %v3171, 7
      %v3173 = vsub.s32 0, %v3172
      %v3174 = vrot.slane %v2880, %v3173
      %v3175 = vlaneseq
      %v3176 = vshrl.u32 %v3175, 7
      %v3177 = vsub.s32 0, %v3176
      %v3178 = vrot.slane %v2888, %v3177
      %v3179 = vlaneseq
      %v3180 = vshrl.u32 %v3179, 7
      %v3181 = vsub.s32 0, %v3180
      %v3182 = vrot.slane %v2890, %v3181
      %v3183 = vlaneseq
      %v3184 = vshrl.u32 %v3183, 7
      %v3185 = vsub.s32 0, %v3184
      %v3186 = vrot.slane %v2873, %v3185
      %v3187 = vlaneseq
      %v3188 = vshrl.u32 %v3187, 7
      %v3189 = vsub.s32 0, %v3188
      %v3190 = vrot.slane %v2887, %v3189
      %v3191 = vlaneseq
      %v3192 = vshrl.u32 %v3191, 7
      %v3193 = vsub.s32 0, %v3192
      %v3194 = vrot.slane %v2889, %v3193
      %v3195 = vlaneseq
      %v3196 = vshrl.u32 %v3195, 7
      %v3197 = vsub.s32 0, %v3196
      %v3198 = vrot.slane %v2891, %v3197
      %v3199 = vlaneseq
      %v3200 = vshrl.u32 %v3199, 7
      %v3201 = vsub.s32 0, %v3200
      %v3202 = vrot.slane %v2915, %v3201
      %v3203 = vlaneseq
      %v3204 = vshrl.u32 %v3203, 7
      %v3205 = vsub.s32 0, %v3204
      %v3206 = vrot.slane %v2929, %v3205
      %v3207 = vlaneseq
      %v3208 = vshrl.u32 %v3207, 7
      %v3209 = vsub.s32 0, %v3208
      %v3210 = vrot.slane %v2937, %v3209
      %v3211 = vlaneseq
      %v3212 = vshrl.u32 %v3211, 7
      %v3213 = vsub.s32 0, %v3212
      %v3214 = vrot.slane %v2939, %v3213
      %v3215 = vlaneseq
      %v3216 = vshrl.u32 %v3215, 7
      %v3217 = vsub.s32 0, %v3216
      %v3218 = vrot.slane %v2922, %v3217
      %v3219 = vlaneseq
      %v3220 = vshrl.u32 %v3219, 7
      %v3221 = vsub.s32 0, %v3220
      %v3222 = vrot.slane %v2936, %v3221
      %v3223 = vlaneseq
      %v3224 = vshrl.u32 %v3223, 7
      %v3225 = vsub.s32 0, %v3224
      %v3226 = vrot.slane %v2938, %v3225
      %v3227 = vlaneseq
      %v3228 = vshrl.u32 %v3227, 7
      %v3229 = vsub.s32 0, %v3228
      %v3230 = vrot.slane %v2940, %v3229
      %v3231 = vlaneseq
      %v3232 = vshrl.u32 %v3231, 7
      %v3233 = vsub.s32 0, %v3232
      %v3234 = vrot.slane %v2964, %v3233
      %v3235 = vlaneseq
      %v3236 = vshrl.u32 %v3235, 7
      %v3237 = vsub.s32 0, %v3236
      %v3238 = vrot.slane %v2978, %v3237
      %v3239 = vlaneseq
      %v3240 = vshrl.u32 %v3239, 7
      %v3241 = vsub.s32 0, %v3240
      %v3242 = vrot.slane %v2986, %v3241
      %v3243 = vlaneseq
      %v3244 = vshrl.u32 %v3243, 7
      %v3245 = vsub.s32 0, %v3244
      %v3246 = vrot.slane %v2988, %v3245
      %v3247 = vlaneseq
      %v3248 = vshrl.u32 %v3247, 7
      %v3249 = vsub.s32 0, %v3248
      %v3250 = vrot.slane %v2971, %v3249
      %v3251 = vlaneseq
      %v3252 = vshrl.u32 %v3251, 7
      %v3253 = vsub.s32 0, %v3252
      %v3254 = vrot.slane %v2985, %v3253
      %v3255 = vlaneseq
      %v3256 = vshrl.u32 %v3255, 7
      %v3257 = vsub.s32 0, %v3256
      %v3258 = vrot.slane %v2987, %v3257
      %v3259 = vlaneseq
      %v3260 = vshrl.u32 %v3259, 7
      %v3261 = vsub.s32 0, %v3260
      %v3262 = vrot.slane %v2989, %v3261
      %v3263 = vlaneseq
      %v3264 = vshrl.u32 %v3263, 7
      %v3265 = vsub.s32 0, %v3264
      %v3266 = vrot.slane %v3013, %v3265
      %v3267 = vlaneseq
      %v3268 = vshrl.u32 %v3267, 7
      %v3269 = vsub.s32 0, %v3268
      %v3270 = vrot.slane %v3027, %v3269
      %v3271 = vlaneseq
      %v3272 = vshrl.u32 %v3271, 7
      %v3273 = vsub.s32 0, %v3272
      %v3274 = vrot.slane %v3035, %v3273
      %v3275 = vlaneseq
      %v3276 = vshrl.u32 %v3275, 7
      %v3277 = vsub.s32 0, %v3276
      %v3278 = vrot.slane %v3037, %v3277
      %v3279 = vlaneseq
      %v3280 = vshrl.u32 %v3279, 7
      %v3281 = vsub.s32 0, %v3280
      %v3282 = vrot.slane %v3020, %v3281
      %v3283 = vlaneseq
      %v3284 = vshrl.u32 %v3283, 7
      %v3285 = vsub.s32 0, %v3284
      %v3286 = vrot.slane %v3034, %v3285
      %v3287 = vlaneseq
      %v3288 = vshrl.u32 %v3287, 7
      %v3289 = vsub.s32 0, %v3288
      %v3290 = vrot.slane %v3036, %v3289
      %v3291 = vlaneseq
      %v3292 = vshrl.u32 %v3291, 7
      %v3293 = vsub.s32 0, %v3292
      %v3294 = vrot.slane %v3038, %v3293
      %v3359 = vsel %vm1490, %v2206, %v3042
      %v3360 = vsel %vm1490, %v2220, %v3046
      %v3361 = vsel %vm1490, %v2228, %v3050
      %v3362 = vsel %vm1490, %v2230, %v3054
      %v3363 = vsel %vm1490, %v2213, %v3058
      %v3364 = vsel %vm1490, %v2227, %v3062
      %v3365 = vsel %vm1490, %v2229, %v3066
      %v3366 = vsel %vm1490, %v2231, %v3070
      %v3367 = vsel %vm1490, %v2255, %v3074
      %v3368 = vsel %vm1490, %v2269, %v3078
      %v3369 = vsel %vm1490, %v2277, %v3082
      %v3370 = vsel %vm1490, %v2279, %v3086
      %v3371 = vsel %vm1490, %v2262, %v3090
      %v3372 = vsel %vm1490, %v2276, %v3094
      %v3373 = vsel %vm1490, %v2278, %v3098
      %v3374 = vsel %vm1490, %v2280, %v3102
      %v3375 = vsel %vm1490, %v2304, %v3106
      %v3376 = vsel %vm1490, %v2318, %v3110
      %v3377 = vsel %vm1490, %v2326, %v3114
      %v3378 = vsel %vm1490, %v2328, %v3118
      %v3379 = vsel %vm1490, %v2311, %v3122
      %v3380 = vsel %vm1490, %v2325, %v3126
      %v3381 = vsel %vm1490, %v2327, %v3130
      %v3382 = vsel %vm1490, %v2329, %v3134
      %v3383 = vsel %vm1490, %v2353, %v3138
      %v3384 = vsel %vm1490, %v2367, %v3142
      %v3385 = vsel %vm1490, %v2375, %v3146
      %v3386 = vsel %vm1490, %v2377, %v3150
      %v3387 = vsel %vm1490, %v2360, %v3154
      %v3388 = vsel %vm1490, %v2374, %v3158
      %v3389 = vsel %vm1490, %v2376, %v3162
      %v3390 = vsel %vm1490, %v2378, %v3166
      %v3391 = vsel %vm1490, %v2402, %v3170
      %v3392 = vsel %vm1490, %v2416, %v3174
      %v3393 = vsel %vm1490, %v2424, %v3178
      %v3394 = vsel %vm1490, %v2426, %v3182
      %v3395 = vsel %vm1490, %v2409, %v3186
      %v3396 = vsel %vm1490, %v2423, %v3190
      %v3397 = vsel %vm1490, %v2425, %v3194
      %v3398 = vsel %vm1490, %v2427, %v3198
      %v3399 = vsel %vm1490, %v2451, %v3202
      %v3400 = vsel %vm1490, %v2465, %v3206
      %v3401 = vsel %vm1490, %v2473, %v3210
      %v3402 = vsel %vm1490, %v2475, %v3214
      %v3403 = vsel %vm1490, %v2458, %v3218
      %v3404 = vsel %vm1490, %v2472, %v3222
      %v3405 = vsel %vm1490, %v2474, %v3226
      %v3406 = vsel %vm1490, %v2476, %v3230
      %v3407 = vsel %vm1490, %v2500, %v3234
      %v3408 = vsel %vm1490, %v2514, %v3238
      %v3409 = vsel %vm1490, %v2522, %v3242
      %v3410 = vsel %vm1490, %v2524, %v3246
      %v3411 = vsel %vm1490, %v2507, %v3250
      %v3412 = vsel %vm1490, %v2521, %v3254
      %v3413 = vsel %vm1490, %v2523, %v3258
      %v3414 = vsel %vm1490, %v2525, %v3262
      %v3415 = vsel %vm1490, %v2549, %v3266
      %v3416 = vsel %vm1490, %v2563, %v3270
      %v3417 = vsel %vm1490, %v2571, %v3274
      %v3418 = vsel %vm1490, %v2573, %v3278
      %v3419 = vsel %vm1490, %v2556, %v3282
      %v3420 = vsel %vm1490, %v2570, %v3286
      %v3421 = vsel %vm1490, %v2572, %v3290
      %v3422 = vsel %vm1490, %v2574, %v3294
      %v3423 = vld [vmem:[%s9] sm:$0xff]
      %v3424 = vld [vmem:[%s9 + $0x8] sm:$0xff]
      %v3425 = vld [vmem:[%s9 + $0x10] sm:$0xff]
      %v3426 = vld [vmem:[%s9 + $0x18] sm:$0xff]
      %v3427 = vld [vmem:[%s9 + $0x20] sm:$0xff]
      %v3428 = vld [vmem:[%s9 + $0x28] sm:$0xff]
      %v3429 = vld [vmem:[%s9 + $0x30] sm:$0xff]
      %v3430 = vld [vmem:[%s9 + $0x38] sm:$0xff]
      %v3431 = vld [vmem:[%s9 + $0x40] sm:$0xff]
      %v3432 = vld [vmem:[%s9 + $0x48] sm:$0xff]
      %v3433 = vld [vmem:[%s9 + $0x50] sm:$0xff]
      %v3434 = vld [vmem:[%s9 + $0x58] sm:$0xff]
      %v3435 = vld [vmem:[%s9 + $0x60] sm:$0xff]
      %v3436 = vld [vmem:[%s9 + $0x68] sm:$0xff]
      %v3437 = vld [vmem:[%s9 + $0x70] sm:$0xff]
      %v3438 = vld [vmem:[%s9 + $0x78] sm:$0xff]
      %v3439 = vld [vmem:[%s9 + $0x80] sm:$0xff]
      %v3440 = vld [vmem:[%s9 + $0x88] sm:$0xff]
      %v3441 = vld [vmem:[%s9 + $0x90] sm:$0xff]
      %v3442 = vld [vmem:[%s9 + $0x98] sm:$0xff]
      %v3443 = vld [vmem:[%s9 + $0xa0] sm:$0xff]
      %v3444 = vld [vmem:[%s9 + $0xa8] sm:$0xff]
      %v3445 = vld [vmem:[%s9 + $0xb0] sm:$0xff]
      %v3446 = vld [vmem:[%s9 + $0xb8] sm:$0xff]
      %v3447 = vld [vmem:[%s9 + $0xc0] sm:$0xff]
      %v3448 = vld [vmem:[%s9 + $0xc8] sm:$0xff]
      %v3449 = vld [vmem:[%s9 + $0xd0] sm:$0xff]
      %v3450 = vld [vmem:[%s9 + $0xd8] sm:$0xff]
      %v3451 = vld [vmem:[%s9 + $0xe0] sm:$0xff]
      %v3452 = vld [vmem:[%s9 + $0xe8] sm:$0xff]
      %v3453 = vld [vmem:[%s9 + $0xf0] sm:$0xff]
      %v3454 = vld [vmem:[%s9 + $0xf8] sm:$0xff]
      %v3455 = vld [vmem:[%s10] sm:$0xff]
      %v3456 = vld [vmem:[%s10 + $0x8] sm:$0xff]
      %v3457 = vld [vmem:[%s10 + $0x10] sm:$0xff]
      %v3458 = vld [vmem:[%s10 + $0x18] sm:$0xff]
      %v3459 = vld [vmem:[%s10 + $0x20] sm:$0xff]
      %v3460 = vld [vmem:[%s10 + $0x28] sm:$0xff]
      %v3461 = vld [vmem:[%s10 + $0x30] sm:$0xff]
      %v3462 = vld [vmem:[%s10 + $0x38] sm:$0xff]
      %v3463 = vld [vmem:[%s10 + $0x40] sm:$0xff]
      %v3464 = vld [vmem:[%s10 + $0x48] sm:$0xff]
      %v3465 = vld [vmem:[%s10 + $0x50] sm:$0xff]
      %v3466 = vld [vmem:[%s10 + $0x58] sm:$0xff]
      %v3467 = vld [vmem:[%s10 + $0x60] sm:$0xff]
      %v3468 = vld [vmem:[%s10 + $0x68] sm:$0xff]
      %v3469 = vld [vmem:[%s10 + $0x70] sm:$0xff]
      %v3470 = vld [vmem:[%s10 + $0x78] sm:$0xff]
      %v3471 = vld [vmem:[%s11] sm:$0x1]
      %v3472 = vld [vmem:[%s12] sm:$0x1]
      %v3537 = vcombine.low %v3359, %v3360
      %v3538 = vcombine.low %v3361, %v3362
      %v3540 = vunpack.c.l.s4 1983009808
      %v3541 = vunpack.c.0.s8 %v3540
      %v3542 = vlaneseq
      %v3543 = vshrl.u32 %v3542, 7
      %v3544 = vsub.s32 %v3541, %v3543
      %v3545 = vrot.slane %v3537, %v3544
      %v3547 = vunpack.c.l.s4 1983009808
      %v3548 = vunpack.c.0.s8 %v3547
      %v3549 = vlaneseq
      %v3550 = vshrl.u32 %v3549, 7
      %v3551 = vsub.s32 %v3548, %v3550
      %v3552 = vrot.slane %v3538, %v3551
      %v3553 = vcombine.low %v3545, %v3552
      %v3554 = vcombine.low %v3363, %v3364
      %v3555 = vcombine.low %v3365, %v3366
      %v3557 = vunpack.c.l.s4 1983009808
      %v3558 = vunpack.c.0.s8 %v3557
      %v3559 = vlaneseq
      %v3560 = vshrl.u32 %v3559, 7
      %v3561 = vsub.s32 %v3558, %v3560
      %v3562 = vrot.slane %v3554, %v3561
      %v3564 = vunpack.c.l.s4 1983009808
      %v3565 = vunpack.c.0.s8 %v3564
      %v3566 = vlaneseq
      %v3567 = vshrl.u32 %v3566, 7
      %v3568 = vsub.s32 %v3565, %v3567
      %v3569 = vrot.slane %v3555, %v3568
      %v3570 = vcombine.low %v3562, %v3569
      %v3571 = vcombine.low %v3367, %v3368
      %v3572 = vcombine.low %v3369, %v3370
      %v3574 = vunpack.c.l.s4 1983009808
      %v3575 = vunpack.c.0.s8 %v3574
      %v3576 = vlaneseq
      %v3577 = vshrl.u32 %v3576, 7
      %v3578 = vsub.s32 %v3575, %v3577
      %v3579 = vrot.slane %v3571, %v3578
      %v3581 = vunpack.c.l.s4 1983009808
      %v3582 = vunpack.c.0.s8 %v3581
      %v3583 = vlaneseq
      %v3584 = vshrl.u32 %v3583, 7
      %v3585 = vsub.s32 %v3582, %v3584
      %v3586 = vrot.slane %v3572, %v3585
      %v3587 = vcombine.low %v3579, %v3586
      %v3588 = vcombine.low %v3371, %v3372
      %v3589 = vcombine.low %v3373, %v3374
      %v3591 = vunpack.c.l.s4 1983009808
      %v3592 = vunpack.c.0.s8 %v3591
      %v3593 = vlaneseq
      %v3594 = vshrl.u32 %v3593, 7
      %v3595 = vsub.s32 %v3592, %v3594
      %v3596 = vrot.slane %v3588, %v3595
      %v3598 = vunpack.c.l.s4 1983009808
      %v3599 = vunpack.c.0.s8 %v3598
      %v3600 = vlaneseq
      %v3601 = vshrl.u32 %v3600, 7
      %v3602 = vsub.s32 %v3599, %v3601
      %v3603 = vrot.slane %v3589, %v3602
      %v3604 = vcombine.low %v3596, %v3603
      %v3605 = vcombine.low %v3375, %v3376
      %v3606 = vcombine.low %v3377, %v3378
      %v3608 = vunpack.c.l.s4 1983009808
      %v3609 = vunpack.c.0.s8 %v3608
      %v3610 = vlaneseq
      %v3611 = vshrl.u32 %v3610, 7
      %v3612 = vsub.s32 %v3609, %v3611
      %v3613 = vrot.slane %v3605, %v3612
      %v3615 = vunpack.c.l.s4 1983009808
      %v3616 = vunpack.c.0.s8 %v3615
      %v3617 = vlaneseq
      %v3618 = vshrl.u32 %v3617, 7
      %v3619 = vsub.s32 %v3616, %v3618
      %v3620 = vrot.slane %v3606, %v3619
      %v3621 = vcombine.low %v3613, %v3620
      %v3622 = vcombine.low %v3379, %v3380
      %v3623 = vcombine.low %v3381, %v3382
      %v3625 = vunpack.c.l.s4 1983009808
      %v3626 = vunpack.c.0.s8 %v3625
      %v3627 = vlaneseq
      %v3628 = vshrl.u32 %v3627, 7
      %v3629 = vsub.s32 %v3626, %v3628
      %v3630 = vrot.slane %v3622, %v3629
      %v3632 = vunpack.c.l.s4 1983009808
      %v3633 = vunpack.c.0.s8 %v3632
      %v3634 = vlaneseq
      %v3635 = vshrl.u32 %v3634, 7
      %v3636 = vsub.s32 %v3633, %v3635
      %v3637 = vrot.slane %v3623, %v3636
      %v3638 = vcombine.low %v3630, %v3637
      %v3639 = vcombine.low %v3383, %v3384
      %v3640 = vcombine.low %v3385, %v3386
      %v3642 = vunpack.c.l.s4 1983009808
      %v3643 = vunpack.c.0.s8 %v3642
      %v3644 = vlaneseq
      %v3645 = vshrl.u32 %v3644, 7
      %v3646 = vsub.s32 %v3643, %v3645
      %v3647 = vrot.slane %v3639, %v3646
      %v3649 = vunpack.c.l.s4 1983009808
      %v3650 = vunpack.c.0.s8 %v3649
      %v3651 = vlaneseq
      %v3652 = vshrl.u32 %v3651, 7
      %v3653 = vsub.s32 %v3650, %v3652
      %v3654 = vrot.slane %v3640, %v3653
      %v3655 = vcombine.low %v3647, %v3654
      %v3656 = vcombine.low %v3387, %v3388
      %v3657 = vcombine.low %v3389, %v3390
      %v3659 = vunpack.c.l.s4 1983009808
      %v3660 = vunpack.c.0.s8 %v3659
      %v3661 = vlaneseq
      %v3662 = vshrl.u32 %v3661, 7
      %v3663 = vsub.s32 %v3660, %v3662
      %v3664 = vrot.slane %v3656, %v3663
      %v3666 = vunpack.c.l.s4 1983009808
      %v3667 = vunpack.c.0.s8 %v3666
      %v3668 = vlaneseq
      %v3669 = vshrl.u32 %v3668, 7
      %v3670 = vsub.s32 %v3667, %v3669
      %v3671 = vrot.slane %v3657, %v3670
      %v3672 = vcombine.low %v3664, %v3671
      %v3673 = vcombine.low %v3391, %v3392
      %v3674 = vcombine.low %v3393, %v3394
      %v3676 = vunpack.c.l.s4 1983009808
      %v3677 = vunpack.c.0.s8 %v3676
      %v3678 = vlaneseq
      %v3679 = vshrl.u32 %v3678, 7
      %v3680 = vsub.s32 %v3677, %v3679
      %v3681 = vrot.slane %v3673, %v3680
      %v3683 = vunpack.c.l.s4 1983009808
      %v3684 = vunpack.c.0.s8 %v3683
      %v3685 = vlaneseq
      %v3686 = vshrl.u32 %v3685, 7
      %v3687 = vsub.s32 %v3684, %v3686
      %v3688 = vrot.slane %v3674, %v3687
      %v3689 = vcombine.low %v3681, %v3688
      %v3690 = vcombine.low %v3395, %v3396
      %v3691 = vcombine.low %v3397, %v3398
      %v3693 = vunpack.c.l.s4 1983009808
      %v3694 = vunpack.c.0.s8 %v3693
      %v3695 = vlaneseq
      %v3696 = vshrl.u32 %v3695, 7
      %v3697 = vsub.s32 %v3694, %v3696
      %v3698 = vrot.slane %v3690, %v3697
      %v3700 = vunpack.c.l.s4 1983009808
      %v3701 = vunpack.c.0.s8 %v3700
      %v3702 = vlaneseq
      %v3703 = vshrl.u32 %v3702, 7
      %v3704 = vsub.s32 %v3701, %v3703
      %v3705 = vrot.slane %v3691, %v3704
      %v3706 = vcombine.low %v3698, %v3705
      %v3707 = vcombine.low %v3399, %v3400
      %v3708 = vcombine.low %v3401, %v3402
      %v3710 = vunpack.c.l.s4 1983009808
      %v3711 = vunpack.c.0.s8 %v3710
      %v3712 = vlaneseq
      %v3713 = vshrl.u32 %v3712, 7
      %v3714 = vsub.s32 %v3711, %v3713
      %v3715 = vrot.slane %v3707, %v3714
      %v3717 = vunpack.c.l.s4 1983009808
      %v3718 = vunpack.c.0.s8 %v3717
      %v3719 = vlaneseq
      %v3720 = vshrl.u32 %v3719, 7
      %v3721 = vsub.s32 %v3718, %v3720
      %v3722 = vrot.slane %v3708, %v3721
      %v3723 = vcombine.low %v3715, %v3722
      %v3724 = vcombine.low %v3403, %v3404
      %v3725 = vcombine.low %v3405, %v3406
      %v3727 = vunpack.c.l.s4 1983009808
      %v3728 = vunpack.c.0.s8 %v3727
      %v3729 = vlaneseq
      %v3730 = vshrl.u32 %v3729, 7
      %v3731 = vsub.s32 %v3728, %v3730
      %v3732 = vrot.slane %v3724, %v3731
      %v3734 = vunpack.c.l.s4 1983009808
      %v3735 = vunpack.c.0.s8 %v3734
      %v3736 = vlaneseq
      %v3737 = vshrl.u32 %v3736, 7
      %v3738 = vsub.s32 %v3735, %v3737
      %v3739 = vrot.slane %v3725, %v3738
      %v3740 = vcombine.low %v3732, %v3739
      %v3741 = vcombine.low %v3407, %v3408
      %v3742 = vcombine.low %v3409, %v3410
      %v3744 = vunpack.c.l.s4 1983009808
      %v3745 = vunpack.c.0.s8 %v3744
      %v3746 = vlaneseq
      %v3747 = vshrl.u32 %v3746, 7
      %v3748 = vsub.s32 %v3745, %v3747
      %v3749 = vrot.slane %v3741, %v3748
      %v3751 = vunpack.c.l.s4 1983009808
      %v3752 = vunpack.c.0.s8 %v3751
      %v3753 = vlaneseq
      %v3754 = vshrl.u32 %v3753, 7
      %v3755 = vsub.s32 %v3752, %v3754
      %v3756 = vrot.slane %v3742, %v3755
      %v3757 = vcombine.low %v3749, %v3756
      %v3758 = vcombine.low %v3411, %v3412
      %v3759 = vcombine.low %v3413, %v3414
      %v3761 = vunpack.c.l.s4 1983009808
      %v3762 = vunpack.c.0.s8 %v3761
      %v3763 = vlaneseq
      %v3764 = vshrl.u32 %v3763, 7
      %v3765 = vsub.s32 %v3762, %v3764
      %v3766 = vrot.slane %v3758, %v3765
      %v3768 = vunpack.c.l.s4 1983009808
      %v3769 = vunpack.c.0.s8 %v3768
      %v3770 = vlaneseq
      %v3771 = vshrl.u32 %v3770, 7
      %v3772 = vsub.s32 %v3769, %v3771
      %v3773 = vrot.slane %v3759, %v3772
      %v3774 = vcombine.low %v3766, %v3773
      %v3775 = vcombine.low %v3415, %v3416
      %v3776 = vcombine.low %v3417, %v3418
      %v3778 = vunpack.c.l.s4 1983009808
      %v3779 = vunpack.c.0.s8 %v3778
      %v3780 = vlaneseq
      %v3781 = vshrl.u32 %v3780, 7
      %v3782 = vsub.s32 %v3779, %v3781
      %v3783 = vrot.slane %v3775, %v3782
      %v3785 = vunpack.c.l.s4 1983009808
      %v3786 = vunpack.c.0.s8 %v3785
      %v3787 = vlaneseq
      %v3788 = vshrl.u32 %v3787, 7
      %v3789 = vsub.s32 %v3786, %v3788
      %v3790 = vrot.slane %v3776, %v3789
      %v3791 = vcombine.low %v3783, %v3790
      %v3792 = vcombine.low %v3419, %v3420
      %v3793 = vcombine.low %v3421, %v3422
      %v3795 = vunpack.c.l.s4 1983009808
      %v3796 = vunpack.c.0.s8 %v3795
      %v3797 = vlaneseq
      %v3798 = vshrl.u32 %v3797, 7
      %v3799 = vsub.s32 %v3796, %v3798
      %v3800 = vrot.slane %v3792, %v3799
      %v3802 = vunpack.c.l.s4 1983009808
      %v3803 = vunpack.c.0.s8 %v3802
      %v3804 = vlaneseq
      %v3805 = vshrl.u32 %v3804, 7
      %v3806 = vsub.s32 %v3803, %v3805
      %v3807 = vrot.slane %v3793, %v3806
      %v3808 = vcombine.low %v3800, %v3807
      %v3809 = vrot.slane %v3553, 1
      %v3810 = vrot.slane %v3570, 1
      %v3811 = vsel %vm610, %v3809, %v3810
      %v3812 = vrot.slane %v3587, 1
      %v3813 = vsel %vm610, %v3810, %v3812
      %v3814 = vrot.slane %v3604, 1
      %v3815 = vsel %vm610, %v3812, %v3814
      %v3816 = vrot.slane %v3621, 1
      %v3817 = vsel %vm610, %v3814, %v3816
      %v3818 = vrot.slane %v3638, 1
      %v3819 = vsel %vm610, %v3816, %v3818
      %v3820 = vrot.slane %v3655, 1
      %v3821 = vsel %vm610, %v3818, %v3820
      %v3822 = vrot.slane %v3672, 1
      %v3823 = vsel %vm610, %v3820, %v3822
      %v3824 = vrot.slane %v3689, 1
      %v3825 = vsel %vm610, %v3822, %v3824
      %v3826 = vrot.slane %v3706, 1
      %v3827 = vsel %vm610, %v3824, %v3826
      %v3828 = vrot.slane %v3723, 1
      %v3829 = vsel %vm610, %v3826, %v3828
      %v3830 = vrot.slane %v3740, 1
      %v3831 = vsel %vm610, %v3828, %v3830
      %v3832 = vrot.slane %v3757, 1
      %v3833 = vsel %vm610, %v3830, %v3832
      %v3834 = vrot.slane %v3774, 1
      %v3835 = vsel %vm610, %v3832, %v3834
      %v3836 = vrot.slane %v3791, 1
      %v3837 = vsel %vm610, %v3834, %v3836
      %v3838 = vrot.slane %v3808, 1
      %v3839 = vsel %vm610, %v3836, %v3838
      %v3856 = vsel %vm610, %v3838, 0.0
      %v3857 = vadd.s32 %v624, 64
      %v3858 = vadd.s32 %v624, 72
      %v3859 = vadd.s32 %v624, 80
      %v3860 = vadd.s32 %v624, 88
      %v3861 = vadd.s32 %v624, 96
      %v3862 = vadd.s32 %v624, 104
      %v3863 = vadd.s32 %v624, 112
      %v3864 = vadd.s32 %v624, 120
      %vm3865 = vcmp.lt.s32.totalorder %v624, 0
      %v3866 = vsub.s32 0, %v624
      %v3867 = vsel %vm3865, %v3866, %v624
      %v3868 = vshrl.u32 %v3867, 4
      %v3869 = vand.u32 %v3867, 15
      %v3870 = vsub.s32 0, %v3869
      %v3871 = vsel %vm3865, %v3870, %v3869
      %vm3872 = vcmp.lt.s32.totalorder %v625, 0
      %v3873 = vsub.s32 0, %v625
      %v3874 = vsel %vm3872, %v3873, %v625
      %v3875 = vshrl.u32 %v3874, 4
      %v3876 = vand.u32 %v3874, 15
      %v3877 = vsub.s32 0, %v3876
      %v3878 = vsel %vm3872, %v3877, %v3876
      %vm3879 = vcmp.lt.s32.totalorder %v626, 0
      %v3880 = vsub.s32 0, %v626
      %v3881 = vsel %vm3879, %v3880, %v626
      %v3882 = vshrl.u32 %v3881, 4
      %v3883 = vand.u32 %v3881, 15
      %v3884 = vsub.s32 0, %v3883
      %v3885 = vsel %vm3879, %v3884, %v3883
      %vm3886 = vcmp.lt.s32.totalorder %v627, 0
      %v3887 = vsub.s32 0, %v627
      %v3888 = vsel %vm3886, %v3887, %v627
      %v3889 = vshrl.u32 %v3888, 4
      %v3890 = vand.u32 %v3888, 15
      %v3891 = vsub.s32 0, %v3890
      %v3892 = vsel %vm3886, %v3891, %v3890
      %vm3893 = vcmp.lt.s32.totalorder %v1765, 0
      %v3894 = vsub.s32 0, %v1765
      %v3895 = vsel %vm3893, %v3894, %v1765
      %v3896 = vshrl.u32 %v3895, 4
      %v3897 = vand.u32 %v3895, 15
      %v3898 = vsub.s32 0, %v3897
      %v3899 = vsel %vm3893, %v3898, %v3897
      %vm3900 = vcmp.lt.s32.totalorder %v1766, 0
      %v3901 = vsub.s32 0, %v1766
      %v3902 = vsel %vm3900, %v3901, %v1766
      %v3903 = vshrl.u32 %v3902, 4
      %v3904 = vand.u32 %v3902, 15
      %v3905 = vsub.s32 0, %v3904
      %v3906 = vsel %vm3900, %v3905, %v3904
      %vm3907 = vcmp.lt.s32.totalorder %v1767, 0
      %v3908 = vsub.s32 0, %v1767
      %v3909 = vsel %vm3907, %v3908, %v1767
      %v3910 = vshrl.u32 %v3909, 4
      %v3911 = vand.u32 %v3909, 15
      %v3912 = vsub.s32 0, %v3911
      %v3913 = vsel %vm3907, %v3912, %v3911
      %vm3914 = vcmp.lt.s32.totalorder %v1768, 0
      %v3915 = vsub.s32 0, %v1768
      %v3916 = vsel %vm3914, %v3915, %v1768
      %v3917 = vshrl.u32 %v3916, 4
      %v3918 = vand.u32 %v3916, 15
      %v3919 = vsub.s32 0, %v3918
      %v3920 = vsel %vm3914, %v3919, %v3918
      %vm3921 = vcmp.lt.s32.totalorder %v3857, 0
      %v3922 = vsub.s32 0, %v3857
      %v3923 = vsel %vm3921, %v3922, %v3857
      %v3924 = vshrl.u32 %v3923, 4
      %v3925 = vand.u32 %v3923, 15
      %v3926 = vsub.s32 0, %v3925
      %v3927 = vsel %vm3921, %v3926, %v3925
      %vm3928 = vcmp.lt.s32.totalorder %v3858, 0
      %v3929 = vsub.s32 0, %v3858
      %v3930 = vsel %vm3928, %v3929, %v3858
      %v3931 = vshrl.u32 %v3930, 4
      %v3932 = vand.u32 %v3930, 15
      %v3933 = vsub.s32 0, %v3932
      %v3934 = vsel %vm3928, %v3933, %v3932
      %vm3935 = vcmp.lt.s32.totalorder %v3859, 0
      %v3936 = vsub.s32 0, %v3859
      %v3937 = vsel %vm3935, %v3936, %v3859
      %v3938 = vshrl.u32 %v3937, 4
      %v3939 = vand.u32 %v3937, 15
      %v3940 = vsub.s32 0, %v3939
      %v3941 = vsel %vm3935, %v3940, %v3939
      %vm3942 = vcmp.lt.s32.totalorder %v3860, 0
      %v3943 = vsub.s32 0, %v3860
      %v3944 = vsel %vm3942, %v3943, %v3860
      %v3945 = vshrl.u32 %v3944, 4
      %v3946 = vand.u32 %v3944, 15
      %v3947 = vsub.s32 0, %v3946
      %v3948 = vsel %vm3942, %v3947, %v3946
      %vm3949 = vcmp.lt.s32.totalorder %v3861, 0
      %v3950 = vsub.s32 0, %v3861
      %v3951 = vsel %vm3949, %v3950, %v3861
      %v3952 = vshrl.u32 %v3951, 4
      %v3953 = vand.u32 %v3951, 15
      %v3954 = vsub.s32 0, %v3953
      %v3955 = vsel %vm3949, %v3954, %v3953
      %vm3956 = vcmp.lt.s32.totalorder %v3862, 0
      %v3957 = vsub.s32 0, %v3862
      %v3958 = vsel %vm3956, %v3957, %v3862
      %v3959 = vshrl.u32 %v3958, 4
      %v3960 = vand.u32 %v3958, 15
      %v3961 = vsub.s32 0, %v3960
      %v3962 = vsel %vm3956, %v3961, %v3960
      %vm3963 = vcmp.lt.s32.totalorder %v3863, 0
      %v3964 = vsub.s32 0, %v3863
      %v3965 = vsel %vm3963, %v3964, %v3863
      %v3966 = vshrl.u32 %v3965, 4
      %v3967 = vand.u32 %v3965, 15
      %v3968 = vsub.s32 0, %v3967
      %v3969 = vsel %vm3963, %v3968, %v3967
      %vm3970 = vcmp.lt.s32.totalorder %v3864, 0
      %v3971 = vsub.s32 0, %v3864
      %v3972 = vsel %vm3970, %v3971, %v3864
      %v3973 = vshrl.u32 %v3972, 4
      %v3974 = vand.u32 %v3972, 15
      %v3975 = vsub.s32 0, %v3974
      %v3976 = vsel %vm3970, %v3975, %v3974
      %vm3977 = vcmp.ne.s32.totalorder %v3871, 0
      %vm3978 = vcmp.ne.s32.totalorder %v3878, 0
      %vm3979 = vcmp.ne.s32.totalorder %v3885, 0
      %vm3980 = vcmp.ne.s32.totalorder %v3892, 0
      %vm3981 = vcmp.ne.s32.totalorder %v3899, 0
      %vm3982 = vcmp.ne.s32.totalorder %v3906, 0
      %vm3983 = vcmp.ne.s32.totalorder %v3913, 0
      %vm3984 = vcmp.ne.s32.totalorder %v3920, 0
      %vm3985 = vcmp.ne.s32.totalorder %v3927, 0
      %vm3986 = vcmp.ne.s32.totalorder %v3934, 0
      %vm3987 = vcmp.ne.s32.totalorder %v3941, 0
      %vm3988 = vcmp.ne.s32.totalorder %v3948, 0
      %vm3989 = vcmp.ne.s32.totalorder %v3955, 0
      %vm3990 = vcmp.ne.s32.totalorder %v3962, 0
      %vm3991 = vcmp.ne.s32.totalorder %v3969, 0
      %vm3992 = vcmp.ne.s32.totalorder %v3976, 0
      %vm3993 = vcmp.lt.s32.totalorder %v3871, 0
      %vm3994 = vcmp.lt.s32.totalorder %v3878, 0
      %vm3995 = vcmp.lt.s32.totalorder %v3885, 0
      %vm3996 = vcmp.lt.s32.totalorder %v3892, 0
      %vm3997 = vcmp.lt.s32.totalorder %v3899, 0
      %vm3998 = vcmp.lt.s32.totalorder %v3906, 0
      %vm3999 = vcmp.lt.s32.totalorder %v3913, 0
      %vm4000 = vcmp.lt.s32.totalorder %v3920, 0
      %vm4001 = vcmp.lt.s32.totalorder %v3927, 0
      %vm4002 = vcmp.lt.s32.totalorder %v3934, 0
      %vm4003 = vcmp.lt.s32.totalorder %v3941, 0
      %vm4004 = vcmp.lt.s32.totalorder %v3948, 0
      %vm4005 = vcmp.lt.s32.totalorder %v3955, 0
      %vm4006 = vcmp.lt.s32.totalorder %v3962, 0
      %vm4007 = vcmp.lt.s32.totalorder %v3969, 0
      %vm4008 = vcmp.lt.s32.totalorder %v3976, 0
      %vm4009 = vmand %vm3993, %vm3977
      %vm4010 = vmand %vm3994, %vm3978
      %vm4011 = vmand %vm3995, %vm3979
      %vm4012 = vmand %vm3996, %vm3980
      %vm4013 = vmand %vm3997, %vm3981
      %vm4014 = vmand %vm3998, %vm3982
      %vm4015 = vmand %vm3999, %vm3983
      %vm4016 = vmand %vm4000, %vm3984
      %vm4017 = vmand %vm4001, %vm3985
      %vm4018 = vmand %vm4002, %vm3986
      %vm4019 = vmand %vm4003, %vm3987
      %vm4020 = vmand %vm4004, %vm3988
      %vm4021 = vmand %vm4005, %vm3989
      %vm4022 = vmand %vm4006, %vm3990
      %vm4023 = vmand %vm4007, %vm3991
      %vm4024 = vmand %vm4008, %vm3992
      %v4025 = vadd.s32 %v3871, 16
      %v4026 = vadd.s32 %v3878, 16
      %v4027 = vadd.s32 %v3885, 16
      %v4028 = vadd.s32 %v3892, 16
      %v4029 = vadd.s32 %v3899, 16
      %v4030 = vadd.s32 %v3906, 16
      %v4031 = vadd.s32 %v3913, 16
      %v4032 = vadd.s32 %v3920, 16
      %v4033 = vadd.s32 %v3927, 16
      %v4034 = vadd.s32 %v3934, 16
      %v4035 = vadd.s32 %v3941, 16
      %v4036 = vadd.s32 %v3948, 16
      %v4037 = vadd.s32 %v3955, 16
      %v4038 = vadd.s32 %v3962, 16
      %v4039 = vadd.s32 %v3969, 16
      %v4040 = vadd.s32 %v3976, 16
      %v4041 = vsel %vm4009, %v4025, %v3871
      %v4042 = vsel %vm4010, %v4026, %v3878
      %v4043 = vsel %vm4011, %v4027, %v3885
      %v4044 = vsel %vm4012, %v4028, %v3892
      %v4045 = vsel %vm4013, %v4029, %v3899
      %v4046 = vsel %vm4014, %v4030, %v3906
      %v4047 = vsel %vm4015, %v4031, %v3913
      %v4048 = vsel %vm4016, %v4032, %v3920
      %v4049 = vsel %vm4017, %v4033, %v3927
      %v4050 = vsel %vm4018, %v4034, %v3934
      %v4051 = vsel %vm4019, %v4035, %v3941
      %v4052 = vsel %vm4020, %v4036, %v3948
      %v4053 = vsel %vm4021, %v4037, %v3955
      %v4054 = vsel %vm4022, %v4038, %v3962
      %v4055 = vsel %vm4023, %v4039, %v3969
      %v4056 = vsel %vm4024, %v4040, %v3976
      %vm4057 = vcmp.eq.s32.totalorder %v4041, 15
      %vm4058 = vcmp.eq.s32.totalorder %v4042, 15
      %vm4059 = vcmp.eq.s32.totalorder %v4043, 15
      %vm4060 = vcmp.eq.s32.totalorder %v4044, 15
      %vm4061 = vcmp.eq.s32.totalorder %v4045, 15
      %vm4062 = vcmp.eq.s32.totalorder %v4046, 15
      %vm4063 = vcmp.eq.s32.totalorder %v4047, 15
      %vm4064 = vcmp.eq.s32.totalorder %v4048, 15
      %vm4065 = vcmp.eq.s32.totalorder %v4049, 15
      %vm4066 = vcmp.eq.s32.totalorder %v4050, 15
      %vm4067 = vcmp.eq.s32.totalorder %v4051, 15
      %vm4068 = vcmp.eq.s32.totalorder %v4052, 15
      %vm4069 = vcmp.eq.s32.totalorder %v4053, 15
      %vm4070 = vcmp.eq.s32.totalorder %v4054, 15
      %vm4071 = vcmp.eq.s32.totalorder %v4055, 15
      %vm4072 = vcmp.eq.s32.totalorder %v4056, 15
      %v4073 = vsel %vm4057, 0.0, %v3811
      %v4074 = vsel %vm4058, 0.0, %v3813
      %v4075 = vsel %vm4059, 0.0, %v3815
      %v4076 = vsel %vm4060, 0.0, %v3817
      %v4077 = vsel %vm4061, 0.0, %v3819
      %v4078 = vsel %vm4062, 0.0, %v3821
      %v4079 = vsel %vm4063, 0.0, %v3823
      %v4080 = vsel %vm4064, 0.0, %v3825
      %v4081 = vsel %vm4065, 0.0, %v3827
      %v4082 = vsel %vm4066, 0.0, %v3829
      %v4083 = vsel %vm4067, 0.0, %v3831
      %v4084 = vsel %vm4068, 0.0, %v3833
      %v4085 = vsel %vm4069, 0.0, %v3835
      %v4086 = vsel %vm4070, 0.0, %v3837
      %v4087 = vsel %vm4071, 0.0, %v3839
      %v4088 = vsel %vm4072, 0.0, %v3856
      %4105 = vmatprep.subr.mxu0 %v3424
      %4106 = vmatpush1.msra.mxu0 %v3423
      %4107 = vmatprep.subr.mxu0 %v3426
      %4108 = vmatpush1.msra.mxu0 %v3425
      %4109 = vmatprep.subr.mxu0 %v3428
      %4110 = vmatpush1.msra.mxu0 %v3427
      %4111 = vmatprep.subr.mxu0 %v3430
      %4112 = vmatpush1.msra.mxu0 %v3429
      %4113 = vmatprep.subr.mxu0 %v3432
      %4114 = vmatpush1.msra.mxu0 %v3431
      %4115 = vmatprep.subr.mxu0 %v3434
      %4116 = vmatpush1.msra.mxu0 %v3433
      %4117 = vmatprep.subr.mxu0 %v3436
      %4118 = vmatpush1.msra.mxu0 %v3435
      %4119 = vmatprep.subr.mxu0 %v3438
      %4120 = vmatpush1.msra.mxu0 %v3437
      %4121 = vmatprep.subr.mxu0 %v3440
      %4122 = vmatpush1.msra.mxu0 %v3439
      %4123 = vmatprep.subr.mxu0 %v3442
      %4124 = vmatpush1.msra.mxu0 %v3441
      %4125 = vmatprep.subr.mxu0 %v3444
      %4126 = vmatpush1.msra.mxu0 %v3443
      %4127 = vmatprep.subr.mxu0 %v3446
      %4128 = vmatpush1.msra.mxu0 %v3445
      %4129 = vmatprep.subr.mxu0 %v3448
      %4130 = vmatpush1.msra.mxu0 %v3447
      %4131 = vmatprep.subr.mxu0 %v3450
      %4132 = vmatpush1.msra.mxu0 %v3449
      %4133 = vmatprep.subr.mxu0 %v3452
      %4134 = vmatpush1.msra.mxu0 %v3451
      %4135 = vmatprep.subr.mxu0 %v3454
      %4136 = vmatpush1.msra.mxu0 %v3453
      %4137 = vmatprep.subr.mxu0 0.0
      %4138 = vmatpush1.msra.mxu0 0.0
      %4139 = vmatprep.subr.mxu0 0.0
      %4140 = vmatpush1.msra.mxu0 0.0
      %4141 = vmatprep.subr.mxu0 0.0
      %4142 = vmatpush1.msra.mxu0 0.0
      %4143 = vmatprep.subr.mxu0 0.0
      %4144 = vmatpush1.msra.mxu0 0.0
      %4145 = vmatprep.subr.mxu0 0.0
      %4146 = vmatpush1.msra.mxu0 0.0
      %4147 = vmatprep.subr.mxu0 0.0
      %4148 = vmatpush1.msra.mxu0 0.0
      %4149 = vmatprep.subr.mxu0 0.0
      %4150 = vmatpush1.msra.mxu0 0.0
      %4151 = vmatprep.subr.mxu0 0.0
      %4152 = vmatpush1.msra.mxu0 0.0
      %4153 = vmatprep.subr.mxu0 0.0
      %4154 = vmatpush1.msra.mxu0 0.0
      %4155 = vmatprep.subr.mxu0 0.0
      %4156 = vmatpush1.msra.mxu0 0.0
      %4157 = vmatprep.subr.mxu0 0.0
      %4158 = vmatpush1.msra.mxu0 0.0
      %4159 = vmatprep.subr.mxu0 0.0
      %4160 = vmatpush1.msra.mxu0 0.0
      %4161 = vmatprep.subr.mxu0 0.0
      %4162 = vmatpush1.msra.mxu0 0.0
      %4163 = vmatprep.subr.mxu0 0.0
      %4164 = vmatpush1.msra.mxu0 0.0
      %4165 = vmatprep.subr.mxu0 0.0
      %4166 = vmatpush1.msra.mxu0 0.0
      %4167 = vmatprep.subr.mxu0 0.0
      %4168 = vmatpush1.msra.mxu0 0.0
      %4169 = vmatprep.mubr.f32.mxu0 0.0
      %4170 = vmatmul.mubr.f32.gmra.mrb[0].mxu0 %v3553
      %v4171 = vpop.f32.mrb[0].mxu0
      %v4172 = vadd.f32 0.0, %v4171
      %v4173 = vpop.f32.mrb[0].mxu0
      %v4174 = vadd.f32 0.0, %v4173
      %4175 = vmatprep.mubr.f32.mxu0 0.0
      %4176 = vmatmul.mubr.f32.gmra.mrb[0].mxu0 %v3570
      %v4177 = vpop.f32.mrb[0].mxu0
      %v4178 = vadd.f32 0.0, %v4177
      %v4179 = vpop.f32.mrb[0].mxu0
      %v4180 = vadd.f32 0.0, %v4179
      %4181 = vmatprep.mubr.f32.mxu0 0.0
      %4182 = vmatmul.mubr.f32.gmra.mrb[0].mxu0 %v3587
      %v4183 = vpop.f32.mrb[0].mxu0
      %v4184 = vadd.f32 0.0, %v4183
      %v4185 = vpop.f32.mrb[0].mxu0
      %v4186 = vadd.f32 0.0, %v4185
      %4187 = vmatprep.mubr.f32.mxu0 0.0
      %4188 = vmatmul.mubr.f32.gmra.mrb[0].mxu0 %v3604
      %v4189 = vpop.f32.mrb[0].mxu0
      %v4190 = vadd.f32 0.0, %v4189
      %v4191 = vpop.f32.mrb[0].mxu0
      %v4192 = vadd.f32 0.0, %v4191
      %4193 = vmatprep.mubr.f32.mxu0 0.0
      %4194 = vmatmul.mubr.f32.gmra.mrb[0].mxu0 %v3621
      %v4195 = vpop.f32.mrb[0].mxu0
      %v4196 = vadd.f32 0.0, %v4195
      %v4197 = vpop.f32.mrb[0].mxu0
      %v4198 = vadd.f32 0.0, %v4197
      %4199 = vmatprep.mubr.f32.mxu0 0.0
      %4200 = vmatmul.mubr.f32.gmra.mrb[0].mxu0 %v3638
      %v4201 = vpop.f32.mrb[0].mxu0
      %v4202 = vadd.f32 0.0, %v4201
      %v4203 = vpop.f32.mrb[0].mxu0
      %v4204 = vadd.f32 0.0, %v4203
      %4205 = vmatprep.mubr.f32.mxu0 0.0
      %4206 = vmatmul.mubr.f32.gmra.mrb[0].mxu0 %v3655
      %v4207 = vpop.f32.mrb[0].mxu0
      %v4208 = vadd.f32 0.0, %v4207
      %v4209 = vpop.f32.mrb[0].mxu0
      %v4210 = vadd.f32 0.0, %v4209
      %4211 = vmatprep.mubr.f32.mxu0 0.0
      %4212 = vmatmul.mubr.f32.gmra.mrb[0].mxu0 %v3672
      %v4213 = vpop.f32.mrb[0].mxu0
      %v4214 = vadd.f32 0.0, %v4213
      %v4215 = vpop.f32.mrb[0].mxu0
      %v4216 = vadd.f32 0.0, %v4215
      %4217 = vmatprep.mubr.f32.mxu0 0.0
      %4218 = vmatmul.mubr.f32.gmra.mrb[0].mxu0 %v3689
      %v4219 = vpop.f32.mrb[0].mxu0
      %v4220 = vadd.f32 0.0, %v4219
      %v4221 = vpop.f32.mrb[0].mxu0
      %v4222 = vadd.f32 0.0, %v4221
      %4223 = vmatprep.mubr.f32.mxu0 0.0
      %4224 = vmatmul.mubr.f32.gmra.mrb[0].mxu0 %v3706
      %v4225 = vpop.f32.mrb[0].mxu0
      %v4226 = vadd.f32 0.0, %v4225
      %v4227 = vpop.f32.mrb[0].mxu0
      %v4228 = vadd.f32 0.0, %v4227
      %4229 = vmatprep.mubr.f32.mxu0 0.0
      %4230 = vmatmul.mubr.f32.gmra.mrb[0].mxu0 %v3723
      %v4231 = vpop.f32.mrb[0].mxu0
      %v4232 = vadd.f32 0.0, %v4231
      %v4233 = vpop.f32.mrb[0].mxu0
      %v4234 = vadd.f32 0.0, %v4233
      %4235 = vmatprep.mubr.f32.mxu0 0.0
      %4236 = vmatmul.mubr.f32.gmra.mrb[0].mxu0 %v3740
      %v4237 = vpop.f32.mrb[0].mxu0
      %v4238 = vadd.f32 0.0, %v4237
      %v4239 = vpop.f32.mrb[0].mxu0
      %v4240 = vadd.f32 0.0, %v4239
      %4241 = vmatprep.mubr.f32.mxu0 0.0
      %4242 = vmatmul.mubr.f32.gmra.mrb[0].mxu0 %v3757
      %v4243 = vpop.f32.mrb[0].mxu0
      %v4244 = vadd.f32 0.0, %v4243
      %v4245 = vpop.f32.mrb[0].mxu0
      %v4246 = vadd.f32 0.0, %v4245
      %4247 = vmatprep.mubr.f32.mxu0 0.0
      %4248 = vmatmul.mubr.f32.gmra.mrb[0].mxu0 %v3774
      %v4249 = vpop.f32.mrb[0].mxu0
      %v4250 = vadd.f32 0.0, %v4249
      %v4251 = vpop.f32.mrb[0].mxu0
      %v4252 = vadd.f32 0.0, %v4251
      %4253 = vmatprep.mubr.f32.mxu0 0.0
      %4254 = vmatmul.mubr.f32.gmra.mrb[0].mxu0 %v3791
      %v4255 = vpop.f32.mrb[0].mxu0
      %v4256 = vadd.f32 0.0, %v4255
      %v4257 = vpop.f32.mrb[0].mxu0
      %v4258 = vadd.f32 0.0, %v4257
      %4259 = vmatprep.mubr.f32.mxu0 0.0
      %4260 = vmatmul.mubr.f32.gmra.mrb[0].mxu0 %v3808
      %v4261 = vpop.f32.mrb[0].mxu0
      %v4262 = vadd.f32 0.0, %v4261
      %v4263 = vpop.f32.mrb[0].mxu0
      %v4264 = vadd.f32 0.0, %v4263
      %4265 = vdwg.mxu0
      %4266 = vmatprep.subr.mxu0 0.0
      %4267 = vmatpush1.msra.mxu0 %v3455
      %4268 = vmatprep.subr.mxu0 0.0
      %4269 = vmatpush1.msra.mxu0 %v3456
      %4270 = vmatprep.subr.mxu0 0.0
      %4271 = vmatpush1.msra.mxu0 %v3457
      %4272 = vmatprep.subr.mxu0 0.0
      %4273 = vmatpush1.msra.mxu0 %v3458
      %4274 = vmatprep.subr.mxu0 0.0
      %4275 = vmatpush1.msra.mxu0 %v3459
      %4276 = vmatprep.subr.mxu0 0.0
      %4277 = vmatpush1.msra.mxu0 %v3460
      %4278 = vmatprep.subr.mxu0 0.0
      %4279 = vmatpush1.msra.mxu0 %v3461
      %4280 = vmatprep.subr.mxu0 0.0
      %4281 = vmatpush1.msra.mxu0 %v3462
      %4282 = vmatprep.subr.mxu0 0.0
      %4283 = vmatpush1.msra.mxu0 %v3463
      %4284 = vmatprep.subr.mxu0 0.0
      %4285 = vmatpush1.msra.mxu0 %v3464
      %4286 = vmatprep.subr.mxu0 0.0
      %4287 = vmatpush1.msra.mxu0 %v3465
      %4288 = vmatprep.subr.mxu0 0.0
      %4289 = vmatpush1.msra.mxu0 %v3466
      %4290 = vmatprep.subr.mxu0 0.0
      %4291 = vmatpush1.msra.mxu0 %v3467
      %4292 = vmatprep.subr.mxu0 0.0
      %4293 = vmatpush1.msra.mxu0 %v3468
      %4294 = vmatprep.subr.mxu0 0.0
      %4295 = vmatpush1.msra.mxu0 %v3469
      %4296 = vmatprep.subr.mxu0 0.0
      %4297 = vmatpush1.msra.mxu0 %v3470
      %4298 = vmatprep.subr.mxu0 0.0
      %4299 = vmatpush1.msra.mxu0 0.0
      %4300 = vmatprep.subr.mxu0 0.0
      %4301 = vmatpush1.msra.mxu0 0.0
      %4302 = vmatprep.subr.mxu0 0.0
      %4303 = vmatpush1.msra.mxu0 0.0
      %4304 = vmatprep.subr.mxu0 0.0
      %4305 = vmatpush1.msra.mxu0 0.0
      %4306 = vmatprep.subr.mxu0 0.0
      %4307 = vmatpush1.msra.mxu0 0.0
      %4308 = vmatprep.subr.mxu0 0.0
      %4309 = vmatpush1.msra.mxu0 0.0
      %4310 = vmatprep.subr.mxu0 0.0
      %4311 = vmatpush1.msra.mxu0 0.0
      %4312 = vmatprep.subr.mxu0 0.0
      %4313 = vmatpush1.msra.mxu0 0.0
      %4314 = vmatprep.subr.mxu0 0.0
      %4315 = vmatpush1.msra.mxu0 0.0
      %4316 = vmatprep.subr.mxu0 0.0
      %4317 = vmatpush1.msra.mxu0 0.0
      %4318 = vmatprep.subr.mxu0 0.0
      %4319 = vmatpush1.msra.mxu0 0.0
      %4320 = vmatprep.subr.mxu0 0.0
      %4321 = vmatpush1.msra.mxu0 0.0
      %4322 = vmatprep.subr.mxu0 0.0
      %4323 = vmatpush1.msra.mxu0 0.0
      %4324 = vmatprep.subr.mxu0 0.0
      %4325 = vmatpush1.msra.mxu0 0.0
      %4326 = vmatprep.subr.mxu0 0.0
      %4327 = vmatpush1.msra.mxu0 0.0
      %4328 = vmatprep.subr.mxu0 0.0
      %4329 = vmatpush1.msra.mxu0 0.0
      %4330 = vmatprep.mubr.f32.mxu0 0.0
      %4331 = vmatmul.mubr.f32.gmra.mrb[0].mxu0 %v4073
      %v4332 = vpop.f32.mrb[0].mxu0
      %v4333 = vadd.f32 0.0, %v4332
      %v4334 = vpop.f32.mrb[0].mxu0
      %4335 = vmatprep.mubr.f32.mxu0 0.0
      %4336 = vmatmul.mubr.f32.gmra.mrb[0].mxu0 %v4074
      %v4337 = vpop.f32.mrb[0].mxu0
      %v4338 = vadd.f32 0.0, %v4337
      %v4339 = vpop.f32.mrb[0].mxu0
      %4340 = vmatprep.mubr.f32.mxu0 0.0
      %4341 = vmatmul.mubr.f32.gmra.mrb[0].mxu0 %v4075
      %v4342 = vpop.f32.mrb[0].mxu0
      %v4343 = vadd.f32 0.0, %v4342
      %v4344 = vpop.f32.mrb[0].mxu0
      %4345 = vmatprep.mubr.f32.mxu0 0.0
      %4346 = vmatmul.mubr.f32.gmra.mrb[0].mxu0 %v4076
      %v4347 = vpop.f32.mrb[0].mxu0
      %v4348 = vadd.f32 0.0, %v4347
      %v4349 = vpop.f32.mrb[0].mxu0
      %4350 = vmatprep.mubr.f32.mxu0 0.0
      %4351 = vmatmul.mubr.f32.gmra.mrb[0].mxu0 %v4077
      %v4352 = vpop.f32.mrb[0].mxu0
      %v4353 = vadd.f32 0.0, %v4352
      %v4354 = vpop.f32.mrb[0].mxu0
      %4355 = vmatprep.mubr.f32.mxu0 0.0
      %4356 = vmatmul.mubr.f32.gmra.mrb[0].mxu0 %v4078
      %v4357 = vpop.f32.mrb[0].mxu0
      %v4358 = vadd.f32 0.0, %v4357
      %v4359 = vpop.f32.mrb[0].mxu0
      %4360 = vmatprep.mubr.f32.mxu0 0.0
      %4361 = vmatmul.mubr.f32.gmra.mrb[0].mxu0 %v4079
      %v4362 = vpop.f32.mrb[0].mxu0
      %v4363 = vadd.f32 0.0, %v4362
      %v4364 = vpop.f32.mrb[0].mxu0
      %4365 = vmatprep.mubr.f32.mxu0 0.0
      %4366 = vmatmul.mubr.f32.gmra.mrb[0].mxu0 %v4080
      %v4367 = vpop.f32.mrb[0].mxu0
      %v4368 = vadd.f32 0.0, %v4367
      %v4369 = vpop.f32.mrb[0].mxu0
      %4370 = vmatprep.mubr.f32.mxu0 0.0
      %4371 = vmatmul.mubr.f32.gmra.mrb[0].mxu0 %v4081
      %v4372 = vpop.f32.mrb[0].mxu0
      %v4373 = vadd.f32 0.0, %v4372
      %v4374 = vpop.f32.mrb[0].mxu0
      %4375 = vmatprep.mubr.f32.mxu0 0.0
      %4376 = vmatmul.mubr.f32.gmra.mrb[0].mxu0 %v4082
      %v4377 = vpop.f32.mrb[0].mxu0
      %v4378 = vadd.f32 0.0, %v4377
      %v4379 = vpop.f32.mrb[0].mxu0
      %4380 = vmatprep.mubr.f32.mxu0 0.0
      %4381 = vmatmul.mubr.f32.gmra.mrb[0].mxu0 %v4083
      %v4382 = vpop.f32.mrb[0].mxu0
      %v4383 = vadd.f32 0.0, %v4382
      %v4384 = vpop.f32.mrb[0].mxu0
      %4385 = vmatprep.mubr.f32.mxu0 0.0
      %4386 = vmatmul.mubr.f32.gmra.mrb[0].mxu0 %v4084
      %v4387 = vpop.f32.mrb[0].mxu0
      %v4388 = vadd.f32 0.0, %v4387
      %v4389 = vpop.f32.mrb[0].mxu0
      %4390 = vmatprep.mubr.f32.mxu0 0.0
      %4391 = vmatmul.mubr.f32.gmra.mrb[0].mxu0 %v4085
      %v4392 = vpop.f32.mrb[0].mxu0
      %v4393 = vadd.f32 0.0, %v4392
      %v4394 = vpop.f32.mrb[0].mxu0
      %4395 = vmatprep.mubr.f32.mxu0 0.0
      %4396 = vmatmul.mubr.f32.gmra.mrb[0].mxu0 %v4086
      %v4397 = vpop.f32.mrb[0].mxu0
      %v4398 = vadd.f32 0.0, %v4397
      %v4399 = vpop.f32.mrb[0].mxu0
      %4400 = vmatprep.mubr.f32.mxu0 0.0
      %4401 = vmatmul.mubr.f32.gmra.mrb[0].mxu0 %v4087
      %v4402 = vpop.f32.mrb[0].mxu0
      %v4403 = vadd.f32 0.0, %v4402
      %v4404 = vpop.f32.mrb[0].mxu0
      %4405 = vmatprep.mubr.f32.mxu0 0.0
      %4406 = vmatmul.mubr.f32.gmra.mrb[0].mxu0 %v4088
      %v4407 = vpop.f32.mrb[0].mxu0
      %v4408 = vadd.f32 0.0, %v4407
      %v4409 = vpop.f32.mrb[0].mxu0
      %4410 = vdwg.mxu0
      %v4412 = vlaneseq
      %v4413 = vshrl.u32 %v4412, 7
      %v4414 = vsub.s32 0, %v4413
      %v4415 = vrot.slane %v3471, %v4414
      %v4417 = vmul.f32 %v4172, %v4415
      %v4418 = vmul.f32 %v4178, %v4415
      %v4419 = vmul.f32 %v4184, %v4415
      %v4420 = vmul.f32 %v4190, %v4415
      %v4421 = vmul.f32 %v4196, %v4415
      %v4422 = vmul.f32 %v4202, %v4415
      %v4423 = vmul.f32 %v4208, %v4415
      %v4424 = vmul.f32 %v4214, %v4415
      %v4425 = vmul.f32 %v4220, %v4415
      %v4426 = vmul.f32 %v4226, %v4415
      %v4427 = vmul.f32 %v4232, %v4415
      %v4428 = vmul.f32 %v4238, %v4415
      %v4429 = vmul.f32 %v4244, %v4415
      %v4430 = vmul.f32 %v4250, %v4415
      %v4431 = vmul.f32 %v4256, %v4415
      %v4432 = vmul.f32 %v4262, %v4415
      %v4434 = vlaneseq
      %v4435 = vshrl.u32 %v4434, 7
      %v4436 = vsub.s32 0, %v4435
      %v4437 = vrot.slane %v3472, %v4436
      %v4439 = vadd.f32 %v4417, %v4437
      %v4440 = vadd.f32 %v4418, %v4437
      %v4441 = vadd.f32 %v4419, %v4437
      %v4442 = vadd.f32 %v4420, %v4437
      %v4443 = vadd.f32 %v4421, %v4437
      %v4444 = vadd.f32 %v4422, %v4437
      %v4445 = vadd.f32 %v4423, %v4437
      %v4446 = vadd.f32 %v4424, %v4437
      %v4447 = vadd.f32 %v4425, %v4437
      %v4448 = vadd.f32 %v4426, %v4437
      %v4449 = vadd.f32 %v4427, %v4437
      %v4450 = vadd.f32 %v4428, %v4437
      %v4451 = vadd.f32 %v4429, %v4437
      %v4452 = vadd.f32 %v4430, %v4437
      %v4453 = vadd.f32 %v4431, %v4437
      %v4454 = vadd.f32 %v4432, %v4437
      %v4455 = vadd.f32 %v4174, %v4333
      %v4456 = vadd.f32 %v4180, %v4338
      %v4457 = vadd.f32 %v4186, %v4343
      %v4458 = vadd.f32 %v4192, %v4348
      %v4459 = vadd.f32 %v4198, %v4353
      %v4460 = vadd.f32 %v4204, %v4358
      %v4461 = vadd.f32 %v4210, %v4363
      %v4462 = vadd.f32 %v4216, %v4368
      %v4463 = vadd.f32 %v4222, %v4373
      %v4464 = vadd.f32 %v4228, %v4378
      %v4465 = vadd.f32 %v4234, %v4383
      %v4466 = vadd.f32 %v4240, %v4388
      %v4467 = vadd.f32 %v4246, %v4393
      %v4468 = vadd.f32 %v4252, %v4398
      %v4469 = vadd.f32 %v4258, %v4403
      %v4470 = vadd.f32 %v4264, %v4408
      %v4471 = vmul.f32 %v4455, %v4415
      %v4472 = vmul.f32 %v4456, %v4415
      %v4473 = vmul.f32 %v4457, %v4415
      %v4474 = vmul.f32 %v4458, %v4415
      %v4475 = vmul.f32 %v4459, %v4415
      %v4476 = vmul.f32 %v4460, %v4415
      %v4477 = vmul.f32 %v4461, %v4415
      %v4478 = vmul.f32 %v4462, %v4415
      %v4479 = vmul.f32 %v4463, %v4415
      %v4480 = vmul.f32 %v4464, %v4415
      %v4481 = vmul.f32 %v4465, %v4415
      %v4482 = vmul.f32 %v4466, %v4415
      %v4483 = vmul.f32 %v4467, %v4415
      %v4484 = vmul.f32 %v4468, %v4415
      %v4485 = vmul.f32 %v4469, %v4415
      %v4486 = vmul.f32 %v4470, %v4415
      %v4487 = vadd.f32 %v4471, %v4437
      %v4488 = vadd.f32 %v4472, %v4437
      %v4489 = vadd.f32 %v4473, %v4437
      %v4490 = vadd.f32 %v4474, %v4437
      %v4491 = vadd.f32 %v4475, %v4437
      %v4492 = vadd.f32 %v4476, %v4437
      %v4493 = vadd.f32 %v4477, %v4437
      %v4494 = vadd.f32 %v4478, %v4437
      %v4495 = vadd.f32 %v4479, %v4437
      %v4496 = vadd.f32 %v4480, %v4437
      %v4497 = vadd.f32 %v4481, %v4437
      %v4498 = vadd.f32 %v4482, %v4437
      %v4499 = vadd.f32 %v4483, %v4437
      %v4500 = vadd.f32 %v4484, %v4437
      %v4501 = vadd.f32 %v4485, %v4437
      %v4502 = vadd.f32 %v4486, %v4437
      %v4503 = vmax.f32 %v4439, 0.0
      %v4504 = vmax.f32 %v4440, 0.0
      %v4505 = vmax.f32 %v4441, 0.0
      %v4506 = vmax.f32 %v4442, 0.0
      %v4507 = vmax.f32 %v4443, 0.0
      %v4508 = vmax.f32 %v4444, 0.0
      %v4509 = vmax.f32 %v4445, 0.0
      %v4510 = vmax.f32 %v4446, 0.0
      %v4511 = vmax.f32 %v4447, 0.0
      %v4512 = vmax.f32 %v4448, 0.0
      %v4513 = vmax.f32 %v4449, 0.0
      %v4514 = vmax.f32 %v4450, 0.0
      %v4515 = vmax.f32 %v4451, 0.0
      %v4516 = vmax.f32 %v4452, 0.0
      %v4517 = vmax.f32 %v4453, 0.0
      %v4518 = vmax.f32 %v4454, 0.0
      %v4519 = vmax.f32 %v4487, 0.0
      %v4520 = vmax.f32 %v4488, 0.0
      %v4521 = vmax.f32 %v4489, 0.0
      %v4522 = vmax.f32 %v4490, 0.0
      %v4523 = vmax.f32 %v4491, 0.0
      %v4524 = vmax.f32 %v4492, 0.0
      %v4525 = vmax.f32 %v4493, 0.0
      %v4526 = vmax.f32 %v4494, 0.0
      %v4527 = vmax.f32 %v4495, 0.0
      %v4528 = vmax.f32 %v4496, 0.0
      %v4529 = vmax.f32 %v4497, 0.0
      %v4530 = vmax.f32 %v4498, 0.0
      %v4531 = vmax.f32 %v4499, 0.0
      %v4532 = vmax.f32 %v4500, 0.0
      %v4533 = vmax.f32 %v4501, 0.0
      %v4534 = vmax.f32 %v4502, 0.0
      %v4551 = vcombine.high %v4503, %v4503
      %v4553 = vunpack.c.l.s4 1966171168
      %v4554 = vunpack.c.0.s8 %v4553
      %v4555 = vlaneseq
      %v4556 = vshrl.u32 %v4555, 7
      %v4557 = vsub.s32 %v4554, %v4556
      %v4558 = vrot.slane %v4503, %v4557
      %v4560 = vunpack.c.l.s4 1966171168
      %v4561 = vunpack.c.0.s8 %v4560
      %v4562 = vlaneseq
      %v4563 = vshrl.u32 %v4562, 7
      %v4564 = vsub.s32 %v4561, %v4563
      %v4565 = vrot.slane %v4551, %v4564
      %v4566 = vcombine.high %v4558, %v4558
      %v4567 = vcombine.high %v4565, %v4565
      %v4569 = vunpack.c.l.s4 1966171168
      %v4570 = vunpack.c.0.s8 %v4569
      %v4571 = vlaneseq
      %v4572 = vshrl.u32 %v4571, 7
      %v4573 = vsub.s32 %v4570, %v4572
      %v4574 = vrot.slane %v4558, %v4573
      %v4576 = vunpack.c.l.s4 1966171168
      %v4577 = vunpack.c.0.s8 %v4576
      %v4578 = vlaneseq
      %v4579 = vshrl.u32 %v4578, 7
      %v4580 = vsub.s32 %v4577, %v4579
      %v4581 = vrot.slane %v4565, %v4580
      %v4583 = vunpack.c.l.s4 1966171168
      %v4584 = vunpack.c.0.s8 %v4583
      %v4585 = vlaneseq
      %v4586 = vshrl.u32 %v4585, 7
      %v4587 = vsub.s32 %v4584, %v4586
      %v4588 = vrot.slane %v4566, %v4587
      %v4590 = vunpack.c.l.s4 1966171168
      %v4591 = vunpack.c.0.s8 %v4590
      %v4592 = vlaneseq
      %v4593 = vshrl.u32 %v4592, 7
      %v4594 = vsub.s32 %v4591, %v4593
      %v4595 = vrot.slane %v4567, %v4594
      %v4596 = vcombine.high %v4574, %v4574
      %v4597 = vcombine.high %v4581, %v4581
      %v4598 = vcombine.high %v4588, %v4588
      %v4599 = vcombine.high %v4595, %v4595
      %v4600 = vcombine.high %v4504, %v4504
      %v4602 = vunpack.c.l.s4 1966171168
      %v4603 = vunpack.c.0.s8 %v4602
      %v4604 = vlaneseq
      %v4605 = vshrl.u32 %v4604, 7
      %v4606 = vsub.s32 %v4603, %v4605
      %v4607 = vrot.slane %v4504, %v4606
      %v4609 = vunpack.c.l.s4 1966171168
      %v4610 = vunpack.c.0.s8 %v4609
      %v4611 = vlaneseq
      %v4612 = vshrl.u32 %v4611, 7
      %v4613 = vsub.s32 %v4610, %v4612
      %v4614 = vrot.slane %v4600, %v4613
      %v4615 = vcombine.high %v4607, %v4607
      %v4616 = vcombine.high %v4614, %v4614
      %v4618 = vunpack.c.l.s4 1966171168
      %v4619 = vunpack.c.0.s8 %v4618
      %v4620 = vlaneseq
      %v4621 = vshrl.u32 %v4620, 7
      %v4622 = vsub.s32 %v4619, %v4621
      %v4623 = vrot.slane %v4607, %v4622
      %v4625 = vunpack.c.l.s4 1966171168
      %v4626 = vunpack.c.0.s8 %v4625
      %v4627 = vlaneseq
      %v4628 = vshrl.u32 %v4627, 7
      %v4629 = vsub.s32 %v4626, %v4628
      %v4630 = vrot.slane %v4614, %v4629
      %v4632 = vunpack.c.l.s4 1966171168
      %v4633 = vunpack.c.0.s8 %v4632
      %v4634 = vlaneseq
      %v4635 = vshrl.u32 %v4634, 7
      %v4636 = vsub.s32 %v4633, %v4635
      %v4637 = vrot.slane %v4615, %v4636
      %v4639 = vunpack.c.l.s4 1966171168
      %v4640 = vunpack.c.0.s8 %v4639
      %v4641 = vlaneseq
      %v4642 = vshrl.u32 %v4641, 7
      %v4643 = vsub.s32 %v4640, %v4642
      %v4644 = vrot.slane %v4616, %v4643
      %v4645 = vcombine.high %v4623, %v4623
      %v4646 = vcombine.high %v4630, %v4630
      %v4647 = vcombine.high %v4637, %v4637
      %v4648 = vcombine.high %v4644, %v4644
      %v4649 = vcombine.high %v4505, %v4505
      %v4651 = vunpack.c.l.s4 1966171168
      %v4652 = vunpack.c.0.s8 %v4651
      %v4653 = vlaneseq
      %v4654 = vshrl.u32 %v4653, 7
      %v4655 = vsub.s32 %v4652, %v4654
      %v4656 = vrot.slane %v4505, %v4655
      %v4658 = vunpack.c.l.s4 1966171168
      %v4659 = vunpack.c.0.s8 %v4658
      %v4660 = vlaneseq
      %v4661 = vshrl.u32 %v4660, 7
      %v4662 = vsub.s32 %v4659, %v4661
      %v4663 = vrot.slane %v4649, %v4662
      %v4664 = vcombine.high %v4656, %v4656
      %v4665 = vcombine.high %v4663, %v4663
      %v4667 = vunpack.c.l.s4 1966171168
      %v4668 = vunpack.c.0.s8 %v4667
      %v4669 = vlaneseq
      %v4670 = vshrl.u32 %v4669, 7
      %v4671 = vsub.s32 %v4668, %v4670
      %v4672 = vrot.slane %v4656, %v4671
      %v4674 = vunpack.c.l.s4 1966171168
      %v4675 = vunpack.c.0.s8 %v4674
      %v4676 = vlaneseq
      %v4677 = vshrl.u32 %v4676, 7
      %v4678 = vsub.s32 %v4675, %v4677
      %v4679 = vrot.slane %v4663, %v4678
      %v4681 = vunpack.c.l.s4 1966171168
      %v4682 = vunpack.c.0.s8 %v4681
      %v4683 = vlaneseq
      %v4684 = vshrl.u32 %v4683, 7
      %v4685 = vsub.s32 %v4682, %v4684
      %v4686 = vrot.slane %v4664, %v4685
      %v4688 = vunpack.c.l.s4 1966171168
      %v4689 = vunpack.c.0.s8 %v4688
      %v4690 = vlaneseq
      %v4691 = vshrl.u32 %v4690, 7
      %v4692 = vsub.s32 %v4689, %v4691
      %v4693 = vrot.slane %v4665, %v4692
      %v4694 = vcombine.high %v4672, %v4672
      %v4695 = vcombine.high %v4679, %v4679
      %v4696 = vcombine.high %v4686, %v4686
      %v4697 = vcombine.high %v4693, %v4693
      %v4698 = vcombine.high %v4506, %v4506
      %v4700 = vunpack.c.l.s4 1966171168
      %v4701 = vunpack.c.0.s8 %v4700
      %v4702 = vlaneseq
      %v4703 = vshrl.u32 %v4702, 7
      %v4704 = vsub.s32 %v4701, %v4703
      %v4705 = vrot.slane %v4506, %v4704
      %v4707 = vunpack.c.l.s4 1966171168
      %v4708 = vunpack.c.0.s8 %v4707
      %v4709 = vlaneseq
      %v4710 = vshrl.u32 %v4709, 7
      %v4711 = vsub.s32 %v4708, %v4710
      %v4712 = vrot.slane %v4698, %v4711
      %v4713 = vcombine.high %v4705, %v4705
      %v4714 = vcombine.high %v4712, %v4712
      %v4716 = vunpack.c.l.s4 1966171168
      %v4717 = vunpack.c.0.s8 %v4716
      %v4718 = vlaneseq
      %v4719 = vshrl.u32 %v4718, 7
      %v4720 = vsub.s32 %v4717, %v4719
      %v4721 = vrot.slane %v4705, %v4720
      %v4723 = vunpack.c.l.s4 1966171168
      %v4724 = vunpack.c.0.s8 %v4723
      %v4725 = vlaneseq
      %v4726 = vshrl.u32 %v4725, 7
      %v4727 = vsub.s32 %v4724, %v4726
      %v4728 = vrot.slane %v4712, %v4727
      %v4730 = vunpack.c.l.s4 1966171168
      %v4731 = vunpack.c.0.s8 %v4730
      %v4732 = vlaneseq
      %v4733 = vshrl.u32 %v4732, 7
      %v4734 = vsub.s32 %v4731, %v4733
      %v4735 = vrot.slane %v4713, %v4734
      %v4737 = vunpack.c.l.s4 1966171168
      %v4738 = vunpack.c.0.s8 %v4737
      %v4739 = vlaneseq
      %v4740 = vshrl.u32 %v4739, 7
      %v4741 = vsub.s32 %v4738, %v4740
      %v4742 = vrot.slane %v4714, %v4741
      %v4743 = vcombine.high %v4721, %v4721
      %v4744 = vcombine.high %v4728, %v4728
      %v4745 = vcombine.high %v4735, %v4735
      %v4746 = vcombine.high %v4742, %v4742
      %v4747 = vcombine.high %v4507, %v4507
      %v4749 = vunpack.c.l.s4 1966171168
      %v4750 = vunpack.c.0.s8 %v4749
      %v4751 = vlaneseq
      %v4752 = vshrl.u32 %v4751, 7
      %v4753 = vsub.s32 %v4750, %v4752
      %v4754 = vrot.slane %v4507, %v4753
      %v4756 = vunpack.c.l.s4 1966171168
      %v4757 = vunpack.c.0.s8 %v4756
      %v4758 = vlaneseq
      %v4759 = vshrl.u32 %v4758, 7
      %v4760 = vsub.s32 %v4757, %v4759
      %v4761 = vrot.slane %v4747, %v4760
      %v4762 = vcombine.high %v4754, %v4754
      %v4763 = vcombine.high %v4761, %v4761
      %v4765 = vunpack.c.l.s4 1966171168
      %v4766 = vunpack.c.0.s8 %v4765
      %v4767 = vlaneseq
      %v4768 = vshrl.u32 %v4767, 7
      %v4769 = vsub.s32 %v4766, %v4768
      %v4770 = vrot.slane %v4754, %v4769
      %v4772 = vunpack.c.l.s4 1966171168
      %v4773 = vunpack.c.0.s8 %v4772
      %v4774 = vlaneseq
      %v4775 = vshrl.u32 %v4774, 7
      %v4776 = vsub.s32 %v4773, %v4775
      %v4777 = vrot.slane %v4761, %v4776
      %v4779 = vunpack.c.l.s4 1966171168
      %v4780 = vunpack.c.0.s8 %v4779
      %v4781 = vlaneseq
      %v4782 = vshrl.u32 %v4781, 7
      %v4783 = vsub.s32 %v4780, %v4782
      %v4784 = vrot.slane %v4762, %v4783
      %v4786 = vunpack.c.l.s4 1966171168
      %v4787 = vunpack.c.0.s8 %v4786
      %v4788 = vlaneseq
      %v4789 = vshrl.u32 %v4788, 7
      %v4790 = vsub.s32 %v4787, %v4789
      %v4791 = vrot.slane %v4763, %v4790
      %v4792 = vcombine.high %v4770, %v4770
      %v4793 = vcombine.high %v4777, %v4777
      %v4794 = vcombine.high %v4784, %v4784
      %v4795 = vcombine.high %v4791, %v4791
      %v4796 = vcombine.high %v4508, %v4508
      %v4798 = vunpack.c.l.s4 1966171168
      %v4799 = vunpack.c.0.s8 %v4798
      %v4800 = vlaneseq
      %v4801 = vshrl.u32 %v4800, 7
      %v4802 = vsub.s32 %v4799, %v4801
      %v4803 = vrot.slane %v4508, %v4802
      %v4805 = vunpack.c.l.s4 1966171168
      %v4806 = vunpack.c.0.s8 %v4805
      %v4807 = vlaneseq
      %v4808 = vshrl.u32 %v4807, 7
      %v4809 = vsub.s32 %v4806, %v4808
      %v4810 = vrot.slane %v4796, %v4809
      %v4811 = vcombine.high %v4803, %v4803
      %v4812 = vcombine.high %v4810, %v4810
      %v4814 = vunpack.c.l.s4 1966171168
      %v4815 = vunpack.c.0.s8 %v4814
      %v4816 = vlaneseq
      %v4817 = vshrl.u32 %v4816, 7
      %v4818 = vsub.s32 %v4815, %v4817
      %v4819 = vrot.slane %v4803, %v4818
      %v4821 = vunpack.c.l.s4 1966171168
      %v4822 = vunpack.c.0.s8 %v4821
      %v4823 = vlaneseq
      %v4824 = vshrl.u32 %v4823, 7
      %v4825 = vsub.s32 %v4822, %v4824
      %v4826 = vrot.slane %v4810, %v4825
      %v4828 = vunpack.c.l.s4 1966171168
      %v4829 = vunpack.c.0.s8 %v4828
      %v4830 = vlaneseq
      %v4831 = vshrl.u32 %v4830, 7
      %v4832 = vsub.s32 %v4829, %v4831
      %v4833 = vrot.slane %v4811, %v4832
      %v4835 = vunpack.c.l.s4 1966171168
      %v4836 = vunpack.c.0.s8 %v4835
      %v4837 = vlaneseq
      %v4838 = vshrl.u32 %v4837, 7
      %v4839 = vsub.s32 %v4836, %v4838
      %v4840 = vrot.slane %v4812, %v4839
      %v4841 = vcombine.high %v4819, %v4819
      %v4842 = vcombine.high %v4826, %v4826
      %v4843 = vcombine.high %v4833, %v4833
      %v4844 = vcombine.high %v4840, %v4840
      %v4845 = vcombine.high %v4509, %v4509
      %v4847 = vunpack.c.l.s4 1966171168
      %v4848 = vunpack.c.0.s8 %v4847
      %v4849 = vlaneseq
      %v4850 = vshrl.u32 %v4849, 7
      %v4851 = vsub.s32 %v4848, %v4850
      %v4852 = vrot.slane %v4509, %v4851
      %v4854 = vunpack.c.l.s4 1966171168
      %v4855 = vunpack.c.0.s8 %v4854
      %v4856 = vlaneseq
      %v4857 = vshrl.u32 %v4856, 7
      %v4858 = vsub.s32 %v4855, %v4857
      %v4859 = vrot.slane %v4845, %v4858
      %v4860 = vcombine.high %v4852, %v4852
      %v4861 = vcombine.high %v4859, %v4859
      %v4863 = vunpack.c.l.s4 1966171168
      %v4864 = vunpack.c.0.s8 %v4863
      %v4865 = vlaneseq
      %v4866 = vshrl.u32 %v4865, 7
      %v4867 = vsub.s32 %v4864, %v4866
      %v4868 = vrot.slane %v4852, %v4867
      %v4870 = vunpack.c.l.s4 1966171168
      %v4871 = vunpack.c.0.s8 %v4870
      %v4872 = vlaneseq
      %v4873 = vshrl.u32 %v4872, 7
      %v4874 = vsub.s32 %v4871, %v4873
      %v4875 = vrot.slane %v4859, %v4874
      %v4877 = vunpack.c.l.s4 1966171168
      %v4878 = vunpack.c.0.s8 %v4877
      %v4879 = vlaneseq
      %v4880 = vshrl.u32 %v4879, 7
      %v4881 = vsub.s32 %v4878, %v4880
      %v4882 = vrot.slane %v4860, %v4881
      %v4884 = vunpack.c.l.s4 1966171168
      %v4885 = vunpack.c.0.s8 %v4884
      %v4886 = vlaneseq
      %v4887 = vshrl.u32 %v4886, 7
      %v4888 = vsub.s32 %v4885, %v4887
      %v4889 = vrot.slane %v4861, %v4888
      %v4890 = vcombine.high %v4868, %v4868
      %v4891 = vcombine.high %v4875, %v4875
      %v4892 = vcombine.high %v4882, %v4882
      %v4893 = vcombine.high %v4889, %v4889
      %v4894 = vcombine.high %v4510, %v4510
      %v4896 = vunpack.c.l.s4 1966171168
      %v4897 = vunpack.c.0.s8 %v4896
      %v4898 = vlaneseq
      %v4899 = vshrl.u32 %v4898, 7
      %v4900 = vsub.s32 %v4897, %v4899
      %v4901 = vrot.slane %v4510, %v4900
      %v4903 = vunpack.c.l.s4 1966171168
      %v4904 = vunpack.c.0.s8 %v4903
      %v4905 = vlaneseq
      %v4906 = vshrl.u32 %v4905, 7
      %v4907 = vsub.s32 %v4904, %v4906
      %v4908 = vrot.slane %v4894, %v4907
      %v4909 = vcombine.high %v4901, %v4901
      %v4910 = vcombine.high %v4908, %v4908
      %v4912 = vunpack.c.l.s4 1966171168
      %v4913 = vunpack.c.0.s8 %v4912
      %v4914 = vlaneseq
      %v4915 = vshrl.u32 %v4914, 7
      %v4916 = vsub.s32 %v4913, %v4915
      %v4917 = vrot.slane %v4901, %v4916
      %v4919 = vunpack.c.l.s4 1966171168
      %v4920 = vunpack.c.0.s8 %v4919
      %v4921 = vlaneseq
      %v4922 = vshrl.u32 %v4921, 7
      %v4923 = vsub.s32 %v4920, %v4922
      %v4924 = vrot.slane %v4908, %v4923
      %v4926 = vunpack.c.l.s4 1966171168
      %v4927 = vunpack.c.0.s8 %v4926
      %v4928 = vlaneseq
      %v4929 = vshrl.u32 %v4928, 7
      %v4930 = vsub.s32 %v4927, %v4929
      %v4931 = vrot.slane %v4909, %v4930
      %v4933 = vunpack.c.l.s4 1966171168
      %v4934 = vunpack.c.0.s8 %v4933
      %v4935 = vlaneseq
      %v4936 = vshrl.u32 %v4935, 7
      %v4937 = vsub.s32 %v4934, %v4936
      %v4938 = vrot.slane %v4910, %v4937
      %v4939 = vcombine.high %v4917, %v4917
      %v4940 = vcombine.high %v4924, %v4924
      %v4941 = vcombine.high %v4931, %v4931
      %v4942 = vcombine.high %v4938, %v4938
      %v4943 = vcombine.high %v4511, %v4511
      %v4945 = vunpack.c.l.s4 1966171168
      %v4946 = vunpack.c.0.s8 %v4945
      %v4947 = vlaneseq
      %v4948 = vshrl.u32 %v4947, 7
      %v4949 = vsub.s32 %v4946, %v4948
      %v4950 = vrot.slane %v4511, %v4949
      %v4952 = vunpack.c.l.s4 1966171168
      %v4953 = vunpack.c.0.s8 %v4952
      %v4954 = vlaneseq
      %v4955 = vshrl.u32 %v4954, 7
      %v4956 = vsub.s32 %v4953, %v4955
      %v4957 = vrot.slane %v4943, %v4956
      %v4958 = vcombine.high %v4950, %v4950
      %v4959 = vcombine.high %v4957, %v4957
      %v4961 = vunpack.c.l.s4 1966171168
      %v4962 = vunpack.c.0.s8 %v4961
      %v4963 = vlaneseq
      %v4964 = vshrl.u32 %v4963, 7
      %v4965 = vsub.s32 %v4962, %v4964
      %v4966 = vrot.slane %v4950, %v4965
      %v4968 = vunpack.c.l.s4 1966171168
      %v4969 = vunpack.c.0.s8 %v4968
      %v4970 = vlaneseq
      %v4971 = vshrl.u32 %v4970, 7
      %v4972 = vsub.s32 %v4969, %v4971
      %v4973 = vrot.slane %v4957, %v4972
      %v4975 = vunpack.c.l.s4 1966171168
      %v4976 = vunpack.c.0.s8 %v4975
      %v4977 = vlaneseq
      %v4978 = vshrl.u32 %v4977, 7
      %v4979 = vsub.s32 %v4976, %v4978
      %v4980 = vrot.slane %v4958, %v4979
      %v4982 = vunpack.c.l.s4 1966171168
      %v4983 = vunpack.c.0.s8 %v4982
      %v4984 = vlaneseq
      %v4985 = vshrl.u32 %v4984, 7
      %v4986 = vsub.s32 %v4983, %v4985
      %v4987 = vrot.slane %v4959, %v4986
      %v4988 = vcombine.high %v4966, %v4966
      %v4989 = vcombine.high %v4973, %v4973
      %v4990 = vcombine.high %v4980, %v4980
      %v4991 = vcombine.high %v4987, %v4987
      %v4992 = vcombine.high %v4512, %v4512
      %v4994 = vunpack.c.l.s4 1966171168
      %v4995 = vunpack.c.0.s8 %v4994
      %v4996 = vlaneseq
      %v4997 = vshrl.u32 %v4996, 7
      %v4998 = vsub.s32 %v4995, %v4997
      %v4999 = vrot.slane %v4512, %v4998
      %v5001 = vunpack.c.l.s4 1966171168
      %v5002 = vunpack.c.0.s8 %v5001
      %v5003 = vlaneseq
      %v5004 = vshrl.u32 %v5003, 7
      %v5005 = vsub.s32 %v5002, %v5004
      %v5006 = vrot.slane %v4992, %v5005
      %v5007 = vcombine.high %v4999, %v4999
      %v5008 = vcombine.high %v5006, %v5006
      %v5010 = vunpack.c.l.s4 1966171168
      %v5011 = vunpack.c.0.s8 %v5010
      %v5012 = vlaneseq
      %v5013 = vshrl.u32 %v5012, 7
      %v5014 = vsub.s32 %v5011, %v5013
      %v5015 = vrot.slane %v4999, %v5014
      %v5017 = vunpack.c.l.s4 1966171168
      %v5018 = vunpack.c.0.s8 %v5017
      %v5019 = vlaneseq
      %v5020 = vshrl.u32 %v5019, 7
      %v5021 = vsub.s32 %v5018, %v5020
      %v5022 = vrot.slane %v5006, %v5021
      %v5024 = vunpack.c.l.s4 1966171168
      %v5025 = vunpack.c.0.s8 %v5024
      %v5026 = vlaneseq
      %v5027 = vshrl.u32 %v5026, 7
      %v5028 = vsub.s32 %v5025, %v5027
      %v5029 = vrot.slane %v5007, %v5028
      %v5031 = vunpack.c.l.s4 1966171168
      %v5032 = vunpack.c.0.s8 %v5031
      %v5033 = vlaneseq
      %v5034 = vshrl.u32 %v5033, 7
      %v5035 = vsub.s32 %v5032, %v5034
      %v5036 = vrot.slane %v5008, %v5035
      %v5037 = vcombine.high %v5015, %v5015
      %v5038 = vcombine.high %v5022, %v5022
      %v5039 = vcombine.high %v5029, %v5029
      %v5040 = vcombine.high %v5036, %v5036
      %v5041 = vcombine.high %v4513, %v4513
      %v5043 = vunpack.c.l.s4 1966171168
      %v5044 = vunpack.c.0.s8 %v5043
      %v5045 = vlaneseq
      %v5046 = vshrl.u32 %v5045, 7
      %v5047 = vsub.s32 %v5044, %v5046
      %v5048 = vrot.slane %v4513, %v5047
      %v5050 = vunpack.c.l.s4 1966171168
      %v5051 = vunpack.c.0.s8 %v5050
      %v5052 = vlaneseq
      %v5053 = vshrl.u32 %v5052, 7
      %v5054 = vsub.s32 %v5051, %v5053
      %v5055 = vrot.slane %v5041, %v5054
      %v5056 = vcombine.high %v5048, %v5048
      %v5057 = vcombine.high %v5055, %v5055
      %v5059 = vunpack.c.l.s4 1966171168
      %v5060 = vunpack.c.0.s8 %v5059
      %v5061 = vlaneseq
      %v5062 = vshrl.u32 %v5061, 7
      %v5063 = vsub.s32 %v5060, %v5062
      %v5064 = vrot.slane %v5048, %v5063
      %v5066 = vunpack.c.l.s4 1966171168
      %v5067 = vunpack.c.0.s8 %v5066
      %v5068 = vlaneseq
      %v5069 = vshrl.u32 %v5068, 7
      %v5070 = vsub.s32 %v5067, %v5069
      %v5071 = vrot.slane %v5055, %v5070
      %v5073 = vunpack.c.l.s4 1966171168
      %v5074 = vunpack.c.0.s8 %v5073
      %v5075 = vlaneseq
      %v5076 = vshrl.u32 %v5075, 7
      %v5077 = vsub.s32 %v5074, %v5076
      %v5078 = vrot.slane %v5056, %v5077
      %v5080 = vunpack.c.l.s4 1966171168
      %v5081 = vunpack.c.0.s8 %v5080
      %v5082 = vlaneseq
      %v5083 = vshrl.u32 %v5082, 7
      %v5084 = vsub.s32 %v5081, %v5083
      %v5085 = vrot.slane %v5057, %v5084
      %v5086 = vcombine.high %v5064, %v5064
      %v5087 = vcombine.high %v5071, %v5071
      %v5088 = vcombine.high %v5078, %v5078
      %v5089 = vcombine.high %v5085, %v5085
      %v5090 = vcombine.high %v4514, %v4514
      %v5092 = vunpack.c.l.s4 1966171168
      %v5093 = vunpack.c.0.s8 %v5092
      %v5094 = vlaneseq
      %v5095 = vshrl.u32 %v5094, 7
      %v5096 = vsub.s32 %v5093, %v5095
      %v5097 = vrot.slane %v4514, %v5096
      %v5099 = vunpack.c.l.s4 1966171168
      %v5100 = vunpack.c.0.s8 %v5099
      %v5101 = vlaneseq
      %v5102 = vshrl.u32 %v5101, 7
      %v5103 = vsub.s32 %v5100, %v5102
      %v5104 = vrot.slane %v5090, %v5103
      %v5105 = vcombine.high %v5097, %v5097
      %v5106 = vcombine.high %v5104, %v5104
      %v5108 = vunpack.c.l.s4 1966171168
      %v5109 = vunpack.c.0.s8 %v5108
      %v5110 = vlaneseq
      %v5111 = vshrl.u32 %v5110, 7
      %v5112 = vsub.s32 %v5109, %v5111
      %v5113 = vrot.slane %v5097, %v5112
      %v5115 = vunpack.c.l.s4 1966171168
      %v5116 = vunpack.c.0.s8 %v5115
      %v5117 = vlaneseq
      %v5118 = vshrl.u32 %v5117, 7
      %v5119 = vsub.s32 %v5116, %v5118
      %v5120 = vrot.slane %v5104, %v5119
      %v5122 = vunpack.c.l.s4 1966171168
      %v5123 = vunpack.c.0.s8 %v5122
      %v5124 = vlaneseq
      %v5125 = vshrl.u32 %v5124, 7
      %v5126 = vsub.s32 %v5123, %v5125
      %v5127 = vrot.slane %v5105, %v5126
      %v5129 = vunpack.c.l.s4 1966171168
      %v5130 = vunpack.c.0.s8 %v5129
      %v5131 = vlaneseq
      %v5132 = vshrl.u32 %v5131, 7
      %v5133 = vsub.s32 %v5130, %v5132
      %v5134 = vrot.slane %v5106, %v5133
      %v5135 = vcombine.high %v5113, %v5113
      %v5136 = vcombine.high %v5120, %v5120
      %v5137 = vcombine.high %v5127, %v5127
      %v5138 = vcombine.high %v5134, %v5134
      %v5139 = vcombine.high %v4515, %v4515
      %v5141 = vunpack.c.l.s4 1966171168
      %v5142 = vunpack.c.0.s8 %v5141
      %v5143 = vlaneseq
      %v5144 = vshrl.u32 %v5143, 7
      %v5145 = vsub.s32 %v5142, %v5144
      %v5146 = vrot.slane %v4515, %v5145
      %v5148 = vunpack.c.l.s4 1966171168
      %v5149 = vunpack.c.0.s8 %v5148
      %v5150 = vlaneseq
      %v5151 = vshrl.u32 %v5150, 7
      %v5152 = vsub.s32 %v5149, %v5151
      %v5153 = vrot.slane %v5139, %v5152
      %v5154 = vcombine.high %v5146, %v5146
      %v5155 = vcombine.high %v5153, %v5153
      %v5157 = vunpack.c.l.s4 1966171168
      %v5158 = vunpack.c.0.s8 %v5157
      %v5159 = vlaneseq
      %v5160 = vshrl.u32 %v5159, 7
      %v5161 = vsub.s32 %v5158, %v5160
      %v5162 = vrot.slane %v5146, %v5161
      %v5164 = vunpack.c.l.s4 1966171168
      %v5165 = vunpack.c.0.s8 %v5164
      %v5166 = vlaneseq
      %v5167 = vshrl.u32 %v5166, 7
      %v5168 = vsub.s32 %v5165, %v5167
      %v5169 = vrot.slane %v5153, %v5168
      %v5171 = vunpack.c.l.s4 1966171168
      %v5172 = vunpack.c.0.s8 %v5171
      %v5173 = vlaneseq
      %v5174 = vshrl.u32 %v5173, 7
      %v5175 = vsub.s32 %v5172, %v5174
      %v5176 = vrot.slane %v5154, %v5175
      %v5178 = vunpack.c.l.s4 1966171168
      %v5179 = vunpack.c.0.s8 %v5178
      %v5180 = vlaneseq
      %v5181 = vshrl.u32 %v5180, 7
      %v5182 = vsub.s32 %v5179, %v5181
      %v5183 = vrot.slane %v5155, %v5182
      %v5184 = vcombine.high %v5162, %v5162
      %v5185 = vcombine.high %v5169, %v5169
      %v5186 = vcombine.high %v5176, %v5176
      %v5187 = vcombine.high %v5183, %v5183
      %v5188 = vcombine.high %v4516, %v4516
      %v5190 = vunpack.c.l.s4 1966171168
      %v5191 = vunpack.c.0.s8 %v5190
      %v5192 = vlaneseq
      %v5193 = vshrl.u32 %v5192, 7
      %v5194 = vsub.s32 %v5191, %v5193
      %v5195 = vrot.slane %v4516, %v5194
      %v5197 = vunpack.c.l.s4 1966171168
      %v5198 = vunpack.c.0.s8 %v5197
      %v5199 = vlaneseq
      %v5200 = vshrl.u32 %v5199, 7
      %v5201 = vsub.s32 %v5198, %v5200
      %v5202 = vrot.slane %v5188, %v5201
      %v5203 = vcombine.high %v5195, %v5195
      %v5204 = vcombine.high %v5202, %v5202
      %v5206 = vunpack.c.l.s4 1966171168
      %v5207 = vunpack.c.0.s8 %v5206
      %v5208 = vlaneseq
      %v5209 = vshrl.u32 %v5208, 7
      %v5210 = vsub.s32 %v5207, %v5209
      %v5211 = vrot.slane %v5195, %v5210
      %v5213 = vunpack.c.l.s4 1966171168
      %v5214 = vunpack.c.0.s8 %v5213
      %v5215 = vlaneseq
      %v5216 = vshrl.u32 %v5215, 7
      %v5217 = vsub.s32 %v5214, %v5216
      %v5218 = vrot.slane %v5202, %v5217
      %v5220 = vunpack.c.l.s4 1966171168
      %v5221 = vunpack.c.0.s8 %v5220
      %v5222 = vlaneseq
      %v5223 = vshrl.u32 %v5222, 7
      %v5224 = vsub.s32 %v5221, %v5223
      %v5225 = vrot.slane %v5203, %v5224
      %v5227 = vunpack.c.l.s4 1966171168
      %v5228 = vunpack.c.0.s8 %v5227
      %v5229 = vlaneseq
      %v5230 = vshrl.u32 %v5229, 7
      %v5231 = vsub.s32 %v5228, %v5230
      %v5232 = vrot.slane %v5204, %v5231
      %v5233 = vcombine.high %v5211, %v5211
      %v5234 = vcombine.high %v5218, %v5218
      %v5235 = vcombine.high %v5225, %v5225
      %v5236 = vcombine.high %v5232, %v5232
      %v5237 = vcombine.high %v4517, %v4517
      %v5239 = vunpack.c.l.s4 1966171168
      %v5240 = vunpack.c.0.s8 %v5239
      %v5241 = vlaneseq
      %v5242 = vshrl.u32 %v5241, 7
      %v5243 = vsub.s32 %v5240, %v5242
      %v5244 = vrot.slane %v4517, %v5243
      %v5246 = vunpack.c.l.s4 1966171168
      %v5247 = vunpack.c.0.s8 %v5246
      %v5248 = vlaneseq
      %v5249 = vshrl.u32 %v5248, 7
      %v5250 = vsub.s32 %v5247, %v5249
      %v5251 = vrot.slane %v5237, %v5250
      %v5252 = vcombine.high %v5244, %v5244
      %v5253 = vcombine.high %v5251, %v5251
      %v5255 = vunpack.c.l.s4 1966171168
      %v5256 = vunpack.c.0.s8 %v5255
      %v5257 = vlaneseq
      %v5258 = vshrl.u32 %v5257, 7
      %v5259 = vsub.s32 %v5256, %v5258
      %v5260 = vrot.slane %v5244, %v5259
      %v5262 = vunpack.c.l.s4 1966171168
      %v5263 = vunpack.c.0.s8 %v5262
      %v5264 = vlaneseq
      %v5265 = vshrl.u32 %v5264, 7
      %v5266 = vsub.s32 %v5263, %v5265
      %v5267 = vrot.slane %v5251, %v5266
      %v5269 = vunpack.c.l.s4 1966171168
      %v5270 = vunpack.c.0.s8 %v5269
      %v5271 = vlaneseq
      %v5272 = vshrl.u32 %v5271, 7
      %v5273 = vsub.s32 %v5270, %v5272
      %v5274 = vrot.slane %v5252, %v5273
      %v5276 = vunpack.c.l.s4 1966171168
      %v5277 = vunpack.c.0.s8 %v5276
      %v5278 = vlaneseq
      %v5279 = vshrl.u32 %v5278, 7
      %v5280 = vsub.s32 %v5277, %v5279
      %v5281 = vrot.slane %v5253, %v5280
      %v5282 = vcombine.high %v5260, %v5260
      %v5283 = vcombine.high %v5267, %v5267
      %v5284 = vcombine.high %v5274, %v5274
      %v5285 = vcombine.high %v5281, %v5281
      %v5286 = vcombine.high %v4518, %v4518
      %v5288 = vunpack.c.l.s4 1966171168
      %v5289 = vunpack.c.0.s8 %v5288
      %v5290 = vlaneseq
      %v5291 = vshrl.u32 %v5290, 7
      %v5292 = vsub.s32 %v5289, %v5291
      %v5293 = vrot.slane %v4518, %v5292
      %v5295 = vunpack.c.l.s4 1966171168
      %v5296 = vunpack.c.0.s8 %v5295
      %v5297 = vlaneseq
      %v5298 = vshrl.u32 %v5297, 7
      %v5299 = vsub.s32 %v5296, %v5298
      %v5300 = vrot.slane %v5286, %v5299
      %v5301 = vcombine.high %v5293, %v5293
      %v5302 = vcombine.high %v5300, %v5300
      %v5304 = vunpack.c.l.s4 1966171168
      %v5305 = vunpack.c.0.s8 %v5304
      %v5306 = vlaneseq
      %v5307 = vshrl.u32 %v5306, 7
      %v5308 = vsub.s32 %v5305, %v5307
      %v5309 = vrot.slane %v5293, %v5308
      %v5311 = vunpack.c.l.s4 1966171168
      %v5312 = vunpack.c.0.s8 %v5311
      %v5313 = vlaneseq
      %v5314 = vshrl.u32 %v5313, 7
      %v5315 = vsub.s32 %v5312, %v5314
      %v5316 = vrot.slane %v5300, %v5315
      %v5318 = vunpack.c.l.s4 1966171168
      %v5319 = vunpack.c.0.s8 %v5318
      %v5320 = vlaneseq
      %v5321 = vshrl.u32 %v5320, 7
      %v5322 = vsub.s32 %v5319, %v5321
      %v5323 = vrot.slane %v5301, %v5322
      %v5325 = vunpack.c.l.s4 1966171168
      %v5326 = vunpack.c.0.s8 %v5325
      %v5327 = vlaneseq
      %v5328 = vshrl.u32 %v5327, 7
      %v5329 = vsub.s32 %v5326, %v5328
      %v5330 = vrot.slane %v5302, %v5329
      %v5331 = vcombine.high %v5309, %v5309
      %v5332 = vcombine.high %v5316, %v5316
      %v5333 = vcombine.high %v5323, %v5323
      %v5334 = vcombine.high %v5330, %v5330
      %v5479 = vcombine.high %v4519, %v4519
      %v5481 = vunpack.c.l.s4 1966171168
      %v5482 = vunpack.c.0.s8 %v5481
      %v5483 = vlaneseq
      %v5484 = vshrl.u32 %v5483, 7
      %v5485 = vsub.s32 %v5482, %v5484
      %v5486 = vrot.slane %v4519, %v5485
      %v5488 = vunpack.c.l.s4 1966171168
      %v5489 = vunpack.c.0.s8 %v5488
      %v5490 = vlaneseq
      %v5491 = vshrl.u32 %v5490, 7
      %v5492 = vsub.s32 %v5489, %v5491
      %v5493 = vrot.slane %v5479, %v5492
      %v5494 = vcombine.high %v5486, %v5486
      %v5495 = vcombine.high %v5493, %v5493
      %v5497 = vunpack.c.l.s4 1966171168
      %v5498 = vunpack.c.0.s8 %v5497
      %v5499 = vlaneseq
      %v5500 = vshrl.u32 %v5499, 7
      %v5501 = vsub.s32 %v5498, %v5500
      %v5502 = vrot.slane %v5486, %v5501
      %v5504 = vunpack.c.l.s4 1966171168
      %v5505 = vunpack.c.0.s8 %v5504
      %v5506 = vlaneseq
      %v5507 = vshrl.u32 %v5506, 7
      %v5508 = vsub.s32 %v5505, %v5507
      %v5509 = vrot.slane %v5493, %v5508
      %v5511 = vunpack.c.l.s4 1966171168
      %v5512 = vunpack.c.0.s8 %v5511
      %v5513 = vlaneseq
      %v5514 = vshrl.u32 %v5513, 7
      %v5515 = vsub.s32 %v5512, %v5514
      %v5516 = vrot.slane %v5494, %v5515
      %v5518 = vunpack.c.l.s4 1966171168
      %v5519 = vunpack.c.0.s8 %v5518
      %v5520 = vlaneseq
      %v5521 = vshrl.u32 %v5520, 7
      %v5522 = vsub.s32 %v5519, %v5521
      %v5523 = vrot.slane %v5495, %v5522
      %v5524 = vcombine.high %v5502, %v5502
      %v5525 = vcombine.high %v5509, %v5509
      %v5526 = vcombine.high %v5516, %v5516
      %v5527 = vcombine.high %v5523, %v5523
      %v5528 = vcombine.high %v4520, %v4520
      %v5530 = vunpack.c.l.s4 1966171168
      %v5531 = vunpack.c.0.s8 %v5530
      %v5532 = vlaneseq
      %v5533 = vshrl.u32 %v5532, 7
      %v5534 = vsub.s32 %v5531, %v5533
      %v5535 = vrot.slane %v4520, %v5534
      %v5537 = vunpack.c.l.s4 1966171168
      %v5538 = vunpack.c.0.s8 %v5537
      %v5539 = vlaneseq
      %v5540 = vshrl.u32 %v5539, 7
      %v5541 = vsub.s32 %v5538, %v5540
      %v5542 = vrot.slane %v5528, %v5541
      %v5543 = vcombine.high %v5535, %v5535
      %v5544 = vcombine.high %v5542, %v5542
      %v5546 = vunpack.c.l.s4 1966171168
      %v5547 = vunpack.c.0.s8 %v5546
      %v5548 = vlaneseq
      %v5549 = vshrl.u32 %v5548, 7
      %v5550 = vsub.s32 %v5547, %v5549
      %v5551 = vrot.slane %v5535, %v5550
      %v5553 = vunpack.c.l.s4 1966171168
      %v5554 = vunpack.c.0.s8 %v5553
      %v5555 = vlaneseq
      %v5556 = vshrl.u32 %v5555, 7
      %v5557 = vsub.s32 %v5554, %v5556
      %v5558 = vrot.slane %v5542, %v5557
      %v5560 = vunpack.c.l.s4 1966171168
      %v5561 = vunpack.c.0.s8 %v5560
      %v5562 = vlaneseq
      %v5563 = vshrl.u32 %v5562, 7
      %v5564 = vsub.s32 %v5561, %v5563
      %v5565 = vrot.slane %v5543, %v5564
      %v5567 = vunpack.c.l.s4 1966171168
      %v5568 = vunpack.c.0.s8 %v5567
      %v5569 = vlaneseq
      %v5570 = vshrl.u32 %v5569, 7
      %v5571 = vsub.s32 %v5568, %v5570
      %v5572 = vrot.slane %v5544, %v5571
      %v5573 = vcombine.high %v5551, %v5551
      %v5574 = vcombine.high %v5558, %v5558
      %v5575 = vcombine.high %v5565, %v5565
      %v5576 = vcombine.high %v5572, %v5572
      %v5577 = vcombine.high %v4521, %v4521
      %v5579 = vunpack.c.l.s4 1966171168
      %v5580 = vunpack.c.0.s8 %v5579
      %v5581 = vlaneseq
      %v5582 = vshrl.u32 %v5581, 7
      %v5583 = vsub.s32 %v5580, %v5582
      %v5584 = vrot.slane %v4521, %v5583
      %v5586 = vunpack.c.l.s4 1966171168
      %v5587 = vunpack.c.0.s8 %v5586
      %v5588 = vlaneseq
      %v5589 = vshrl.u32 %v5588, 7
      %v5590 = vsub.s32 %v5587, %v5589
      %v5591 = vrot.slane %v5577, %v5590
      %v5592 = vcombine.high %v5584, %v5584
      %v5593 = vcombine.high %v5591, %v5591
      %v5595 = vunpack.c.l.s4 1966171168
      %v5596 = vunpack.c.0.s8 %v5595
      %v5597 = vlaneseq
      %v5598 = vshrl.u32 %v5597, 7
      %v5599 = vsub.s32 %v5596, %v5598
      %v5600 = vrot.slane %v5584, %v5599
      %v5602 = vunpack.c.l.s4 1966171168
      %v5603 = vunpack.c.0.s8 %v5602
      %v5604 = vlaneseq
      %v5605 = vshrl.u32 %v5604, 7
      %v5606 = vsub.s32 %v5603, %v5605
      %v5607 = vrot.slane %v5591, %v5606
      %v5609 = vunpack.c.l.s4 1966171168
      %v5610 = vunpack.c.0.s8 %v5609
      %v5611 = vlaneseq
      %v5612 = vshrl.u32 %v5611, 7
      %v5613 = vsub.s32 %v5610, %v5612
      %v5614 = vrot.slane %v5592, %v5613
      %v5616 = vunpack.c.l.s4 1966171168
      %v5617 = vunpack.c.0.s8 %v5616
      %v5618 = vlaneseq
      %v5619 = vshrl.u32 %v5618, 7
      %v5620 = vsub.s32 %v5617, %v5619
      %v5621 = vrot.slane %v5593, %v5620
      %v5622 = vcombine.high %v5600, %v5600
      %v5623 = vcombine.high %v5607, %v5607
      %v5624 = vcombine.high %v5614, %v5614
      %v5625 = vcombine.high %v5621, %v5621
      %v5626 = vcombine.high %v4522, %v4522
      %v5628 = vunpack.c.l.s4 1966171168
      %v5629 = vunpack.c.0.s8 %v5628
      %v5630 = vlaneseq
      %v5631 = vshrl.u32 %v5630, 7
      %v5632 = vsub.s32 %v5629, %v5631
      %v5633 = vrot.slane %v4522, %v5632
      %v5635 = vunpack.c.l.s4 1966171168
      %v5636 = vunpack.c.0.s8 %v5635
      %v5637 = vlaneseq
      %v5638 = vshrl.u32 %v5637, 7
      %v5639 = vsub.s32 %v5636, %v5638
      %v5640 = vrot.slane %v5626, %v5639
      %v5641 = vcombine.high %v5633, %v5633
      %v5642 = vcombine.high %v5640, %v5640
      %v5644 = vunpack.c.l.s4 1966171168
      %v5645 = vunpack.c.0.s8 %v5644
      %v5646 = vlaneseq
      %v5647 = vshrl.u32 %v5646, 7
      %v5648 = vsub.s32 %v5645, %v5647
      %v5649 = vrot.slane %v5633, %v5648
      %v5651 = vunpack.c.l.s4 1966171168
      %v5652 = vunpack.c.0.s8 %v5651
      %v5653 = vlaneseq
      %v5654 = vshrl.u32 %v5653, 7
      %v5655 = vsub.s32 %v5652, %v5654
      %v5656 = vrot.slane %v5640, %v5655
      %v5658 = vunpack.c.l.s4 1966171168
      %v5659 = vunpack.c.0.s8 %v5658
      %v5660 = vlaneseq
      %v5661 = vshrl.u32 %v5660, 7
      %v5662 = vsub.s32 %v5659, %v5661
      %v5663 = vrot.slane %v5641, %v5662
      %v5665 = vunpack.c.l.s4 1966171168
      %v5666 = vunpack.c.0.s8 %v5665
      %v5667 = vlaneseq
      %v5668 = vshrl.u32 %v5667, 7
      %v5669 = vsub.s32 %v5666, %v5668
      %v5670 = vrot.slane %v5642, %v5669
      %v5671 = vcombine.high %v5649, %v5649
      %v5672 = vcombine.high %v5656, %v5656
      %v5673 = vcombine.high %v5663, %v5663
      %v5674 = vcombine.high %v5670, %v5670
      %v5675 = vcombine.high %v4523, %v4523
      %v5677 = vunpack.c.l.s4 1966171168
      %v5678 = vunpack.c.0.s8 %v5677
      %v5679 = vlaneseq
      %v5680 = vshrl.u32 %v5679, 7
      %v5681 = vsub.s32 %v5678, %v5680
      %v5682 = vrot.slane %v4523, %v5681
      %v5684 = vunpack.c.l.s4 1966171168
      %v5685 = vunpack.c.0.s8 %v5684
      %v5686 = vlaneseq
      %v5687 = vshrl.u32 %v5686, 7
      %v5688 = vsub.s32 %v5685, %v5687
      %v5689 = vrot.slane %v5675, %v5688
      %v5690 = vcombine.high %v5682, %v5682
      %v5691 = vcombine.high %v5689, %v5689
      %v5693 = vunpack.c.l.s4 1966171168
      %v5694 = vunpack.c.0.s8 %v5693
      %v5695 = vlaneseq
      %v5696 = vshrl.u32 %v5695, 7
      %v5697 = vsub.s32 %v5694, %v5696
      %v5698 = vrot.slane %v5682, %v5697
      %v5700 = vunpack.c.l.s4 1966171168
      %v5701 = vunpack.c.0.s8 %v5700
      %v5702 = vlaneseq
      %v5703 = vshrl.u32 %v5702, 7
      %v5704 = vsub.s32 %v5701, %v5703
      %v5705 = vrot.slane %v5689, %v5704
      %v5707 = vunpack.c.l.s4 1966171168
      %v5708 = vunpack.c.0.s8 %v5707
      %v5709 = vlaneseq
      %v5710 = vshrl.u32 %v5709, 7
      %v5711 = vsub.s32 %v5708, %v5710
      %v5712 = vrot.slane %v5690, %v5711
      %v5714 = vunpack.c.l.s4 1966171168
      %v5715 = vunpack.c.0.s8 %v5714
      %v5716 = vlaneseq
      %v5717 = vshrl.u32 %v5716, 7
      %v5718 = vsub.s32 %v5715, %v5717
      %v5719 = vrot.slane %v5691, %v5718
      %v5720 = vcombine.high %v5698, %v5698
      %v5721 = vcombine.high %v5705, %v5705
      %v5722 = vcombine.high %v5712, %v5712
      %v5723 = vcombine.high %v5719, %v5719
      %v5724 = vcombine.high %v4524, %v4524
      %v5726 = vunpack.c.l.s4 1966171168
      %v5727 = vunpack.c.0.s8 %v5726
      %v5728 = vlaneseq
      %v5729 = vshrl.u32 %v5728, 7
      %v5730 = vsub.s32 %v5727, %v5729
      %v5731 = vrot.slane %v4524, %v5730
      %v5733 = vunpack.c.l.s4 1966171168
      %v5734 = vunpack.c.0.s8 %v5733
      %v5735 = vlaneseq
      %v5736 = vshrl.u32 %v5735, 7
      %v5737 = vsub.s32 %v5734, %v5736
      %v5738 = vrot.slane %v5724, %v5737
      %v5739 = vcombine.high %v5731, %v5731
      %v5740 = vcombine.high %v5738, %v5738
      %v5742 = vunpack.c.l.s4 1966171168
      %v5743 = vunpack.c.0.s8 %v5742
      %v5744 = vlaneseq
      %v5745 = vshrl.u32 %v5744, 7
      %v5746 = vsub.s32 %v5743, %v5745
      %v5747 = vrot.slane %v5731, %v5746
      %v5749 = vunpack.c.l.s4 1966171168
      %v5750 = vunpack.c.0.s8 %v5749
      %v5751 = vlaneseq
      %v5752 = vshrl.u32 %v5751, 7
      %v5753 = vsub.s32 %v5750, %v5752
      %v5754 = vrot.slane %v5738, %v5753
      %v5756 = vunpack.c.l.s4 1966171168
      %v5757 = vunpack.c.0.s8 %v5756
      %v5758 = vlaneseq
      %v5759 = vshrl.u32 %v5758, 7
      %v5760 = vsub.s32 %v5757, %v5759
      %v5761 = vrot.slane %v5739, %v5760
      %v5763 = vunpack.c.l.s4 1966171168
      %v5764 = vunpack.c.0.s8 %v5763
      %v5765 = vlaneseq
      %v5766 = vshrl.u32 %v5765, 7
      %v5767 = vsub.s32 %v5764, %v5766
      %v5768 = vrot.slane %v5740, %v5767
      %v5769 = vcombine.high %v5747, %v5747
      %v5770 = vcombine.high %v5754, %v5754
      %v5771 = vcombine.high %v5761, %v5761
      %v5772 = vcombine.high %v5768, %v5768
      %v5773 = vcombine.high %v4525, %v4525
      %v5775 = vunpack.c.l.s4 1966171168
      %v5776 = vunpack.c.0.s8 %v5775
      %v5777 = vlaneseq
      %v5778 = vshrl.u32 %v5777, 7
      %v5779 = vsub.s32 %v5776, %v5778
      %v5780 = vrot.slane %v4525, %v5779
      %v5782 = vunpack.c.l.s4 1966171168
      %v5783 = vunpack.c.0.s8 %v5782
      %v5784 = vlaneseq
      %v5785 = vshrl.u32 %v5784, 7
      %v5786 = vsub.s32 %v5783, %v5785
      %v5787 = vrot.slane %v5773, %v5786
      %v5788 = vcombine.high %v5780, %v5780
      %v5789 = vcombine.high %v5787, %v5787
      %v5791 = vunpack.c.l.s4 1966171168
      %v5792 = vunpack.c.0.s8 %v5791
      %v5793 = vlaneseq
      %v5794 = vshrl.u32 %v5793, 7
      %v5795 = vsub.s32 %v5792, %v5794
      %v5796 = vrot.slane %v5780, %v5795
      %v5798 = vunpack.c.l.s4 1966171168
      %v5799 = vunpack.c.0.s8 %v5798
      %v5800 = vlaneseq
      %v5801 = vshrl.u32 %v5800, 7
      %v5802 = vsub.s32 %v5799, %v5801
      %v5803 = vrot.slane %v5787, %v5802
      %v5805 = vunpack.c.l.s4 1966171168
      %v5806 = vunpack.c.0.s8 %v5805
      %v5807 = vlaneseq
      %v5808 = vshrl.u32 %v5807, 7
      %v5809 = vsub.s32 %v5806, %v5808
      %v5810 = vrot.slane %v5788, %v5809
      %v5812 = vunpack.c.l.s4 1966171168
      %v5813 = vunpack.c.0.s8 %v5812
      %v5814 = vlaneseq
      %v5815 = vshrl.u32 %v5814, 7
      %v5816 = vsub.s32 %v5813, %v5815
      %v5817 = vrot.slane %v5789, %v5816
      %v5818 = vcombine.high %v5796, %v5796
      %v5819 = vcombine.high %v5803, %v5803
      %v5820 = vcombine.high %v5810, %v5810
      %v5821 = vcombine.high %v5817, %v5817
      %v5822 = vcombine.high %v4526, %v4526
      %v5824 = vunpack.c.l.s4 1966171168
      %v5825 = vunpack.c.0.s8 %v5824
      %v5826 = vlaneseq
      %v5827 = vshrl.u32 %v5826, 7
      %v5828 = vsub.s32 %v5825, %v5827
      %v5829 = vrot.slane %v4526, %v5828
      %v5831 = vunpack.c.l.s4 1966171168
      %v5832 = vunpack.c.0.s8 %v5831
      %v5833 = vlaneseq
      %v5834 = vshrl.u32 %v5833, 7
      %v5835 = vsub.s32 %v5832, %v5834
      %v5836 = vrot.slane %v5822, %v5835
      %v5837 = vcombine.high %v5829, %v5829
      %v5838 = vcombine.high %v5836, %v5836
      %v5840 = vunpack.c.l.s4 1966171168
      %v5841 = vunpack.c.0.s8 %v5840
      %v5842 = vlaneseq
      %v5843 = vshrl.u32 %v5842, 7
      %v5844 = vsub.s32 %v5841, %v5843
      %v5845 = vrot.slane %v5829, %v5844
      %v5847 = vunpack.c.l.s4 1966171168
      %v5848 = vunpack.c.0.s8 %v5847
      %v5849 = vlaneseq
      %v5850 = vshrl.u32 %v5849, 7
      %v5851 = vsub.s32 %v5848, %v5850
      %v5852 = vrot.slane %v5836, %v5851
      %v5854 = vunpack.c.l.s4 1966171168
      %v5855 = vunpack.c.0.s8 %v5854
      %v5856 = vlaneseq
      %v5857 = vshrl.u32 %v5856, 7
      %v5858 = vsub.s32 %v5855, %v5857
      %v5859 = vrot.slane %v5837, %v5858
      %v5861 = vunpack.c.l.s4 1966171168
      %v5862 = vunpack.c.0.s8 %v5861
      %v5863 = vlaneseq
      %v5864 = vshrl.u32 %v5863, 7
      %v5865 = vsub.s32 %v5862, %v5864
      %v5866 = vrot.slane %v5838, %v5865
      %v5867 = vcombine.high %v5845, %v5845
      %v5868 = vcombine.high %v5852, %v5852
      %v5869 = vcombine.high %v5859, %v5859
      %v5870 = vcombine.high %v5866, %v5866
      %v5871 = vcombine.high %v4527, %v4527
      %v5873 = vunpack.c.l.s4 1966171168
      %v5874 = vunpack.c.0.s8 %v5873
      %v5875 = vlaneseq
      %v5876 = vshrl.u32 %v5875, 7
      %v5877 = vsub.s32 %v5874, %v5876
      %v5878 = vrot.slane %v4527, %v5877
      %v5880 = vunpack.c.l.s4 1966171168
      %v5881 = vunpack.c.0.s8 %v5880
      %v5882 = vlaneseq
      %v5883 = vshrl.u32 %v5882, 7
      %v5884 = vsub.s32 %v5881, %v5883
      %v5885 = vrot.slane %v5871, %v5884
      %v5886 = vcombine.high %v5878, %v5878
      %v5887 = vcombine.high %v5885, %v5885
      %v5889 = vunpack.c.l.s4 1966171168
      %v5890 = vunpack.c.0.s8 %v5889
      %v5891 = vlaneseq
      %v5892 = vshrl.u32 %v5891, 7
      %v5893 = vsub.s32 %v5890, %v5892
      %v5894 = vrot.slane %v5878, %v5893
      %v5896 = vunpack.c.l.s4 1966171168
      %v5897 = vunpack.c.0.s8 %v5896
      %v5898 = vlaneseq
      %v5899 = vshrl.u32 %v5898, 7
      %v5900 = vsub.s32 %v5897, %v5899
      %v5901 = vrot.slane %v5885, %v5900
      %v5903 = vunpack.c.l.s4 1966171168
      %v5904 = vunpack.c.0.s8 %v5903
      %v5905 = vlaneseq
      %v5906 = vshrl.u32 %v5905, 7
      %v5907 = vsub.s32 %v5904, %v5906
      %v5908 = vrot.slane %v5886, %v5907
      %v5910 = vunpack.c.l.s4 1966171168
      %v5911 = vunpack.c.0.s8 %v5910
      %v5912 = vlaneseq
      %v5913 = vshrl.u32 %v5912, 7
      %v5914 = vsub.s32 %v5911, %v5913
      %v5915 = vrot.slane %v5887, %v5914
      %v5916 = vcombine.high %v5894, %v5894
      %v5917 = vcombine.high %v5901, %v5901
      %v5918 = vcombine.high %v5908, %v5908
      %v5919 = vcombine.high %v5915, %v5915
      %v5920 = vcombine.high %v4528, %v4528
      %v5922 = vunpack.c.l.s4 1966171168
      %v5923 = vunpack.c.0.s8 %v5922
      %v5924 = vlaneseq
      %v5925 = vshrl.u32 %v5924, 7
      %v5926 = vsub.s32 %v5923, %v5925
      %v5927 = vrot.slane %v4528, %v5926
      %v5929 = vunpack.c.l.s4 1966171168
      %v5930 = vunpack.c.0.s8 %v5929
      %v5931 = vlaneseq
      %v5932 = vshrl.u32 %v5931, 7
      %v5933 = vsub.s32 %v5930, %v5932
      %v5934 = vrot.slane %v5920, %v5933
      %v5935 = vcombine.high %v5927, %v5927
      %v5936 = vcombine.high %v5934, %v5934
      %v5938 = vunpack.c.l.s4 1966171168
      %v5939 = vunpack.c.0.s8 %v5938
      %v5940 = vlaneseq
      %v5941 = vshrl.u32 %v5940, 7
      %v5942 = vsub.s32 %v5939, %v5941
      %v5943 = vrot.slane %v5927, %v5942
      %v5945 = vunpack.c.l.s4 1966171168
      %v5946 = vunpack.c.0.s8 %v5945
      %v5947 = vlaneseq
      %v5948 = vshrl.u32 %v5947, 7
      %v5949 = vsub.s32 %v5946, %v5948
      %v5950 = vrot.slane %v5934, %v5949
      %v5952 = vunpack.c.l.s4 1966171168
      %v5953 = vunpack.c.0.s8 %v5952
      %v5954 = vlaneseq
      %v5955 = vshrl.u32 %v5954, 7
      %v5956 = vsub.s32 %v5953, %v5955
      %v5957 = vrot.slane %v5935, %v5956
      %v5959 = vunpack.c.l.s4 1966171168
      %v5960 = vunpack.c.0.s8 %v5959
      %v5961 = vlaneseq
      %v5962 = vshrl.u32 %v5961, 7
      %v5963 = vsub.s32 %v5960, %v5962
      %v5964 = vrot.slane %v5936, %v5963
      %v5965 = vcombine.high %v5943, %v5943
      %v5966 = vcombine.high %v5950, %v5950
      %v5967 = vcombine.high %v5957, %v5957
      %v5968 = vcombine.high %v5964, %v5964
      %v5969 = vcombine.high %v4529, %v4529
      %v5971 = vunpack.c.l.s4 1966171168
      %v5972 = vunpack.c.0.s8 %v5971
      %v5973 = vlaneseq
      %v5974 = vshrl.u32 %v5973, 7
      %v5975 = vsub.s32 %v5972, %v5974
      %v5976 = vrot.slane %v4529, %v5975
      %v5978 = vunpack.c.l.s4 1966171168
      %v5979 = vunpack.c.0.s8 %v5978
      %v5980 = vlaneseq
      %v5981 = vshrl.u32 %v5980, 7
      %v5982 = vsub.s32 %v5979, %v5981
      %v5983 = vrot.slane %v5969, %v5982
      %v5984 = vcombine.high %v5976, %v5976
      %v5985 = vcombine.high %v5983, %v5983
      %v5987 = vunpack.c.l.s4 1966171168
      %v5988 = vunpack.c.0.s8 %v5987
      %v5989 = vlaneseq
      %v5990 = vshrl.u32 %v5989, 7
      %v5991 = vsub.s32 %v5988, %v5990
      %v5992 = vrot.slane %v5976, %v5991
      %v5994 = vunpack.c.l.s4 1966171168
      %v5995 = vunpack.c.0.s8 %v5994
      %v5996 = vlaneseq
      %v5997 = vshrl.u32 %v5996, 7
      %v5998 = vsub.s32 %v5995, %v5997
      %v5999 = vrot.slane %v5983, %v5998
      %v6001 = vunpack.c.l.s4 1966171168
      %v6002 = vunpack.c.0.s8 %v6001
      %v6003 = vlaneseq
      %v6004 = vshrl.u32 %v6003, 7
      %v6005 = vsub.s32 %v6002, %v6004
      %v6006 = vrot.slane %v5984, %v6005
      %v6008 = vunpack.c.l.s4 1966171168
      %v6009 = vunpack.c.0.s8 %v6008
      %v6010 = vlaneseq
      %v6011 = vshrl.u32 %v6010, 7
      %v6012 = vsub.s32 %v6009, %v6011
      %v6013 = vrot.slane %v5985, %v6012
      %v6014 = vcombine.high %v5992, %v5992
      %v6015 = vcombine.high %v5999, %v5999
      %v6016 = vcombine.high %v6006, %v6006
      %v6017 = vcombine.high %v6013, %v6013
      %v6018 = vcombine.high %v4530, %v4530
      %v6020 = vunpack.c.l.s4 1966171168
      %v6021 = vunpack.c.0.s8 %v6020
      %v6022 = vlaneseq
      %v6023 = vshrl.u32 %v6022, 7
      %v6024 = vsub.s32 %v6021, %v6023
      %v6025 = vrot.slane %v4530, %v6024
      %v6027 = vunpack.c.l.s4 1966171168
      %v6028 = vunpack.c.0.s8 %v6027
      %v6029 = vlaneseq
      %v6030 = vshrl.u32 %v6029, 7
      %v6031 = vsub.s32 %v6028, %v6030
      %v6032 = vrot.slane %v6018, %v6031
      %v6033 = vcombine.high %v6025, %v6025
      %v6034 = vcombine.high %v6032, %v6032
      %v6036 = vunpack.c.l.s4 1966171168
      %v6037 = vunpack.c.0.s8 %v6036
      %v6038 = vlaneseq
      %v6039 = vshrl.u32 %v6038, 7
      %v6040 = vsub.s32 %v6037, %v6039
      %v6041 = vrot.slane %v6025, %v6040
      %v6043 = vunpack.c.l.s4 1966171168
      %v6044 = vunpack.c.0.s8 %v6043
      %v6045 = vlaneseq
      %v6046 = vshrl.u32 %v6045, 7
      %v6047 = vsub.s32 %v6044, %v6046
      %v6048 = vrot.slane %v6032, %v6047
      %v6050 = vunpack.c.l.s4 1966171168
      %v6051 = vunpack.c.0.s8 %v6050
      %v6052 = vlaneseq
      %v6053 = vshrl.u32 %v6052, 7
      %v6054 = vsub.s32 %v6051, %v6053
      %v6055 = vrot.slane %v6033, %v6054
      %v6057 = vunpack.c.l.s4 1966171168
      %v6058 = vunpack.c.0.s8 %v6057
      %v6059 = vlaneseq
      %v6060 = vshrl.u32 %v6059, 7
      %v6061 = vsub.s32 %v6058, %v6060
      %v6062 = vrot.slane %v6034, %v6061
      %v6063 = vcombine.high %v6041, %v6041
      %v6064 = vcombine.high %v6048, %v6048
      %v6065 = vcombine.high %v6055, %v6055
      %v6066 = vcombine.high %v6062, %v6062
      %v6067 = vcombine.high %v4531, %v4531
      %v6069 = vunpack.c.l.s4 1966171168
      %v6070 = vunpack.c.0.s8 %v6069
      %v6071 = vlaneseq
      %v6072 = vshrl.u32 %v6071, 7
      %v6073 = vsub.s32 %v6070, %v6072
      %v6074 = vrot.slane %v4531, %v6073
      %v6076 = vunpack.c.l.s4 1966171168
      %v6077 = vunpack.c.0.s8 %v6076
      %v6078 = vlaneseq
      %v6079 = vshrl.u32 %v6078, 7
      %v6080 = vsub.s32 %v6077, %v6079
      %v6081 = vrot.slane %v6067, %v6080
      %v6082 = vcombine.high %v6074, %v6074
      %v6083 = vcombine.high %v6081, %v6081
      %v6085 = vunpack.c.l.s4 1966171168
      %v6086 = vunpack.c.0.s8 %v6085
      %v6087 = vlaneseq
      %v6088 = vshrl.u32 %v6087, 7
      %v6089 = vsub.s32 %v6086, %v6088
      %v6090 = vrot.slane %v6074, %v6089
      %v6092 = vunpack.c.l.s4 1966171168
      %v6093 = vunpack.c.0.s8 %v6092
      %v6094 = vlaneseq
      %v6095 = vshrl.u32 %v6094, 7
      %v6096 = vsub.s32 %v6093, %v6095
      %v6097 = vrot.slane %v6081, %v6096
      %v6099 = vunpack.c.l.s4 1966171168
      %v6100 = vunpack.c.0.s8 %v6099
      %v6101 = vlaneseq
      %v6102 = vshrl.u32 %v6101, 7
      %v6103 = vsub.s32 %v6100, %v6102
      %v6104 = vrot.slane %v6082, %v6103
      %v6106 = vunpack.c.l.s4 1966171168
      %v6107 = vunpack.c.0.s8 %v6106
      %v6108 = vlaneseq
      %v6109 = vshrl.u32 %v6108, 7
      %v6110 = vsub.s32 %v6107, %v6109
      %v6111 = vrot.slane %v6083, %v6110
      %v6112 = vcombine.high %v6090, %v6090
      %v6113 = vcombine.high %v6097, %v6097
      %v6114 = vcombine.high %v6104, %v6104
      %v6115 = vcombine.high %v6111, %v6111
      %v6116 = vcombine.high %v4532, %v4532
      %v6118 = vunpack.c.l.s4 1966171168
      %v6119 = vunpack.c.0.s8 %v6118
      %v6120 = vlaneseq
      %v6121 = vshrl.u32 %v6120, 7
      %v6122 = vsub.s32 %v6119, %v6121
      %v6123 = vrot.slane %v4532, %v6122
      %v6125 = vunpack.c.l.s4 1966171168
      %v6126 = vunpack.c.0.s8 %v6125
      %v6127 = vlaneseq
      %v6128 = vshrl.u32 %v6127, 7
      %v6129 = vsub.s32 %v6126, %v6128
      %v6130 = vrot.slane %v6116, %v6129
      %v6131 = vcombine.high %v6123, %v6123
      %v6132 = vcombine.high %v6130, %v6130
      %v6134 = vunpack.c.l.s4 1966171168
      %v6135 = vunpack.c.0.s8 %v6134
      %v6136 = vlaneseq
      %v6137 = vshrl.u32 %v6136, 7
      %v6138 = vsub.s32 %v6135, %v6137
      %v6139 = vrot.slane %v6123, %v6138
      %v6141 = vunpack.c.l.s4 1966171168
      %v6142 = vunpack.c.0.s8 %v6141
      %v6143 = vlaneseq
      %v6144 = vshrl.u32 %v6143, 7
      %v6145 = vsub.s32 %v6142, %v6144
      %v6146 = vrot.slane %v6130, %v6145
      %v6148 = vunpack.c.l.s4 1966171168
      %v6149 = vunpack.c.0.s8 %v6148
      %v6150 = vlaneseq
      %v6151 = vshrl.u32 %v6150, 7
      %v6152 = vsub.s32 %v6149, %v6151
      %v6153 = vrot.slane %v6131, %v6152
      %v6155 = vunpack.c.l.s4 1966171168
      %v6156 = vunpack.c.0.s8 %v6155
      %v6157 = vlaneseq
      %v6158 = vshrl.u32 %v6157, 7
      %v6159 = vsub.s32 %v6156, %v6158
      %v6160 = vrot.slane %v6132, %v6159
      %v6161 = vcombine.high %v6139, %v6139
      %v6162 = vcombine.high %v6146, %v6146
      %v6163 = vcombine.high %v6153, %v6153
      %v6164 = vcombine.high %v6160, %v6160
      %v6165 = vcombine.high %v4533, %v4533
      %v6167 = vunpack.c.l.s4 1966171168
      %v6168 = vunpack.c.0.s8 %v6167
      %v6169 = vlaneseq
      %v6170 = vshrl.u32 %v6169, 7
      %v6171 = vsub.s32 %v6168, %v6170
      %v6172 = vrot.slane %v4533, %v6171
      %v6174 = vunpack.c.l.s4 1966171168
      %v6175 = vunpack.c.0.s8 %v6174
      %v6176 = vlaneseq
      %v6177 = vshrl.u32 %v6176, 7
      %v6178 = vsub.s32 %v6175, %v6177
      %v6179 = vrot.slane %v6165, %v6178
      %v6180 = vcombine.high %v6172, %v6172
      %v6181 = vcombine.high %v6179, %v6179
      %v6183 = vunpack.c.l.s4 1966171168
      %v6184 = vunpack.c.0.s8 %v6183
      %v6185 = vlaneseq
      %v6186 = vshrl.u32 %v6185, 7
      %v6187 = vsub.s32 %v6184, %v6186
      %v6188 = vrot.slane %v6172, %v6187
      %v6190 = vunpack.c.l.s4 1966171168
      %v6191 = vunpack.c.0.s8 %v6190
      %v6192 = vlaneseq
      %v6193 = vshrl.u32 %v6192, 7
      %v6194 = vsub.s32 %v6191, %v6193
      %v6195 = vrot.slane %v6179, %v6194
      %v6197 = vunpack.c.l.s4 1966171168
      %v6198 = vunpack.c.0.s8 %v6197
      %v6199 = vlaneseq
      %v6200 = vshrl.u32 %v6199, 7
      %v6201 = vsub.s32 %v6198, %v6200
      %v6202 = vrot.slane %v6180, %v6201
      %v6204 = vunpack.c.l.s4 1966171168
      %v6205 = vunpack.c.0.s8 %v6204
      %v6206 = vlaneseq
      %v6207 = vshrl.u32 %v6206, 7
      %v6208 = vsub.s32 %v6205, %v6207
      %v6209 = vrot.slane %v6181, %v6208
      %v6210 = vcombine.high %v6188, %v6188
      %v6211 = vcombine.high %v6195, %v6195
      %v6212 = vcombine.high %v6202, %v6202
      %v6213 = vcombine.high %v6209, %v6209
      %v6214 = vcombine.high %v4534, %v4534
      %v6216 = vunpack.c.l.s4 1966171168
      %v6217 = vunpack.c.0.s8 %v6216
      %v6218 = vlaneseq
      %v6219 = vshrl.u32 %v6218, 7
      %v6220 = vsub.s32 %v6217, %v6219
      %v6221 = vrot.slane %v4534, %v6220
      %v6223 = vunpack.c.l.s4 1966171168
      %v6224 = vunpack.c.0.s8 %v6223
      %v6225 = vlaneseq
      %v6226 = vshrl.u32 %v6225, 7
      %v6227 = vsub.s32 %v6224, %v6226
      %v6228 = vrot.slane %v6214, %v6227
      %v6229 = vcombine.high %v6221, %v6221
      %v6230 = vcombine.high %v6228, %v6228
      %v6232 = vunpack.c.l.s4 1966171168
      %v6233 = vunpack.c.0.s8 %v6232
      %v6234 = vlaneseq
      %v6235 = vshrl.u32 %v6234, 7
      %v6236 = vsub.s32 %v6233, %v6235
      %v6237 = vrot.slane %v6221, %v6236
      %v6239 = vunpack.c.l.s4 1966171168
      %v6240 = vunpack.c.0.s8 %v6239
      %v6241 = vlaneseq
      %v6242 = vshrl.u32 %v6241, 7
      %v6243 = vsub.s32 %v6240, %v6242
      %v6244 = vrot.slane %v6228, %v6243
      %v6246 = vunpack.c.l.s4 1966171168
      %v6247 = vunpack.c.0.s8 %v6246
      %v6248 = vlaneseq
      %v6249 = vshrl.u32 %v6248, 7
      %v6250 = vsub.s32 %v6247, %v6249
      %v6251 = vrot.slane %v6229, %v6250
      %v6253 = vunpack.c.l.s4 1966171168
      %v6254 = vunpack.c.0.s8 %v6253
      %v6255 = vlaneseq
      %v6256 = vshrl.u32 %v6255, 7
      %v6257 = vsub.s32 %v6254, %v6256
      %v6258 = vrot.slane %v6230, %v6257
      %v6259 = vcombine.high %v6237, %v6237
      %v6260 = vcombine.high %v6244, %v6244
      %v6261 = vcombine.high %v6251, %v6251
      %v6262 = vcombine.high %v6258, %v6258
      %v6263 = vlaneseq
      %v6264 = vshrl.u32 %v6263, 7
      %v6265 = vsub.s32 0, %v6264
      %v6266 = vrot.slane %v5502, %v6265
      %v6267 = vlaneseq
      %v6268 = vshrl.u32 %v6267, 7
      %v6269 = vsub.s32 0, %v6268
      %v6270 = vrot.slane %v5516, %v6269
      %v6271 = vlaneseq
      %v6272 = vshrl.u32 %v6271, 7
      %v6273 = vsub.s32 0, %v6272
      %v6274 = vrot.slane %v5524, %v6273
      %v6275 = vlaneseq
      %v6276 = vshrl.u32 %v6275, 7
      %v6277 = vsub.s32 0, %v6276
      %v6278 = vrot.slane %v5526, %v6277
      %v6279 = vlaneseq
      %v6280 = vshrl.u32 %v6279, 7
      %v6281 = vsub.s32 0, %v6280
      %v6282 = vrot.slane %v5509, %v6281
      %v6283 = vlaneseq
      %v6284 = vshrl.u32 %v6283, 7
      %v6285 = vsub.s32 0, %v6284
      %v6286 = vrot.slane %v5523, %v6285
      %v6287 = vlaneseq
      %v6288 = vshrl.u32 %v6287, 7
      %v6289 = vsub.s32 0, %v6288
      %v6290 = vrot.slane %v5525, %v6289
      %v6291 = vlaneseq
      %v6292 = vshrl.u32 %v6291, 7
      %v6293 = vsub.s32 0, %v6292
      %v6294 = vrot.slane %v5527, %v6293
      %v6295 = vlaneseq
      %v6296 = vshrl.u32 %v6295, 7
      %v6297 = vsub.s32 0, %v6296
      %v6298 = vrot.slane %v5551, %v6297
      %v6299 = vlaneseq
      %v6300 = vshrl.u32 %v6299, 7
      %v6301 = vsub.s32 0, %v6300
      %v6302 = vrot.slane %v5565, %v6301
      %v6303 = vlaneseq
      %v6304 = vshrl.u32 %v6303, 7
      %v6305 = vsub.s32 0, %v6304
      %v6306 = vrot.slane %v5573, %v6305
      %v6307 = vlaneseq
      %v6308 = vshrl.u32 %v6307, 7
      %v6309 = vsub.s32 0, %v6308
      %v6310 = vrot.slane %v5575, %v6309
      %v6311 = vlaneseq
      %v6312 = vshrl.u32 %v6311, 7
      %v6313 = vsub.s32 0, %v6312
      %v6314 = vrot.slane %v5558, %v6313
      %v6315 = vlaneseq
      %v6316 = vshrl.u32 %v6315, 7
      %v6317 = vsub.s32 0, %v6316
      %v6318 = vrot.slane %v5572, %v6317
      %v6319 = vlaneseq
      %v6320 = vshrl.u32 %v6319, 7
      %v6321 = vsub.s32 0, %v6320
      %v6322 = vrot.slane %v5574, %v6321
      %v6323 = vlaneseq
      %v6324 = vshrl.u32 %v6323, 7
      %v6325 = vsub.s32 0, %v6324
      %v6326 = vrot.slane %v5576, %v6325
      %v6327 = vlaneseq
      %v6328 = vshrl.u32 %v6327, 7
      %v6329 = vsub.s32 0, %v6328
      %v6330 = vrot.slane %v5600, %v6329
      %v6331 = vlaneseq
      %v6332 = vshrl.u32 %v6331, 7
      %v6333 = vsub.s32 0, %v6332
      %v6334 = vrot.slane %v5614, %v6333
      %v6335 = vlaneseq
      %v6336 = vshrl.u32 %v6335, 7
      %v6337 = vsub.s32 0, %v6336
      %v6338 = vrot.slane %v5622, %v6337
      %v6339 = vlaneseq
      %v6340 = vshrl.u32 %v6339, 7
      %v6341 = vsub.s32 0, %v6340
      %v6342 = vrot.slane %v5624, %v6341
      %v6343 = vlaneseq
      %v6344 = vshrl.u32 %v6343, 7
      %v6345 = vsub.s32 0, %v6344
      %v6346 = vrot.slane %v5607, %v6345
      %v6347 = vlaneseq
      %v6348 = vshrl.u32 %v6347, 7
      %v6349 = vsub.s32 0, %v6348
      %v6350 = vrot.slane %v5621, %v6349
      %v6351 = vlaneseq
      %v6352 = vshrl.u32 %v6351, 7
      %v6353 = vsub.s32 0, %v6352
      %v6354 = vrot.slane %v5623, %v6353
      %v6355 = vlaneseq
      %v6356 = vshrl.u32 %v6355, 7
      %v6357 = vsub.s32 0, %v6356
      %v6358 = vrot.slane %v5625, %v6357
      %v6359 = vlaneseq
      %v6360 = vshrl.u32 %v6359, 7
      %v6361 = vsub.s32 0, %v6360
      %v6362 = vrot.slane %v5649, %v6361
      %v6363 = vlaneseq
      %v6364 = vshrl.u32 %v6363, 7
      %v6365 = vsub.s32 0, %v6364
      %v6366 = vrot.slane %v5663, %v6365
      %v6367 = vlaneseq
      %v6368 = vshrl.u32 %v6367, 7
      %v6369 = vsub.s32 0, %v6368
      %v6370 = vrot.slane %v5671, %v6369
      %v6371 = vlaneseq
      %v6372 = vshrl.u32 %v6371, 7
      %v6373 = vsub.s32 0, %v6372
      %v6374 = vrot.slane %v5673, %v6373
      %v6375 = vlaneseq
      %v6376 = vshrl.u32 %v6375, 7
      %v6377 = vsub.s32 0, %v6376
      %v6378 = vrot.slane %v5656, %v6377
      %v6379 = vlaneseq
      %v6380 = vshrl.u32 %v6379, 7
      %v6381 = vsub.s32 0, %v6380
      %v6382 = vrot.slane %v5670, %v6381
      %v6383 = vlaneseq
      %v6384 = vshrl.u32 %v6383, 7
      %v6385 = vsub.s32 0, %v6384
      %v6386 = vrot.slane %v5672, %v6385
      %v6387 = vlaneseq
      %v6388 = vshrl.u32 %v6387, 7
      %v6389 = vsub.s32 0, %v6388
      %v6390 = vrot.slane %v5674, %v6389
      %v6391 = vlaneseq
      %v6392 = vshrl.u32 %v6391, 7
      %v6393 = vsub.s32 0, %v6392
      %v6394 = vrot.slane %v5698, %v6393
      %v6395 = vlaneseq
      %v6396 = vshrl.u32 %v6395, 7
      %v6397 = vsub.s32 0, %v6396
      %v6398 = vrot.slane %v5712, %v6397
      %v6399 = vlaneseq
      %v6400 = vshrl.u32 %v6399, 7
      %v6401 = vsub.s32 0, %v6400
      %v6402 = vrot.slane %v5720, %v6401
      %v6403 = vlaneseq
      %v6404 = vshrl.u32 %v6403, 7
      %v6405 = vsub.s32 0, %v6404
      %v6406 = vrot.slane %v5722, %v6405
      %v6407 = vlaneseq
      %v6408 = vshrl.u32 %v6407, 7
      %v6409 = vsub.s32 0, %v6408
      %v6410 = vrot.slane %v5705, %v6409
      %v6411 = vlaneseq
      %v6412 = vshrl.u32 %v6411, 7
      %v6413 = vsub.s32 0, %v6412
      %v6414 = vrot.slane %v5719, %v6413
      %v6415 = vlaneseq
      %v6416 = vshrl.u32 %v6415, 7
      %v6417 = vsub.s32 0, %v6416
      %v6418 = vrot.slane %v5721, %v6417
      %v6419 = vlaneseq
      %v6420 = vshrl.u32 %v6419, 7
      %v6421 = vsub.s32 0, %v6420
      %v6422 = vrot.slane %v5723, %v6421
      %v6423 = vlaneseq
      %v6424 = vshrl.u32 %v6423, 7
      %v6425 = vsub.s32 0, %v6424
      %v6426 = vrot.slane %v5747, %v6425
      %v6427 = vlaneseq
      %v6428 = vshrl.u32 %v6427, 7
      %v6429 = vsub.s32 0, %v6428
      %v6430 = vrot.slane %v5761, %v6429
      %v6431 = vlaneseq
      %v6432 = vshrl.u32 %v6431, 7
      %v6433 = vsub.s32 0, %v6432
      %v6434 = vrot.slane %v5769, %v6433
      %v6435 = vlaneseq
      %v6436 = vshrl.u32 %v6435, 7
      %v6437 = vsub.s32 0, %v6436
      %v6438 = vrot.slane %v5771, %v6437
      %v6439 = vlaneseq
      %v6440 = vshrl.u32 %v6439, 7
      %v6441 = vsub.s32 0, %v6440
      %v6442 = vrot.slane %v5754, %v6441
      %v6443 = vlaneseq
      %v6444 = vshrl.u32 %v6443, 7
      %v6445 = vsub.s32 0, %v6444
      %v6446 = vrot.slane %v5768, %v6445
      %v6447 = vlaneseq
      %v6448 = vshrl.u32 %v6447, 7
      %v6449 = vsub.s32 0, %v6448
      %v6450 = vrot.slane %v5770, %v6449
      %v6451 = vlaneseq
      %v6452 = vshrl.u32 %v6451, 7
      %v6453 = vsub.s32 0, %v6452
      %v6454 = vrot.slane %v5772, %v6453
      %v6455 = vlaneseq
      %v6456 = vshrl.u32 %v6455, 7
      %v6457 = vsub.s32 0, %v6456
      %v6458 = vrot.slane %v5796, %v6457
      %v6459 = vlaneseq
      %v6460 = vshrl.u32 %v6459, 7
      %v6461 = vsub.s32 0, %v6460
      %v6462 = vrot.slane %v5810, %v6461
      %v6463 = vlaneseq
      %v6464 = vshrl.u32 %v6463, 7
      %v6465 = vsub.s32 0, %v6464
      %v6466 = vrot.slane %v5818, %v6465
      %v6467 = vlaneseq
      %v6468 = vshrl.u32 %v6467, 7
      %v6469 = vsub.s32 0, %v6468
      %v6470 = vrot.slane %v5820, %v6469
      %v6471 = vlaneseq
      %v6472 = vshrl.u32 %v6471, 7
      %v6473 = vsub.s32 0, %v6472
      %v6474 = vrot.slane %v5803, %v6473
      %v6475 = vlaneseq
      %v6476 = vshrl.u32 %v6475, 7
      %v6477 = vsub.s32 0, %v6476
      %v6478 = vrot.slane %v5817, %v6477
      %v6479 = vlaneseq
      %v6480 = vshrl.u32 %v6479, 7
      %v6481 = vsub.s32 0, %v6480
      %v6482 = vrot.slane %v5819, %v6481
      %v6483 = vlaneseq
      %v6484 = vshrl.u32 %v6483, 7
      %v6485 = vsub.s32 0, %v6484
      %v6486 = vrot.slane %v5821, %v6485
      %v6487 = vlaneseq
      %v6488 = vshrl.u32 %v6487, 7
      %v6489 = vsub.s32 0, %v6488
      %v6490 = vrot.slane %v5845, %v6489
      %v6491 = vlaneseq
      %v6492 = vshrl.u32 %v6491, 7
      %v6493 = vsub.s32 0, %v6492
      %v6494 = vrot.slane %v5859, %v6493
      %v6495 = vlaneseq
      %v6496 = vshrl.u32 %v6495, 7
      %v6497 = vsub.s32 0, %v6496
      %v6498 = vrot.slane %v5867, %v6497
      %v6499 = vlaneseq
      %v6500 = vshrl.u32 %v6499, 7
      %v6501 = vsub.s32 0, %v6500
      %v6502 = vrot.slane %v5869, %v6501
      %v6503 = vlaneseq
      %v6504 = vshrl.u32 %v6503, 7
      %v6505 = vsub.s32 0, %v6504
      %v6506 = vrot.slane %v5852, %v6505
      %v6507 = vlaneseq
      %v6508 = vshrl.u32 %v6507, 7
      %v6509 = vsub.s32 0, %v6508
      %v6510 = vrot.slane %v5866, %v6509
      %v6511 = vlaneseq
      %v6512 = vshrl.u32 %v6511, 7
      %v6513 = vsub.s32 0, %v6512
      %v6514 = vrot.slane %v5868, %v6513
      %v6515 = vlaneseq
      %v6516 = vshrl.u32 %v6515, 7
      %v6517 = vsub.s32 0, %v6516
      %v6518 = vrot.slane %v5870, %v6517
      %v6519 = vlaneseq
      %v6520 = vshrl.u32 %v6519, 7
      %v6521 = vsub.s32 0, %v6520
      %v6522 = vrot.slane %v5894, %v6521
      %v6523 = vlaneseq
      %v6524 = vshrl.u32 %v6523, 7
      %v6525 = vsub.s32 0, %v6524
      %v6526 = vrot.slane %v5908, %v6525
      %v6527 = vlaneseq
      %v6528 = vshrl.u32 %v6527, 7
      %v6529 = vsub.s32 0, %v6528
      %v6530 = vrot.slane %v5916, %v6529
      %v6531 = vlaneseq
      %v6532 = vshrl.u32 %v6531, 7
      %v6533 = vsub.s32 0, %v6532
      %v6534 = vrot.slane %v5918, %v6533
      %v6535 = vlaneseq
      %v6536 = vshrl.u32 %v6535, 7
      %v6537 = vsub.s32 0, %v6536
      %v6538 = vrot.slane %v5901, %v6537
      %v6539 = vlaneseq
      %v6540 = vshrl.u32 %v6539, 7
      %v6541 = vsub.s32 0, %v6540
      %v6542 = vrot.slane %v5915, %v6541
      %v6543 = vlaneseq
      %v6544 = vshrl.u32 %v6543, 7
      %v6545 = vsub.s32 0, %v6544
      %v6546 = vrot.slane %v5917, %v6545
      %v6547 = vlaneseq
      %v6548 = vshrl.u32 %v6547, 7
      %v6549 = vsub.s32 0, %v6548
      %v6550 = vrot.slane %v5919, %v6549
      %v6551 = vlaneseq
      %v6552 = vshrl.u32 %v6551, 7
      %v6553 = vsub.s32 0, %v6552
      %v6554 = vrot.slane %v5943, %v6553
      %v6555 = vlaneseq
      %v6556 = vshrl.u32 %v6555, 7
      %v6557 = vsub.s32 0, %v6556
      %v6558 = vrot.slane %v5957, %v6557
      %v6559 = vlaneseq
      %v6560 = vshrl.u32 %v6559, 7
      %v6561 = vsub.s32 0, %v6560
      %v6562 = vrot.slane %v5965, %v6561
      %v6563 = vlaneseq
      %v6564 = vshrl.u32 %v6563, 7
      %v6565 = vsub.s32 0, %v6564
      %v6566 = vrot.slane %v5967, %v6565
      %v6567 = vlaneseq
      %v6568 = vshrl.u32 %v6567, 7
      %v6569 = vsub.s32 0, %v6568
      %v6570 = vrot.slane %v5950, %v6569
      %v6571 = vlaneseq
      %v6572 = vshrl.u32 %v6571, 7
      %v6573 = vsub.s32 0, %v6572
      %v6574 = vrot.slane %v5964, %v6573
      %v6575 = vlaneseq
      %v6576 = vshrl.u32 %v6575, 7
      %v6577 = vsub.s32 0, %v6576
      %v6578 = vrot.slane %v5966, %v6577
      %v6579 = vlaneseq
      %v6580 = vshrl.u32 %v6579, 7
      %v6581 = vsub.s32 0, %v6580
      %v6582 = vrot.slane %v5968, %v6581
      %v6583 = vlaneseq
      %v6584 = vshrl.u32 %v6583, 7
      %v6585 = vsub.s32 0, %v6584
      %v6586 = vrot.slane %v5992, %v6585
      %v6587 = vlaneseq
      %v6588 = vshrl.u32 %v6587, 7
      %v6589 = vsub.s32 0, %v6588
      %v6590 = vrot.slane %v6006, %v6589
      %v6591 = vlaneseq
      %v6592 = vshrl.u32 %v6591, 7
      %v6593 = vsub.s32 0, %v6592
      %v6594 = vrot.slane %v6014, %v6593
      %v6595 = vlaneseq
      %v6596 = vshrl.u32 %v6595, 7
      %v6597 = vsub.s32 0, %v6596
      %v6598 = vrot.slane %v6016, %v6597
      %v6599 = vlaneseq
      %v6600 = vshrl.u32 %v6599, 7
      %v6601 = vsub.s32 0, %v6600
      %v6602 = vrot.slane %v5999, %v6601
      %v6603 = vlaneseq
      %v6604 = vshrl.u32 %v6603, 7
      %v6605 = vsub.s32 0, %v6604
      %v6606 = vrot.slane %v6013, %v6605
      %v6607 = vlaneseq
      %v6608 = vshrl.u32 %v6607, 7
      %v6609 = vsub.s32 0, %v6608
      %v6610 = vrot.slane %v6015, %v6609
      %v6611 = vlaneseq
      %v6612 = vshrl.u32 %v6611, 7
      %v6613 = vsub.s32 0, %v6612
      %v6614 = vrot.slane %v6017, %v6613
      %v6615 = vlaneseq
      %v6616 = vshrl.u32 %v6615, 7
      %v6617 = vsub.s32 0, %v6616
      %v6618 = vrot.slane %v6041, %v6617
      %v6619 = vlaneseq
      %v6620 = vshrl.u32 %v6619, 7
      %v6621 = vsub.s32 0, %v6620
      %v6622 = vrot.slane %v6055, %v6621
      %v6623 = vlaneseq
      %v6624 = vshrl.u32 %v6623, 7
      %v6625 = vsub.s32 0, %v6624
      %v6626 = vrot.slane %v6063, %v6625
      %v6627 = vlaneseq
      %v6628 = vshrl.u32 %v6627, 7
      %v6629 = vsub.s32 0, %v6628
      %v6630 = vrot.slane %v6065, %v6629
      %v6631 = vlaneseq
      %v6632 = vshrl.u32 %v6631, 7
      %v6633 = vsub.s32 0, %v6632
      %v6634 = vrot.slane %v6048, %v6633
      %v6635 = vlaneseq
      %v6636 = vshrl.u32 %v6635, 7
      %v6637 = vsub.s32 0, %v6636
      %v6638 = vrot.slane %v6062, %v6637
      %v6639 = vlaneseq
      %v6640 = vshrl.u32 %v6639, 7
      %v6641 = vsub.s32 0, %v6640
      %v6642 = vrot.slane %v6064, %v6641
      %v6643 = vlaneseq
      %v6644 = vshrl.u32 %v6643, 7
      %v6645 = vsub.s32 0, %v6644
      %v6646 = vrot.slane %v6066, %v6645
      %v6647 = vlaneseq
      %v6648 = vshrl.u32 %v6647, 7
      %v6649 = vsub.s32 0, %v6648
      %v6650 = vrot.slane %v6090, %v6649
      %v6651 = vlaneseq
      %v6652 = vshrl.u32 %v6651, 7
      %v6653 = vsub.s32 0, %v6652
      %v6654 = vrot.slane %v6104, %v6653
      %v6655 = vlaneseq
      %v6656 = vshrl.u32 %v6655, 7
      %v6657 = vsub.s32 0, %v6656
      %v6658 = vrot.slane %v6112, %v6657
      %v6659 = vlaneseq
      %v6660 = vshrl.u32 %v6659, 7
      %v6661 = vsub.s32 0, %v6660
      %v6662 = vrot.slane %v6114, %v6661
      %v6663 = vlaneseq
      %v6664 = vshrl.u32 %v6663, 7
      %v6665 = vsub.s32 0, %v6664
      %v6666 = vrot.slane %v6097, %v6665
      %v6667 = vlaneseq
      %v6668 = vshrl.u32 %v6667, 7
      %v6669 = vsub.s32 0, %v6668
      %v6670 = vrot.slane %v6111, %v6669
      %v6671 = vlaneseq
      %v6672 = vshrl.u32 %v6671, 7
      %v6673 = vsub.s32 0, %v6672
      %v6674 = vrot.slane %v6113, %v6673
      %v6675 = vlaneseq
      %v6676 = vshrl.u32 %v6675, 7
      %v6677 = vsub.s32 0, %v6676
      %v6678 = vrot.slane %v6115, %v6677
      %v6679 = vlaneseq
      %v6680 = vshrl.u32 %v6679, 7
      %v6681 = vsub.s32 0, %v6680
      %v6682 = vrot.slane %v6139, %v6681
      %v6683 = vlaneseq
      %v6684 = vshrl.u32 %v6683, 7
      %v6685 = vsub.s32 0, %v6684
      %v6686 = vrot.slane %v6153, %v6685
      %v6687 = vlaneseq
      %v6688 = vshrl.u32 %v6687, 7
      %v6689 = vsub.s32 0, %v6688
      %v6690 = vrot.slane %v6161, %v6689
      %v6691 = vlaneseq
      %v6692 = vshrl.u32 %v6691, 7
      %v6693 = vsub.s32 0, %v6692
      %v6694 = vrot.slane %v6163, %v6693
      %v6695 = vlaneseq
      %v6696 = vshrl.u32 %v6695, 7
      %v6697 = vsub.s32 0, %v6696
      %v6698 = vrot.slane %v6146, %v6697
      %v6699 = vlaneseq
      %v6700 = vshrl.u32 %v6699, 7
      %v6701 = vsub.s32 0, %v6700
      %v6702 = vrot.slane %v6160, %v6701
      %v6703 = vlaneseq
      %v6704 = vshrl.u32 %v6703, 7
      %v6705 = vsub.s32 0, %v6704
      %v6706 = vrot.slane %v6162, %v6705
      %v6707 = vlaneseq
      %v6708 = vshrl.u32 %v6707, 7
      %v6709 = vsub.s32 0, %v6708
      %v6710 = vrot.slane %v6164, %v6709
      %v6711 = vlaneseq
      %v6712 = vshrl.u32 %v6711, 7
      %v6713 = vsub.s32 0, %v6712
      %v6714 = vrot.slane %v6188, %v6713
      %v6715 = vlaneseq
      %v6716 = vshrl.u32 %v6715, 7
      %v6717 = vsub.s32 0, %v6716
      %v6718 = vrot.slane %v6202, %v6717
      %v6719 = vlaneseq
      %v6720 = vshrl.u32 %v6719, 7
      %v6721 = vsub.s32 0, %v6720
      %v6722 = vrot.slane %v6210, %v6721
      %v6723 = vlaneseq
      %v6724 = vshrl.u32 %v6723, 7
      %v6725 = vsub.s32 0, %v6724
      %v6726 = vrot.slane %v6212, %v6725
      %v6727 = vlaneseq
      %v6728 = vshrl.u32 %v6727, 7
      %v6729 = vsub.s32 0, %v6728
      %v6730 = vrot.slane %v6195, %v6729
      %v6731 = vlaneseq
      %v6732 = vshrl.u32 %v6731, 7
      %v6733 = vsub.s32 0, %v6732
      %v6734 = vrot.slane %v6209, %v6733
      %v6735 = vlaneseq
      %v6736 = vshrl.u32 %v6735, 7
      %v6737 = vsub.s32 0, %v6736
      %v6738 = vrot.slane %v6211, %v6737
      %v6739 = vlaneseq
      %v6740 = vshrl.u32 %v6739, 7
      %v6741 = vsub.s32 0, %v6740
      %v6742 = vrot.slane %v6213, %v6741
      %v6743 = vlaneseq
      %v6744 = vshrl.u32 %v6743, 7
      %v6745 = vsub.s32 0, %v6744
      %v6746 = vrot.slane %v6237, %v6745
      %v6747 = vlaneseq
      %v6748 = vshrl.u32 %v6747, 7
      %v6749 = vsub.s32 0, %v6748
      %v6750 = vrot.slane %v6251, %v6749
      %v6751 = vlaneseq
      %v6752 = vshrl.u32 %v6751, 7
      %v6753 = vsub.s32 0, %v6752
      %v6754 = vrot.slane %v6259, %v6753
      %v6755 = vlaneseq
      %v6756 = vshrl.u32 %v6755, 7
      %v6757 = vsub.s32 0, %v6756
      %v6758 = vrot.slane %v6261, %v6757
      %v6759 = vlaneseq
      %v6760 = vshrl.u32 %v6759, 7
      %v6761 = vsub.s32 0, %v6760
      %v6762 = vrot.slane %v6244, %v6761
      %v6763 = vlaneseq
      %v6764 = vshrl.u32 %v6763, 7
      %v6765 = vsub.s32 0, %v6764
      %v6766 = vrot.slane %v6258, %v6765
      %v6767 = vlaneseq
      %v6768 = vshrl.u32 %v6767, 7
      %v6769 = vsub.s32 0, %v6768
      %v6770 = vrot.slane %v6260, %v6769
      %v6771 = vlaneseq
      %v6772 = vshrl.u32 %v6771, 7
      %v6773 = vsub.s32 0, %v6772
      %v6774 = vrot.slane %v6262, %v6773
      %v6903 = vsel %vm1490, %v4574, %v6266
      %v6904 = vsel %vm1490, %v4588, %v6270
      %v6905 = vsel %vm1490, %v4596, %v6274
      %v6906 = vsel %vm1490, %v4598, %v6278
      %v6907 = vsel %vm1490, %v4581, %v6282
      %v6908 = vsel %vm1490, %v4595, %v6286
      %v6909 = vsel %vm1490, %v4597, %v6290
      %v6910 = vsel %vm1490, %v4599, %v6294
      %v6911 = vsel %vm1490, %v4623, %v6298
      %v6912 = vsel %vm1490, %v4637, %v6302
      %v6913 = vsel %vm1490, %v4645, %v6306
      %v6914 = vsel %vm1490, %v4647, %v6310
      %v6915 = vsel %vm1490, %v4630, %v6314
      %v6916 = vsel %vm1490, %v4644, %v6318
      %v6917 = vsel %vm1490, %v4646, %v6322
      %v6918 = vsel %vm1490, %v4648, %v6326
      %v6919 = vsel %vm1490, %v4672, %v6330
      %v6920 = vsel %vm1490, %v4686, %v6334
      %v6921 = vsel %vm1490, %v4694, %v6338
      %v6922 = vsel %vm1490, %v4696, %v6342
      %v6923 = vsel %vm1490, %v4679, %v6346
      %v6924 = vsel %vm1490, %v4693, %v6350
      %v6925 = vsel %vm1490, %v4695, %v6354
      %v6926 = vsel %vm1490, %v4697, %v6358
      %v6927 = vsel %vm1490, %v4721, %v6362
      %v6928 = vsel %vm1490, %v4735, %v6366
      %v6929 = vsel %vm1490, %v4743, %v6370
      %v6930 = vsel %vm1490, %v4745, %v6374
      %v6931 = vsel %vm1490, %v4728, %v6378
      %v6932 = vsel %vm1490, %v4742, %v6382
      %v6933 = vsel %vm1490, %v4744, %v6386
      %v6934 = vsel %vm1490, %v4746, %v6390
      %v6935 = vsel %vm1490, %v4770, %v6394
      %v6936 = vsel %vm1490, %v4784, %v6398
      %v6937 = vsel %vm1490, %v4792, %v6402
      %v6938 = vsel %vm1490, %v4794, %v6406
      %v6939 = vsel %vm1490, %v4777, %v6410
      %v6940 = vsel %vm1490, %v4791, %v6414
      %v6941 = vsel %vm1490, %v4793, %v6418
      %v6942 = vsel %vm1490, %v4795, %v6422
      %v6943 = vsel %vm1490, %v4819, %v6426
      %v6944 = vsel %vm1490, %v4833, %v6430
      %v6945 = vsel %vm1490, %v4841, %v6434
      %v6946 = vsel %vm1490, %v4843, %v6438
      %v6947 = vsel %vm1490, %v4826, %v6442
      %v6948 = vsel %vm1490, %v4840, %v6446
      %v6949 = vsel %vm1490, %v4842, %v6450
      %v6950 = vsel %vm1490, %v4844, %v6454
      %v6951 = vsel %vm1490, %v4868, %v6458
      %v6952 = vsel %vm1490, %v4882, %v6462
      %v6953 = vsel %vm1490, %v4890, %v6466
      %v6954 = vsel %vm1490, %v4892, %v6470
      %v6955 = vsel %vm1490, %v4875, %v6474
      %v6956 = vsel %vm1490, %v4889, %v6478
      %v6957 = vsel %vm1490, %v4891, %v6482
      %v6958 = vsel %vm1490, %v4893, %v6486
      %v6959 = vsel %vm1490, %v4917, %v6490
      %v6960 = vsel %vm1490, %v4931, %v6494
      %v6961 = vsel %vm1490, %v4939, %v6498
      %v6962 = vsel %vm1490, %v4941, %v6502
      %v6963 = vsel %vm1490, %v4924, %v6506
      %v6964 = vsel %vm1490, %v4938, %v6510
      %v6965 = vsel %vm1490, %v4940, %v6514
      %v6966 = vsel %vm1490, %v4942, %v6518
      %v6967 = vsel %vm1490, %v4966, %v6522
      %v6968 = vsel %vm1490, %v4980, %v6526
      %v6969 = vsel %vm1490, %v4988, %v6530
      %v6970 = vsel %vm1490, %v4990, %v6534
      %v6971 = vsel %vm1490, %v4973, %v6538
      %v6972 = vsel %vm1490, %v4987, %v6542
      %v6973 = vsel %vm1490, %v4989, %v6546
      %v6974 = vsel %vm1490, %v4991, %v6550
      %v6975 = vsel %vm1490, %v5015, %v6554
      %v6976 = vsel %vm1490, %v5029, %v6558
      %v6977 = vsel %vm1490, %v5037, %v6562
      %v6978 = vsel %vm1490, %v5039, %v6566
      %v6979 = vsel %vm1490, %v5022, %v6570
      %v6980 = vsel %vm1490, %v5036, %v6574
      %v6981 = vsel %vm1490, %v5038, %v6578
      %v6982 = vsel %vm1490, %v5040, %v6582
      %v6983 = vsel %vm1490, %v5064, %v6586
      %v6984 = vsel %vm1490, %v5078, %v6590
      %v6985 = vsel %vm1490, %v5086, %v6594
      %v6986 = vsel %vm1490, %v5088, %v6598
      %v6987 = vsel %vm1490, %v5071, %v6602
      %v6988 = vsel %vm1490, %v5085, %v6606
      %v6989 = vsel %vm1490, %v5087, %v6610
      %v6990 = vsel %vm1490, %v5089, %v6614
      %v6991 = vsel %vm1490, %v5113, %v6618
      %v6992 = vsel %vm1490, %v5127, %v6622
      %v6993 = vsel %vm1490, %v5135, %v6626
      %v6994 = vsel %vm1490, %v5137, %v6630
      %v6995 = vsel %vm1490, %v5120, %v6634
      %v6996 = vsel %vm1490, %v5134, %v6638
      %v6997 = vsel %vm1490, %v5136, %v6642
      %v6998 = vsel %vm1490, %v5138, %v6646
      %v6999 = vsel %vm1490, %v5162, %v6650
      %v7000 = vsel %vm1490, %v5176, %v6654
      %v7001 = vsel %vm1490, %v5184, %v6658
      %v7002 = vsel %vm1490, %v5186, %v6662
      %v7003 = vsel %vm1490, %v5169, %v6666
      %v7004 = vsel %vm1490, %v5183, %v6670
      %v7005 = vsel %vm1490, %v5185, %v6674
      %v7006 = vsel %vm1490, %v5187, %v6678
      %v7007 = vsel %vm1490, %v5211, %v6682
      %v7008 = vsel %vm1490, %v5225, %v6686
      %v7009 = vsel %vm1490, %v5233, %v6690
      %v7010 = vsel %vm1490, %v5235, %v6694
      %v7011 = vsel %vm1490, %v5218, %v6698
      %v7012 = vsel %vm1490, %v5232, %v6702
      %v7013 = vsel %vm1490, %v5234, %v6706
      %v7014 = vsel %vm1490, %v5236, %v6710
      %v7015 = vsel %vm1490, %v5260, %v6714
      %v7016 = vsel %vm1490, %v5274, %v6718
      %v7017 = vsel %vm1490, %v5282, %v6722
      %v7018 = vsel %vm1490, %v5284, %v6726
      %v7019 = vsel %vm1490, %v5267, %v6730
      %v7020 = vsel %vm1490, %v5281, %v6734
      %v7021 = vsel %vm1490, %v5283, %v6738
      %v7022 = vsel %vm1490, %v5285, %v6742
      %v7023 = vsel %vm1490, %v5309, %v6746
      %v7024 = vsel %vm1490, %v5323, %v6750
      %v7025 = vsel %vm1490, %v5331, %v6754
      %v7026 = vsel %vm1490, %v5333, %v6758
      %v7027 = vsel %vm1490, %v5316, %v6762
      %v7028 = vsel %vm1490, %v5330, %v6766
      %v7029 = vsel %vm1490, %v5332, %v6770
      %v7030 = vsel %vm1490, %v5334, %v6774
      %v7031 = vld [vmem:[%s13] sm:$0xff]
      %v7032 = vld [vmem:[%s13 + $0x8] sm:$0xff]
      %v7033 = vld [vmem:[%s13 + $0x10] sm:$0xff]
      %v7034 = vld [vmem:[%s13 + $0x18] sm:$0xff]
      %v7035 = vld [vmem:[%s13 + $0x20] sm:$0xff]
      %v7036 = vld [vmem:[%s13 + $0x28] sm:$0xff]
      %v7037 = vld [vmem:[%s13 + $0x30] sm:$0xff]
      %v7038 = vld [vmem:[%s13 + $0x38] sm:$0xff]
      %v7039 = vld [vmem:[%s13 + $0x40] sm:$0xff]
      %v7040 = vld [vmem:[%s13 + $0x48] sm:$0xff]
      %v7041 = vld [vmem:[%s13 + $0x50] sm:$0xff]
      %v7042 = vld [vmem:[%s13 + $0x58] sm:$0xff]
      %v7043 = vld [vmem:[%s13 + $0x60] sm:$0xff]
      %v7044 = vld [vmem:[%s13 + $0x68] sm:$0xff]
      %v7045 = vld [vmem:[%s13 + $0x70] sm:$0xff]
      %v7046 = vld [vmem:[%s13 + $0x78] sm:$0xff]
      %v7047 = vld [vmem:[%s14] sm:$0xff]
      %v7048 = vld [vmem:[%s14 + $0x8] sm:$0xff]
      %v7049 = vld [vmem:[%s14 + $0x10] sm:$0xff]
      %v7050 = vld [vmem:[%s14 + $0x18] sm:$0xff]
      %v7051 = vld [vmem:[%s14 + $0x20] sm:$0xff]
      %v7052 = vld [vmem:[%s14 + $0x28] sm:$0xff]
      %v7053 = vld [vmem:[%s14 + $0x30] sm:$0xff]
      %v7054 = vld [vmem:[%s14 + $0x38] sm:$0xff]
      %v7055 = vld [vmem:[%s14 + $0x40] sm:$0xff]
      %v7056 = vld [vmem:[%s14 + $0x48] sm:$0xff]
      %v7057 = vld [vmem:[%s14 + $0x50] sm:$0xff]
      %v7058 = vld [vmem:[%s14 + $0x58] sm:$0xff]
      %v7059 = vld [vmem:[%s14 + $0x60] sm:$0xff]
      %v7060 = vld [vmem:[%s14 + $0x68] sm:$0xff]
      %v7061 = vld [vmem:[%s14 + $0x70] sm:$0xff]
      %v7062 = vld [vmem:[%s14 + $0x78] sm:$0xff]
      %v7063 = vld [vmem:[%s15] sm:$0x1]
      %v7064 = vld [vmem:[%s16] sm:$0x1]
      %v7193 = vcombine.low %v6903, %v6904
      %v7194 = vcombine.low %v6905, %v6906
      %v7196 = vunpack.c.l.s4 1983009808
      %v7197 = vunpack.c.0.s8 %v7196
      %v7198 = vlaneseq
      %v7199 = vshrl.u32 %v7198, 7
      %v7200 = vsub.s32 %v7197, %v7199
      %v7201 = vrot.slane %v7193, %v7200
      %v7203 = vunpack.c.l.s4 1983009808
      %v7204 = vunpack.c.0.s8 %v7203
      %v7205 = vlaneseq
      %v7206 = vshrl.u32 %v7205, 7
      %v7207 = vsub.s32 %v7204, %v7206
      %v7208 = vrot.slane %v7194, %v7207
      %v7209 = vcombine.low %v7201, %v7208
      %v7210 = vcombine.low %v6907, %v6908
      %v7211 = vcombine.low %v6909, %v6910
      %v7213 = vunpack.c.l.s4 1983009808
      %v7214 = vunpack.c.0.s8 %v7213
      %v7215 = vlaneseq
      %v7216 = vshrl.u32 %v7215, 7
      %v7217 = vsub.s32 %v7214, %v7216
      %v7218 = vrot.slane %v7210, %v7217
      %v7220 = vunpack.c.l.s4 1983009808
      %v7221 = vunpack.c.0.s8 %v7220
      %v7222 = vlaneseq
      %v7223 = vshrl.u32 %v7222, 7
      %v7224 = vsub.s32 %v7221, %v7223
      %v7225 = vrot.slane %v7211, %v7224
      %v7226 = vcombine.low %v7218, %v7225
      %v7227 = vcombine.low %v6911, %v6912
      %v7228 = vcombine.low %v6913, %v6914
      %v7230 = vunpack.c.l.s4 1983009808
      %v7231 = vunpack.c.0.s8 %v7230
      %v7232 = vlaneseq
      %v7233 = vshrl.u32 %v7232, 7
      %v7234 = vsub.s32 %v7231, %v7233
      %v7235 = vrot.slane %v7227, %v7234
      %v7237 = vunpack.c.l.s4 1983009808
      %v7238 = vunpack.c.0.s8 %v7237
      %v7239 = vlaneseq
      %v7240 = vshrl.u32 %v7239, 7
      %v7241 = vsub.s32 %v7238, %v7240
      %v7242 = vrot.slane %v7228, %v7241
      %v7243 = vcombine.low %v7235, %v7242
      %v7244 = vcombine.low %v6915, %v6916
      %v7245 = vcombine.low %v6917, %v6918
      %v7247 = vunpack.c.l.s4 1983009808
      %v7248 = vunpack.c.0.s8 %v7247
      %v7249 = vlaneseq
      %v7250 = vshrl.u32 %v7249, 7
      %v7251 = vsub.s32 %v7248, %v7250
      %v7252 = vrot.slane %v7244, %v7251
      %v7254 = vunpack.c.l.s4 1983009808
      %v7255 = vunpack.c.0.s8 %v7254
      %v7256 = vlaneseq
      %v7257 = vshrl.u32 %v7256, 7
      %v7258 = vsub.s32 %v7255, %v7257
      %v7259 = vrot.slane %v7245, %v7258
      %v7260 = vcombine.low %v7252, %v7259
      %v7261 = vcombine.low %v6919, %v6920
      %v7262 = vcombine.low %v6921, %v6922
      %v7264 = vunpack.c.l.s4 1983009808
      %v7265 = vunpack.c.0.s8 %v7264
      %v7266 = vlaneseq
      %v7267 = vshrl.u32 %v7266, 7
      %v7268 = vsub.s32 %v7265, %v7267
      %v7269 = vrot.slane %v7261, %v7268
      %v7271 = vunpack.c.l.s4 1983009808
      %v7272 = vunpack.c.0.s8 %v7271
      %v7273 = vlaneseq
      %v7274 = vshrl.u32 %v7273, 7
      %v7275 = vsub.s32 %v7272, %v7274
      %v7276 = vrot.slane %v7262, %v7275
      %v7277 = vcombine.low %v7269, %v7276
      %v7278 = vcombine.low %v6923, %v6924
      %v7279 = vcombine.low %v6925, %v6926
      %v7281 = vunpack.c.l.s4 1983009808
      %v7282 = vunpack.c.0.s8 %v7281
      %v7283 = vlaneseq
      %v7284 = vshrl.u32 %v7283, 7
      %v7285 = vsub.s32 %v7282, %v7284
      %v7286 = vrot.slane %v7278, %v7285
      %v7288 = vunpack.c.l.s4 1983009808
      %v7289 = vunpack.c.0.s8 %v7288
      %v7290 = vlaneseq
      %v7291 = vshrl.u32 %v7290, 7
      %v7292 = vsub.s32 %v7289, %v7291
      %v7293 = vrot.slane %v7279, %v7292
      %v7294 = vcombine.low %v7286, %v7293
      %v7295 = vcombine.low %v6927, %v6928
      %v7296 = vcombine.low %v6929, %v6930
      %v7298 = vunpack.c.l.s4 1983009808
      %v7299 = vunpack.c.0.s8 %v7298
      %v7300 = vlaneseq
      %v7301 = vshrl.u32 %v7300, 7
      %v7302 = vsub.s32 %v7299, %v7301
      %v7303 = vrot.slane %v7295, %v7302
      %v7305 = vunpack.c.l.s4 1983009808
      %v7306 = vunpack.c.0.s8 %v7305
      %v7307 = vlaneseq
      %v7308 = vshrl.u32 %v7307, 7
      %v7309 = vsub.s32 %v7306, %v7308
      %v7310 = vrot.slane %v7296, %v7309
      %v7311 = vcombine.low %v7303, %v7310
      %v7312 = vcombine.low %v6931, %v6932
      %v7313 = vcombine.low %v6933, %v6934
      %v7315 = vunpack.c.l.s4 1983009808
      %v7316 = vunpack.c.0.s8 %v7315
      %v7317 = vlaneseq
      %v7318 = vshrl.u32 %v7317, 7
      %v7319 = vsub.s32 %v7316, %v7318
      %v7320 = vrot.slane %v7312, %v7319
      %v7322 = vunpack.c.l.s4 1983009808
      %v7323 = vunpack.c.0.s8 %v7322
      %v7324 = vlaneseq
      %v7325 = vshrl.u32 %v7324, 7
      %v7326 = vsub.s32 %v7323, %v7325
      %v7327 = vrot.slane %v7313, %v7326
      %v7328 = vcombine.low %v7320, %v7327
      %v7329 = vcombine.low %v6935, %v6936
      %v7330 = vcombine.low %v6937, %v6938
      %v7332 = vunpack.c.l.s4 1983009808
      %v7333 = vunpack.c.0.s8 %v7332
      %v7334 = vlaneseq
      %v7335 = vshrl.u32 %v7334, 7
      %v7336 = vsub.s32 %v7333, %v7335
      %v7337 = vrot.slane %v7329, %v7336
      %v7339 = vunpack.c.l.s4 1983009808
      %v7340 = vunpack.c.0.s8 %v7339
      %v7341 = vlaneseq
      %v7342 = vshrl.u32 %v7341, 7
      %v7343 = vsub.s32 %v7340, %v7342
      %v7344 = vrot.slane %v7330, %v7343
      %v7345 = vcombine.low %v7337, %v7344
      %v7346 = vcombine.low %v6939, %v6940
      %v7347 = vcombine.low %v6941, %v6942
      %v7349 = vunpack.c.l.s4 1983009808
      %v7350 = vunpack.c.0.s8 %v7349
      %v7351 = vlaneseq
      %v7352 = vshrl.u32 %v7351, 7
      %v7353 = vsub.s32 %v7350, %v7352
      %v7354 = vrot.slane %v7346, %v7353
      %v7356 = vunpack.c.l.s4 1983009808
      %v7357 = vunpack.c.0.s8 %v7356
      %v7358 = vlaneseq
      %v7359 = vshrl.u32 %v7358, 7
      %v7360 = vsub.s32 %v7357, %v7359
      %v7361 = vrot.slane %v7347, %v7360
      %v7362 = vcombine.low %v7354, %v7361
      %v7363 = vcombine.low %v6943, %v6944
      %v7364 = vcombine.low %v6945, %v6946
      %v7366 = vunpack.c.l.s4 1983009808
      %v7367 = vunpack.c.0.s8 %v7366
      %v7368 = vlaneseq
      %v7369 = vshrl.u32 %v7368, 7
      %v7370 = vsub.s32 %v7367, %v7369
      %v7371 = vrot.slane %v7363, %v7370
      %v7373 = vunpack.c.l.s4 1983009808
      %v7374 = vunpack.c.0.s8 %v7373
      %v7375 = vlaneseq
      %v7376 = vshrl.u32 %v7375, 7
      %v7377 = vsub.s32 %v7374, %v7376
      %v7378 = vrot.slane %v7364, %v7377
      %v7379 = vcombine.low %v7371, %v7378
      %v7380 = vcombine.low %v6947, %v6948
      %v7381 = vcombine.low %v6949, %v6950
      %v7383 = vunpack.c.l.s4 1983009808
      %v7384 = vunpack.c.0.s8 %v7383
      %v7385 = vlaneseq
      %v7386 = vshrl.u32 %v7385, 7
      %v7387 = vsub.s32 %v7384, %v7386
      %v7388 = vrot.slane %v7380, %v7387
      %v7390 = vunpack.c.l.s4 1983009808
      %v7391 = vunpack.c.0.s8 %v7390
      %v7392 = vlaneseq
      %v7393 = vshrl.u32 %v7392, 7
      %v7394 = vsub.s32 %v7391, %v7393
      %v7395 = vrot.slane %v7381, %v7394
      %v7396 = vcombine.low %v7388, %v7395
      %v7397 = vcombine.low %v6951, %v6952
      %v7398 = vcombine.low %v6953, %v6954
      %v7400 = vunpack.c.l.s4 1983009808
      %v7401 = vunpack.c.0.s8 %v7400
      %v7402 = vlaneseq
      %v7403 = vshrl.u32 %v7402, 7
      %v7404 = vsub.s32 %v7401, %v7403
      %v7405 = vrot.slane %v7397, %v7404
      %v7407 = vunpack.c.l.s4 1983009808
      %v7408 = vunpack.c.0.s8 %v7407
      %v7409 = vlaneseq
      %v7410 = vshrl.u32 %v7409, 7
      %v7411 = vsub.s32 %v7408, %v7410
      %v7412 = vrot.slane %v7398, %v7411
      %v7413 = vcombine.low %v7405, %v7412
      %v7414 = vcombine.low %v6955, %v6956
      %v7415 = vcombine.low %v6957, %v6958
      %v7417 = vunpack.c.l.s4 1983009808
      %v7418 = vunpack.c.0.s8 %v7417
      %v7419 = vlaneseq
      %v7420 = vshrl.u32 %v7419, 7
      %v7421 = vsub.s32 %v7418, %v7420
      %v7422 = vrot.slane %v7414, %v7421
      %v7424 = vunpack.c.l.s4 1983009808
      %v7425 = vunpack.c.0.s8 %v7424
      %v7426 = vlaneseq
      %v7427 = vshrl.u32 %v7426, 7
      %v7428 = vsub.s32 %v7425, %v7427
      %v7429 = vrot.slane %v7415, %v7428
      %v7430 = vcombine.low %v7422, %v7429
      %v7431 = vcombine.low %v6959, %v6960
      %v7432 = vcombine.low %v6961, %v6962
      %v7434 = vunpack.c.l.s4 1983009808
      %v7435 = vunpack.c.0.s8 %v7434
      %v7436 = vlaneseq
      %v7437 = vshrl.u32 %v7436, 7
      %v7438 = vsub.s32 %v7435, %v7437
      %v7439 = vrot.slane %v7431, %v7438
      %v7441 = vunpack.c.l.s4 1983009808
      %v7442 = vunpack.c.0.s8 %v7441
      %v7443 = vlaneseq
      %v7444 = vshrl.u32 %v7443, 7
      %v7445 = vsub.s32 %v7442, %v7444
      %v7446 = vrot.slane %v7432, %v7445
      %v7447 = vcombine.low %v7439, %v7446
      %v7448 = vcombine.low %v6963, %v6964
      %v7449 = vcombine.low %v6965, %v6966
      %v7451 = vunpack.c.l.s4 1983009808
      %v7452 = vunpack.c.0.s8 %v7451
      %v7453 = vlaneseq
      %v7454 = vshrl.u32 %v7453, 7
      %v7455 = vsub.s32 %v7452, %v7454
      %v7456 = vrot.slane %v7448, %v7455
      %v7458 = vunpack.c.l.s4 1983009808
      %v7459 = vunpack.c.0.s8 %v7458
      %v7460 = vlaneseq
      %v7461 = vshrl.u32 %v7460, 7
      %v7462 = vsub.s32 %v7459, %v7461
      %v7463 = vrot.slane %v7449, %v7462
      %v7464 = vcombine.low %v7456, %v7463
      %v7465 = vcombine.low %v6967, %v6968
      %v7466 = vcombine.low %v6969, %v6970
      %v7468 = vunpack.c.l.s4 1983009808
      %v7469 = vunpack.c.0.s8 %v7468
      %v7470 = vlaneseq
      %v7471 = vshrl.u32 %v7470, 7
      %v7472 = vsub.s32 %v7469, %v7471
      %v7473 = vrot.slane %v7465, %v7472
      %v7475 = vunpack.c.l.s4 1983009808
      %v7476 = vunpack.c.0.s8 %v7475
      %v7477 = vlaneseq
      %v7478 = vshrl.u32 %v7477, 7
      %v7479 = vsub.s32 %v7476, %v7478
      %v7480 = vrot.slane %v7466, %v7479
      %v7481 = vcombine.low %v7473, %v7480
      %v7482 = vcombine.low %v6971, %v6972
      %v7483 = vcombine.low %v6973, %v6974
      %v7485 = vunpack.c.l.s4 1983009808
      %v7486 = vunpack.c.0.s8 %v7485
      %v7487 = vlaneseq
      %v7488 = vshrl.u32 %v7487, 7
      %v7489 = vsub.s32 %v7486, %v7488
      %v7490 = vrot.slane %v7482, %v7489
      %v7492 = vunpack.c.l.s4 1983009808
      %v7493 = vunpack.c.0.s8 %v7492
      %v7494 = vlaneseq
      %v7495 = vshrl.u32 %v7494, 7
      %v7496 = vsub.s32 %v7493, %v7495
      %v7497 = vrot.slane %v7483, %v7496
      %v7498 = vcombine.low %v7490, %v7497
      %v7499 = vcombine.low %v6975, %v6976
      %v7500 = vcombine.low %v6977, %v6978
      %v7502 = vunpack.c.l.s4 1983009808
      %v7503 = vunpack.c.0.s8 %v7502
      %v7504 = vlaneseq
      %v7505 = vshrl.u32 %v7504, 7
      %v7506 = vsub.s32 %v7503, %v7505
      %v7507 = vrot.slane %v7499, %v7506
      %v7509 = vunpack.c.l.s4 1983009808
      %v7510 = vunpack.c.0.s8 %v7509
      %v7511 = vlaneseq
      %v7512 = vshrl.u32 %v7511, 7
      %v7513 = vsub.s32 %v7510, %v7512
      %v7514 = vrot.slane %v7500, %v7513
      %v7515 = vcombine.low %v7507, %v7514
      %v7516 = vcombine.low %v6979, %v6980
      %v7517 = vcombine.low %v6981, %v6982
      %v7519 = vunpack.c.l.s4 1983009808
      %v7520 = vunpack.c.0.s8 %v7519
      %v7521 = vlaneseq
      %v7522 = vshrl.u32 %v7521, 7
      %v7523 = vsub.s32 %v7520, %v7522
      %v7524 = vrot.slane %v7516, %v7523
      %v7526 = vunpack.c.l.s4 1983009808
      %v7527 = vunpack.c.0.s8 %v7526
      %v7528 = vlaneseq
      %v7529 = vshrl.u32 %v7528, 7
      %v7530 = vsub.s32 %v7527, %v7529
      %v7531 = vrot.slane %v7517, %v7530
      %v7532 = vcombine.low %v7524, %v7531
      %v7533 = vcombine.low %v6983, %v6984
      %v7534 = vcombine.low %v6985, %v6986
      %v7536 = vunpack.c.l.s4 1983009808
      %v7537 = vunpack.c.0.s8 %v7536
      %v7538 = vlaneseq
      %v7539 = vshrl.u32 %v7538, 7
      %v7540 = vsub.s32 %v7537, %v7539
      %v7541 = vrot.slane %v7533, %v7540
      %v7543 = vunpack.c.l.s4 1983009808
      %v7544 = vunpack.c.0.s8 %v7543
      %v7545 = vlaneseq
      %v7546 = vshrl.u32 %v7545, 7
      %v7547 = vsub.s32 %v7544, %v7546
      %v7548 = vrot.slane %v7534, %v7547
      %v7549 = vcombine.low %v7541, %v7548
      %v7550 = vcombine.low %v6987, %v6988
      %v7551 = vcombine.low %v6989, %v6990
      %v7553 = vunpack.c.l.s4 1983009808
      %v7554 = vunpack.c.0.s8 %v7553
      %v7555 = vlaneseq
      %v7556 = vshrl.u32 %v7555, 7
      %v7557 = vsub.s32 %v7554, %v7556
      %v7558 = vrot.slane %v7550, %v7557
      %v7560 = vunpack.c.l.s4 1983009808
      %v7561 = vunpack.c.0.s8 %v7560
      %v7562 = vlaneseq
      %v7563 = vshrl.u32 %v7562, 7
      %v7564 = vsub.s32 %v7561, %v7563
      %v7565 = vrot.slane %v7551, %v7564
      %v7566 = vcombine.low %v7558, %v7565
      %v7567 = vcombine.low %v6991, %v6992
      %v7568 = vcombine.low %v6993, %v6994
      %v7570 = vunpack.c.l.s4 1983009808
      %v7571 = vunpack.c.0.s8 %v7570
      %v7572 = vlaneseq
      %v7573 = vshrl.u32 %v7572, 7
      %v7574 = vsub.s32 %v7571, %v7573
      %v7575 = vrot.slane %v7567, %v7574
      %v7577 = vunpack.c.l.s4 1983009808
      %v7578 = vunpack.c.0.s8 %v7577
      %v7579 = vlaneseq
      %v7580 = vshrl.u32 %v7579, 7
      %v7581 = vsub.s32 %v7578, %v7580
      %v7582 = vrot.slane %v7568, %v7581
      %v7583 = vcombine.low %v7575, %v7582
      %v7584 = vcombine.low %v6995, %v6996
      %v7585 = vcombine.low %v6997, %v6998
      %v7587 = vunpack.c.l.s4 1983009808
      %v7588 = vunpack.c.0.s8 %v7587
      %v7589 = vlaneseq
      %v7590 = vshrl.u32 %v7589, 7
      %v7591 = vsub.s32 %v7588, %v7590
      %v7592 = vrot.slane %v7584, %v7591
      %v7594 = vunpack.c.l.s4 1983009808
      %v7595 = vunpack.c.0.s8 %v7594
      %v7596 = vlaneseq
      %v7597 = vshrl.u32 %v7596, 7
      %v7598 = vsub.s32 %v7595, %v7597
      %v7599 = vrot.slane %v7585, %v7598
      %v7600 = vcombine.low %v7592, %v7599
      %v7601 = vcombine.low %v6999, %v7000
      %v7602 = vcombine.low %v7001, %v7002
      %v7604 = vunpack.c.l.s4 1983009808
      %v7605 = vunpack.c.0.s8 %v7604
      %v7606 = vlaneseq
      %v7607 = vshrl.u32 %v7606, 7
      %v7608 = vsub.s32 %v7605, %v7607
      %v7609 = vrot.slane %v7601, %v7608
      %v7611 = vunpack.c.l.s4 1983009808
      %v7612 = vunpack.c.0.s8 %v7611
      %v7613 = vlaneseq
      %v7614 = vshrl.u32 %v7613, 7
      %v7615 = vsub.s32 %v7612, %v7614
      %v7616 = vrot.slane %v7602, %v7615
      %v7617 = vcombine.low %v7609, %v7616
      %v7618 = vcombine.low %v7003, %v7004
      %v7619 = vcombine.low %v7005, %v7006
      %v7621 = vunpack.c.l.s4 1983009808
      %v7622 = vunpack.c.0.s8 %v7621
      %v7623 = vlaneseq
      %v7624 = vshrl.u32 %v7623, 7
      %v7625 = vsub.s32 %v7622, %v7624
      %v7626 = vrot.slane %v7618, %v7625
      %v7628 = vunpack.c.l.s4 1983009808
      %v7629 = vunpack.c.0.s8 %v7628
      %v7630 = vlaneseq
      %v7631 = vshrl.u32 %v7630, 7
      %v7632 = vsub.s32 %v7629, %v7631
      %v7633 = vrot.slane %v7619, %v7632
      %v7634 = vcombine.low %v7626, %v7633
      %v7635 = vcombine.low %v7007, %v7008
      %v7636 = vcombine.low %v7009, %v7010
      %v7638 = vunpack.c.l.s4 1983009808
      %v7639 = vunpack.c.0.s8 %v7638
      %v7640 = vlaneseq
      %v7641 = vshrl.u32 %v7640, 7
      %v7642 = vsub.s32 %v7639, %v7641
      %v7643 = vrot.slane %v7635, %v7642
      %v7645 = vunpack.c.l.s4 1983009808
      %v7646 = vunpack.c.0.s8 %v7645
      %v7647 = vlaneseq
      %v7648 = vshrl.u32 %v7647, 7
      %v7649 = vsub.s32 %v7646, %v7648
      %v7650 = vrot.slane %v7636, %v7649
      %v7651 = vcombine.low %v7643, %v7650
      %v7652 = vcombine.low %v7011, %v7012
      %v7653 = vcombine.low %v7013, %v7014
      %v7655 = vunpack.c.l.s4 1983009808
      %v7656 = vunpack.c.0.s8 %v7655
      %v7657 = vlaneseq
      %v7658 = vshrl.u32 %v7657, 7
      %v7659 = vsub.s32 %v7656, %v7658
      %v7660 = vrot.slane %v7652, %v7659
      %v7662 = vunpack.c.l.s4 1983009808
      %v7663 = vunpack.c.0.s8 %v7662
      %v7664 = vlaneseq
      %v7665 = vshrl.u32 %v7664, 7
      %v7666 = vsub.s32 %v7663, %v7665
      %v7667 = vrot.slane %v7653, %v7666
      %v7668 = vcombine.low %v7660, %v7667
      %v7669 = vcombine.low %v7015, %v7016
      %v7670 = vcombine.low %v7017, %v7018
      %v7672 = vunpack.c.l.s4 1983009808
      %v7673 = vunpack.c.0.s8 %v7672
      %v7674 = vlaneseq
      %v7675 = vshrl.u32 %v7674, 7
      %v7676 = vsub.s32 %v7673, %v7675
      %v7677 = vrot.slane %v7669, %v7676
      %v7679 = vunpack.c.l.s4 1983009808
      %v7680 = vunpack.c.0.s8 %v7679
      %v7681 = vlaneseq
      %v7682 = vshrl.u32 %v7681, 7
      %v7683 = vsub.s32 %v7680, %v7682
      %v7684 = vrot.slane %v7670, %v7683
      %v7685 = vcombine.low %v7677, %v7684
      %v7686 = vcombine.low %v7019, %v7020
      %v7687 = vcombine.low %v7021, %v7022
      %v7689 = vunpack.c.l.s4 1983009808
      %v7690 = vunpack.c.0.s8 %v7689
      %v7691 = vlaneseq
      %v7692 = vshrl.u32 %v7691, 7
      %v7693 = vsub.s32 %v7690, %v7692
      %v7694 = vrot.slane %v7686, %v7693
      %v7696 = vunpack.c.l.s4 1983009808
      %v7697 = vunpack.c.0.s8 %v7696
      %v7698 = vlaneseq
      %v7699 = vshrl.u32 %v7698, 7
      %v7700 = vsub.s32 %v7697, %v7699
      %v7701 = vrot.slane %v7687, %v7700
      %v7702 = vcombine.low %v7694, %v7701
      %v7703 = vcombine.low %v7023, %v7024
      %v7704 = vcombine.low %v7025, %v7026
      %v7706 = vunpack.c.l.s4 1983009808
      %v7707 = vunpack.c.0.s8 %v7706
      %v7708 = vlaneseq
      %v7709 = vshrl.u32 %v7708, 7
      %v7710 = vsub.s32 %v7707, %v7709
      %v7711 = vrot.slane %v7703, %v7710
      %v7713 = vunpack.c.l.s4 1983009808
      %v7714 = vunpack.c.0.s8 %v7713
      %v7715 = vlaneseq
      %v7716 = vshrl.u32 %v7715, 7
      %v7717 = vsub.s32 %v7714, %v7716
      %v7718 = vrot.slane %v7704, %v7717
      %v7719 = vcombine.low %v7711, %v7718
      %v7720 = vcombine.low %v7027, %v7028
      %v7721 = vcombine.low %v7029, %v7030
      %v7723 = vunpack.c.l.s4 1983009808
      %v7724 = vunpack.c.0.s8 %v7723
      %v7725 = vlaneseq
      %v7726 = vshrl.u32 %v7725, 7
      %v7727 = vsub.s32 %v7724, %v7726
      %v7728 = vrot.slane %v7720, %v7727
      %v7730 = vunpack.c.l.s4 1983009808
      %v7731 = vunpack.c.0.s8 %v7730
      %v7732 = vlaneseq
      %v7733 = vshrl.u32 %v7732, 7
      %v7734 = vsub.s32 %v7731, %v7733
      %v7735 = vrot.slane %v7721, %v7734
      %v7736 = vcombine.low %v7728, %v7735
      %v7737 = vrot.slane %v7209, 1
      %v7738 = vrot.slane %v7226, 1
      %v7739 = vsel %vm610, %v7737, %v7738
      %v7740 = vrot.slane %v7243, 1
      %v7741 = vsel %vm610, %v7738, %v7740
      %v7742 = vrot.slane %v7260, 1
      %v7743 = vsel %vm610, %v7740, %v7742
      %v7744 = vrot.slane %v7277, 1
      %v7745 = vsel %vm610, %v7742, %v7744
      %v7746 = vrot.slane %v7294, 1
      %v7747 = vsel %vm610, %v7744, %v7746
      %v7748 = vrot.slane %v7311, 1
      %v7749 = vsel %vm610, %v7746, %v7748
      %v7750 = vrot.slane %v7328, 1
      %v7751 = vsel %vm610, %v7748, %v7750
      %v7752 = vrot.slane %v7345, 1
      %v7753 = vsel %vm610, %v7750, %v7752
      %v7754 = vrot.slane %v7362, 1
      %v7755 = vsel %vm610, %v7752, %v7754
      %v7756 = vrot.slane %v7379, 1
      %v7757 = vsel %vm610, %v7754, %v7756
      %v7758 = vrot.slane %v7396, 1
      %v7759 = vsel %vm610, %v7756, %v7758
      %v7760 = vrot.slane %v7413, 1
      %v7761 = vsel %vm610, %v7758, %v7760
      %v7762 = vrot.slane %v7430, 1
      %v7763 = vsel %vm610, %v7760, %v7762
      %v7764 = vrot.slane %v7447, 1
      %v7765 = vsel %vm610, %v7762, %v7764
      %v7766 = vrot.slane %v7464, 1
      %v7767 = vsel %vm610, %v7764, %v7766
      %v7768 = vrot.slane %v7481, 1
      %v7769 = vsel %vm610, %v7766, %v7768
      %v7770 = vrot.slane %v7498, 1
      %v7771 = vsel %vm610, %v7768, %v7770
      %v7772 = vrot.slane %v7515, 1
      %v7773 = vsel %vm610, %v7770, %v7772
      %v7774 = vrot.slane %v7532, 1
      %v7775 = vsel %vm610, %v7772, %v7774
      %v7776 = vrot.slane %v7549, 1
      %v7777 = vsel %vm610, %v7774, %v7776
      %v7778 = vrot.slane %v7566, 1
      %v7779 = vsel %vm610, %v7776, %v7778
      %v7780 = vrot.slane %v7583, 1
      %v7781 = vsel %vm610, %v7778, %v7780
      %v7782 = vrot.slane %v7600, 1
      %v7783 = vsel %vm610, %v7780, %v7782
      %v7784 = vrot.slane %v7617, 1
      %v7785 = vsel %vm610, %v7782, %v7784
      %v7786 = vrot.slane %v7634, 1
      %v7787 = vsel %vm610, %v7784, %v7786
      %v7788 = vrot.slane %v7651, 1
      %v7789 = vsel %vm610, %v7786, %v7788
      %v7790 = vrot.slane %v7668, 1
      %v7791 = vsel %vm610, %v7788, %v7790
      %v7792 = vrot.slane %v7685, 1
      %v7793 = vsel %vm610, %v7790, %v7792
      %v7794 = vrot.slane %v7702, 1
      %v7795 = vsel %vm610, %v7792, %v7794
      %v7796 = vrot.slane %v7719, 1
      %v7797 = vsel %vm610, %v7794, %v7796
      %v7798 = vrot.slane %v7736, 1
      %v7799 = vsel %vm610, %v7796, %v7798
      %v7832 = vsel %vm610, %v7798, 0.0
      %v7833 = vadd.s32 %v624, 128
      %v7834 = vadd.s32 %v624, 136
      %v7835 = vadd.s32 %v624, 144
      %v7836 = vadd.s32 %v624, 152
      %v7837 = vadd.s32 %v624, 160
      %v7838 = vadd.s32 %v624, 168
      %v7839 = vadd.s32 %v624, 176
      %v7840 = vadd.s32 %v624, 184
      %v7841 = vadd.s32 %v624, 192
      %v7842 = vadd.s32 %v624, 200
      %v7843 = vadd.s32 %v624, 208
      %v7844 = vadd.s32 %v624, 216
      %v7845 = vadd.s32 %v624, 224
      %v7846 = vadd.s32 %v624, 232
      %v7847 = vadd.s32 %v624, 240
      %v7848 = vadd.s32 %v624, 248
      %vm7849 = vcmp.lt.s32.totalorder %v624, 0
      %v7850 = vsub.s32 0, %v624
      %v7851 = vsel %vm7849, %v7850, %v624
      %v7852 = vshrl.u32 %v7851, 5
      %v7853 = vand.u32 %v7851, 31
      %v7854 = vsub.s32 0, %v7853
      %v7855 = vsel %vm7849, %v7854, %v7853
      %vm7856 = vcmp.lt.s32.totalorder %v625, 0
      %v7857 = vsub.s32 0, %v625
      %v7858 = vsel %vm7856, %v7857, %v625
      %v7859 = vshrl.u32 %v7858, 5
      %v7860 = vand.u32 %v7858, 31
      %v7861 = vsub.s32 0, %v7860
      %v7862 = vsel %vm7856, %v7861, %v7860
      %vm7863 = vcmp.lt.s32.totalorder %v626, 0
      %v7864 = vsub.s32 0, %v626
      %v7865 = vsel %vm7863, %v7864, %v626
      %v7866 = vshrl.u32 %v7865, 5
      %v7867 = vand.u32 %v7865, 31
      %v7868 = vsub.s32 0, %v7867
      %v7869 = vsel %vm7863, %v7868, %v7867
      %vm7870 = vcmp.lt.s32.totalorder %v627, 0
      %v7871 = vsub.s32 0, %v627
      %v7872 = vsel %vm7870, %v7871, %v627
      %v7873 = vshrl.u32 %v7872, 5
      %v7874 = vand.u32 %v7872, 31
      %v7875 = vsub.s32 0, %v7874
      %v7876 = vsel %vm7870, %v7875, %v7874
      %vm7877 = vcmp.lt.s32.totalorder %v1765, 0
      %v7878 = vsub.s32 0, %v1765
      %v7879 = vsel %vm7877, %v7878, %v1765
      %v7880 = vshrl.u32 %v7879, 5
      %v7881 = vand.u32 %v7879, 31
      %v7882 = vsub.s32 0, %v7881
      %v7883 = vsel %vm7877, %v7882, %v7881
      %vm7884 = vcmp.lt.s32.totalorder %v1766, 0
      %v7885 = vsub.s32 0, %v1766
      %v7886 = vsel %vm7884, %v7885, %v1766
      %v7887 = vshrl.u32 %v7886, 5
      %v7888 = vand.u32 %v7886, 31
      %v7889 = vsub.s32 0, %v7888
      %v7890 = vsel %vm7884, %v7889, %v7888
      %vm7891 = vcmp.lt.s32.totalorder %v1767, 0
      %v7892 = vsub.s32 0, %v1767
      %v7893 = vsel %vm7891, %v7892, %v1767
      %v7894 = vshrl.u32 %v7893, 5
      %v7895 = vand.u32 %v7893, 31
      %v7896 = vsub.s32 0, %v7895
      %v7897 = vsel %vm7891, %v7896, %v7895
      %vm7898 = vcmp.lt.s32.totalorder %v1768, 0
      %v7899 = vsub.s32 0, %v1768
      %v7900 = vsel %vm7898, %v7899, %v1768
      %v7901 = vshrl.u32 %v7900, 5
      %v7902 = vand.u32 %v7900, 31
      %v7903 = vsub.s32 0, %v7902
      %v7904 = vsel %vm7898, %v7903, %v7902
      %vm7905 = vcmp.lt.s32.totalorder %v3857, 0
      %v7906 = vsub.s32 0, %v3857
      %v7907 = vsel %vm7905, %v7906, %v3857
      %v7908 = vshrl.u32 %v7907, 5
      %v7909 = vand.u32 %v7907, 31
      %v7910 = vsub.s32 0, %v7909
      %v7911 = vsel %vm7905, %v7910, %v7909
      %vm7912 = vcmp.lt.s32.totalorder %v3858, 0
      %v7913 = vsub.s32 0, %v3858
      %v7914 = vsel %vm7912, %v7913, %v3858
      %v7915 = vshrl.u32 %v7914, 5
      %v7916 = vand.u32 %v7914, 31
      %v7917 = vsub.s32 0, %v7916
      %v7918 = vsel %vm7912, %v7917, %v7916
      %vm7919 = vcmp.lt.s32.totalorder %v3859, 0
      %v7920 = vsub.s32 0, %v3859
      %v7921 = vsel %vm7919, %v7920, %v3859
      %v7922 = vshrl.u32 %v7921, 5
      %v7923 = vand.u32 %v7921, 31
      %v7924 = vsub.s32 0, %v7923
      %v7925 = vsel %vm7919, %v7924, %v7923
      %vm7926 = vcmp.lt.s32.totalorder %v3860, 0
      %v7927 = vsub.s32 0, %v3860
      %v7928 = vsel %vm7926, %v7927, %v3860
      %v7929 = vshrl.u32 %v7928, 5
      %v7930 = vand.u32 %v7928, 31
      %v7931 = vsub.s32 0, %v7930
      %v7932 = vsel %vm7926, %v7931, %v7930
      %vm7933 = vcmp.lt.s32.totalorder %v3861, 0
      %v7934 = vsub.s32 0, %v3861
      %v7935 = vsel %vm7933, %v7934, %v3861
      %v7936 = vshrl.u32 %v7935, 5
      %v7937 = vand.u32 %v7935, 31
      %v7938 = vsub.s32 0, %v7937
      %v7939 = vsel %vm7933, %v7938, %v7937
      %vm7940 = vcmp.lt.s32.totalorder %v3862, 0
      %v7941 = vsub.s32 0, %v3862
      %v7942 = vsel %vm7940, %v7941, %v3862
      %v7943 = vshrl.u32 %v7942, 5
      %v7944 = vand.u32 %v7942, 31
      %v7945 = vsub.s32 0, %v7944
      %v7946 = vsel %vm7940, %v7945, %v7944
      %vm7947 = vcmp.lt.s32.totalorder %v3863, 0
      %v7948 = vsub.s32 0, %v3863
      %v7949 = vsel %vm7947, %v7948, %v3863
      %v7950 = vshrl.u32 %v7949, 5
      %v7951 = vand.u32 %v7949, 31
      %v7952 = vsub.s32 0, %v7951
      %v7953 = vsel %vm7947, %v7952, %v7951
      %vm7954 = vcmp.lt.s32.totalorder %v3864, 0
      %v7955 = vsub.s32 0, %v3864
      %v7956 = vsel %vm7954, %v7955, %v3864
      %v7957 = vshrl.u32 %v7956, 5
      %v7958 = vand.u32 %v7956, 31
      %v7959 = vsub.s32 0, %v7958
      %v7960 = vsel %vm7954, %v7959, %v7958
      %vm7961 = vcmp.lt.s32.totalorder %v7833, 0
      %v7962 = vsub.s32 0, %v7833
      %v7963 = vsel %vm7961, %v7962, %v7833
      %v7964 = vshrl.u32 %v7963, 5
      %v7965 = vand.u32 %v7963, 31
      %v7966 = vsub.s32 0, %v7965
      %v7967 = vsel %vm7961, %v7966, %v7965
      %vm7968 = vcmp.lt.s32.totalorder %v7834, 0
      %v7969 = vsub.s32 0, %v7834
      %v7970 = vsel %vm7968, %v7969, %v7834
      %v7971 = vshrl.u32 %v7970, 5
      %v7972 = vand.u32 %v7970, 31
      %v7973 = vsub.s32 0, %v7972
      %v7974 = vsel %vm7968, %v7973, %v7972
      %vm7975 = vcmp.lt.s32.totalorder %v7835, 0
      %v7976 = vsub.s32 0, %v7835
      %v7977 = vsel %vm7975, %v7976, %v7835
      %v7978 = vshrl.u32 %v7977, 5
      %v7979 = vand.u32 %v7977, 31
      %v7980 = vsub.s32 0, %v7979
      %v7981 = vsel %vm7975, %v7980, %v7979
      %vm7982 = vcmp.lt.s32.totalorder %v7836, 0
      %v7983 = vsub.s32 0, %v7836
      %v7984 = vsel %vm7982, %v7983, %v7836
      %v7985 = vshrl.u32 %v7984, 5
      %v7986 = vand.u32 %v7984, 31
      %v7987 = vsub.s32 0, %v7986
      %v7988 = vsel %vm7982, %v7987, %v7986
      %vm7989 = vcmp.lt.s32.totalorder %v7837, 0
      %v7990 = vsub.s32 0, %v7837
      %v7991 = vsel %vm7989, %v7990, %v7837
      %v7992 = vshrl.u32 %v7991, 5
      %v7993 = vand.u32 %v7991, 31
      %v7994 = vsub.s32 0, %v7993
      %v7995 = vsel %vm7989, %v7994, %v7993
      %vm7996 = vcmp.lt.s32.totalorder %v7838, 0
      %v7997 = vsub.s32 0, %v7838
      %v7998 = vsel %vm7996, %v7997, %v7838
      %v7999 = vshrl.u32 %v7998, 5
      %v8000 = vand.u32 %v7998, 31
      %v8001 = vsub.s32 0, %v8000
      %v8002 = vsel %vm7996, %v8001, %v8000
      %vm8003 = vcmp.lt.s32.totalorder %v7839, 0
      %v8004 = vsub.s32 0, %v7839
      %v8005 = vsel %vm8003, %v8004, %v7839
      %v8006 = vshrl.u32 %v8005, 5
      %v8007 = vand.u32 %v8005, 31
      %v8008 = vsub.s32 0, %v8007
      %v8009 = vsel %vm8003, %v8008, %v8007
      %vm8010 = vcmp.lt.s32.totalorder %v7840, 0
      %v8011 = vsub.s32 0, %v7840
      %v8012 = vsel %vm8010, %v8011, %v7840
      %v8013 = vshrl.u32 %v8012, 5
      %v8014 = vand.u32 %v8012, 31
      %v8015 = vsub.s32 0, %v8014
      %v8016 = vsel %vm8010, %v8015, %v8014
      %vm8017 = vcmp.lt.s32.totalorder %v7841, 0
      %v8018 = vsub.s32 0, %v7841
      %v8019 = vsel %vm8017, %v8018, %v7841
      %v8020 = vshrl.u32 %v8019, 5
      %v8021 = vand.u32 %v8019, 31
      %v8022 = vsub.s32 0, %v8021
      %v8023 = vsel %vm8017, %v8022, %v8021
      %vm8024 = vcmp.lt.s32.totalorder %v7842, 0
      %v8025 = vsub.s32 0, %v7842
      %v8026 = vsel %vm8024, %v8025, %v7842
      %v8027 = vshrl.u32 %v8026, 5
      %v8028 = vand.u32 %v8026, 31
      %v8029 = vsub.s32 0, %v8028
      %v8030 = vsel %vm8024, %v8029, %v8028
      %vm8031 = vcmp.lt.s32.totalorder %v7843, 0
      %v8032 = vsub.s32 0, %v7843
      %v8033 = vsel %vm8031, %v8032, %v7843
      %v8034 = vshrl.u32 %v8033, 5
      %v8035 = vand.u32 %v8033, 31
      %v8036 = vsub.s32 0, %v8035
      %v8037 = vsel %vm8031, %v8036, %v8035
      %vm8038 = vcmp.lt.s32.totalorder %v7844, 0
      %v8039 = vsub.s32 0, %v7844
      %v8040 = vsel %vm8038, %v8039, %v7844
      %v8041 = vshrl.u32 %v8040, 5
      %v8042 = vand.u32 %v8040, 31
      %v8043 = vsub.s32 0, %v8042
      %v8044 = vsel %vm8038, %v8043, %v8042
      %vm8045 = vcmp.lt.s32.totalorder %v7845, 0
      %v8046 = vsub.s32 0, %v7845
      %v8047 = vsel %vm8045, %v8046, %v7845
      %v8048 = vshrl.u32 %v8047, 5
      %v8049 = vand.u32 %v8047, 31
      %v8050 = vsub.s32 0, %v8049
      %v8051 = vsel %vm8045, %v8050, %v8049
      %vm8052 = vcmp.lt.s32.totalorder %v7846, 0
      %v8053 = vsub.s32 0, %v7846
      %v8054 = vsel %vm8052, %v8053, %v7846
      %v8055 = vshrl.u32 %v8054, 5
      %v8056 = vand.u32 %v8054, 31
      %v8057 = vsub.s32 0, %v8056
      %v8058 = vsel %vm8052, %v8057, %v8056
      %vm8059 = vcmp.lt.s32.totalorder %v7847, 0
      %v8060 = vsub.s32 0, %v7847
      %v8061 = vsel %vm8059, %v8060, %v7847
      %v8062 = vshrl.u32 %v8061, 5
      %v8063 = vand.u32 %v8061, 31
      %v8064 = vsub.s32 0, %v8063
      %v8065 = vsel %vm8059, %v8064, %v8063
      %vm8066 = vcmp.lt.s32.totalorder %v7848, 0
      %v8067 = vsub.s32 0, %v7848
      %v8068 = vsel %vm8066, %v8067, %v7848
      %v8069 = vshrl.u32 %v8068, 5
      %v8070 = vand.u32 %v8068, 31
      %v8071 = vsub.s32 0, %v8070
      %v8072 = vsel %vm8066, %v8071, %v8070
      %vm8073 = vcmp.ne.s32.totalorder %v7855, 0
      %vm8074 = vcmp.ne.s32.totalorder %v7862, 0
      %vm8075 = vcmp.ne.s32.totalorder %v7869, 0
      %vm8076 = vcmp.ne.s32.totalorder %v7876, 0
      %vm8077 = vcmp.ne.s32.totalorder %v7883, 0
      %vm8078 = vcmp.ne.s32.totalorder %v7890, 0
      %vm8079 = vcmp.ne.s32.totalorder %v7897, 0
      %vm8080 = vcmp.ne.s32.totalorder %v7904, 0
      %vm8081 = vcmp.ne.s32.totalorder %v7911, 0
      %vm8082 = vcmp.ne.s32.totalorder %v7918, 0
      %vm8083 = vcmp.ne.s32.totalorder %v7925, 0
      %vm8084 = vcmp.ne.s32.totalorder %v7932, 0
      %vm8085 = vcmp.ne.s32.totalorder %v7939, 0
      %vm8086 = vcmp.ne.s32.totalorder %v7946, 0
      %vm8087 = vcmp.ne.s32.totalorder %v7953, 0
      %vm8088 = vcmp.ne.s32.totalorder %v7960, 0
      %vm8089 = vcmp.ne.s32.totalorder %v7967, 0
      %vm8090 = vcmp.ne.s32.totalorder %v7974, 0
      %vm8091 = vcmp.ne.s32.totalorder %v7981, 0
      %vm8092 = vcmp.ne.s32.totalorder %v7988, 0
      %vm8093 = vcmp.ne.s32.totalorder %v7995, 0
      %vm8094 = vcmp.ne.s32.totalorder %v8002, 0
      %vm8095 = vcmp.ne.s32.totalorder %v8009, 0
      %vm8096 = vcmp.ne.s32.totalorder %v8016, 0
      %vm8097 = vcmp.ne.s32.totalorder %v8023, 0
      %vm8098 = vcmp.ne.s32.totalorder %v8030, 0
      %vm8099 = vcmp.ne.s32.totalorder %v8037, 0
      %vm8100 = vcmp.ne.s32.totalorder %v8044, 0
      %vm8101 = vcmp.ne.s32.totalorder %v8051, 0
      %vm8102 = vcmp.ne.s32.totalorder %v8058, 0
      %vm8103 = vcmp.ne.s32.totalorder %v8065, 0
      %vm8104 = vcmp.ne.s32.totalorder %v8072, 0
      %vm8105 = vcmp.lt.s32.totalorder %v7855, 0
      %vm8106 = vcmp.lt.s32.totalorder %v7862, 0
      %vm8107 = vcmp.lt.s32.totalorder %v7869, 0
      %vm8108 = vcmp.lt.s32.totalorder %v7876, 0
      %vm8109 = vcmp.lt.s32.totalorder %v7883, 0
      %vm8110 = vcmp.lt.s32.totalorder %v7890, 0
      %vm8111 = vcmp.lt.s32.totalorder %v7897, 0
      %vm8112 = vcmp.lt.s32.totalorder %v7904, 0
      %vm8113 = vcmp.lt.s32.totalorder %v7911, 0
      %vm8114 = vcmp.lt.s32.totalorder %v7918, 0
      %vm8115 = vcmp.lt.s32.totalorder %v7925, 0
      %vm8116 = vcmp.lt.s32.totalorder %v7932, 0
      %vm8117 = vcmp.lt.s32.totalorder %v7939, 0
      %vm8118 = vcmp.lt.s32.totalorder %v7946, 0
      %vm8119 = vcmp.lt.s32.totalorder %v7953, 0
      %vm8120 = vcmp.lt.s32.totalorder %v7960, 0
      %vm8121 = vcmp.lt.s32.totalorder %v7967, 0
      %vm8122 = vcmp.lt.s32.totalorder %v7974, 0
      %vm8123 = vcmp.lt.s32.totalorder %v7981, 0
      %vm8124 = vcmp.lt.s32.totalorder %v7988, 0
      %vm8125 = vcmp.lt.s32.totalorder %v7995, 0
      %vm8126 = vcmp.lt.s32.totalorder %v8002, 0
      %vm8127 = vcmp.lt.s32.totalorder %v8009, 0
      %vm8128 = vcmp.lt.s32.totalorder %v8016, 0
      %vm8129 = vcmp.lt.s32.totalorder %v8023, 0
      %vm8130 = vcmp.lt.s32.totalorder %v8030, 0
      %vm8131 = vcmp.lt.s32.totalorder %v8037, 0
      %vm8132 = vcmp.lt.s32.totalorder %v8044, 0
      %vm8133 = vcmp.lt.s32.totalorder %v8051, 0
      %vm8134 = vcmp.lt.s32.totalorder %v8058, 0
      %vm8135 = vcmp.lt.s32.totalorder %v8065, 0
      %vm8136 = vcmp.lt.s32.totalorder %v8072, 0
      %vm8137 = vmand %vm8105, %vm8073
      %vm8138 = vmand %vm8106, %vm8074
      %vm8139 = vmand %vm8107, %vm8075
      %vm8140 = vmand %vm8108, %vm8076
      %vm8141 = vmand %vm8109, %vm8077
      %vm8142 = vmand %vm8110, %vm8078
      %vm8143 = vmand %vm8111, %vm8079
      %vm8144 = vmand %vm8112, %vm8080
      %vm8145 = vmand %vm8113, %vm8081
      %vm8146 = vmand %vm8114, %vm8082
      %vm8147 = vmand %vm8115, %vm8083
      %vm8148 = vmand %vm8116, %vm8084
      %vm8149 = vmand %vm8117, %vm8085
      %vm8150 = vmand %vm8118, %vm8086
      %vm8151 = vmand %vm8119, %vm8087
      %vm8152 = vmand %vm8120, %vm8088
      %vm8153 = vmand %vm8121, %vm8089
      %vm8154 = vmand %vm8122, %vm8090
      %vm8155 = vmand %vm8123, %vm8091
      %vm8156 = vmand %vm8124, %vm8092
      %vm8157 = vmand %vm8125, %vm8093
      %vm8158 = vmand %vm8126, %vm8094
      %vm8159 = vmand %vm8127, %vm8095
      %vm8160 = vmand %vm8128, %vm8096
      %vm8161 = vmand %vm8129, %vm8097
      %vm8162 = vmand %vm8130, %vm8098
      %vm8163 = vmand %vm8131, %vm8099
      %vm8164 = vmand %vm8132, %vm8100
      %vm8165 = vmand %vm8133, %vm8101
      %vm8166 = vmand %vm8134, %vm8102
      %vm8167 = vmand %vm8135, %vm8103
      %vm8168 = vmand %vm8136, %vm8104
      %v8169 = vadd.s32 %v7855, 32
      %v8170 = vadd.s32 %v7862, 32
      %v8171 = vadd.s32 %v7869, 32
      %v8172 = vadd.s32 %v7876, 32
      %v8173 = vadd.s32 %v7883, 32
      %v8174 = vadd.s32 %v7890, 32
      %v8175 = vadd.s32 %v7897, 32
      %v8176 = vadd.s32 %v7904, 32
      %v8177 = vadd.s32 %v7911, 32
      %v8178 = vadd.s32 %v7918, 32
      %v8179 = vadd.s32 %v7925, 32
      %v8180 = vadd.s32 %v7932, 32
      %v8181 = vadd.s32 %v7939, 32
      %v8182 = vadd.s32 %v7946, 32
      %v8183 = vadd.s32 %v7953, 32
      %v8184 = vadd.s32 %v7960, 32
      %v8185 = vadd.s32 %v7967, 32
      %v8186 = vadd.s32 %v7974, 32
      %v8187 = vadd.s32 %v7981, 32
      %v8188 = vadd.s32 %v7988, 32
      %v8189 = vadd.s32 %v7995, 32
      %v8190 = vadd.s32 %v8002, 32
      %v8191 = vadd.s32 %v8009, 32
      %v8192 = vadd.s32 %v8016, 32
      %v8193 = vadd.s32 %v8023, 32
      %v8194 = vadd.s32 %v8030, 32
      %v8195 = vadd.s32 %v8037, 32
      %v8196 = vadd.s32 %v8044, 32
      %v8197 = vadd.s32 %v8051, 32
      %v8198 = vadd.s32 %v8058, 32
      %v8199 = vadd.s32 %v8065, 32
      %v8200 = vadd.s32 %v8072, 32
      %v8201 = vsel %vm8137, %v8169, %v7855
      %v8202 = vsel %vm8138, %v8170, %v7862
      %v8203 = vsel %vm8139, %v8171, %v7869
      %v8204 = vsel %vm8140, %v8172, %v7876
      %v8205 = vsel %vm8141, %v8173, %v7883
      %v8206 = vsel %vm8142, %v8174, %v7890
      %v8207 = vsel %vm8143, %v8175, %v7897
      %v8208 = vsel %vm8144, %v8176, %v7904
      %v8209 = vsel %vm8145, %v8177, %v7911
      %v8210 = vsel %vm8146, %v8178, %v7918
      %v8211 = vsel %vm8147, %v8179, %v7925
      %v8212 = vsel %vm8148, %v8180, %v7932
      %v8213 = vsel %vm8149, %v8181, %v7939
      %v8214 = vsel %vm8150, %v8182, %v7946
      %v8215 = vsel %vm8151, %v8183, %v7953
      %v8216 = vsel %vm8152, %v8184, %v7960
      %v8217 = vsel %vm8153, %v8185, %v7967
      %v8218 = vsel %vm8154, %v8186, %v7974
      %v8219 = vsel %vm8155, %v8187, %v7981
      %v8220 = vsel %vm8156, %v8188, %v7988
      %v8221 = vsel %vm8157, %v8189, %v7995
      %v8222 = vsel %vm8158, %v8190, %v8002
      %v8223 = vsel %vm8159, %v8191, %v8009
      %v8224 = vsel %vm8160, %v8192, %v8016
      %v8225 = vsel %vm8161, %v8193, %v8023
      %v8226 = vsel %vm8162, %v8194, %v8030
      %v8227 = vsel %vm8163, %v8195, %v8037
      %v8228 = vsel %vm8164, %v8196, %v8044
      %v8229 = vsel %vm8165, %v8197, %v8051
      %v8230 = vsel %vm8166, %v8198, %v8058
      %v8231 = vsel %vm8167, %v8199, %v8065
      %v8232 = vsel %vm8168, %v8200, %v8072
      %vm8233 = vcmp.eq.s32.totalorder %v8201, 31
      %vm8234 = vcmp.eq.s32.totalorder %v8202, 31
      %vm8235 = vcmp.eq.s32.totalorder %v8203, 31
      %vm8236 = vcmp.eq.s32.totalorder %v8204, 31
      %vm8237 = vcmp.eq.s32.totalorder %v8205, 31
      %vm8238 = vcmp.eq.s32.totalorder %v8206, 31
      %vm8239 = vcmp.eq.s32.totalorder %v8207, 31
      %vm8240 = vcmp.eq.s32.totalorder %v8208, 31
      %vm8241 = vcmp.eq.s32.totalorder %v8209, 31
      %vm8242 = vcmp.eq.s32.totalorder %v8210, 31
      %vm8243 = vcmp.eq.s32.totalorder %v8211, 31
      %vm8244 = vcmp.eq.s32.totalorder %v8212, 31
      %vm8245 = vcmp.eq.s32.totalorder %v8213, 31
      %vm8246 = vcmp.eq.s32.totalorder %v8214, 31
      %vm8247 = vcmp.eq.s32.totalorder %v8215, 31
      %vm8248 = vcmp.eq.s32.totalorder %v8216, 31
      %vm8249 = vcmp.eq.s32.totalorder %v8217, 31
      %vm8250 = vcmp.eq.s32.totalorder %v8218, 31
      %vm8251 = vcmp.eq.s32.totalorder %v8219, 31
      %vm8252 = vcmp.eq.s32.totalorder %v8220, 31
      %vm8253 = vcmp.eq.s32.totalorder %v8221, 31
      %vm8254 = vcmp.eq.s32.totalorder %v8222, 31
      %vm8255 = vcmp.eq.s32.totalorder %v8223, 31
      %vm8256 = vcmp.eq.s32.totalorder %v8224, 31
      %vm8257 = vcmp.eq.s32.totalorder %v8225, 31
      %vm8258 = vcmp.eq.s32.totalorder %v8226, 31
      %vm8259 = vcmp.eq.s32.totalorder %v8227, 31
      %vm8260 = vcmp.eq.s32.totalorder %v8228, 31
      %vm8261 = vcmp.eq.s32.totalorder %v8229, 31
      %vm8262 = vcmp.eq.s32.totalorder %v8230, 31
      %vm8263 = vcmp.eq.s32.totalorder %v8231, 31
      %vm8264 = vcmp.eq.s32.totalorder %v8232, 31
      %v8265 = vsel %vm8233, 0.0, %v7739
      %v8266 = vsel %vm8234, 0.0, %v7741
      %v8267 = vsel %vm8235, 0.0, %v7743
      %v8268 = vsel %vm8236, 0.0, %v7745
      %v8269 = vsel %vm8237, 0.0, %v7747
      %v8270 = vsel %vm8238, 0.0, %v7749
      %v8271 = vsel %vm8239, 0.0, %v7751
      %v8272 = vsel %vm8240, 0.0, %v7753
      %v8273 = vsel %vm8241, 0.0, %v7755
      %v8274 = vsel %vm8242, 0.0, %v7757
      %v8275 = vsel %vm8243, 0.0, %v7759
      %v8276 = vsel %vm8244, 0.0, %v7761
      %v8277 = vsel %vm8245, 0.0, %v7763
      %v8278 = vsel %vm8246, 0.0, %v7765
      %v8279 = vsel %vm8247, 0.0, %v7767
      %v8280 = vsel %vm8248, 0.0, %v7769
      %v8281 = vsel %vm8249, 0.0, %v7771
      %v8282 = vsel %vm8250, 0.0, %v7773
      %v8283 = vsel %vm8251, 0.0, %v7775
      %v8284 = vsel %vm8252, 0.0, %v7777
      %v8285 = vsel %vm8253, 0.0, %v7779
      %v8286 = vsel %vm8254, 0.0, %v7781
      %v8287 = vsel %vm8255, 0.0, %v7783
      %v8288 = vsel %vm8256, 0.0, %v7785
      %v8289 = vsel %vm8257, 0.0, %v7787
      %v8290 = vsel %vm8258, 0.0, %v7789
      %v8291 = vsel %vm8259, 0.0, %v7791
      %v8292 = vsel %vm8260, 0.0, %v7793
      %v8293 = vsel %vm8261, 0.0, %v7795
      %v8294 = vsel %vm8262, 0.0, %v7797
      %v8295 = vsel %vm8263, 0.0, %v7799
      %v8296 = vsel %vm8264, 0.0, %v7832
      %8297 = vmatprep.subr.mxu0 0.0
      %8298 = vmatpush1.msra.mxu0 %v7047
      %8299 = vmatprep.subr.mxu0 0.0
      %8300 = vmatpush1.msra.mxu0 %v7048
      %8301 = vmatprep.subr.mxu0 0.0
      %8302 = vmatpush1.msra.mxu0 %v7049
      %8303 = vmatprep.subr.mxu0 0.0
      %8304 = vmatpush1.msra.mxu0 %v7050
      %8305 = vmatprep.subr.mxu0 0.0
      %8306 = vmatpush1.msra.mxu0 %v7051
      %8307 = vmatprep.subr.mxu0 0.0
      %8308 = vmatpush1.msra.mxu0 %v7052
      %8309 = vmatprep.subr.mxu0 0.0
      %8310 = vmatpush1.msra.mxu0 %v7053
      %8311 = vmatprep.subr.mxu0 0.0
      %8312 = vmatpush1.msra.mxu0 %v7054
      %8313 = vmatprep.subr.mxu0 0.0
      %8314 = vmatpush1.msra.mxu0 %v7055
      %8315 = vmatprep.subr.mxu0 0.0
      %8316 = vmatpush1.msra.mxu0 %v7056
      %8317 = vmatprep.subr.mxu0 0.0
      %8318 = vmatpush1.msra.mxu0 %v7057
      %8319 = vmatprep.subr.mxu0 0.0
      %8320 = vmatpush1.msra.mxu0 %v7058
      %8321 = vmatprep.subr.mxu0 0.0
      %8322 = vmatpush1.msra.mxu0 %v7059
      %8323 = vmatprep.subr.mxu0 0.0
      %8324 = vmatpush1.msra.mxu0 %v7060
      %8325 = vmatprep.subr.mxu0 0.0
      %8326 = vmatpush1.msra.mxu0 %v7061
      %8327 = vmatprep.subr.mxu0 0.0
      %8328 = vmatpush1.msra.mxu0 %v7062
      %8329 = vmatprep.subr.mxu0 0.0
      %8330 = vmatpush1.msra.mxu0 0.0
      %8331 = vmatprep.subr.mxu0 0.0
      %8332 = vmatpush1.msra.mxu0 0.0
      %8333 = vmatprep.subr.mxu0 0.0
      %8334 = vmatpush1.msra.mxu0 0.0
      %8335 = vmatprep.subr.mxu0 0.0
      %8336 = vmatpush1.msra.mxu0 0.0
      %8337 = vmatprep.subr.mxu0 0.0
      %8338 = vmatpush1.msra.mxu0 0.0
      %8339 = vmatprep.subr.mxu0 0.0
      %8340 = vmatpush1.msra.mxu0 0.0
      %8341 = vmatprep.subr.mxu0 0.0
      %8342 = vmatpush1.msra.mxu0 0.0
      %8343 = vmatprep.subr.mxu0 0.0
      %8344 = vmatpush1.msra.mxu0 0.0
      %8345 = vmatprep.subr.mxu0 0.0
      %8346 = vmatpush1.msra.mxu0 0.0
      %8347 = vmatprep.subr.mxu0 0.0
      %8348 = vmatpush1.msra.mxu0 0.0
      %8349 = vmatprep.subr.mxu0 0.0
      %8350 = vmatpush1.msra.mxu0 0.0
      %8351 = vmatprep.subr.mxu0 0.0
      %8352 = vmatpush1.msra.mxu0 0.0
      %8353 = vmatprep.subr.mxu0 0.0
      %8354 = vmatpush1.msra.mxu0 0.0
      %8355 = vmatprep.subr.mxu0 0.0
      %8356 = vmatpush1.msra.mxu0 0.0
      %8357 = vmatprep.subr.mxu0 0.0
      %8358 = vmatpush1.msra.mxu0 0.0
      %8359 = vmatprep.subr.mxu0 0.0
      %8360 = vmatpush1.msra.mxu0 0.0
      %8361 = vmatprep.mubr.f32.mxu0 0.0
      %8362 = vmatmul.mubr.f32.gmra.mrb[0].mxu0 %v8265
      %v8363 = vpop.f32.mrb[0].mxu0
      %v8364 = vadd.f32 0.0, %v8363
      %v8365 = vpop.f32.mrb[0].mxu0
      %8366 = vmatprep.mubr.f32.mxu0 0.0
      %8367 = vmatmul.mubr.f32.gmra.mrb[0].mxu0 %v8266
      %v8368 = vpop.f32.mrb[0].mxu0
      %v8369 = vadd.f32 0.0, %v8368
      %v8370 = vpop.f32.mrb[0].mxu0
      %8371 = vmatprep.mubr.f32.mxu0 0.0
      %8372 = vmatmul.mubr.f32.gmra.mrb[0].mxu0 %v8267
      %v8373 = vpop.f32.mrb[0].mxu0
      %v8374 = vadd.f32 0.0, %v8373
      %v8375 = vpop.f32.mrb[0].mxu0
      %8376 = vmatprep.mubr.f32.mxu0 0.0
      %8377 = vmatmul.mubr.f32.gmra.mrb[0].mxu0 %v8268
      %v8378 = vpop.f32.mrb[0].mxu0
      %v8379 = vadd.f32 0.0, %v8378
      %v8380 = vpop.f32.mrb[0].mxu0
      %8381 = vmatprep.mubr.f32.mxu0 0.0
      %8382 = vmatmul.mubr.f32.gmra.mrb[0].mxu0 %v8269
      %v8383 = vpop.f32.mrb[0].mxu0
      %v8384 = vadd.f32 0.0, %v8383
      %v8385 = vpop.f32.mrb[0].mxu0
      %8386 = vmatprep.mubr.f32.mxu0 0.0
      %8387 = vmatmul.mubr.f32.gmra.mrb[0].mxu0 %v8270
      %v8388 = vpop.f32.mrb[0].mxu0
      %v8389 = vadd.f32 0.0, %v8388
      %v8390 = vpop.f32.mrb[0].mxu0
      %8391 = vmatprep.mubr.f32.mxu0 0.0
      %8392 = vmatmul.mubr.f32.gmra.mrb[0].mxu0 %v8271
      %v8393 = vpop.f32.mrb[0].mxu0
      %v8394 = vadd.f32 0.0, %v8393
      %v8395 = vpop.f32.mrb[0].mxu0
      %8396 = vmatprep.mubr.f32.mxu0 0.0
      %8397 = vmatmul.mubr.f32.gmra.mrb[0].mxu0 %v8272
      %v8398 = vpop.f32.mrb[0].mxu0
      %v8399 = vadd.f32 0.0, %v8398
      %v8400 = vpop.f32.mrb[0].mxu0
      %8401 = vmatprep.mubr.f32.mxu0 0.0
      %8402 = vmatmul.mubr.f32.gmra.mrb[0].mxu0 %v8273
      %v8403 = vpop.f32.mrb[0].mxu0
      %v8404 = vadd.f32 0.0, %v8403
      %v8405 = vpop.f32.mrb[0].mxu0
      %8406 = vmatprep.mubr.f32.mxu0 0.0
      %8407 = vmatmul.mubr.f32.gmra.mrb[0].mxu0 %v8274
      %v8408 = vpop.f32.mrb[0].mxu0
      %v8409 = vadd.f32 0.0, %v8408
      %v8410 = vpop.f32.mrb[0].mxu0
      %8411 = vmatprep.mubr.f32.mxu0 0.0
      %8412 = vmatmul.mubr.f32.gmra.mrb[0].mxu0 %v8275
      %v8413 = vpop.f32.mrb[0].mxu0
      %v8414 = vadd.f32 0.0, %v8413
      %v8415 = vpop.f32.mrb[0].mxu0
      %8416 = vmatprep.mubr.f32.mxu0 0.0
      %8417 = vmatmul.mubr.f32.gmra.mrb[0].mxu0 %v8276
      %v8418 = vpop.f32.mrb[0].mxu0
      %v8419 = vadd.f32 0.0, %v8418
      %v8420 = vpop.f32.mrb[0].mxu0
      %8421 = vmatprep.mubr.f32.mxu0 0.0
      %8422 = vmatmul.mubr.f32.gmra.mrb[0].mxu0 %v8277
      %v8423 = vpop.f32.mrb[0].mxu0
      %v8424 = vadd.f32 0.0, %v8423
      %v8425 = vpop.f32.mrb[0].mxu0
      %8426 = vmatprep.mubr.f32.mxu0 0.0
      %8427 = vmatmul.mubr.f32.gmra.mrb[0].mxu0 %v8278
      %v8428 = vpop.f32.mrb[0].mxu0
      %v8429 = vadd.f32 0.0, %v8428
      %v8430 = vpop.f32.mrb[0].mxu0
      %8431 = vmatprep.mubr.f32.mxu0 0.0
      %8432 = vmatmul.mubr.f32.gmra.mrb[0].mxu0 %v8279
      %v8433 = vpop.f32.mrb[0].mxu0
      %v8434 = vadd.f32 0.0, %v8433
      %v8435 = vpop.f32.mrb[0].mxu0
      %8436 = vmatprep.mubr.f32.mxu0 0.0
      %8437 = vmatmul.mubr.f32.gmra.mrb[0].mxu0 %v8280
      %v8438 = vpop.f32.mrb[0].mxu0
      %v8439 = vadd.f32 0.0, %v8438
      %v8440 = vpop.f32.mrb[0].mxu0
      %8441 = vmatprep.mubr.f32.mxu0 0.0
      %8442 = vmatmul.mubr.f32.gmra.mrb[0].mxu0 %v8281
      %v8443 = vpop.f32.mrb[0].mxu0
      %v8444 = vadd.f32 0.0, %v8443
      %v8445 = vpop.f32.mrb[0].mxu0
      %8446 = vmatprep.mubr.f32.mxu0 0.0
      %8447 = vmatmul.mubr.f32.gmra.mrb[0].mxu0 %v8282
      %v8448 = vpop.f32.mrb[0].mxu0
      %v8449 = vadd.f32 0.0, %v8448
      %v8450 = vpop.f32.mrb[0].mxu0
      %8451 = vmatprep.mubr.f32.mxu0 0.0
      %8452 = vmatmul.mubr.f32.gmra.mrb[0].mxu0 %v8283
      %v8453 = vpop.f32.mrb[0].mxu0
      %v8454 = vadd.f32 0.0, %v8453
      %v8455 = vpop.f32.mrb[0].mxu0
      %8456 = vmatprep.mubr.f32.mxu0 0.0
      %8457 = vmatmul.mubr.f32.gmra.mrb[0].mxu0 %v8284
      %v8458 = vpop.f32.mrb[0].mxu0
      %v8459 = vadd.f32 0.0, %v8458
      %v8460 = vpop.f32.mrb[0].mxu0
      %8461 = vmatprep.mubr.f32.mxu0 0.0
      %8462 = vmatmul.mubr.f32.gmra.mrb[0].mxu0 %v8285
      %v8463 = vpop.f32.mrb[0].mxu0
      %v8464 = vadd.f32 0.0, %v8463
      %v8465 = vpop.f32.mrb[0].mxu0
      %8466 = vmatprep.mubr.f32.mxu0 0.0
      %8467 = vmatmul.mubr.f32.gmra.mrb[0].mxu0 %v8286
      %v8468 = vpop.f32.mrb[0].mxu0
      %v8469 = vadd.f32 0.0, %v8468
      %v8470 = vpop.f32.mrb[0].mxu0
      %8471 = vmatprep.mubr.f32.mxu0 0.0
      %8472 = vmatmul.mubr.f32.gmra.mrb[0].mxu0 %v8287
      %v8473 = vpop.f32.mrb[0].mxu0
      %v8474 = vadd.f32 0.0, %v8473
      %v8475 = vpop.f32.mrb[0].mxu0
      %8476 = vmatprep.mubr.f32.mxu0 0.0
      %8477 = vmatmul.mubr.f32.gmra.mrb[0].mxu0 %v8288
      %v8478 = vpop.f32.mrb[0].mxu0
      %v8479 = vadd.f32 0.0, %v8478
      %v8480 = vpop.f32.mrb[0].mxu0
      %8481 = vmatprep.mubr.f32.mxu0 0.0
      %8482 = vmatmul.mubr.f32.gmra.mrb[0].mxu0 %v8289
      %v8483 = vpop.f32.mrb[0].mxu0
      %v8484 = vadd.f32 0.0, %v8483
      %v8485 = vpop.f32.mrb[0].mxu0
      %8486 = vmatprep.mubr.f32.mxu0 0.0
      %8487 = vmatmul.mubr.f32.gmra.mrb[0].mxu0 %v8290
      %v8488 = vpop.f32.mrb[0].mxu0
      %v8489 = vadd.f32 0.0, %v8488
      %v8490 = vpop.f32.mrb[0].mxu0
      %8491 = vmatprep.mubr.f32.mxu0 0.0
      %8492 = vmatmul.mubr.f32.gmra.mrb[0].mxu0 %v8291
      %v8493 = vpop.f32.mrb[0].mxu0
      %v8494 = vadd.f32 0.0, %v8493
      %v8495 = vpop.f32.mrb[0].mxu0
      %8496 = vmatprep.mubr.f32.mxu0 0.0
      %8497 = vmatmul.mubr.f32.gmra.mrb[0].mxu0 %v8292
      %v8498 = vpop.f32.mrb[0].mxu0
      %v8499 = vadd.f32 0.0, %v8498
      %v8500 = vpop.f32.mrb[0].mxu0
      %8501 = vmatprep.mubr.f32.mxu0 0.0
      %8502 = vmatmul.mubr.f32.gmra.mrb[0].mxu0 %v8293
      %v8503 = vpop.f32.mrb[0].mxu0
      %v8504 = vadd.f32 0.0, %v8503
      %v8505 = vpop.f32.mrb[0].mxu0
      %8506 = vmatprep.mubr.f32.mxu0 0.0
      %8507 = vmatmul.mubr.f32.gmra.mrb[0].mxu0 %v8294
      %v8508 = vpop.f32.mrb[0].mxu0
      %v8509 = vadd.f32 0.0, %v8508
      %v8510 = vpop.f32.mrb[0].mxu0
      %8511 = vmatprep.mubr.f32.mxu0 0.0
      %8512 = vmatmul.mubr.f32.gmra.mrb[0].mxu0 %v8295
      %v8513 = vpop.f32.mrb[0].mxu0
      %v8514 = vadd.f32 0.0, %v8513
      %v8515 = vpop.f32.mrb[0].mxu0
      %8516 = vmatprep.mubr.f32.mxu0 0.0
      %8517 = vmatmul.mubr.f32.gmra.mrb[0].mxu0 %v8296
      %v8518 = vpop.f32.mrb[0].mxu0
      %v8519 = vadd.f32 0.0, %v8518
      %v8520 = vpop.f32.mrb[0].mxu0
      %8521 = vdwg.mxu0
      %8554 = vmatprep.subr.mxu0 0.0
      %8555 = vmatpush1.msra.mxu0 %v7031
      %8556 = vmatprep.subr.mxu0 0.0
      %8557 = vmatpush1.msra.mxu0 %v7032
      %8558 = vmatprep.subr.mxu0 0.0
      %8559 = vmatpush1.msra.mxu0 %v7033
      %8560 = vmatprep.subr.mxu0 0.0
      %8561 = vmatpush1.msra.mxu0 %v7034
      %8562 = vmatprep.subr.mxu0 0.0
      %8563 = vmatpush1.msra.mxu0 %v7035
      %8564 = vmatprep.subr.mxu0 0.0
      %8565 = vmatpush1.msra.mxu0 %v7036
      %8566 = vmatprep.subr.mxu0 0.0
      %8567 = vmatpush1.msra.mxu0 %v7037
      %8568 = vmatprep.subr.mxu0 0.0
      %8569 = vmatpush1.msra.mxu0 %v7038
      %8570 = vmatprep.subr.mxu0 0.0
      %8571 = vmatpush1.msra.mxu0 %v7039
      %8572 = vmatprep.subr.mxu0 0.0
      %8573 = vmatpush1.msra.mxu0 %v7040
      %8574 = vmatprep.subr.mxu0 0.0
      %8575 = vmatpush1.msra.mxu0 %v7041
      %8576 = vmatprep.subr.mxu0 0.0
      %8577 = vmatpush1.msra.mxu0 %v7042
      %8578 = vmatprep.subr.mxu0 0.0
      %8579 = vmatpush1.msra.mxu0 %v7043
      %8580 = vmatprep.subr.mxu0 0.0
      %8581 = vmatpush1.msra.mxu0 %v7044
      %8582 = vmatprep.subr.mxu0 0.0
      %8583 = vmatpush1.msra.mxu0 %v7045
      %8584 = vmatprep.subr.mxu0 0.0
      %8585 = vmatpush1.msra.mxu0 %v7046
      %8586 = vmatprep.subr.mxu0 0.0
      %8587 = vmatpush1.msra.mxu0 0.0
      %8588 = vmatprep.subr.mxu0 0.0
      %8589 = vmatpush1.msra.mxu0 0.0
      %8590 = vmatprep.subr.mxu0 0.0
      %8591 = vmatpush1.msra.mxu0 0.0
      %8592 = vmatprep.subr.mxu0 0.0
      %8593 = vmatpush1.msra.mxu0 0.0
      %8594 = vmatprep.subr.mxu0 0.0
      %8595 = vmatpush1.msra.mxu0 0.0
      %8596 = vmatprep.subr.mxu0 0.0
      %8597 = vmatpush1.msra.mxu0 0.0
      %8598 = vmatprep.subr.mxu0 0.0
      %8599 = vmatpush1.msra.mxu0 0.0
      %8600 = vmatprep.subr.mxu0 0.0
      %8601 = vmatpush1.msra.mxu0 0.0
      %8602 = vmatprep.subr.mxu0 0.0
      %8603 = vmatpush1.msra.mxu0 0.0
      %8604 = vmatprep.subr.mxu0 0.0
      %8605 = vmatpush1.msra.mxu0 0.0
      %8606 = vmatprep.subr.mxu0 0.0
      %8607 = vmatpush1.msra.mxu0 0.0
      %8608 = vmatprep.subr.mxu0 0.0
      %8609 = vmatpush1.msra.mxu0 0.0
      %8610 = vmatprep.subr.mxu0 0.0
      %8611 = vmatpush1.msra.mxu0 0.0
      %8612 = vmatprep.subr.mxu0 0.0
      %8613 = vmatpush1.msra.mxu0 0.0
      %8614 = vmatprep.subr.mxu0 0.0
      %8615 = vmatpush1.msra.mxu0 0.0
      %8616 = vmatprep.subr.mxu0 0.0
      %8617 = vmatpush1.msra.mxu0 0.0
      %8618 = vmatprep.mubr.f32.mxu0 0.0
      %8619 = vmatmul.mubr.f32.gmra.mrb[0].mxu0 %v7209
      %v8620 = vpop.f32.mrb[0].mxu0
      %v8621 = vadd.f32 %v8364, %v8620
      %v8622 = vpop.f32.mrb[0].mxu0
      %8623 = vmatprep.mubr.f32.mxu0 0.0
      %8624 = vmatmul.mubr.f32.gmra.mrb[0].mxu0 %v7226
      %v8625 = vpop.f32.mrb[0].mxu0
      %v8626 = vadd.f32 %v8369, %v8625
      %v8627 = vpop.f32.mrb[0].mxu0
      %8628 = vmatprep.mubr.f32.mxu0 0.0
      %8629 = vmatmul.mubr.f32.gmra.mrb[0].mxu0 %v7243
      %v8630 = vpop.f32.mrb[0].mxu0
      %v8631 = vadd.f32 %v8374, %v8630
      %v8632 = vpop.f32.mrb[0].mxu0
      %8633 = vmatprep.mubr.f32.mxu0 0.0
      %8634 = vmatmul.mubr.f32.gmra.mrb[0].mxu0 %v7260
      %v8635 = vpop.f32.mrb[0].mxu0
      %v8636 = vadd.f32 %v8379, %v8635
      %v8637 = vpop.f32.mrb[0].mxu0
      %8638 = vmatprep.mubr.f32.mxu0 0.0
      %8639 = vmatmul.mubr.f32.gmra.mrb[0].mxu0 %v7277
      %v8640 = vpop.f32.mrb[0].mxu0
      %v8641 = vadd.f32 %v8384, %v8640
      %v8642 = vpop.f32.mrb[0].mxu0
      %8643 = vmatprep.mubr.f32.mxu0 0.0
      %8644 = vmatmul.mubr.f32.gmra.mrb[0].mxu0 %v7294
      %v8645 = vpop.f32.mrb[0].mxu0
      %v8646 = vadd.f32 %v8389, %v8645
      %v8647 = vpop.f32.mrb[0].mxu0
      %8648 = vmatprep.mubr.f32.mxu0 0.0
      %8649 = vmatmul.mubr.f32.gmra.mrb[0].mxu0 %v7311
      %v8650 = vpop.f32.mrb[0].mxu0
      %v8651 = vadd.f32 %v8394, %v8650
      %v8652 = vpop.f32.mrb[0].mxu0
      %8653 = vmatprep.mubr.f32.mxu0 0.0
      %8654 = vmatmul.mubr.f32.gmra.mrb[0].mxu0 %v7328
      %v8655 = vpop.f32.mrb[0].mxu0
      %v8656 = vadd.f32 %v8399, %v8655
      %v8657 = vpop.f32.mrb[0].mxu0
      %8658 = vmatprep.mubr.f32.mxu0 0.0
      %8659 = vmatmul.mubr.f32.gmra.mrb[0].mxu0 %v7345
      %v8660 = vpop.f32.mrb[0].mxu0
      %v8661 = vadd.f32 %v8404, %v8660
      %v8662 = vpop.f32.mrb[0].mxu0
      %8663 = vmatprep.mubr.f32.mxu0 0.0
      %8664 = vmatmul.mubr.f32.gmra.mrb[0].mxu0 %v7362
      %v8665 = vpop.f32.mrb[0].mxu0
      %v8666 = vadd.f32 %v8409, %v8665
      %v8667 = vpop.f32.mrb[0].mxu0
      %8668 = vmatprep.mubr.f32.mxu0 0.0
      %8669 = vmatmul.mubr.f32.gmra.mrb[0].mxu0 %v7379
      %v8670 = vpop.f32.mrb[0].mxu0
      %v8671 = vadd.f32 %v8414, %v8670
      %v8672 = vpop.f32.mrb[0].mxu0
      %8673 = vmatprep.mubr.f32.mxu0 0.0
      %8674 = vmatmul.mubr.f32.gmra.mrb[0].mxu0 %v7396
      %v8675 = vpop.f32.mrb[0].mxu0
      %v8676 = vadd.f32 %v8419, %v8675
      %v8677 = vpop.f32.mrb[0].mxu0
      %8678 = vmatprep.mubr.f32.mxu0 0.0
      %8679 = vmatmul.mubr.f32.gmra.mrb[0].mxu0 %v7413
      %v8680 = vpop.f32.mrb[0].mxu0
      %v8681 = vadd.f32 %v8424, %v8680
      %v8682 = vpop.f32.mrb[0].mxu0
      %8683 = vmatprep.mubr.f32.mxu0 0.0
      %8684 = vmatmul.mubr.f32.gmra.mrb[0].mxu0 %v7430
      %v8685 = vpop.f32.mrb[0].mxu0
      %v8686 = vadd.f32 %v8429, %v8685
      %v8687 = vpop.f32.mrb[0].mxu0
      %8688 = vmatprep.mubr.f32.mxu0 0.0
      %8689 = vmatmul.mubr.f32.gmra.mrb[0].mxu0 %v7447
      %v8690 = vpop.f32.mrb[0].mxu0
      %v8691 = vadd.f32 %v8434, %v8690
      %v8692 = vpop.f32.mrb[0].mxu0
      %8693 = vmatprep.mubr.f32.mxu0 0.0
      %8694 = vmatmul.mubr.f32.gmra.mrb[0].mxu0 %v7464
      %v8695 = vpop.f32.mrb[0].mxu0
      %v8696 = vadd.f32 %v8439, %v8695
      %v8697 = vpop.f32.mrb[0].mxu0
      %8698 = vmatprep.mubr.f32.mxu0 0.0
      %8699 = vmatmul.mubr.f32.gmra.mrb[0].mxu0 %v7481
      %v8700 = vpop.f32.mrb[0].mxu0
      %v8701 = vadd.f32 %v8444, %v8700
      %v8702 = vpop.f32.mrb[0].mxu0
      %8703 = vmatprep.mubr.f32.mxu0 0.0
      %8704 = vmatmul.mubr.f32.gmra.mrb[0].mxu0 %v7498
      %v8705 = vpop.f32.mrb[0].mxu0
      %v8706 = vadd.f32 %v8449, %v8705
      %v8707 = vpop.f32.mrb[0].mxu0
      %8708 = vmatprep.mubr.f32.mxu0 0.0
      %8709 = vmatmul.mubr.f32.gmra.mrb[0].mxu0 %v7515
      %v8710 = vpop.f32.mrb[0].mxu0
      %v8711 = vadd.f32 %v8454, %v8710
      %v8712 = vpop.f32.mrb[0].mxu0
      %8713 = vmatprep.mubr.f32.mxu0 0.0
      %8714 = vmatmul.mubr.f32.gmra.mrb[0].mxu0 %v7532
      %v8715 = vpop.f32.mrb[0].mxu0
      %v8716 = vadd.f32 %v8459, %v8715
      %v8717 = vpop.f32.mrb[0].mxu0
      %8718 = vmatprep.mubr.f32.mxu0 0.0
      %8719 = vmatmul.mubr.f32.gmra.mrb[0].mxu0 %v7549
      %v8720 = vpop.f32.mrb[0].mxu0
      %v8721 = vadd.f32 %v8464, %v8720
      %v8722 = vpop.f32.mrb[0].mxu0
      %8723 = vmatprep.mubr.f32.mxu0 0.0
      %8724 = vmatmul.mubr.f32.gmra.mrb[0].mxu0 %v7566
      %v8725 = vpop.f32.mrb[0].mxu0
      %v8726 = vadd.f32 %v8469, %v8725
      %v8727 = vpop.f32.mrb[0].mxu0
      %8728 = vmatprep.mubr.f32.mxu0 0.0
      %8729 = vmatmul.mubr.f32.gmra.mrb[0].mxu0 %v7583
      %v8730 = vpop.f32.mrb[0].mxu0
      %v8731 = vadd.f32 %v8474, %v8730
      %v8732 = vpop.f32.mrb[0].mxu0
      %8733 = vmatprep.mubr.f32.mxu0 0.0
      %8734 = vmatmul.mubr.f32.gmra.mrb[0].mxu0 %v7600
      %v8735 = vpop.f32.mrb[0].mxu0
      %v8736 = vadd.f32 %v8479, %v8735
      %v8737 = vpop.f32.mrb[0].mxu0
      %8738 = vmatprep.mubr.f32.mxu0 0.0
      %8739 = vmatmul.mubr.f32.gmra.mrb[0].mxu0 %v7617
      %v8740 = vpop.f32.mrb[0].mxu0
      %v8741 = vadd.f32 %v8484, %v8740
      %v8742 = vpop.f32.mrb[0].mxu0
      %8743 = vmatprep.mubr.f32.mxu0 0.0
      %8744 = vmatmul.mubr.f32.gmra.mrb[0].mxu0 %v7634
      %v8745 = vpop.f32.mrb[0].mxu0
      %v8746 = vadd.f32 %v8489, %v8745
      %v8747 = vpop.f32.mrb[0].mxu0
      %8748 = vmatprep.mubr.f32.mxu0 0.0
      %8749 = vmatmul.mubr.f32.gmra.mrb[0].mxu0 %v7651
      %v8750 = vpop.f32.mrb[0].mxu0
      %v8751 = vadd.f32 %v8494, %v8750
      %v8752 = vpop.f32.mrb[0].mxu0
      %8753 = vmatprep.mubr.f32.mxu0 0.0
      %8754 = vmatmul.mubr.f32.gmra.mrb[0].mxu0 %v7668
      %v8755 = vpop.f32.mrb[0].mxu0
      %v8756 = vadd.f32 %v8499, %v8755
      %v8757 = vpop.f32.mrb[0].mxu0
      %8758 = vmatprep.mubr.f32.mxu0 0.0
      %8759 = vmatmul.mubr.f32.gmra.mrb[0].mxu0 %v7685
      %v8760 = vpop.f32.mrb[0].mxu0
      %v8761 = vadd.f32 %v8504, %v8760
      %v8762 = vpop.f32.mrb[0].mxu0
      %8763 = vmatprep.mubr.f32.mxu0 0.0
      %8764 = vmatmul.mubr.f32.gmra.mrb[0].mxu0 %v7702
      %v8765 = vpop.f32.mrb[0].mxu0
      %v8766 = vadd.f32 %v8509, %v8765
      %v8767 = vpop.f32.mrb[0].mxu0
      %8768 = vmatprep.mubr.f32.mxu0 0.0
      %8769 = vmatmul.mubr.f32.gmra.mrb[0].mxu0 %v7719
      %v8770 = vpop.f32.mrb[0].mxu0
      %v8771 = vadd.f32 %v8514, %v8770
      %v8772 = vpop.f32.mrb[0].mxu0
      %8773 = vmatprep.mubr.f32.mxu0 0.0
      %8774 = vmatmul.mubr.f32.gmra.mrb[0].mxu0 %v7736
      %v8775 = vpop.f32.mrb[0].mxu0
      %v8776 = vadd.f32 %v8519, %v8775
      %v8777 = vpop.f32.mrb[0].mxu0
      %8778 = vdwg.mxu0
      %v8780 = vlaneseq
      %v8781 = vshrl.u32 %v8780, 7
      %v8782 = vsub.s32 0, %v8781
      %v8783 = vrot.slane %v7063, %v8782
      %v8785 = vmul.f32 %v8621, %v8783
      %v8786 = vmul.f32 %v8626, %v8783
      %v8787 = vmul.f32 %v8631, %v8783
      %v8788 = vmul.f32 %v8636, %v8783
      %v8789 = vmul.f32 %v8641, %v8783
      %v8790 = vmul.f32 %v8646, %v8783
      %v8791 = vmul.f32 %v8651, %v8783
      %v8792 = vmul.f32 %v8656, %v8783
      %v8793 = vmul.f32 %v8661, %v8783
      %v8794 = vmul.f32 %v8666, %v8783
      %v8795 = vmul.f32 %v8671, %v8783
      %v8796 = vmul.f32 %v8676, %v8783
      %v8797 = vmul.f32 %v8681, %v8783
      %v8798 = vmul.f32 %v8686, %v8783
      %v8799 = vmul.f32 %v8691, %v8783
      %v8800 = vmul.f32 %v8696, %v8783
      %v8801 = vmul.f32 %v8701, %v8783
      %v8802 = vmul.f32 %v8706, %v8783
      %v8803 = vmul.f32 %v8711, %v8783
      %v8804 = vmul.f32 %v8716, %v8783
      %v8805 = vmul.f32 %v8721, %v8783
      %v8806 = vmul.f32 %v8726, %v8783
      %v8807 = vmul.f32 %v8731, %v8783
      %v8808 = vmul.f32 %v8736, %v8783
      %v8809 = vmul.f32 %v8741, %v8783
      %v8810 = vmul.f32 %v8746, %v8783
      %v8811 = vmul.f32 %v8751, %v8783
      %v8812 = vmul.f32 %v8756, %v8783
      %v8813 = vmul.f32 %v8761, %v8783
      %v8814 = vmul.f32 %v8766, %v8783
      %v8815 = vmul.f32 %v8771, %v8783
      %v8816 = vmul.f32 %v8776, %v8783
      %v8818 = vlaneseq
      %v8819 = vshrl.u32 %v8818, 7
      %v8820 = vsub.s32 0, %v8819
      %v8821 = vrot.slane %v7064, %v8820
      %v8823 = vadd.f32 %v8785, %v8821
      %v8824 = vadd.f32 %v8786, %v8821
      %v8825 = vadd.f32 %v8787, %v8821
      %v8826 = vadd.f32 %v8788, %v8821
      %v8827 = vadd.f32 %v8789, %v8821
      %v8828 = vadd.f32 %v8790, %v8821
      %v8829 = vadd.f32 %v8791, %v8821
      %v8830 = vadd.f32 %v8792, %v8821
      %v8831 = vadd.f32 %v8793, %v8821
      %v8832 = vadd.f32 %v8794, %v8821
      %v8833 = vadd.f32 %v8795, %v8821
      %v8834 = vadd.f32 %v8796, %v8821
      %v8835 = vadd.f32 %v8797, %v8821
      %v8836 = vadd.f32 %v8798, %v8821
      %v8837 = vadd.f32 %v8799, %v8821
      %v8838 = vadd.f32 %v8800, %v8821
      %v8839 = vadd.f32 %v8801, %v8821
      %v8840 = vadd.f32 %v8802, %v8821
      %v8841 = vadd.f32 %v8803, %v8821
      %v8842 = vadd.f32 %v8804, %v8821
      %v8843 = vadd.f32 %v8805, %v8821
      %v8844 = vadd.f32 %v8806, %v8821
      %v8845 = vadd.f32 %v8807, %v8821
      %v8846 = vadd.f32 %v8808, %v8821
      %v8847 = vadd.f32 %v8809, %v8821
      %v8848 = vadd.f32 %v8810, %v8821
      %v8849 = vadd.f32 %v8811, %v8821
      %v8850 = vadd.f32 %v8812, %v8821
      %v8851 = vadd.f32 %v8813, %v8821
      %v8852 = vadd.f32 %v8814, %v8821
      %v8853 = vadd.f32 %v8815, %v8821
      %v8854 = vadd.f32 %v8816, %v8821
      %8855 = vst [vmem:[%s550] sm:$0xff] %v8823
      %8856 = vst [vmem:[%s550 + $0x8] sm:$0xff] %v8824
      %8857 = vst [vmem:[%s550 + $0x10] sm:$0xff] %v8825
      %8858 = vst [vmem:[%s550 + $0x18] sm:$0xff] %v8826
      %8859 = vst [vmem:[%s550 + $0x20] sm:$0xff] %v8827
      %8860 = vst [vmem:[%s550 + $0x28] sm:$0xff] %v8828
      %8861 = vst [vmem:[%s550 + $0x30] sm:$0xff] %v8829
      %8862 = vst [vmem:[%s550 + $0x38] sm:$0xff] %v8830
      %8863 = vst [vmem:[%s550 + $0x40] sm:$0xff] %v8831
      %8864 = vst [vmem:[%s550 + $0x48] sm:$0xff] %v8832
      %8865 = vst [vmem:[%s550 + $0x50] sm:$0xff] %v8833
      %8866 = vst [vmem:[%s550 + $0x58] sm:$0xff] %v8834
      %8867 = vst [vmem:[%s550 + $0x60] sm:$0xff] %v8835
      %8868 = vst [vmem:[%s550 + $0x68] sm:$0xff] %v8836
      %8869 = vst [vmem:[%s550 + $0x70] sm:$0xff] %v8837
      %8870 = vst [vmem:[%s550 + $0x78] sm:$0xff] %v8838
      %8871 = vst [vmem:[%s550 + $0x80] sm:$0xff] %v8839
      %8872 = vst [vmem:[%s550 + $0x88] sm:$0xff] %v8840
      %8873 = vst [vmem:[%s550 + $0x90] sm:$0xff] %v8841
      %8874 = vst [vmem:[%s550 + $0x98] sm:$0xff] %v8842
      %8875 = vst [vmem:[%s550 + $0xa0] sm:$0xff] %v8843
      %8876 = vst [vmem:[%s550 + $0xa8] sm:$0xff] %v8844
      %8877 = vst [vmem:[%s550 + $0xb0] sm:$0xff] %v8845
      %8878 = vst [vmem:[%s550 + $0xb8] sm:$0xff] %v8846
      %8879 = vst [vmem:[%s550 + $0xc0] sm:$0xff] %v8847
      %8880 = vst [vmem:[%s550 + $0xc8] sm:$0xff] %v8848
      %8881 = vst [vmem:[%s550 + $0xd0] sm:$0xff] %v8849
      %8882 = vst [vmem:[%s550 + $0xd8] sm:$0xff] %v8850
      %8883 = vst [vmem:[%s550 + $0xe0] sm:$0xff] %v8851
      %8884 = vst [vmem:[%s550 + $0xe8] sm:$0xff] %v8852
      %8885 = vst [vmem:[%s550 + $0xf0] sm:$0xff] %v8853
      %8886 = vst [vmem:[%s550 + $0xf8] sm:$0xff] %v8854
      %s8887 = smul.u32 32, %s28
      %p8888 = scmp.lt.s32.totalorder %s8887, 63
      %s8889 = scalar_select %p8888, %s8887, 63
      %s8890 = smul.addr %s8889, 8
      %s8891 = scalar_lea.vmem %s17, %s8890
      // Predicated region
      $region89: #{conv_decoder_forward.1} parent=87 // pred_check
        %p8892 = pneg %p408
      $region90: #{conv_decoder_forward.1} parent=87 // pred_check_branch
        %8894 = sbr.rel (%p8892) target = $region92
      $region91: #{conv_decoder_forward.1} parent=87 // pred_region
        %s8895 = smul.u32 32, %s28
      $region92: #{conv_decoder_forward.1} parent=87 // pred_fallthru
        _
    $region88: #{conv_decoder_forward.1} parent=5 // pred_fallthru
      _
    %p8896 = scmp.le.s32.totalorder 2, %s23
    // Predicated region
    $region93: #{conv_decoder_forward.1} parent=5 // pred_check
      %p8897 = pneg %p8896
    $region94: #{conv_decoder_forward.1} parent=5 // pred_check_branch
      %8899 = sbr.rel (%p8897) target = $region96
    $region95: #{conv_decoder_forward.1} parent=5 // pred_region
      %s8900 = ssub.s32 %s23, 2
      // Predicated region
      $region97: #{conv_decoder_forward.1} parent=95 // pred_check
        %p8901 = pneg %p414
      $region98: #{conv_decoder_forward.1} parent=95 // pred_check_branch
        %8903 = sbr.rel (%p8901) target = $region100
      $region99: #{conv_decoder_forward.1} parent=95 // pred_region
        %s8904 = smul.u32 32, %s29
        %p8905 = scmp.lt.s32.totalorder %s8904, 63
        %s8906 = scalar_select %p8905, %s8904, 63
        %s8907 = smul.addr %s8906, 8
        %s8908 = scalar_lea.vmem %s17, %s8907
      $region100: #{conv_decoder_forward.1} parent=95 // pred_fallthru
        _
    $region96: #{conv_decoder_forward.1} parent=5 // pred_fallthru
      _
  $region6: #{conv_decoder_forward.1} parent=0 // loop_footer
    %s27 = sadd.s32 1, %s23
  $region7: #{conv_decoder_forward.1} parent=0 // loop_footer_branch
    %22 = sbr.rel target = $region3
  $region8: #{conv_decoder_forward.1} parent=0 // loop_exit
    _

</llo_original>
